<compile_context>
chip_gen: v5e
topology: v5e:2x2
jax: 0.10.0
libtpu: 0.0.40
codegen_flags: <defaults>
</compile_context>

<pallas_src>
import numpy as np

import jax
import jax.numpy as jnp
from jax.experimental import pallas as pl
from jax.experimental.pallas import tpu as pltpu


# ---------------------------------------------------------------------------
# Host-side helpers (faithful translations of the PyTorch module glue)
# ---------------------------------------------------------------------------
def window_partition_jax(x, ws):
    # x: (B, H, W, C) -> (B*nW, ws, ws, C)
    B, H, W, C = x.shape
    x = x.reshape(B, H // ws, ws, W // ws, ws, C)
    return x.transpose(0, 1, 3, 2, 4, 5).reshape(-1, ws, ws, C)


def window_reverse_jax(windows, ws, H, W):
    # windows: (B*nW, ws, ws, C) -> (B, H, W, C)
    B = windows.shape[0] // ((H * W) // (ws * ws))
    x = windows.reshape(B, H // ws, W // ws, ws, ws, -1)
    return x.transpose(0, 1, 3, 2, 4, 5).reshape(B, H, W, -1)


def _relative_position_index(ws):
    coords = np.stack(np.meshgrid(np.arange(ws), np.arange(ws), indexing="ij"))
    coords_flat = coords.reshape(2, -1)
    rel = coords_flat[:, :, None] - coords_flat[:, None, :]
    rel = rel.transpose(1, 2, 0).astype(np.int64)
    rel[:, :, 0] += ws - 1
    rel[:, :, 1] += ws - 1
    rel[:, :, 0] *= 2 * ws - 1
    return rel.sum(-1)  # (N, N)


def relative_position_bias(table, ws, num_heads):
    # table: ((2*ws-1)^2, num_heads) -> (num_heads, N, N)
    N = ws * ws
    idx = _relative_position_index(ws).reshape(-1)
    rpb = table[idx].reshape(N, N, num_heads)
    return jnp.transpose(rpb, (2, 0, 1))


def build_attn_mask(H, W, ws, ss):
    # (nW, N, N) additive mask; zeros when shift == 0
    N = ws * ws
    nW = (H // ws) * (W // ws)
    if ss == 0:
        return jnp.zeros((nW, N, N), jnp.float32)
    img_mask = np.zeros((1, H, W, 1), np.float32)
    cnt = 0
    for hs in (slice(0, -ws), slice(-ws, -ss), slice(-ss, None)):
        for wsl in (slice(0, -ws), slice(-ws, -ss), slice(-ss, None)):
            img_mask[:, hs, wsl, :] = cnt
            cnt += 1
    mw = img_mask.reshape(1, H // ws, ws, W // ws, ws, 1)
    mw = mw.transpose(0, 1, 3, 2, 4, 5).reshape(-1, N)
    am = mw[:, None, :] - mw[:, :, None]
    am = np.where(am != 0, -100.0, 0.0).astype(np.float32)
    return jnp.asarray(am)


# ---------------------------------------------------------------------------
# Pallas forward
# ---------------------------------------------------------------------------
def swin_block_forward(x, params, input_resolution, num_heads, window_size,
                       shift_size):
    """x: (B, L, C) f32. params: PyTorch-layout weights. Returns (B, L, C)."""
    B, L, C = x.shape
    H, W = input_resolution
    assert L == H * W, "input feature has wrong size"

    ws, ss = window_size, shift_size
    if min(input_resolution) <= ws:          # same adjustment as __init__
        ss, ws = 0, min(input_resolution)
    assert 0 <= ss < ws

    N = ws * ws
    nW = (H // ws) * (W // ws)
    nh = num_heads
    hd = C // nh
    scale = hd ** (-0.5)
    hidden = params["fc1_w"].shape[0]
    eps = 1e-5

    # ---- parameter layout prep (host-side, one-time layout transforms) ----
    qkv_w, qkv_b = params["qkv_w"], params["qkv_b"]            # (3C, C), (3C,)
    wqkv = qkv_w.T                                             # (C, 3C) [q|k|v]
    bqkv = qkv_b.reshape(1, 3 * C)
    # fold the 1/sqrt(hd) query scale into the q columns of the fused weight
    scale_vec = jnp.concatenate([jnp.full((C,), scale, jnp.float32),
                                 jnp.ones((2 * C,), jnp.float32)])
    wqkv = wqkv * scale_vec[None, :]
    bqkv = bqkv * scale_vec[None, :]
    wp = params["proj_w"].T                                    # (C, C)
    bp = params["proj_b"].reshape(1, C)
    rpb = relative_position_bias(params["rpb_table"], ws, nh)  # (nh, N, N)
    if ss > 0:
        # fold shift mask + relative-position bias into one resident tensor
        mask = build_attn_mask(H, W, ws, ss)                   # (nW, N, N)
        bias = rpb[:, None, :, :] + mask[None, :, :, :]        # (nh, nW, N, N)
    else:
        bias = rpb[:, None, :, :]                              # (nh, 1, N, N)
    nWb = bias.shape[1]
    g1 = params["norm1_w"].reshape(1, C)
    b1 = params["norm1_b"].reshape(1, C)
    g2 = params["norm2_w"].reshape(1, C)
    b2 = params["norm2_b"].reshape(1, C)
    w1 = params["fc1_w"].T                                     # (C, hidden)
    fb1 = params["fc1_b"].reshape(1, hidden)
    w2 = params["fc2_w"].T                                     # (hidden, C)
    fb2 = params["fc2_b"].reshape(1, C)

    # ---- window partition of the *raw* input (norm1 + residual-1 are fused
    #      in-kernel; both are per-token so they commute with the permutation)
    x_img = x.reshape(B, H, W, C)
    if ss > 0:
        x_img = jnp.roll(x_img, shift=(-ss, -ss), axis=(1, 2))
    xw = window_partition_jax(x_img, ws).reshape(-1, N, C)     # (B_, N, C)
    B_ = xw.shape[0]
    WB = nW                       # windows per grid step (one image per step)
    n_steps = B_ // WB            # == B; 2 fat "parallel" steps at test config

    # ------------------------------------------------------------------
    # Kernel 1: fused norm1 + windowed MHA + projection + residual-1
    # ------------------------------------------------------------------
    def _attn_kernel(x_ref, g1_ref, b1_ref, wqkv_ref, bqkv_ref, bias_ref,
                     wp_ref, bp_ref, o_ref):
        xin = x_ref[...].astype(jnp.float32)                   # (WB, N, C)
        x2d = xin.reshape(WB * N, C)
        # norm1
        mu = jnp.mean(x2d, axis=-1, keepdims=True)
        var = jnp.mean((x2d - mu) ** 2, axis=-1, keepdims=True)
        xn = (x2d - mu) * jax.lax.rsqrt(var + eps)
        xn = xn * g1_ref[...] + b1_ref[...]
        # single fused QKV matmul (query scale already folded into weights)
        qkv = jnp.dot(xn, wqkv_ref[...],
                      preferred_element_type=jnp.float32) + bqkv_ref[...]
        head_outs = []
        for h in range(nh):                                    # unrolled, nh small
            qh = qkv[:, h * hd:(h + 1) * hd].reshape(WB, N, hd)
            kh = qkv[:, C + h * hd:C + (h + 1) * hd].reshape(WB, N, hd)
            vh = qkv[:, 2 * C + h * hd:2 * C + (h + 1) * hd].reshape(WB, N, hd)
            s = jnp.einsum("wnd,wmd->wnm", qh, kh,
                           preferred_element_type=jnp.float32)  # (WB, N, N)
            s = s + bias_ref[h]          # (nWb,N,N); broadcasts when nWb == 1
            # numerically stable softmax; exact reciprocal keeps 2e-3 tolerance
            s = s - jnp.max(s, axis=-1, keepdims=True)
            p = jnp.exp(s)
            p = p * pl.reciprocal(jnp.sum(p, axis=-1, keepdims=True),
                                  approx=False)
            head_outs.append(jnp.einsum("wnm,wmd->wnd", p, vh,
                                        preferred_element_type=jnp.float32))
        # concat heads along channel -> single K=C projection matmul
        out2d = jnp.concatenate(head_outs, axis=-1).reshape(WB * N, C)
        y = jnp.dot(out2d, wp_ref[...],
                    preferred_element_type=jnp.float32) + bp_ref[...]
        y = y + x2d                      # fused residual-1 (pre-norm input)
        o_ref[...] = y.reshape(WB, N, C).astype(o_ref.dtype)

    attn_cost = pl.CostEstimate(
        flops=int(B_ * (8 * N * C * C + 4 * N * N * C)),
        transcendentals=int(B_ * nh * N * N),
        bytes_accessed=int(4 * (2 * B_ * N * C + 4 * C * C + 4 * C
                                + nh * nWb * N * N)),
    )

    attn_win = pl.pallas_call(
        _attn_kernel,
        out_shape=jax.ShapeDtypeStruct((B_, N, C), x.dtype),
        grid=(n_steps,),
        in_specs=[
            pl.BlockSpec((WB, N, C), lambda i: (i, 0, 0)),        # x windows
            pl.BlockSpec((1, C), lambda i: (0, 0)),               # norm1 w
            pl.BlockSpec((1, C), lambda i: (0, 0)),               # norm1 b
            pl.BlockSpec((C, 3 * C), lambda i: (0, 0)),           # fused Wqkv
            pl.BlockSpec((1, 3 * C), lambda i: (0, 0)),           # fused bqkv
            pl.BlockSpec((nh, nWb, N, N), lambda i: (0, 0, 0, 0)),  # rpb(+mask)
            pl.BlockSpec((C, C), lambda i: (0, 0)),               # Wproj
            pl.BlockSpec((1, C), lambda i: (0, 0)),               # bproj
        ],
        out_specs=pl.BlockSpec((WB, N, C), lambda i: (i, 0, 0)),
        compiler_params=pltpu.CompilerParams(
            dimension_semantics=("parallel",)),
        cost_estimate=attn_cost,
    )(xw, g1, b1, wqkv, bqkv, bias, wp, bp)

    # ---- window reverse + roll back (pure permutation glue) ----
    # Kernel-1 output already contains residual-1, so this IS shortcut + attn.
    x_res = window_reverse_jax(attn_win.reshape(-1, ws, ws, C), ws, H, W)
    if ss > 0:
        x_res = jnp.roll(x_res, shift=(ss, ss), axis=(1, 2))
    x_res = x_res.reshape(B * L, C)

    # ------------------------------------------------------------------
    # Kernel 2: fused norm2 + MLP (fc1/GELU/fc2) + residual-2
    # ------------------------------------------------------------------
    def _mlp_kernel(a_ref, g2_ref, b2_ref, w1_ref, fb1_ref, w2_ref, fb2_ref,
                    o_ref):
        y = a_ref[...].astype(jnp.float32)        # already shortcut + attn
        mu = jnp.mean(y, axis=-1, keepdims=True)
        var = jnp.mean((y - mu) ** 2, axis=-1, keepdims=True)
        yn = (y - mu) * jax.lax.rsqrt(var + eps)
        yn = yn * g2_ref[...] + b2_ref[...]
        hmid = jnp.dot(yn, w1_ref[...],
                       preferred_element_type=jnp.float32) + fb1_ref[...]
        # TODO(synk): PyTorch nn.GELU default is exact (erf-based); tanh
        # approximation is used here for guaranteed Mosaic lowering.
        hmid = jax.nn.gelu(hmid, approximate=True)
        z = jnp.dot(hmid, w2_ref[...],
                    preferred_element_type=jnp.float32) + fb2_ref[...]
        o_ref[...] = (y + z).astype(o_ref.dtype)

    R = B * L
    # Two fat row tiles: keeps both v7x TensorCores busy; on single-TC
    # v5e/v6e the extra step costs <1 us.  (At production C/hidden sizes the
    # resident fc1/fc2 blocks would need pltpu.CompilerParams(vmem_limit_bytes)
    # and hidden-dim tiling on v7x's 64 MiB VMEM — irrelevant at this config.)
    TILE_R = R // 2 if (R % 16 == 0) else R

    mlp_cost = pl.CostEstimate(
        flops=int(4 * R * C * hidden),
        transcendentals=int(R * hidden),
        bytes_accessed=int(4 * (2 * R * C + 2 * C * hidden + hidden + 5 * C)),
    )

    out = pl.pallas_call(
        _mlp_kernel,
        out_shape=jax.ShapeDtypeStruct((R, C), x.dtype),
        grid=(R // TILE_R,),
        in_specs=[
            pl.BlockSpec((TILE_R, C), lambda i: (i, 0)),   # residual-1 rows
            pl.BlockSpec((1, C), lambda i: (0, 0)),        # norm2 w
            pl.BlockSpec((1, C), lambda i: (0, 0)),        # norm2 b
            pl.BlockSpec((C, hidden), lambda i: (0, 0)),   # fc1 W (resident)
            pl.BlockSpec((1, hidden), lambda i: (0, 0)),   # fc1 b
            pl.BlockSpec((hidden, C), lambda i: (0, 0)),   # fc2 W (resident)
            pl.BlockSpec((1, C), lambda i: (0, 0)),        # fc2 b
        ],
        out_specs=pl.BlockSpec((TILE_R, C), lambda i: (i, 0)),
        compiler_params=pltpu.CompilerParams(
            dimension_semantics=("parallel",)),
        cost_estimate=mlp_cost,
    )(x_res, g2, b2, w1, fb1, w2, fb2)

    return out.reshape(B, L, C)


# ---------------------------------------------------------------------------
# Pure-JAX reference (mirrors the PyTorch forward, drop rates = 0)
# ---------------------------------------------------------------------------
def _layer_norm_ref(x, w, b, eps=1e-5):
    mu = jnp.mean(x, axis=-1, keepdims=True)
    var = jnp.mean((x - mu) ** 2, axis=-1, keepdims=True)
    return (x - mu) / jnp.sqrt(var + eps) * w + b


def swin_block_ref(x, params, input_resolution, num_heads, window_size,
                   shift_size):
    B, L, C = x.shape
    H, W = input_resolution
    ws, ss = window_size, shift_size
    if min(input_resolution) <= ws:
        ss, ws = 0, min(input_resolution)
    N = ws * ws
    nW = (H // ws) * (W // ws)
    nh = num_heads
    hd = C // nh
    scale = hd ** (-0.5)

    shortcut = x
    xn = _layer_norm_ref(x, params["norm1_w"], params["norm1_b"])
    xn = xn.reshape(B, H, W, C)
    if ss > 0:
        xn = jnp.roll(xn, shift=(-ss, -ss), axis=(1, 2))
    xw = window_partition_jax(xn, ws).reshape(-1, N, C)
    B_ = xw.shape[0]

    qkv = xw @ params["qkv_w"].T + params["qkv_b"]
    qkv = qkv.reshape(B_, N, 3, nh, hd).transpose(2, 0, 3, 1, 4)
    q, k, v = qkv[0] * scale, qkv[1], qkv[2]
    attn = q @ jnp.swapaxes(k, -2, -1)                     # (B_, nh, N, N)
    attn = attn + relative_position_bias(params["rpb_table"], ws, nh)[None]
    if ss > 0:
        mask = build_attn_mask(H, W, ws, ss)
        attn = attn.reshape(B_ // nW, nW, nh, N, N) + mask[None, :, None]
        attn = attn.reshape(-1, nh, N, N)
    attn = jax.nn.softmax(attn, axis=-1)
    out = (attn @ v).transpose(0, 2, 1, 3).reshape(B_, N, C)
    out = out @ params["proj_w"].T + params["proj_b"]

    sx = window_reverse_jax(out.reshape(-1, ws, ws, C), ws, H, W)
    if ss > 0:
        sx = jnp.roll(sx, shift=(ss, ss), axis=(1, 2))
    x = shortcut + sx.reshape(B, L, C)

    yn = _layer_norm_ref(x, params["norm2_w"], params["norm2_b"])
    h = jax.nn.gelu(yn @ params["fc1_w"].T + params["fc1_b"], approximate=True)
    return x + (h @ params["fc2_w"].T + params["fc2_b"])


# ---------------------------------------------------------------------------
if __name__ == "__main__":
    # Module config: dim=32, input_resolution=(16,16), num_heads=4,
    # window_size=8, mlp_ratio=4.0 -> hidden=128; batch B=2, L=256.
    C = 32
    Hres, Wres = 16, 16
    num_heads = 4
    window_size = 8
    mlp_ratio = 4.0
    hidden = int(C * mlp_ratio)
    B = 2
    L = Hres * Wres

    keys = jax.random.split(jax.random.PRNGKey(0), 14)
    params = {
        "norm1_w": 1.0 + 0.1 * jax.random.normal(keys[0], (C,), jnp.float32),
        "norm1_b": 0.1 * jax.random.normal(keys[1], (C,), jnp.float32),
        "qkv_w": 0.05 * jax.random.normal(keys[2], (3 * C, C), jnp.float32),
        "qkv_b": 0.05 * jax.random.normal(keys[3], (3 * C,), jnp.float32),
        "rpb_table": 0.05 * jax.random.normal(
            keys[4], ((2 * window_size - 1) ** 2, num_heads), jnp.float32),
        "proj_w": 0.05 * jax.random.normal(keys[5], (C, C), jnp.float32),
        "proj_b": 0.05 * jax.random.normal(keys[6], (C,), jnp.float32),
        "norm2_w": 1.0 + 0.1 * jax.random.normal(keys[7], (C,), jnp.float32),
        "norm2_b": 0.1 * jax.random.normal(keys[8], (C,), jnp.float32),
        "fc1_w": 0.05 * jax.random.normal(keys[9], (hidden, C), jnp.float32),
        "fc1_b": 0.05 * jax.random.normal(keys[10], (hidden,), jnp.float32),
        "fc2_w": 0.05 * jax.random.normal(keys[11], (C, hidden), jnp.float32),
        "fc2_b": 0.05 * jax.random.normal(keys[12], (C,), jnp.float32),
    }
    x = jax.random.normal(keys[13], (B, L, C), jnp.float32)

    fwd = jax.jit(swin_block_forward, static_argnums=(2, 3, 4, 5))

    # Exercise both the W-MSA (shift=0) and SW-MSA (shift=ws//2, masked) paths.
    for shift in (0, window_size // 2):
        out = fwd(x, params, (Hres, Wres), num_heads, window_size, shift)
        out = jax.block_until_ready(out)
        ref = swin_block_ref(x, params, (Hres, Wres), num_heads,
                             window_size, shift)
        assert out.shape == (B, L, C)
        err = float(jnp.max(jnp.abs(out - ref)))
        assert jnp.allclose(out, ref, atol=2e-3, rtol=2e-3), \
            f"mismatch (shift={shift}): max abs err {err}"

    print("KERNEL_OK")
</pallas_src>

<mosaic_0001>
module attributes {stable_mosaic.version = 11 : i64} {
  func.func @_mlp_kernel(%arg0: i32, %arg1: memref<256x32xf32, #tpu.memory_space<vmem>>, %arg2: memref<1x32xf32, #tpu.memory_space<vmem>>, %arg3: memref<1x32xf32, #tpu.memory_space<vmem>>, %arg4: memref<32x128xf32, #tpu.memory_space<vmem>>, %arg5: memref<1x128xf32, #tpu.memory_space<vmem>>, %arg6: memref<128x32xf32, #tpu.memory_space<vmem>>, %arg7: memref<1x32xf32, #tpu.memory_space<vmem>>, %arg8: memref<256x32xf32, #tpu.memory_space<vmem>>) attributes {dimension_semantics = [#tpu.dimension_semantics<parallel>], iteration_bounds = array<i64: 2>, scalar_prefetch = 0 : i64, scratch_operands = 0 : i64, tpu.core_type = #tpu.core_type<tc>, window_params = [{transform_indices = @transform_0, window_bounds = array<i64: 256, 32>}, {pipeline_mode = #tpu.pipeline_mode<synchronous>, transform_indices = @transform_1, window_bounds = array<i64: 1, 32>}, {pipeline_mode = #tpu.pipeline_mode<synchronous>, transform_indices = @transform_2, window_bounds = array<i64: 1, 32>}, {pipeline_mode = #tpu.pipeline_mode<synchronous>, transform_indices = @transform_3, window_bounds = array<i64: 32, 128>}, {pipeline_mode = #tpu.pipeline_mode<synchronous>, transform_indices = @transform_4, window_bounds = array<i64: 1, 128>}, {pipeline_mode = #tpu.pipeline_mode<synchronous>, transform_indices = @transform_5, window_bounds = array<i64: 128, 32>}, {pipeline_mode = #tpu.pipeline_mode<synchronous>, transform_indices = @transform_6, window_bounds = array<i64: 1, 32>}, {transform_indices = @transform_7, window_bounds = array<i64: 256, 32>}]} {
    %c0 = arith.constant 0 : index
    %c0_0 = arith.constant 0 : index
    %0 = vector.load %arg1[%c0, %c0_0] : memref<256x32xf32, #tpu.memory_space<vmem>>, vector<256x32xf32>
    %cst = arith.constant dense<0.000000e+00> : vector<256xf32>
    %1 = vector.multi_reduction <add>, %0, %cst [1] : vector<256x32xf32> to vector<256xf32>
    %2 = vector.shape_cast %1 : vector<256xf32> to vector<256x1xf32>
    %cst_1 = arith.constant 3.200000e+01 : f32
    %3 = vector.broadcast %cst_1 : f32 to vector<256x1xf32>
    %4 = arith.divf %2, %3 : vector<256x1xf32>
    %5 = vector.broadcast %4 : vector<256x1xf32> to vector<256x32xf32>
    %6 = arith.subf %0, %5 : vector<256x32xf32>
    %7 = arith.mulf %6, %6 : vector<256x32xf32>
    %cst_2 = arith.constant dense<0.000000e+00> : vector<256xf32>
    %8 = vector.multi_reduction <add>, %7, %cst_2 [1] : vector<256x32xf32> to vector<256xf32>
    %9 = vector.shape_cast %8 : vector<256xf32> to vector<256x1xf32>
    %cst_3 = arith.constant 3.200000e+01 : f32
    %10 = vector.broadcast %cst_3 : f32 to vector<256x1xf32>
    %11 = arith.divf %9, %10 : vector<256x1xf32>
    %12 = vector.broadcast %4 : vector<256x1xf32> to vector<256x32xf32>
    %13 = arith.subf %0, %12 : vector<256x32xf32>
    %cst_4 = arith.constant 9.99999974E-6 : f32
    %14 = vector.broadcast %cst_4 : f32 to vector<256x1xf32>
    %15 = arith.addf %11, %14 : vector<256x1xf32>
    %16 = math.rsqrt %15 : vector<256x1xf32>
    %17 = vector.broadcast %16 : vector<256x1xf32> to vector<256x32xf32>
    %18 = arith.mulf %13, %17 : vector<256x32xf32>
    %c0_5 = arith.constant 0 : index
    %c0_6 = arith.constant 0 : index
    %19 = vector.load %arg2[%c0_5, %c0_6] : memref<1x32xf32, #tpu.memory_space<vmem>>, vector<1x32xf32>
    %20 = vector.broadcast %19 : vector<1x32xf32> to vector<256x32xf32>
    %21 = arith.mulf %18, %20 : vector<256x32xf32>
    %c0_7 = arith.constant 0 : index
    %c0_8 = arith.constant 0 : index
    %22 = vector.load %arg3[%c0_7, %c0_8] : memref<1x32xf32, #tpu.memory_space<vmem>>, vector<1x32xf32>
    %23 = vector.broadcast %22 : vector<1x32xf32> to vector<256x32xf32>
    %24 = arith.addf %21, %23 : vector<256x32xf32>
    %c0_9 = arith.constant 0 : index
    %c0_10 = arith.constant 0 : index
    %25 = vector.load %arg4[%c0_9, %c0_10] : memref<32x128xf32, #tpu.memory_space<vmem>>, vector<32x128xf32>
    %cst_11 = arith.constant dense<0.000000e+00> : vector<256x128xf32>
    %26 = tpu.matmul %24, %25, %cst_11 {dimension_numbers = #tpu.dot_dimension_numbers<[1], [0], [0], [1], [0, 0, 1, 1], [], []>} : vector<256x32xf32>, vector<32x128xf32>, vector<256x128xf32> -> vector<256x128xf32>
    %c0_12 = arith.constant 0 : index
    %c0_13 = arith.constant 0 : index
    %27 = vector.load %arg5[%c0_12, %c0_13] : memref<1x128xf32, #tpu.memory_space<vmem>>, vector<1x128xf32>
    %28 = vector.broadcast %27 : vector<1x128xf32> to vector<256x128xf32>
    %29 = arith.addf %26, %28 : vector<256x128xf32>
    %30 = arith.mulf %29, %29 : vector<256x128xf32>
    %31 = arith.mulf %29, %30 : vector<256x128xf32>
    %cst_14 = arith.constant 4.471500e-02 : f32
    %32 = vector.broadcast %cst_14 : f32 to vector<256x128xf32>
    %33 = arith.mulf %32, %31 : vector<256x128xf32>
    %34 = arith.addf %29, %33 : vector<256x128xf32>
    %cst_15 = arith.constant 0.797884583 : f32
    %35 = vector.broadcast %cst_15 : f32 to vector<256x128xf32>
    %36 = arith.mulf %35, %34 : vector<256x128xf32>
    %37 = math.tanh %36 : vector<256x128xf32>
    %cst_16 = arith.constant 1.000000e+00 : f32
    %38 = vector.broadcast %cst_16 : f32 to vector<256x128xf32>
    %39 = arith.addf %38, %37 : vector<256x128xf32>
    %cst_17 = arith.constant 5.000000e-01 : f32
    %40 = vector.broadcast %cst_17 : f32 to vector<256x128xf32>
    %41 = arith.mulf %40, %39 : vector<256x128xf32>
    %42 = arith.mulf %29, %41 : vector<256x128xf32>
    %c0_18 = arith.constant 0 : index
    %c0_19 = arith.constant 0 : index
    %43 = vector.load %arg6[%c0_18, %c0_19] : memref<128x32xf32, #tpu.memory_space<vmem>>, vector<128x32xf32>
    %cst_20 = arith.constant dense<0.000000e+00> : vector<256x32xf32>
    %44 = tpu.matmul %42, %43, %cst_20 {dimension_numbers = #tpu.dot_dimension_numbers<[1], [0], [0], [1], [0, 0, 1, 1], [], []>} : vector<256x128xf32>, vector<128x32xf32>, vector<256x32xf32> -> vector<256x32xf32>
    %c0_21 = arith.constant 0 : index
    %c0_22 = arith.constant 0 : index
    %45 = vector.load %arg7[%c0_21, %c0_22] : memref<1x32xf32, #tpu.memory_space<vmem>>, vector<1x32xf32>
    %46 = vector.broadcast %45 : vector<1x32xf32> to vector<256x32xf32>
    %47 = arith.addf %44, %46 : vector<256x32xf32>
    %48 = arith.addf %0, %47 : vector<256x32xf32>
    %c0_23 = arith.constant 0 : index
    %c0_24 = arith.constant 0 : index
    %49 = vector.load %arg8[%c0_23, %c0_24] : memref<256x32xf32, #tpu.memory_space<vmem>>, vector<256x32xf32>
    tpu.vector_store %arg8[%c0_23, %c0_24], %48 {strides = array<i32>} : memref<256x32xf32, #tpu.memory_space<vmem>>, vector<256x32xf32>,
    return
  }
  func.func @transform_0(%arg0: i32) -> (i32, i32) {
    %c0_i32 = arith.constant 0 : i32
    %c0_i32_0 = arith.constant 0 : i32
    return %arg0, %c0_i32 : i32, i32
  }
  func.func @transform_1(%arg0: i32) -> (i32, i32) {
    %c0_i32 = arith.constant 0 : i32
    %c0_i32_0 = arith.constant 0 : i32
    %c0_i32_1 = arith.constant 0 : i32
    return %c0_i32, %c0_i32_0 : i32, i32
  }
  func.func @transform_2(%arg0: i32) -> (i32, i32) {
    %c0_i32 = arith.constant 0 : i32
    %c0_i32_0 = arith.constant 0 : i32
    %c0_i32_1 = arith.constant 0 : i32
    return %c0_i32, %c0_i32_0 : i32, i32
  }
  func.func @transform_3(%arg0: i32) -> (i32, i32) {
    %c0_i32 = arith.constant 0 : i32
    %c0_i32_0 = arith.constant 0 : i32
    %c0_i32_1 = arith.constant 0 : i32
    return %c0_i32, %c0_i32_0 : i32, i32
  }
  func.func @transform_4(%arg0: i32) -> (i32, i32) {
    %c0_i32 = arith.constant 0 : i32
    %c0_i32_0 = arith.constant 0 : i32
    %c0_i32_1 = arith.constant 0 : i32
    return %c0_i32, %c0_i32_0 : i32, i32
  }
  func.func @transform_5(%arg0: i32) -> (i32, i32) {
    %c0_i32 = arith.constant 0 : i32
    %c0_i32_0 = arith.constant 0 : i32
    %c0_i32_1 = arith.constant 0 : i32
    return %c0_i32, %c0_i32_0 : i32, i32
  }
  func.func @transform_6(%arg0: i32) -> (i32, i32) {
    %c0_i32 = arith.constant 0 : i32
    %c0_i32_0 = arith.constant 0 : i32
    %c0_i32_1 = arith.constant 0 : i32
    return %c0_i32, %c0_i32_0 : i32, i32
  }
  func.func @transform_7(%arg0: i32) -> (i32, i32) {
    %c0_i32 = arith.constant 0 : i32
    %c0_i32_0 = arith.constant 0 : i32
    return %arg0, %c0_i32 : i32, i32
  }
}

module attributes {stable_mosaic.version = 11 : i64} {
  func.func @_attn_kernel(%arg0: i32, %arg1: memref<4x64x32xf32, #tpu.memory_space<vmem>>, %arg2: memref<1x32xf32, #tpu.memory_space<vmem>>, %arg3: memref<1x32xf32, #tpu.memory_space<vmem>>, %arg4: memref<32x96xf32, #tpu.memory_space<vmem>>, %arg5: memref<1x96xf32, #tpu.memory_space<vmem>>, %arg6: memref<4x1x64x64xf32, #tpu.memory_space<vmem>>, %arg7: memref<32x32xf32, #tpu.memory_space<vmem>>, %arg8: memref<1x32xf32, #tpu.memory_space<vmem>>, %arg9: memref<4x64x32xf32, #tpu.memory_space<vmem>>) attributes {dimension_semantics = [#tpu.dimension_semantics<parallel>], iteration_bounds = array<i64: 2>, scalar_prefetch = 0 : i64, scratch_operands = 0 : i64, tpu.core_type = #tpu.core_type<tc>, window_params = [{transform_indices = @transform_0, window_bounds = array<i64: 4, 64, 32>}, {pipeline_mode = #tpu.pipeline_mode<synchronous>, transform_indices = @transform_1, window_bounds = array<i64: 1, 32>}, {pipeline_mode = #tpu.pipeline_mode<synchronous>, transform_indices = @transform_2, window_bounds = array<i64: 1, 32>}, {pipeline_mode = #tpu.pipeline_mode<synchronous>, transform_indices = @transform_3, window_bounds = array<i64: 32, 96>}, {pipeline_mode = #tpu.pipeline_mode<synchronous>, transform_indices = @transform_4, window_bounds = array<i64: 1, 96>}, {pipeline_mode = #tpu.pipeline_mode<synchronous>, transform_indices = @transform_5, window_bounds = array<i64: 4, 1, 64, 64>}, {pipeline_mode = #tpu.pipeline_mode<synchronous>, transform_indices = @transform_6, window_bounds = array<i64: 32, 32>}, {pipeline_mode = #tpu.pipeline_mode<synchronous>, transform_indices = @transform_7, window_bounds = array<i64: 1, 32>}, {transform_indices = @transform_8, window_bounds = array<i64: 4, 64, 32>}]} {
    %c0 = arith.constant 0 : index
    %c0_0 = arith.constant 0 : index
    %c0_1 = arith.constant 0 : index
    %0 = vector.load %arg1[%c0, %c0_0, %c0_1] : memref<4x64x32xf32, #tpu.memory_space<vmem>>, vector<4x64x32xf32>
    %1 = vector.shape_cast %0 : vector<4x64x32xf32> to vector<256x32xf32>
    %cst = arith.constant dense<0.000000e+00> : vector<256xf32>
    %2 = vector.multi_reduction <add>, %1, %cst [1] : vector<256x32xf32> to vector<256xf32>
    %3 = vector.shape_cast %2 : vector<256xf32> to vector<256x1xf32>
    %cst_2 = arith.constant 3.200000e+01 : f32
    %4 = vector.broadcast %cst_2 : f32 to vector<256x1xf32>
    %5 = arith.divf %3, %4 : vector<256x1xf32>
    %6 = vector.broadcast %5 : vector<256x1xf32> to vector<256x32xf32>
    %7 = arith.subf %1, %6 : vector<256x32xf32>
    %8 = arith.mulf %7, %7 : vector<256x32xf32>
    %cst_3 = arith.constant dense<0.000000e+00> : vector<256xf32>
    %9 = vector.multi_reduction <add>, %8, %cst_3 [1] : vector<256x32xf32> to vector<256xf32>
    %10 = vector.shape_cast %9 : vector<256xf32> to vector<256x1xf32>
    %cst_4 = arith.constant 3.200000e+01 : f32
    %11 = vector.broadcast %cst_4 : f32 to vector<256x1xf32>
    %12 = arith.divf %10, %11 : vector<256x1xf32>
    %13 = vector.broadcast %5 : vector<256x1xf32> to vector<256x32xf32>
    %14 = arith.subf %1, %13 : vector<256x32xf32>
    %cst_5 = arith.constant 9.99999974E-6 : f32
    %15 = vector.broadcast %cst_5 : f32 to vector<256x1xf32>
    %16 = arith.addf %12, %15 : vector<256x1xf32>
    %17 = math.rsqrt %16 : vector<256x1xf32>
    %18 = vector.broadcast %17 : vector<256x1xf32> to vector<256x32xf32>
    %19 = arith.mulf %14, %18 : vector<256x32xf32>
    %c0_6 = arith.constant 0 : index
    %c0_7 = arith.constant 0 : index
    %20 = vector.load %arg2[%c0_6, %c0_7] : memref<1x32xf32, #tpu.memory_space<vmem>>, vector<1x32xf32>
    %21 = vector.broadcast %20 : vector<1x32xf32> to vector<256x32xf32>
    %22 = arith.mulf %19, %21 : vector<256x32xf32>
    %c0_8 = arith.constant 0 : index
    %c0_9 = arith.constant 0 : index
    %23 = vector.load %arg3[%c0_8, %c0_9] : memref<1x32xf32, #tpu.memory_space<vmem>>, vector<1x32xf32>
    %24 = vector.broadcast %23 : vector<1x32xf32> to vector<256x32xf32>
    %25 = arith.addf %22, %24 : vector<256x32xf32>
    %c0_10 = arith.constant 0 : index
    %c0_11 = arith.constant 0 : index
    %26 = vector.load %arg4[%c0_10, %c0_11] : memref<32x96xf32, #tpu.memory_space<vmem>>, vector<32x96xf32>
    %cst_12 = arith.constant dense<0.000000e+00> : vector<256x96xf32>
    %27 = tpu.matmul %25, %26, %cst_12 {dimension_numbers = #tpu.dot_dimension_numbers<[1], [0], [0], [1], [0, 0, 1, 1], [], []>} : vector<256x32xf32>, vector<32x96xf32>, vector<256x96xf32> -> vector<256x96xf32>
    %c0_13 = arith.constant 0 : index
    %c0_14 = arith.constant 0 : index
    %28 = vector.load %arg5[%c0_13, %c0_14] : memref<1x96xf32, #tpu.memory_space<vmem>>, vector<1x96xf32>
    %29 = vector.broadcast %28 : vector<1x96xf32> to vector<256x96xf32>
    %30 = arith.addf %27, %29 : vector<256x96xf32>
    %31 = vector.extract_strided_slice %30 {offsets = [0, 0], sizes = [256, 8], strides = [1, 1]} : vector<256x96xf32> to vector<256x8xf32>
    %32 = vector.shape_cast %31 : vector<256x8xf32> to vector<4x64x8xf32>
    %33 = vector.extract_strided_slice %30 {offsets = [0, 32], sizes = [256, 8], strides = [1, 1]} : vector<256x96xf32> to vector<256x8xf32>
    %34 = vector.shape_cast %33 : vector<256x8xf32> to vector<4x64x8xf32>
    %35 = vector.extract_strided_slice %30 {offsets = [0, 64], sizes = [256, 8], strides = [1, 1]} : vector<256x96xf32> to vector<256x8xf32>
    %36 = vector.shape_cast %35 : vector<256x8xf32> to vector<4x64x8xf32>
    "tpu.trace_start"() <{level = 10 : i32, message = "wnd,wmd->wnm"}> : () -> ()
    %cst_15 = arith.constant dense<0.000000e+00> : vector<4x64x64xf32>
    %37 = tpu.matmul %32, %34, %cst_15 {dimension_numbers = #tpu.dot_dimension_numbers<[2], [2], [1], [1], [0, 0, 0, 1, 1, 1], [0], [0]>} : vector<4x64x8xf32>, vector<4x64x8xf32>, vector<4x64x64xf32> -> vector<4x64x64xf32>
    "tpu.trace_stop"() : () -> ()
    %c0_16 = arith.constant 0 : index
    %c0_17 = arith.constant 0 : index
    %c0_18 = arith.constant 0 : index
    %c0_19 = arith.constant 0 : index
    %38 = vector.load %arg6[%c0_16, %c0_17, %c0_18, %c0_19] : memref<4x1x64x64xf32, #tpu.memory_space<vmem>>, vector<1x1x64x64xf32>
    %39 = vector.shape_cast %38 : vector<1x1x64x64xf32> to vector<1x64x64xf32>
    %40 = vector.broadcast %39 : vector<1x64x64xf32> to vector<4x64x64xf32>
    %41 = arith.addf %37, %40 : vector<4x64x64xf32>
    %cst_20 = arith.constant dense<0xFF800000> : vector<4x64xf32>
    %42 = vector.multi_reduction <maximumf>, %41, %cst_20 [2] : vector<4x64x64xf32> to vector<4x64xf32>
    %43 = vector.shape_cast %42 : vector<4x64xf32> to vector<4x64x1xf32>
    %44 = vector.broadcast %43 : vector<4x64x1xf32> to vector<4x64x64xf32>
    %45 = arith.subf %41, %44 : vector<4x64x64xf32>
    %46 = math.exp %45 : vector<4x64x64xf32>
    %cst_21 = arith.constant dense<0.000000e+00> : vector<4x64xf32>
    %47 = vector.multi_reduction <add>, %46, %cst_21 [2] : vector<4x64x64xf32> to vector<4x64xf32>
    %48 = vector.shape_cast %47 : vector<4x64xf32> to vector<4x64x1xf32>
    %49 = tpu.reciprocal %48 : vector<4x64x1xf32> -> vector<4x64x1xf32>
    %50 = vector.broadcast %49 : vector<4x64x1xf32> to vector<4x64x64xf32>
    %51 = arith.mulf %46, %50 : vector<4x64x64xf32>
    "tpu.trace_start"() <{level = 10 : i32, message = "wnm,wmd->wnd"}> : () -> ()
    %cst_22 = arith.constant dense<0.000000e+00> : vector<4x64x8xf32>
    %52 = tpu.matmul %51, %36, %cst_22 {dimension_numbers = #tpu.dot_dimension_numbers<[2], [1], [1], [2], [0, 0, 0, 1, 1, 2], [0], [0]>} : vector<4x64x64xf32>, vector<4x64x8xf32>, vector<4x64x8xf32> -> vector<4x64x8xf32>
    "tpu.trace_stop"() : () -> ()
    %53 = vector.extract_strided_slice %30 {offsets = [0, 8], sizes = [256, 8], strides = [1, 1]} : vector<256x96xf32> to vector<256x8xf32>
    %54 = vector.shape_cast %53 : vector<256x8xf32> to vector<4x64x8xf32>
    %55 = vector.extract_strided_slice %30 {offsets = [0, 40], sizes = [256, 8], strides = [1, 1]} : vector<256x96xf32> to vector<256x8xf32>
    %56 = vector.shape_cast %55 : vector<256x8xf32> to vector<4x64x8xf32>
    %57 = vector.extract_strided_slice %30 {offsets = [0, 72], sizes = [256, 8], strides = [1, 1]} : vector<256x96xf32> to vector<256x8xf32>
    %58 = vector.shape_cast %57 : vector<256x8xf32> to vector<4x64x8xf32>
    "tpu.trace_start"() <{level = 10 : i32, message = "wnd,wmd->wnm"}> : () -> ()
    %cst_23 = arith.constant dense<0.000000e+00> : vector<4x64x64xf32>
    %59 = tpu.matmul %54, %56, %cst_23 {dimension_numbers = #tpu.dot_dimension_numbers<[2], [2], [1], [1], [0, 0, 0, 1, 1, 1], [0], [0]>} : vector<4x64x8xf32>, vector<4x64x8xf32>, vector<4x64x64xf32> -> vector<4x64x64xf32>
    "tpu.trace_stop"() : () -> ()
    %c1 = arith.constant 1 : index
    %c0_24 = arith.constant 0 : index
    %c0_25 = arith.constant 0 : index
    %c0_26 = arith.constant 0 : index
    %60 = vector.load %arg6[%c1, %c0_24, %c0_25, %c0_26] : memref<4x1x64x64xf32, #tpu.memory_space<vmem>>, vector<1x1x64x64xf32>
    %61 = vector.shape_cast %60 : vector<1x1x64x64xf32> to vector<1x64x64xf32>
    %62 = vector.broadcast %61 : vector<1x64x64xf32> to vector<4x64x64xf32>
    %63 = arith.addf %59, %62 : vector<4x64x64xf32>
    %cst_27 = arith.constant dense<0xFF800000> : vector<4x64xf32>
    %64 = vector.multi_reduction <maximumf>, %63, %cst_27 [2] : vector<4x64x64xf32> to vector<4x64xf32>
    %65 = vector.shape_cast %64 : vector<4x64xf32> to vector<4x64x1xf32>
    %66 = vector.broadcast %65 : vector<4x64x1xf32> to vector<4x64x64xf32>
    %67 = arith.subf %63, %66 : vector<4x64x64xf32>
    %68 = math.exp %67 : vector<4x64x64xf32>
    %cst_28 = arith.constant dense<0.000000e+00> : vector<4x64xf32>
    %69 = vector.multi_reduction <add>, %68, %cst_28 [2] : vector<4x64x64xf32> to vector<4x64xf32>
    %70 = vector.shape_cast %69 : vector<4x64xf32> to vector<4x64x1xf32>
    %71 = tpu.reciprocal %70 : vector<4x64x1xf32> -> vector<4x64x1xf32>
    %72 = vector.broadcast %71 : vector<4x64x1xf32> to vector<4x64x64xf32>
    %73 = arith.mulf %68, %72 : vector<4x64x64xf32>
    "tpu.trace_start"() <{level = 10 : i32, message = "wnm,wmd->wnd"}> : () -> ()
    %cst_29 = arith.constant dense<0.000000e+00> : vector<4x64x8xf32>
    %74 = tpu.matmul %73, %58, %cst_29 {dimension_numbers = #tpu.dot_dimension_numbers<[2], [1], [1], [2], [0, 0, 0, 1, 1, 2], [0], [0]>} : vector<4x64x64xf32>, vector<4x64x8xf32>, vector<4x64x8xf32> -> vector<4x64x8xf32>
    "tpu.trace_stop"() : () -> ()
    %75 = vector.extract_strided_slice %30 {offsets = [0, 16], sizes = [256, 8], strides = [1, 1]} : vector<256x96xf32> to vector<256x8xf32>
    %76 = vector.shape_cast %75 : vector<256x8xf32> to vector<4x64x8xf32>
    %77 = vector.extract_strided_slice %30 {offsets = [0, 48], sizes = [256, 8], strides = [1, 1]} : vector<256x96xf32> to vector<256x8xf32>
    %78 = vector.shape_cast %77 : vector<256x8xf32> to vector<4x64x8xf32>
    %79 = vector.extract_strided_slice %30 {offsets = [0, 80], sizes = [256, 8], strides = [1, 1]} : vector<256x96xf32> to vector<256x8xf32>
    %80 = vector.shape_cast %79 : vector<256x8xf32> to vector<4x64x8xf32>
    "tpu.trace_start"() <{level = 10 : i32, message = "wnd,wmd->wnm"}> : () -> ()
    %cst_30 = arith.constant dense<0.000000e+00> : vector<4x64x64xf32>
    %81 = tpu.matmul %76, %78, %cst_30 {dimension_numbers = #tpu.dot_dimension_numbers<[2], [2], [1], [1], [0, 0, 0, 1, 1, 1], [0], [0]>} : vector<4x64x8xf32>, vector<4x64x8xf32>, vector<4x64x64xf32> -> vector<4x64x64xf32>
    "tpu.trace_stop"() : () -> ()
    %c2 = arith.constant 2 : index
    %c0_31 = arith.constant 0 : index
    %c0_32 = arith.constant 0 : index
    %c0_33 = arith.constant 0 : index
    %82 = vector.load %arg6[%c2, %c0_31, %c0_32, %c0_33] : memref<4x1x64x64xf32, #tpu.memory_space<vmem>>, vector<1x1x64x64xf32>
    %83 = vector.shape_cast %82 : vector<1x1x64x64xf32> to vector<1x64x64xf32>
    %84 = vector.broadcast %83 : vector<1x64x64xf32> to vector<4x64x64xf32>
    %85 = arith.addf %81, %84 : vector<4x64x64xf32>
    %cst_34 = arith.constant dense<0xFF800000> : vector<4x64xf32>
    %86 = vector.multi_reduction <maximumf>, %85, %cst_34 [2] : vector<4x64x64xf32> to vector<4x64xf32>
    %87 = vector.shape_cast %86 : vector<4x64xf32> to vector<4x64x1xf32>
    %88 = vector.broadcast %87 : vector<4x64x1xf32> to vector<4x64x64xf32>
    %89 = arith.subf %85, %88 : vector<4x64x64xf32>
    %90 = math.exp %89 : vector<4x64x64xf32>
    %cst_35 = arith.constant dense<0.000000e+00> : vector<4x64xf32>
    %91 = vector.multi_reduction <add>, %90, %cst_35 [2] : vector<4x64x64xf32> to vector<4x64xf32>
    %92 = vector.shape_cast %91 : vector<4x64xf32> to vector<4x64x1xf32>
    %93 = tpu.reciprocal %92 : vector<4x64x1xf32> -> vector<4x64x1xf32>
    %94 = vector.broadcast %93 : vector<4x64x1xf32> to vector<4x64x64xf32>
    %95 = arith.mulf %90, %94 : vector<4x64x64xf32>
    "tpu.trace_start"() <{level = 10 : i32, message = "wnm,wmd->wnd"}> : () -> ()
    %cst_36 = arith.constant dense<0.000000e+00> : vector<4x64x8xf32>
    %96 = tpu.matmul %95, %80, %cst_36 {dimension_numbers = #tpu.dot_dimension_numbers<[2], [1], [1], [2], [0, 0, 0, 1, 1, 2], [0], [0]>} : vector<4x64x64xf32>, vector<4x64x8xf32>, vector<4x64x8xf32> -> vector<4x64x8xf32>
    "tpu.trace_stop"() : () -> ()
    %97 = vector.extract_strided_slice %30 {offsets = [0, 24], sizes = [256, 8], strides = [1, 1]} : vector<256x96xf32> to vector<256x8xf32>
    %98 = vector.shape_cast %97 : vector<256x8xf32> to vector<4x64x8xf32>
    %99 = vector.extract_strided_slice %30 {offsets = [0, 56], sizes = [256, 8], strides = [1, 1]} : vector<256x96xf32> to vector<256x8xf32>
    %100 = vector.shape_cast %99 : vector<256x8xf32> to vector<4x64x8xf32>
    %101 = vector.extract_strided_slice %30 {offsets = [0, 88], sizes = [256, 8], strides = [1, 1]} : vector<256x96xf32> to vector<256x8xf32>
    %102 = vector.shape_cast %101 : vector<256x8xf32> to vector<4x64x8xf32>
    "tpu.trace_start"() <{level = 10 : i32, message = "wnd,wmd->wnm"}> : () -> ()
    %cst_37 = arith.constant dense<0.000000e+00> : vector<4x64x64xf32>
    %103 = tpu.matmul %98, %100, %cst_37 {dimension_numbers = #tpu.dot_dimension_numbers<[2], [2], [1], [1], [0, 0, 0, 1, 1, 1], [0], [0]>} : vector<4x64x8xf32>, vector<4x64x8xf32>, vector<4x64x64xf32> -> vector<4x64x64xf32>
    "tpu.trace_stop"() : () -> ()
    %c3 = arith.constant 3 : index
    %c0_38 = arith.constant 0 : index
    %c0_39 = arith.constant 0 : index
    %c0_40 = arith.constant 0 : index
    %104 = vector.load %arg6[%c3, %c0_38, %c0_39, %c0_40] : memref<4x1x64x64xf32, #tpu.memory_space<vmem>>, vector<1x1x64x64xf32>
    %105 = vector.shape_cast %104 : vector<1x1x64x64xf32> to vector<1x64x64xf32>
    %106 = vector.broadcast %105 : vector<1x64x64xf32> to vector<4x64x64xf32>
    %107 = arith.addf %103, %106 : vector<4x64x64xf32>
    %cst_41 = arith.constant dense<0xFF800000> : vector<4x64xf32>
    %108 = vector.multi_reduction <maximumf>, %107, %cst_41 [2] : vector<4x64x64xf32> to vector<4x64xf32>
    %109 = vector.shape_cast %108 : vector<4x64xf32> to vector<4x64x1xf32>
    %110 = vector.broadcast %109 : vector<4x64x1xf32> to vector<4x64x64xf32>
    %111 = arith.subf %107, %110 : vector<4x64x64xf32>
    %112 = math.exp %111 : vector<4x64x64xf32>
    %cst_42 = arith.constant dense<0.000000e+00> : vector<4x64xf32>
    %113 = vector.multi_reduction <add>, %112, %cst_42 [2] : vector<4x64x64xf32> to vector<4x64xf32>
    %114 = vector.shape_cast %113 : vector<4x64xf32> to vector<4x64x1xf32>
    %115 = tpu.reciprocal %114 : vector<4x64x1xf32> -> vector<4x64x1xf32>
    %116 = vector.broadcast %115 : vector<4x64x1xf32> to vector<4x64x64xf32>
    %117 = arith.mulf %112, %116 : vector<4x64x64xf32>
    "tpu.trace_start"() <{level = 10 : i32, message = "wnm,wmd->wnd"}> : () -> ()
    %cst_43 = arith.constant dense<0.000000e+00> : vector<4x64x8xf32>
    %118 = tpu.matmul %117, %102, %cst_43 {dimension_numbers = #tpu.dot_dimension_numbers<[2], [1], [1], [2], [0, 0, 0, 1, 1, 2], [0], [0]>} : vector<4x64x64xf32>, vector<4x64x8xf32>, vector<4x64x8xf32> -> vector<4x64x8xf32>
    "tpu.trace_stop"() : () -> ()
    %119 = tpu.concatenate %52, %74, %96, %118 in 2 : vector<4x64x8xf32>, vector<4x64x8xf32>, vector<4x64x8xf32>, vector<4x64x8xf32> -> vector<4x64x32xf32>
    %120 = vector.shape_cast %119 : vector<4x64x32xf32> to vector<256x32xf32>
    %c0_44 = arith.constant 0 : index
    %c0_45 = arith.constant 0 : index
    %121 = vector.load %arg7[%c0_44, %c0_45] : memref<32x32xf32, #tpu.memory_space<vmem>>, vector<32x32xf32>
    %cst_46 = arith.constant dense<0.000000e+00> : vector<256x32xf32>
    %122 = tpu.matmul %120, %121, %cst_46 {dimension_numbers = #tpu.dot_dimension_numbers<[1], [0], [0], [1], [0, 0, 1, 1], [], []>} : vector<256x32xf32>, vector<32x32xf32>, vector<256x32xf32> -> vector<256x32xf32>
    %c0_47 = arith.constant 0 : index
    %c0_48 = arith.constant 0 : index
    %123 = vector.load %arg8[%c0_47, %c0_48] : memref<1x32xf32, #tpu.memory_space<vmem>>, vector<1x32xf32>
    %124 = vector.broadcast %123 : vector<1x32xf32> to vector<256x32xf32>
    %125 = arith.addf %122, %124 : vector<256x32xf32>
    %126 = arith.addf %125, %1 : vector<256x32xf32>
    %127 = vector.shape_cast %126 : vector<256x32xf32> to vector<4x64x32xf32>
    %c0_49 = arith.constant 0 : index
    %c0_50 = arith.constant 0 : index
    %c0_51 = arith.constant 0 : index
    %128 = vector.load %arg9[%c0_49, %c0_50, %c0_51] : memref<4x64x32xf32, #tpu.memory_space<vmem>>, vector<4x64x32xf32>
    tpu.vector_store %arg9[%c0_49, %c0_50, %c0_51], %127 {strides = array<i32>} : memref<4x64x32xf32, #tpu.memory_space<vmem>>, vector<4x64x32xf32>,
    return
  }
  func.func @transform_0(%arg0: i32) -> (i32, i32, i32) {
    %c0_i32 = arith.constant 0 : i32
    %c0_i32_0 = arith.constant 0 : i32
    %c0_i32_1 = arith.constant 0 : i32
    return %arg0, %c0_i32, %c0_i32_0 : i32, i32, i32
  }
  func.func @transform_1(%arg0: i32) -> (i32, i32) {
    %c0_i32 = arith.constant 0 : i32
    %c0_i32_0 = arith.constant 0 : i32
    %c0_i32_1 = arith.constant 0 : i32
    return %c0_i32, %c0_i32_0 : i32, i32
  }
  func.func @transform_2(%arg0: i32) -> (i32, i32) {
    %c0_i32 = arith.constant 0 : i32
    %c0_i32_0 = arith.constant 0 : i32
    %c0_i32_1 = arith.constant 0 : i32
    return %c0_i32, %c0_i32_0 : i32, i32
  }
  func.func @transform_3(%arg0: i32) -> (i32, i32) {
    %c0_i32 = arith.constant 0 : i32
    %c0_i32_0 = arith.constant 0 : i32
    %c0_i32_1 = arith.constant 0 : i32
    return %c0_i32, %c0_i32_0 : i32, i32
  }
  func.func @transform_4(%arg0: i32) -> (i32, i32) {
    %c0_i32 = arith.constant 0 : i32
    %c0_i32_0 = arith.constant 0 : i32
    %c0_i32_1 = arith.constant 0 : i32
    return %c0_i32, %c0_i32_0 : i32, i32
  }
  func.func @transform_5(%arg0: i32) -> (i32, i32, i32, i32) {
    %c0_i32 = arith.constant 0 : i32
    %c0_i32_0 = arith.constant 0 : i32
    %c0_i32_1 = arith.constant 0 : i32
    %c0_i32_2 = arith.constant 0 : i32
    %c0_i32_3 = arith.constant 0 : i32
    return %c0_i32, %c0_i32_0, %c0_i32_1, %c0_i32_2 : i32, i32, i32, i32
  }
  func.func @transform_6(%arg0: i32) -> (i32, i32) {
    %c0_i32 = arith.constant 0 : i32
    %c0_i32_0 = arith.constant 0 : i32
    %c0_i32_1 = arith.constant 0 : i32
    return %c0_i32, %c0_i32_0 : i32, i32
  }
  func.func @transform_7(%arg0: i32) -> (i32, i32) {
    %c0_i32 = arith.constant 0 : i32
    %c0_i32_0 = arith.constant 0 : i32
    %c0_i32_1 = arith.constant 0 : i32
    return %c0_i32, %c0_i32_0 : i32, i32
  }
  func.func @transform_8(%arg0: i32) -> (i32, i32, i32) {
    %c0_i32 = arith.constant 0 : i32
    %c0_i32_0 = arith.constant 0 : i32
    %c0_i32_1 = arith.constant 0 : i32
    return %arg0, %c0_i32, %c0_i32_0 : i32, i32, i32
  }
}

</mosaic_0001>

<llo_original>
// kernel: swin_block_forward.3
$region0: #{swin_block_forward.3}
  #allocation0 [shape = 'u32[]', space=smem, size = 0x4, offset = 0x4, fixed_abs, tag = 'smem constant byte address 0x4 - core index']
  #allocation1 [shape = 'u32[72,128]{1,0:T(1,128)}', space=vmem, size = 0x9000, scoped, tag = 'internal scratch']
  %s0 = inlined_call_operand.vmem [shape: f32[512,32], index: 0, kind: input, shape index: {}]
  %s1 = inlined_call_operand.vmem [shape: f32[1,32], index: 1, kind: input, shape index: {}]
  %s2 = inlined_call_operand.vmem [shape: f32[1,32], index: 2, kind: input, shape index: {}]
  %s3 = inlined_call_operand.vmem [shape: f32[32,128], index: 3, kind: input, shape index: {}]
  %s4 = inlined_call_operand.vmem [shape: f32[1,128], index: 4, kind: input, shape index: {}]
  %s5 = inlined_call_operand.vmem [shape: f32[128,32], index: 5, kind: input, shape index: {}]
  %s6 = inlined_call_operand.vmem [shape: f32[1,32], index: 6, kind: input, shape index: {}]
  %s7 = inlined_call_operand.vmem [shape: f32[512,32], index: 7, kind: output, shape index: {}]
  %s8 = sld [smem:[#allocation0]]
  $region61: #{swin_block_forward.3} parent=0
    _
  %s10 = ssub.s32 1, %s8
  %s11 = scalar_select 0, %s10, %s8
  loop: start=0, step=1, limit=4
  $region2: #{swin_block_forward.3} parent=0 // loop_pre_header
    _
  $region3: #{swin_block_forward.3} parent=0 // loop_header
    %s13 = sphi 0, %s17
    %p14 = scmp.ge.s32.totalorder %s13, 4
    %s23 = sphi 0, %s25
    %s26 = sphi 0, %s23
    %s27 = sphi 0, %s26
    %s43 = sphi 0, %s27
    %s47 = sphi 0, %s47
    %s49 = sphi 0, %s47
    %s50 = sphi 0, %s49
    %s64 = sphi 0, %s50
    %s68 = sphi 0, %s68
    %s70 = sphi 0, %s68
    %s71 = sphi 0, %s70
    %s85 = sphi 0, %s71
    %s89 = sphi 0, %s89
    %s91 = sphi 0, %s89
    %s92 = sphi 0, %s91
    %s106 = sphi 0, %s92
    %s110 = sphi 0, %s110
    %s112 = sphi 0, %s110
    %s113 = sphi 0, %s112
    %s127 = sphi 0, %s113
    %s131 = sphi 0, %s131
    %s133 = sphi 0, %s131
    %s134 = sphi 0, %s133
    %s148 = sphi 0, %s134
    %s152 = sphi 0, %s152
    %s154 = sphi 0, %s152
    %s155 = sphi 0, %s154
    %s169 = sphi 0, %s155
    %s175 = sphi 0, %s177
    %s178 = sphi 0, %s175
    %s179 = sphi 0, %s178
    %s195 = sphi 0, %s179
  $region4: #{swin_block_forward.3} parent=0 // loop_header_branch
    %16 = sbr.rel (%p14) target = $region8
  $region5: #{swin_block_forward.3} parent=0 // loop_body
    %s18 = ssub.s32 %s13, 1
    %s19 = ssub.s32 %s13, 2
    %s20 = sadd.s32 %s13, 1
    %s21 = ssub.s32 %s13, %s20
    %p22 = scmp.eq.s32.totalorder %s21, 0
    %s24 = sadd.s32 %s23, 1
    %s25 = scalar_select %p22, %s23, %s24
    %p28 = pneg %p22
    %p29 = scmp.eq.s32.totalorder %s13, 1
    %p30 = por %p28, %p29
    %p31 = scmp.ne.s32.totalorder %s23, %s26
    %p32 = scmp.eq.s32.totalorder %s13, 0
    %p33 = por %p31, %p32
    %p34 = scmp.ne.s32.totalorder %s23, %s26
    %p35 = scmp.eq.s32.totalorder %s18, 1
    %p36 = por %p34, %p35
    %p37 = scmp.ne.s32.totalorder %s26, %s27
    %p38 = scmp.eq.s32.totalorder %s18, 0
    %p39 = por %p37, %p38
    %p40 = scmp.ne.s32.totalorder %s26, %s27
    %p41 = scmp.eq.s32.totalorder %s19, 1
    %p42 = por %p40, %p41
    %p44 = scmp.ne.s32.totalorder %s27, %s43
    %p45 = scmp.eq.s32.totalorder %s19, 0
    %p46 = por %p44, %p45
    %s48 = sadd.s32 %s47, 1
    %p51 = scmp.eq.s32.totalorder %s13, 1
    %p52 = scmp.ne.s32.totalorder %s47, %s49
    %p53 = scmp.eq.s32.totalorder %s13, 0
    %p54 = por %p52, %p53
    %p55 = scmp.ne.s32.totalorder %s47, %s49
    %p56 = scmp.eq.s32.totalorder %s18, 1
    %p57 = por %p55, %p56
    %p58 = scmp.ne.s32.totalorder %s49, %s50
    %p59 = scmp.eq.s32.totalorder %s18, 0
    %p60 = por %p58, %p59
    %p61 = scmp.ne.s32.totalorder %s49, %s50
    %p62 = scmp.eq.s32.totalorder %s19, 1
    %p63 = por %p61, %p62
    %p65 = scmp.ne.s32.totalorder %s50, %s64
    %p66 = scmp.eq.s32.totalorder %s19, 0
    %p67 = por %p65, %p66
    %s69 = sadd.s32 %s68, 1
    %p72 = scmp.eq.s32.totalorder %s13, 1
    %p73 = scmp.ne.s32.totalorder %s68, %s70
    %p74 = scmp.eq.s32.totalorder %s13, 0
    %p75 = por %p73, %p74
    %p76 = scmp.ne.s32.totalorder %s68, %s70
    %p77 = scmp.eq.s32.totalorder %s18, 1
    %p78 = por %p76, %p77
    %p79 = scmp.ne.s32.totalorder %s70, %s71
    %p80 = scmp.eq.s32.totalorder %s18, 0
    %p81 = por %p79, %p80
    %p82 = scmp.ne.s32.totalorder %s70, %s71
    %p83 = scmp.eq.s32.totalorder %s19, 1
    %p84 = por %p82, %p83
    %p86 = scmp.ne.s32.totalorder %s71, %s85
    %p87 = scmp.eq.s32.totalorder %s19, 0
    %p88 = por %p86, %p87
    %s90 = sadd.s32 %s89, 1
    %p93 = scmp.eq.s32.totalorder %s13, 1
    %p94 = scmp.ne.s32.totalorder %s89, %s91
    %p95 = scmp.eq.s32.totalorder %s13, 0
    %p96 = por %p94, %p95
    %p97 = scmp.ne.s32.totalorder %s89, %s91
    %p98 = scmp.eq.s32.totalorder %s18, 1
    %p99 = por %p97, %p98
    %p100 = scmp.ne.s32.totalorder %s91, %s92
    %p101 = scmp.eq.s32.totalorder %s18, 0
    %p102 = por %p100, %p101
    %p103 = scmp.ne.s32.totalorder %s91, %s92
    %p104 = scmp.eq.s32.totalorder %s19, 1
    %p105 = por %p103, %p104
    %p107 = scmp.ne.s32.totalorder %s92, %s106
    %p108 = scmp.eq.s32.totalorder %s19, 0
    %p109 = por %p107, %p108
    %s111 = sadd.s32 %s110, 1
    %p114 = scmp.eq.s32.totalorder %s13, 1
    %p115 = scmp.ne.s32.totalorder %s110, %s112
    %p116 = scmp.eq.s32.totalorder %s13, 0
    %p117 = por %p115, %p116
    %p118 = scmp.ne.s32.totalorder %s110, %s112
    %p119 = scmp.eq.s32.totalorder %s18, 1
    %p120 = por %p118, %p119
    %p121 = scmp.ne.s32.totalorder %s112, %s113
    %p122 = scmp.eq.s32.totalorder %s18, 0
    %p123 = por %p121, %p122
    %p124 = scmp.ne.s32.totalorder %s112, %s113
    %p125 = scmp.eq.s32.totalorder %s19, 1
    %p126 = por %p124, %p125
    %p128 = scmp.ne.s32.totalorder %s113, %s127
    %p129 = scmp.eq.s32.totalorder %s19, 0
    %p130 = por %p128, %p129
    %s132 = sadd.s32 %s131, 1
    %p135 = scmp.eq.s32.totalorder %s13, 1
    %p136 = scmp.ne.s32.totalorder %s131, %s133
    %p137 = scmp.eq.s32.totalorder %s13, 0
    %p138 = por %p136, %p137
    %p139 = scmp.ne.s32.totalorder %s131, %s133
    %p140 = scmp.eq.s32.totalorder %s18, 1
    %p141 = por %p139, %p140
    %p142 = scmp.ne.s32.totalorder %s133, %s134
    %p143 = scmp.eq.s32.totalorder %s18, 0
    %p144 = por %p142, %p143
    %p145 = scmp.ne.s32.totalorder %s133, %s134
    %p146 = scmp.eq.s32.totalorder %s19, 1
    %p147 = por %p145, %p146
    %p149 = scmp.ne.s32.totalorder %s134, %s148
    %p150 = scmp.eq.s32.totalorder %s19, 0
    %p151 = por %p149, %p150
    %s153 = sadd.s32 %s152, 1
    %p156 = scmp.eq.s32.totalorder %s13, 1
    %p157 = scmp.ne.s32.totalorder %s152, %s154
    %p158 = scmp.eq.s32.totalorder %s13, 0
    %p159 = por %p157, %p158
    %p160 = scmp.ne.s32.totalorder %s152, %s154
    %p161 = scmp.eq.s32.totalorder %s18, 1
    %p162 = por %p160, %p161
    %p163 = scmp.ne.s32.totalorder %s154, %s155
    %p164 = scmp.eq.s32.totalorder %s18, 0
    %p165 = por %p163, %p164
    %p166 = scmp.ne.s32.totalorder %s154, %s155
    %p167 = scmp.eq.s32.totalorder %s19, 1
    %p168 = por %p166, %p167
    %p170 = scmp.ne.s32.totalorder %s155, %s169
    %p171 = scmp.eq.s32.totalorder %s19, 0
    %p172 = por %p170, %p171
    %s173 = ssub.s32 %s13, %s20
    %p174 = scmp.eq.s32.totalorder %s173, 0
    %s176 = sadd.s32 %s175, 1
    %s177 = scalar_select %p174, %s175, %s176
    %p180 = pneg %p174
    %p181 = scmp.eq.s32.totalorder %s13, 1
    %p182 = por %p180, %p181
    %p183 = scmp.ne.s32.totalorder %s175, %s178
    %p184 = scmp.eq.s32.totalorder %s13, 0
    %p185 = por %p183, %p184
    %p186 = scmp.ne.s32.totalorder %s175, %s178
    %p187 = scmp.eq.s32.totalorder %s18, 1
    %p188 = por %p186, %p187
    %p189 = scmp.ne.s32.totalorder %s178, %s179
    %p190 = scmp.eq.s32.totalorder %s18, 0
    %p191 = por %p189, %p190
    %p192 = scmp.ne.s32.totalorder %s178, %s179
    %p193 = scmp.eq.s32.totalorder %s19, 1
    %p194 = por %p192, %p193
    %p196 = scmp.ne.s32.totalorder %s179, %s195
    %p197 = scmp.eq.s32.totalorder %s19, 0
    %p198 = por %p196, %p197
    %p199 = scmp.le.s32.totalorder 1, %s13
    %p200 = scmp.lt.s32.totalorder %s13, 3
    %p201 = pnand %p199, %p200
    %p202 = pneg %p201
    // Predicated region
    $region9: #{swin_block_forward.3} parent=5 // pred_check
      _
    $region10: #{swin_block_forward.3} parent=5 // pred_check_branch
      %204 = sbr.rel (%p201) target = $region12
    $region11: #{swin_block_forward.3} parent=5 // pred_region
      %s205 = ssub.s32 %s13, 1
      // Predicated region
      $region13: #{swin_block_forward.3} parent=11 // pred_check
        %p206 = pneg %p60
      $region14: #{swin_block_forward.3} parent=11 // pred_check_branch
        %208 = sbr.rel (%p206) target = $region16
      $region15: #{swin_block_forward.3} parent=11 // pred_region
        _
      $region16: #{swin_block_forward.3} parent=11 // pred_fallthru
        _
      // Predicated region
      $region17: #{swin_block_forward.3} parent=11 // pred_check
        %p209 = pneg %p81
      $region18: #{swin_block_forward.3} parent=11 // pred_check_branch
        %211 = sbr.rel (%p209) target = $region20
      $region19: #{swin_block_forward.3} parent=11 // pred_region
        _
      $region20: #{swin_block_forward.3} parent=11 // pred_fallthru
        _
      // Predicated region
      $region21: #{swin_block_forward.3} parent=11 // pred_check
        %p212 = pneg %p102
      $region22: #{swin_block_forward.3} parent=11 // pred_check_branch
        %214 = sbr.rel (%p212) target = $region24
      $region23: #{swin_block_forward.3} parent=11 // pred_region
        _
      $region24: #{swin_block_forward.3} parent=11 // pred_fallthru
        _
      // Predicated region
      $region25: #{swin_block_forward.3} parent=11 // pred_check
        %p215 = pneg %p123
      $region26: #{swin_block_forward.3} parent=11 // pred_check_branch
        %217 = sbr.rel (%p215) target = $region28
      $region27: #{swin_block_forward.3} parent=11 // pred_region
        _
      $region28: #{swin_block_forward.3} parent=11 // pred_fallthru
        _
      // Predicated region
      $region29: #{swin_block_forward.3} parent=11 // pred_check
        %p218 = pneg %p144
      $region30: #{swin_block_forward.3} parent=11 // pred_check_branch
        %220 = sbr.rel (%p218) target = $region32
      $region31: #{swin_block_forward.3} parent=11 // pred_region
        _
      $region32: #{swin_block_forward.3} parent=11 // pred_fallthru
        _
      // Predicated region
      $region33: #{swin_block_forward.3} parent=11 // pred_check
        %p221 = pneg %p165
      $region34: #{swin_block_forward.3} parent=11 // pred_check_branch
        %223 = sbr.rel (%p221) target = $region36
      $region35: #{swin_block_forward.3} parent=11 // pred_region
        _
      $region36: #{swin_block_forward.3} parent=11 // pred_fallthru
        _
    $region12: #{swin_block_forward.3} parent=5 // pred_fallthru
      _
    %p224 = scmp.lt.s32.totalorder %s13, 2
    // Predicated region
    $region37: #{swin_block_forward.3} parent=5 // pred_check
      %p225 = pneg %p224
    $region38: #{swin_block_forward.3} parent=5 // pred_check_branch
      %227 = sbr.rel (%p225) target = $region40
    $region39: #{swin_block_forward.3} parent=5 // pred_region
      // Predicated region
      $region41: #{swin_block_forward.3} parent=39 // pred_check
        %p228 = pneg %p33
      $region42: #{swin_block_forward.3} parent=39 // pred_check_branch
        %230 = sbr.rel (%p228) target = $region44
      $region43: #{swin_block_forward.3} parent=39 // pred_region
        %s231 = smul.u32 32, %s13
        %p232 = scmp.lt.s32.totalorder %s231, 63
        %s233 = scalar_select %p232, %s231, 63
        %s234 = smul.addr %s233, 8
        %s235 = scalar_lea.vmem %s0, %s234
        %s236 = smul.u32 32, %s13
      $region44: #{swin_block_forward.3} parent=39 // pred_fallthru
        _
    $region40: #{swin_block_forward.3} parent=5 // pred_fallthru
      _
    %p237 = scmp.le.s32.totalorder 1, %s13
    %p238 = scmp.lt.s32.totalorder %s13, 3
    %p239 = pnand %p237, %p238
    %p240 = pneg %p239
    // Predicated region
    $region45: #{swin_block_forward.3} parent=5 // pred_check
      _
    $region46: #{swin_block_forward.3} parent=5 // pred_check_branch
      %242 = sbr.rel (%p239) target = $region48
    $region47: #{swin_block_forward.3} parent=5 // pred_region
      %s243 = ssub.s32 %s13, 1
      %s244 = smul.u32 32, %s18
      %p245 = scmp.lt.s32.totalorder %s244, 63
      %s246 = scalar_select %p245, %s244, 63
      %s247 = smul.addr %s246, 8
      %s248 = scalar_lea.vmem %s0, %s247
      %p249 = pneg %p39
      %p250 = pneg %p36
      %p251 = pneg %p60
      %p252 = pneg %p57
      %p253 = pneg %p81
      %p254 = pneg %p78
      %p255 = pneg %p102
      %p256 = pneg %p99
      %p257 = pneg %p123
      %p258 = pneg %p120
      %p259 = pneg %p144
      %p260 = pneg %p141
      %p261 = pneg %p165
      %p262 = pneg %p162
      %p263 = pneg %p191
      %p264 = pneg %p188
      %s265 = smul.u32 32, %s18
      %p266 = scmp.lt.s32.totalorder %s265, 63
      %s267 = scalar_select %p266, %s265, 63
      %s268 = smul.addr %s267, 8
      %s269 = scalar_lea.vmem %s7, %s268
      %s270 = smul.u32 32, %s18
      %p271 = scmp.lt.s32.totalorder %s270, 63
      %s272 = scalar_select %p271, %s270, 63
      %s273 = smul.addr %s272, 8
      %s274 = scalar_lea.vmem %s0, %s273
      %s275 = smul.u32 32, %s18
      %s276 = smul.u32 32, %s18
      %p277 = scmp.lt.s32.totalorder %s276, 63
      %s278 = scalar_select %p277, %s276, 63
      %s279 = smul.addr %s278, 8
      %s280 = scalar_lea.vmem %s7, %s279
      %s281 = smul.u32 32, %s18
      %v282 = vld [vmem:[%s274] sm:$0xff]
      %v283 = vld [vmem:[%s274 + $0x8] sm:$0xff]
      %v284 = vld [vmem:[%s274 + $0x10] sm:$0xff]
      %v285 = vld [vmem:[%s274 + $0x18] sm:$0xff]
      %v286 = vld [vmem:[%s274 + $0x20] sm:$0xff]
      %v287 = vld [vmem:[%s274 + $0x28] sm:$0xff]
      %v288 = vld [vmem:[%s274 + $0x30] sm:$0xff]
      %v289 = vld [vmem:[%s274 + $0x38] sm:$0xff]
      %v290 = vld [vmem:[%s274 + $0x40] sm:$0xff]
      %v291 = vld [vmem:[%s274 + $0x48] sm:$0xff]
      %v292 = vld [vmem:[%s274 + $0x50] sm:$0xff]
      %v293 = vld [vmem:[%s274 + $0x58] sm:$0xff]
      %v294 = vld [vmem:[%s274 + $0x60] sm:$0xff]
      %v295 = vld [vmem:[%s274 + $0x68] sm:$0xff]
      %v296 = vld [vmem:[%s274 + $0x70] sm:$0xff]
      %v297 = vld [vmem:[%s274 + $0x78] sm:$0xff]
      %v298 = vld [vmem:[%s274 + $0x80] sm:$0xff]
      %v299 = vld [vmem:[%s274 + $0x88] sm:$0xff]
      %v300 = vld [vmem:[%s274 + $0x90] sm:$0xff]
      %v301 = vld [vmem:[%s274 + $0x98] sm:$0xff]
      %v302 = vld [vmem:[%s274 + $0xa0] sm:$0xff]
      %v303 = vld [vmem:[%s274 + $0xa8] sm:$0xff]
      %v304 = vld [vmem:[%s274 + $0xb0] sm:$0xff]
      %v305 = vld [vmem:[%s274 + $0xb8] sm:$0xff]
      %v306 = vld [vmem:[%s274 + $0xc0] sm:$0xff]
      %v307 = vld [vmem:[%s274 + $0xc8] sm:$0xff]
      %v308 = vld [vmem:[%s274 + $0xd0] sm:$0xff]
      %v309 = vld [vmem:[%s274 + $0xd8] sm:$0xff]
      %v310 = vld [vmem:[%s274 + $0xe0] sm:$0xff]
      %v311 = vld [vmem:[%s274 + $0xe8] sm:$0xff]
      %v312 = vld [vmem:[%s274 + $0xf0] sm:$0xff]
      %v313 = vld [vmem:[%s274 + $0xf8] sm:$0xff]
      %vm314 = vcmask 261120
      %v315 = vsel %vm314, %v282, 0.0
      %316 = vadd.xlane.f32.xlu0 %v315
      %v317 = vpop.xlane.xlu0 %316
      %v318 = vsel %vm314, %v283, 0.0
      %319 = vadd.xlane.f32.xlu0 %v318
      %v320 = vpop.xlane.xlu0 %319
      %v321 = vsel %vm314, %v284, 0.0
      %322 = vadd.xlane.f32.xlu0 %v321
      %v323 = vpop.xlane.xlu0 %322
      %v324 = vsel %vm314, %v285, 0.0
      %325 = vadd.xlane.f32.xlu0 %v324
      %v326 = vpop.xlane.xlu0 %325
      %v327 = vsel %vm314, %v286, 0.0
      %328 = vadd.xlane.f32.xlu0 %v327
      %v329 = vpop.xlane.xlu0 %328
      %v330 = vsel %vm314, %v287, 0.0
      %331 = vadd.xlane.f32.xlu0 %v330
      %v332 = vpop.xlane.xlu0 %331
      %v333 = vsel %vm314, %v288, 0.0
      %334 = vadd.xlane.f32.xlu0 %v333
      %v335 = vpop.xlane.xlu0 %334
      %v336 = vsel %vm314, %v289, 0.0
      %337 = vadd.xlane.f32.xlu0 %v336
      %v338 = vpop.xlane.xlu0 %337
      %v339 = vsel %vm314, %v290, 0.0
      %340 = vadd.xlane.f32.xlu0 %v339
      %v341 = vpop.xlane.xlu0 %340
      %v342 = vsel %vm314, %v291, 0.0
      %343 = vadd.xlane.f32.xlu0 %v342
      %v344 = vpop.xlane.xlu0 %343
      %v345 = vsel %vm314, %v292, 0.0
      %346 = vadd.xlane.f32.xlu0 %v345
      %v347 = vpop.xlane.xlu0 %346
      %v348 = vsel %vm314, %v293, 0.0
      %349 = vadd.xlane.f32.xlu0 %v348
      %v350 = vpop.xlane.xlu0 %349
      %v351 = vsel %vm314, %v294, 0.0
      %352 = vadd.xlane.f32.xlu0 %v351
      %v353 = vpop.xlane.xlu0 %352
      %v354 = vsel %vm314, %v295, 0.0
      %355 = vadd.xlane.f32.xlu0 %v354
      %v356 = vpop.xlane.xlu0 %355
      %v357 = vsel %vm314, %v296, 0.0
      %358 = vadd.xlane.f32.xlu0 %v357
      %v359 = vpop.xlane.xlu0 %358
      %v360 = vsel %vm314, %v297, 0.0
      %361 = vadd.xlane.f32.xlu0 %v360
      %v362 = vpop.xlane.xlu0 %361
      %v363 = vsel %vm314, %v298, 0.0
      %364 = vadd.xlane.f32.xlu0 %v363
      %v365 = vpop.xlane.xlu0 %364
      %v366 = vsel %vm314, %v299, 0.0
      %367 = vadd.xlane.f32.xlu0 %v366
      %v368 = vpop.xlane.xlu0 %367
      %v369 = vsel %vm314, %v300, 0.0
      %370 = vadd.xlane.f32.xlu0 %v369
      %v371 = vpop.xlane.xlu0 %370
      %v372 = vsel %vm314, %v301, 0.0
      %373 = vadd.xlane.f32.xlu0 %v372
      %v374 = vpop.xlane.xlu0 %373
      %v375 = vsel %vm314, %v302, 0.0
      %376 = vadd.xlane.f32.xlu0 %v375
      %v377 = vpop.xlane.xlu0 %376
      %v378 = vsel %vm314, %v303, 0.0
      %379 = vadd.xlane.f32.xlu0 %v378
      %v380 = vpop.xlane.xlu0 %379
      %v381 = vsel %vm314, %v304, 0.0
      %382 = vadd.xlane.f32.xlu0 %v381
      %v383 = vpop.xlane.xlu0 %382
      %v384 = vsel %vm314, %v305, 0.0
      %385 = vadd.xlane.f32.xlu0 %v384
      %v386 = vpop.xlane.xlu0 %385
      %v387 = vsel %vm314, %v306, 0.0
      %388 = vadd.xlane.f32.xlu0 %v387
      %v389 = vpop.xlane.xlu0 %388
      %v390 = vsel %vm314, %v307, 0.0
      %391 = vadd.xlane.f32.xlu0 %v390
      %v392 = vpop.xlane.xlu0 %391
      %v393 = vsel %vm314, %v308, 0.0
      %394 = vadd.xlane.f32.xlu0 %v393
      %v395 = vpop.xlane.xlu0 %394
      %v396 = vsel %vm314, %v309, 0.0
      %397 = vadd.xlane.f32.xlu0 %v396
      %v398 = vpop.xlane.xlu0 %397
      %v399 = vsel %vm314, %v310, 0.0
      %400 = vadd.xlane.f32.xlu0 %v399
      %v401 = vpop.xlane.xlu0 %400
      %v402 = vsel %vm314, %v311, 0.0
      %403 = vadd.xlane.f32.xlu0 %v402
      %v404 = vpop.xlane.xlu0 %403
      %v405 = vsel %vm314, %v312, 0.0
      %406 = vadd.xlane.f32.xlu0 %v405
      %v407 = vpop.xlane.xlu0 %406
      %v408 = vsel %vm314, %v313, 0.0
      %409 = vadd.xlane.f32.xlu0 %v408
      %v410 = vpop.xlane.xlu0 %409
      %v411 = vrcp.pop 32.0
      %v412 = vmul.f32 32.0, %v411
      %v413 = vsub.f32 1.0, %v412
      %v414 = vmul.f32 %v411, %v413
      %v415 = vadd.f32 %v411, %v414
      %vm416 = vweird.f32 %v411
      %v417 = vsel %vm416, %v411, %v415
      %v418 = vmul.f32 %v317, %v417
      %v419 = vmul.f32 %v320, %v417
      %v420 = vmul.f32 %v323, %v417
      %v421 = vmul.f32 %v326, %v417
      %v422 = vmul.f32 %v329, %v417
      %v423 = vmul.f32 %v332, %v417
      %v424 = vmul.f32 %v335, %v417
      %v425 = vmul.f32 %v338, %v417
      %v426 = vmul.f32 %v341, %v417
      %v427 = vmul.f32 %v344, %v417
      %v428 = vmul.f32 %v347, %v417
      %v429 = vmul.f32 %v350, %v417
      %v430 = vmul.f32 %v353, %v417
      %v431 = vmul.f32 %v356, %v417
      %v432 = vmul.f32 %v359, %v417
      %v433 = vmul.f32 %v362, %v417
      %v434 = vmul.f32 %v365, %v417
      %v435 = vmul.f32 %v368, %v417
      %v436 = vmul.f32 %v371, %v417
      %v437 = vmul.f32 %v374, %v417
      %v438 = vmul.f32 %v377, %v417
      %v439 = vmul.f32 %v380, %v417
      %v440 = vmul.f32 %v383, %v417
      %v441 = vmul.f32 %v386, %v417
      %v442 = vmul.f32 %v389, %v417
      %v443 = vmul.f32 %v392, %v417
      %v444 = vmul.f32 %v395, %v417
      %v445 = vmul.f32 %v398, %v417
      %v446 = vmul.f32 %v401, %v417
      %v447 = vmul.f32 %v404, %v417
      %v448 = vmul.f32 %v407, %v417
      %v449 = vmul.f32 %v410, %v417
      %v450 = vsub.f32 %v282, %v418
      %v451 = vsub.f32 %v283, %v419
      %v452 = vsub.f32 %v284, %v420
      %v453 = vsub.f32 %v285, %v421
      %v454 = vsub.f32 %v286, %v422
      %v455 = vsub.f32 %v287, %v423
      %v456 = vsub.f32 %v288, %v424
      %v457 = vsub.f32 %v289, %v425
      %v458 = vsub.f32 %v290, %v426
      %v459 = vsub.f32 %v291, %v427
      %v460 = vsub.f32 %v292, %v428
      %v461 = vsub.f32 %v293, %v429
      %v462 = vsub.f32 %v294, %v430
      %v463 = vsub.f32 %v295, %v431
      %v464 = vsub.f32 %v296, %v432
      %v465 = vsub.f32 %v297, %v433
      %v466 = vsub.f32 %v298, %v434
      %v467 = vsub.f32 %v299, %v435
      %v468 = vsub.f32 %v300, %v436
      %v469 = vsub.f32 %v301, %v437
      %v470 = vsub.f32 %v302, %v438
      %v471 = vsub.f32 %v303, %v439
      %v472 = vsub.f32 %v304, %v440
      %v473 = vsub.f32 %v305, %v441
      %v474 = vsub.f32 %v306, %v442
      %v475 = vsub.f32 %v307, %v443
      %v476 = vsub.f32 %v308, %v444
      %v477 = vsub.f32 %v309, %v445
      %v478 = vsub.f32 %v310, %v446
      %v479 = vsub.f32 %v311, %v447
      %v480 = vsub.f32 %v312, %v448
      %v481 = vsub.f32 %v313, %v449
      %v482 = vmul.f32 %v450, %v450
      %v483 = vmul.f32 %v451, %v451
      %v484 = vmul.f32 %v452, %v452
      %v485 = vmul.f32 %v453, %v453
      %v486 = vmul.f32 %v454, %v454
      %v487 = vmul.f32 %v455, %v455
      %v488 = vmul.f32 %v456, %v456
      %v489 = vmul.f32 %v457, %v457
      %v490 = vmul.f32 %v458, %v458
      %v491 = vmul.f32 %v459, %v459
      %v492 = vmul.f32 %v460, %v460
      %v493 = vmul.f32 %v461, %v461
      %v494 = vmul.f32 %v462, %v462
      %v495 = vmul.f32 %v463, %v463
      %v496 = vmul.f32 %v464, %v464
      %v497 = vmul.f32 %v465, %v465
      %v498 = vmul.f32 %v466, %v466
      %v499 = vmul.f32 %v467, %v467
      %v500 = vmul.f32 %v468, %v468
      %v501 = vmul.f32 %v469, %v469
      %v502 = vmul.f32 %v470, %v470
      %v503 = vmul.f32 %v471, %v471
      %v504 = vmul.f32 %v472, %v472
      %v505 = vmul.f32 %v473, %v473
      %v506 = vmul.f32 %v474, %v474
      %v507 = vmul.f32 %v475, %v475
      %v508 = vmul.f32 %v476, %v476
      %v509 = vmul.f32 %v477, %v477
      %v510 = vmul.f32 %v478, %v478
      %v511 = vmul.f32 %v479, %v479
      %v512 = vmul.f32 %v480, %v480
      %v513 = vmul.f32 %v481, %v481
      %v514 = vsel %vm314, %v482, 0.0
      %515 = vadd.xlane.f32.xlu0 %v514
      %v516 = vpop.xlane.xlu0 %515
      %v517 = vsel %vm314, %v483, 0.0
      %518 = vadd.xlane.f32.xlu0 %v517
      %v519 = vpop.xlane.xlu0 %518
      %v520 = vsel %vm314, %v484, 0.0
      %521 = vadd.xlane.f32.xlu0 %v520
      %v522 = vpop.xlane.xlu0 %521
      %v523 = vsel %vm314, %v485, 0.0
      %524 = vadd.xlane.f32.xlu0 %v523
      %v525 = vpop.xlane.xlu0 %524
      %v526 = vsel %vm314, %v486, 0.0
      %527 = vadd.xlane.f32.xlu0 %v526
      %v528 = vpop.xlane.xlu0 %527
      %v529 = vsel %vm314, %v487, 0.0
      %530 = vadd.xlane.f32.xlu0 %v529
      %v531 = vpop.xlane.xlu0 %530
      %v532 = vsel %vm314, %v488, 0.0
      %533 = vadd.xlane.f32.xlu0 %v532
      %v534 = vpop.xlane.xlu0 %533
      %v535 = vsel %vm314, %v489, 0.0
      %536 = vadd.xlane.f32.xlu0 %v535
      %v537 = vpop.xlane.xlu0 %536
      %v538 = vsel %vm314, %v490, 0.0
      %539 = vadd.xlane.f32.xlu0 %v538
      %v540 = vpop.xlane.xlu0 %539
      %v541 = vsel %vm314, %v491, 0.0
      %542 = vadd.xlane.f32.xlu0 %v541
      %v543 = vpop.xlane.xlu0 %542
      %v544 = vsel %vm314, %v492, 0.0
      %545 = vadd.xlane.f32.xlu0 %v544
      %v546 = vpop.xlane.xlu0 %545
      %v547 = vsel %vm314, %v493, 0.0
      %548 = vadd.xlane.f32.xlu0 %v547
      %v549 = vpop.xlane.xlu0 %548
      %v550 = vsel %vm314, %v494, 0.0
      %551 = vadd.xlane.f32.xlu0 %v550
      %v552 = vpop.xlane.xlu0 %551
      %v553 = vsel %vm314, %v495, 0.0
      %554 = vadd.xlane.f32.xlu0 %v553
      %v555 = vpop.xlane.xlu0 %554
      %v556 = vsel %vm314, %v496, 0.0
      %557 = vadd.xlane.f32.xlu0 %v556
      %v558 = vpop.xlane.xlu0 %557
      %v559 = vsel %vm314, %v497, 0.0
      %560 = vadd.xlane.f32.xlu0 %v559
      %v561 = vpop.xlane.xlu0 %560
      %v562 = vsel %vm314, %v498, 0.0
      %563 = vadd.xlane.f32.xlu0 %v562
      %v564 = vpop.xlane.xlu0 %563
      %v565 = vsel %vm314, %v499, 0.0
      %566 = vadd.xlane.f32.xlu0 %v565
      %v567 = vpop.xlane.xlu0 %566
      %v568 = vsel %vm314, %v500, 0.0
      %569 = vadd.xlane.f32.xlu0 %v568
      %v570 = vpop.xlane.xlu0 %569
      %v571 = vsel %vm314, %v501, 0.0
      %572 = vadd.xlane.f32.xlu0 %v571
      %v573 = vpop.xlane.xlu0 %572
      %v574 = vsel %vm314, %v502, 0.0
      %575 = vadd.xlane.f32.xlu0 %v574
      %v576 = vpop.xlane.xlu0 %575
      %v577 = vsel %vm314, %v503, 0.0
      %578 = vadd.xlane.f32.xlu0 %v577
      %v579 = vpop.xlane.xlu0 %578
      %v580 = vsel %vm314, %v504, 0.0
      %581 = vadd.xlane.f32.xlu0 %v580
      %v582 = vpop.xlane.xlu0 %581
      %v583 = vsel %vm314, %v505, 0.0
      %584 = vadd.xlane.f32.xlu0 %v583
      %v585 = vpop.xlane.xlu0 %584
      %v586 = vsel %vm314, %v506, 0.0
      %587 = vadd.xlane.f32.xlu0 %v586
      %v588 = vpop.xlane.xlu0 %587
      %v589 = vsel %vm314, %v507, 0.0
      %590 = vadd.xlane.f32.xlu0 %v589
      %v591 = vpop.xlane.xlu0 %590
      %v592 = vsel %vm314, %v508, 0.0
      %593 = vadd.xlane.f32.xlu0 %v592
      %v594 = vpop.xlane.xlu0 %593
      %v595 = vsel %vm314, %v509, 0.0
      %596 = vadd.xlane.f32.xlu0 %v595
      %v597 = vpop.xlane.xlu0 %596
      %v598 = vsel %vm314, %v510, 0.0
      %599 = vadd.xlane.f32.xlu0 %v598
      %v600 = vpop.xlane.xlu0 %599
      %v601 = vsel %vm314, %v511, 0.0
      %602 = vadd.xlane.f32.xlu0 %v601
      %v603 = vpop.xlane.xlu0 %602
      %v604 = vsel %vm314, %v512, 0.0
      %605 = vadd.xlane.f32.xlu0 %v604
      %v606 = vpop.xlane.xlu0 %605
      %v607 = vsel %vm314, %v513, 0.0
      %608 = vadd.xlane.f32.xlu0 %v607
      %v609 = vpop.xlane.xlu0 %608
      %v610 = vmul.f32 %v516, %v417
      %v611 = vmul.f32 %v519, %v417
      %v612 = vmul.f32 %v522, %v417
      %v613 = vmul.f32 %v525, %v417
      %v614 = vmul.f32 %v528, %v417
      %v615 = vmul.f32 %v531, %v417
      %v616 = vmul.f32 %v534, %v417
      %v617 = vmul.f32 %v537, %v417
      %v618 = vmul.f32 %v540, %v417
      %v619 = vmul.f32 %v543, %v417
      %v620 = vmul.f32 %v546, %v417
      %v621 = vmul.f32 %v549, %v417
      %v622 = vmul.f32 %v552, %v417
      %v623 = vmul.f32 %v555, %v417
      %v624 = vmul.f32 %v558, %v417
      %v625 = vmul.f32 %v561, %v417
      %v626 = vmul.f32 %v564, %v417
      %v627 = vmul.f32 %v567, %v417
      %v628 = vmul.f32 %v570, %v417
      %v629 = vmul.f32 %v573, %v417
      %v630 = vmul.f32 %v576, %v417
      %v631 = vmul.f32 %v579, %v417
      %v632 = vmul.f32 %v582, %v417
      %v633 = vmul.f32 %v585, %v417
      %v634 = vmul.f32 %v588, %v417
      %v635 = vmul.f32 %v591, %v417
      %v636 = vmul.f32 %v594, %v417
      %v637 = vmul.f32 %v597, %v417
      %v638 = vmul.f32 %v600, %v417
      %v639 = vmul.f32 %v603, %v417
      %v640 = vmul.f32 %v606, %v417
      %v641 = vmul.f32 %v609, %v417
      %v642 = vadd.f32 %v610, 1e-05
      %v643 = vadd.f32 %v611, 1e-05
      %v644 = vadd.f32 %v612, 1e-05
      %v645 = vadd.f32 %v613, 1e-05
      %v646 = vadd.f32 %v614, 1e-05
      %v647 = vadd.f32 %v615, 1e-05
      %v648 = vadd.f32 %v616, 1e-05
      %v649 = vadd.f32 %v617, 1e-05
      %v650 = vadd.f32 %v618, 1e-05
      %v651 = vadd.f32 %v619, 1e-05
      %v652 = vadd.f32 %v620, 1e-05
      %v653 = vadd.f32 %v621, 1e-05
      %v654 = vadd.f32 %v622, 1e-05
      %v655 = vadd.f32 %v623, 1e-05
      %v656 = vadd.f32 %v624, 1e-05
      %v657 = vadd.f32 %v625, 1e-05
      %v658 = vadd.f32 %v626, 1e-05
      %v659 = vadd.f32 %v627, 1e-05
      %v660 = vadd.f32 %v628, 1e-05
      %v661 = vadd.f32 %v629, 1e-05
      %v662 = vadd.f32 %v630, 1e-05
      %v663 = vadd.f32 %v631, 1e-05
      %v664 = vadd.f32 %v632, 1e-05
      %v665 = vadd.f32 %v633, 1e-05
      %v666 = vadd.f32 %v634, 1e-05
      %v667 = vadd.f32 %v635, 1e-05
      %v668 = vadd.f32 %v636, 1e-05
      %v669 = vadd.f32 %v637, 1e-05
      %v670 = vadd.f32 %v638, 1e-05
      %v671 = vadd.f32 %v639, 1e-05
      %v672 = vadd.f32 %v640, 1e-05
      %v673 = vadd.f32 %v641, 1e-05
      %v674 = vrsqrt.pop %v642
      %v675 = vmul.f32 %v674, %v642
      %v676 = vmul.f32 %v675, %v674
      %v677 = vmul.f32 0.5, %v676
      %v678 = vsub.f32 1.5, %v677
      %v679 = vmul.f32 %v674, %v678
      %vm680 = vweird.f32 %v642
      %vm681 = vweird.f32 %v674
      %vm682 = vmor %vm680, %vm681
      %v683 = vsel %vm682, %v674, %v679
      %v684 = vrsqrt.pop %v643
      %v685 = vmul.f32 %v684, %v643
      %v686 = vmul.f32 %v685, %v684
      %v687 = vmul.f32 0.5, %v686
      %v688 = vsub.f32 1.5, %v687
      %v689 = vmul.f32 %v684, %v688
      %vm690 = vweird.f32 %v643
      %vm691 = vweird.f32 %v684
      %vm692 = vmor %vm690, %vm691
      %v693 = vsel %vm692, %v684, %v689
      %v694 = vrsqrt.pop %v644
      %v695 = vmul.f32 %v694, %v644
      %v696 = vmul.f32 %v695, %v694
      %v697 = vmul.f32 0.5, %v696
      %v698 = vsub.f32 1.5, %v697
      %v699 = vmul.f32 %v694, %v698
      %vm700 = vweird.f32 %v644
      %vm701 = vweird.f32 %v694
      %vm702 = vmor %vm700, %vm701
      %v703 = vsel %vm702, %v694, %v699
      %v704 = vrsqrt.pop %v645
      %v705 = vmul.f32 %v704, %v645
      %v706 = vmul.f32 %v705, %v704
      %v707 = vmul.f32 0.5, %v706
      %v708 = vsub.f32 1.5, %v707
      %v709 = vmul.f32 %v704, %v708
      %vm710 = vweird.f32 %v645
      %vm711 = vweird.f32 %v704
      %vm712 = vmor %vm710, %vm711
      %v713 = vsel %vm712, %v704, %v709
      %v714 = vrsqrt.pop %v646
      %v715 = vmul.f32 %v714, %v646
      %v716 = vmul.f32 %v715, %v714
      %v717 = vmul.f32 0.5, %v716
      %v718 = vsub.f32 1.5, %v717
      %v719 = vmul.f32 %v714, %v718
      %vm720 = vweird.f32 %v646
      %vm721 = vweird.f32 %v714
      %vm722 = vmor %vm720, %vm721
      %v723 = vsel %vm722, %v714, %v719
      %v724 = vrsqrt.pop %v647
      %v725 = vmul.f32 %v724, %v647
      %v726 = vmul.f32 %v725, %v724
      %v727 = vmul.f32 0.5, %v726
      %v728 = vsub.f32 1.5, %v727
      %v729 = vmul.f32 %v724, %v728
      %vm730 = vweird.f32 %v647
      %vm731 = vweird.f32 %v724
      %vm732 = vmor %vm730, %vm731
      %v733 = vsel %vm732, %v724, %v729
      %v734 = vrsqrt.pop %v648
      %v735 = vmul.f32 %v734, %v648
      %v736 = vmul.f32 %v735, %v734
      %v737 = vmul.f32 0.5, %v736
      %v738 = vsub.f32 1.5, %v737
      %v739 = vmul.f32 %v734, %v738
      %vm740 = vweird.f32 %v648
      %vm741 = vweird.f32 %v734
      %vm742 = vmor %vm740, %vm741
      %v743 = vsel %vm742, %v734, %v739
      %v744 = vrsqrt.pop %v649
      %v745 = vmul.f32 %v744, %v649
      %v746 = vmul.f32 %v745, %v744
      %v747 = vmul.f32 0.5, %v746
      %v748 = vsub.f32 1.5, %v747
      %v749 = vmul.f32 %v744, %v748
      %vm750 = vweird.f32 %v649
      %vm751 = vweird.f32 %v744
      %vm752 = vmor %vm750, %vm751
      %v753 = vsel %vm752, %v744, %v749
      %v754 = vrsqrt.pop %v650
      %v755 = vmul.f32 %v754, %v650
      %v756 = vmul.f32 %v755, %v754
      %v757 = vmul.f32 0.5, %v756
      %v758 = vsub.f32 1.5, %v757
      %v759 = vmul.f32 %v754, %v758
      %vm760 = vweird.f32 %v650
      %vm761 = vweird.f32 %v754
      %vm762 = vmor %vm760, %vm761
      %v763 = vsel %vm762, %v754, %v759
      %v764 = vrsqrt.pop %v651
      %v765 = vmul.f32 %v764, %v651
      %v766 = vmul.f32 %v765, %v764
      %v767 = vmul.f32 0.5, %v766
      %v768 = vsub.f32 1.5, %v767
      %v769 = vmul.f32 %v764, %v768
      %vm770 = vweird.f32 %v651
      %vm771 = vweird.f32 %v764
      %vm772 = vmor %vm770, %vm771
      %v773 = vsel %vm772, %v764, %v769
      %v774 = vrsqrt.pop %v652
      %v775 = vmul.f32 %v774, %v652
      %v776 = vmul.f32 %v775, %v774
      %v777 = vmul.f32 0.5, %v776
      %v778 = vsub.f32 1.5, %v777
      %v779 = vmul.f32 %v774, %v778
      %vm780 = vweird.f32 %v652
      %vm781 = vweird.f32 %v774
      %vm782 = vmor %vm780, %vm781
      %v783 = vsel %vm782, %v774, %v779
      %v784 = vrsqrt.pop %v653
      %v785 = vmul.f32 %v784, %v653
      %v786 = vmul.f32 %v785, %v784
      %v787 = vmul.f32 0.5, %v786
      %v788 = vsub.f32 1.5, %v787
      %v789 = vmul.f32 %v784, %v788
      %vm790 = vweird.f32 %v653
      %vm791 = vweird.f32 %v784
      %vm792 = vmor %vm790, %vm791
      %v793 = vsel %vm792, %v784, %v789
      %v794 = vrsqrt.pop %v654
      %v795 = vmul.f32 %v794, %v654
      %v796 = vmul.f32 %v795, %v794
      %v797 = vmul.f32 0.5, %v796
      %v798 = vsub.f32 1.5, %v797
      %v799 = vmul.f32 %v794, %v798
      %vm800 = vweird.f32 %v654
      %vm801 = vweird.f32 %v794
      %vm802 = vmor %vm800, %vm801
      %v803 = vsel %vm802, %v794, %v799
      %v804 = vrsqrt.pop %v655
      %v805 = vmul.f32 %v804, %v655
      %v806 = vmul.f32 %v805, %v804
      %v807 = vmul.f32 0.5, %v806
      %v808 = vsub.f32 1.5, %v807
      %v809 = vmul.f32 %v804, %v808
      %vm810 = vweird.f32 %v655
      %vm811 = vweird.f32 %v804
      %vm812 = vmor %vm810, %vm811
      %v813 = vsel %vm812, %v804, %v809
      %v814 = vrsqrt.pop %v656
      %v815 = vmul.f32 %v814, %v656
      %v816 = vmul.f32 %v815, %v814
      %v817 = vmul.f32 0.5, %v816
      %v818 = vsub.f32 1.5, %v817
      %v819 = vmul.f32 %v814, %v818
      %vm820 = vweird.f32 %v656
      %vm821 = vweird.f32 %v814
      %vm822 = vmor %vm820, %vm821
      %v823 = vsel %vm822, %v814, %v819
      %v824 = vrsqrt.pop %v657
      %v825 = vmul.f32 %v824, %v657
      %v826 = vmul.f32 %v825, %v824
      %v827 = vmul.f32 0.5, %v826
      %v828 = vsub.f32 1.5, %v827
      %v829 = vmul.f32 %v824, %v828
      %vm830 = vweird.f32 %v657
      %vm831 = vweird.f32 %v824
      %vm832 = vmor %vm830, %vm831
      %v833 = vsel %vm832, %v824, %v829
      %v834 = vrsqrt.pop %v658
      %v835 = vmul.f32 %v834, %v658
      %v836 = vmul.f32 %v835, %v834
      %v837 = vmul.f32 0.5, %v836
      %v838 = vsub.f32 1.5, %v837
      %v839 = vmul.f32 %v834, %v838
      %vm840 = vweird.f32 %v658
      %vm841 = vweird.f32 %v834
      %vm842 = vmor %vm840, %vm841
      %v843 = vsel %vm842, %v834, %v839
      %v844 = vrsqrt.pop %v659
      %v845 = vmul.f32 %v844, %v659
      %v846 = vmul.f32 %v845, %v844
      %v847 = vmul.f32 0.5, %v846
      %v848 = vsub.f32 1.5, %v847
      %v849 = vmul.f32 %v844, %v848
      %vm850 = vweird.f32 %v659
      %vm851 = vweird.f32 %v844
      %vm852 = vmor %vm850, %vm851
      %v853 = vsel %vm852, %v844, %v849
      %v854 = vrsqrt.pop %v660
      %v855 = vmul.f32 %v854, %v660
      %v856 = vmul.f32 %v855, %v854
      %v857 = vmul.f32 0.5, %v856
      %v858 = vsub.f32 1.5, %v857
      %v859 = vmul.f32 %v854, %v858
      %vm860 = vweird.f32 %v660
      %vm861 = vweird.f32 %v854
      %vm862 = vmor %vm860, %vm861
      %v863 = vsel %vm862, %v854, %v859
      %v864 = vrsqrt.pop %v661
      %v865 = vmul.f32 %v864, %v661
      %v866 = vmul.f32 %v865, %v864
      %v867 = vmul.f32 0.5, %v866
      %v868 = vsub.f32 1.5, %v867
      %v869 = vmul.f32 %v864, %v868
      %vm870 = vweird.f32 %v661
      %vm871 = vweird.f32 %v864
      %vm872 = vmor %vm870, %vm871
      %v873 = vsel %vm872, %v864, %v869
      %v874 = vrsqrt.pop %v662
      %v875 = vmul.f32 %v874, %v662
      %v876 = vmul.f32 %v875, %v874
      %v877 = vmul.f32 0.5, %v876
      %v878 = vsub.f32 1.5, %v877
      %v879 = vmul.f32 %v874, %v878
      %vm880 = vweird.f32 %v662
      %vm881 = vweird.f32 %v874
      %vm882 = vmor %vm880, %vm881
      %v883 = vsel %vm882, %v874, %v879
      %v884 = vrsqrt.pop %v663
      %v885 = vmul.f32 %v884, %v663
      %v886 = vmul.f32 %v885, %v884
      %v887 = vmul.f32 0.5, %v886
      %v888 = vsub.f32 1.5, %v887
      %v889 = vmul.f32 %v884, %v888
      %vm890 = vweird.f32 %v663
      %vm891 = vweird.f32 %v884
      %vm892 = vmor %vm890, %vm891
      %v893 = vsel %vm892, %v884, %v889
      %v894 = vrsqrt.pop %v664
      %v895 = vmul.f32 %v894, %v664
      %v896 = vmul.f32 %v895, %v894
      %v897 = vmul.f32 0.5, %v896
      %v898 = vsub.f32 1.5, %v897
      %v899 = vmul.f32 %v894, %v898
      %vm900 = vweird.f32 %v664
      %vm901 = vweird.f32 %v894
      %vm902 = vmor %vm900, %vm901
      %v903 = vsel %vm902, %v894, %v899
      %v904 = vrsqrt.pop %v665
      %v905 = vmul.f32 %v904, %v665
      %v906 = vmul.f32 %v905, %v904
      %v907 = vmul.f32 0.5, %v906
      %v908 = vsub.f32 1.5, %v907
      %v909 = vmul.f32 %v904, %v908
      %vm910 = vweird.f32 %v665
      %vm911 = vweird.f32 %v904
      %vm912 = vmor %vm910, %vm911
      %v913 = vsel %vm912, %v904, %v909
      %v914 = vrsqrt.pop %v666
      %v915 = vmul.f32 %v914, %v666
      %v916 = vmul.f32 %v915, %v914
      %v917 = vmul.f32 0.5, %v916
      %v918 = vsub.f32 1.5, %v917
      %v919 = vmul.f32 %v914, %v918
      %vm920 = vweird.f32 %v666
      %vm921 = vweird.f32 %v914
      %vm922 = vmor %vm920, %vm921
      %v923 = vsel %vm922, %v914, %v919
      %v924 = vrsqrt.pop %v667
      %v925 = vmul.f32 %v924, %v667
      %v926 = vmul.f32 %v925, %v924
      %v927 = vmul.f32 0.5, %v926
      %v928 = vsub.f32 1.5, %v927
      %v929 = vmul.f32 %v924, %v928
      %vm930 = vweird.f32 %v667
      %vm931 = vweird.f32 %v924
      %vm932 = vmor %vm930, %vm931
      %v933 = vsel %vm932, %v924, %v929
      %v934 = vrsqrt.pop %v668
      %v935 = vmul.f32 %v934, %v668
      %v936 = vmul.f32 %v935, %v934
      %v937 = vmul.f32 0.5, %v936
      %v938 = vsub.f32 1.5, %v937
      %v939 = vmul.f32 %v934, %v938
      %vm940 = vweird.f32 %v668
      %vm941 = vweird.f32 %v934
      %vm942 = vmor %vm940, %vm941
      %v943 = vsel %vm942, %v934, %v939
      %v944 = vrsqrt.pop %v669
      %v945 = vmul.f32 %v944, %v669
      %v946 = vmul.f32 %v945, %v944
      %v947 = vmul.f32 0.5, %v946
      %v948 = vsub.f32 1.5, %v947
      %v949 = vmul.f32 %v944, %v948
      %vm950 = vweird.f32 %v669
      %vm951 = vweird.f32 %v944
      %vm952 = vmor %vm950, %vm951
      %v953 = vsel %vm952, %v944, %v949
      %v954 = vrsqrt.pop %v670
      %v955 = vmul.f32 %v954, %v670
      %v956 = vmul.f32 %v955, %v954
      %v957 = vmul.f32 0.5, %v956
      %v958 = vsub.f32 1.5, %v957
      %v959 = vmul.f32 %v954, %v958
      %vm960 = vweird.f32 %v670
      %vm961 = vweird.f32 %v954
      %vm962 = vmor %vm960, %vm961
      %v963 = vsel %vm962, %v954, %v959
      %v964 = vrsqrt.pop %v671
      %v965 = vmul.f32 %v964, %v671
      %v966 = vmul.f32 %v965, %v964
      %v967 = vmul.f32 0.5, %v966
      %v968 = vsub.f32 1.5, %v967
      %v969 = vmul.f32 %v964, %v968
      %vm970 = vweird.f32 %v671
      %vm971 = vweird.f32 %v964
      %vm972 = vmor %vm970, %vm971
      %v973 = vsel %vm972, %v964, %v969
      %v974 = vrsqrt.pop %v672
      %v975 = vmul.f32 %v974, %v672
      %v976 = vmul.f32 %v975, %v974
      %v977 = vmul.f32 0.5, %v976
      %v978 = vsub.f32 1.5, %v977
      %v979 = vmul.f32 %v974, %v978
      %vm980 = vweird.f32 %v672
      %vm981 = vweird.f32 %v974
      %vm982 = vmor %vm980, %vm981
      %v983 = vsel %vm982, %v974, %v979
      %v984 = vrsqrt.pop %v673
      %v985 = vmul.f32 %v984, %v673
      %v986 = vmul.f32 %v985, %v984
      %v987 = vmul.f32 0.5, %v986
      %v988 = vsub.f32 1.5, %v987
      %v989 = vmul.f32 %v984, %v988
      %vm990 = vweird.f32 %v673
      %vm991 = vweird.f32 %v984
      %vm992 = vmor %vm990, %vm991
      %v993 = vsel %vm992, %v984, %v989
      %v994 = vmul.f32 %v450, %v683
      %v995 = vmul.f32 %v451, %v693
      %v996 = vmul.f32 %v452, %v703
      %v997 = vmul.f32 %v453, %v713
      %v998 = vmul.f32 %v454, %v723
      %v999 = vmul.f32 %v455, %v733
      %v1000 = vmul.f32 %v456, %v743
      %v1001 = vmul.f32 %v457, %v753
      %v1002 = vmul.f32 %v458, %v763
      %v1003 = vmul.f32 %v459, %v773
      %v1004 = vmul.f32 %v460, %v783
      %v1005 = vmul.f32 %v461, %v793
      %v1006 = vmul.f32 %v462, %v803
      %v1007 = vmul.f32 %v463, %v813
      %v1008 = vmul.f32 %v464, %v823
      %v1009 = vmul.f32 %v465, %v833
      %v1010 = vmul.f32 %v466, %v843
      %v1011 = vmul.f32 %v467, %v853
      %v1012 = vmul.f32 %v468, %v863
      %v1013 = vmul.f32 %v469, %v873
      %v1014 = vmul.f32 %v470, %v883
      %v1015 = vmul.f32 %v471, %v893
      %v1016 = vmul.f32 %v472, %v903
      %v1017 = vmul.f32 %v473, %v913
      %v1018 = vmul.f32 %v474, %v923
      %v1019 = vmul.f32 %v475, %v933
      %v1020 = vmul.f32 %v476, %v943
      %v1021 = vmul.f32 %v477, %v953
      %v1022 = vmul.f32 %v478, %v963
      %v1023 = vmul.f32 %v479, %v973
      %v1024 = vmul.f32 %v480, %v983
      %v1025 = vmul.f32 %v481, %v993
      %v1026 = vld [vmem:[%s1] sm:$0x1]
      %v1028 = vperm.slane %v1026, 0
      %v1030 = vmul.f32 %v994, %v1028
      %v1031 = vmul.f32 %v995, %v1028
      %v1032 = vmul.f32 %v996, %v1028
      %v1033 = vmul.f32 %v997, %v1028
      %v1034 = vmul.f32 %v998, %v1028
      %v1035 = vmul.f32 %v999, %v1028
      %v1036 = vmul.f32 %v1000, %v1028
      %v1037 = vmul.f32 %v1001, %v1028
      %v1038 = vmul.f32 %v1002, %v1028
      %v1039 = vmul.f32 %v1003, %v1028
      %v1040 = vmul.f32 %v1004, %v1028
      %v1041 = vmul.f32 %v1005, %v1028
      %v1042 = vmul.f32 %v1006, %v1028
      %v1043 = vmul.f32 %v1007, %v1028
      %v1044 = vmul.f32 %v1008, %v1028
      %v1045 = vmul.f32 %v1009, %v1028
      %v1046 = vmul.f32 %v1010, %v1028
      %v1047 = vmul.f32 %v1011, %v1028
      %v1048 = vmul.f32 %v1012, %v1028
      %v1049 = vmul.f32 %v1013, %v1028
      %v1050 = vmul.f32 %v1014, %v1028
      %v1051 = vmul.f32 %v1015, %v1028
      %v1052 = vmul.f32 %v1016, %v1028
      %v1053 = vmul.f32 %v1017, %v1028
      %v1054 = vmul.f32 %v1018, %v1028
      %v1055 = vmul.f32 %v1019, %v1028
      %v1056 = vmul.f32 %v1020, %v1028
      %v1057 = vmul.f32 %v1021, %v1028
      %v1058 = vmul.f32 %v1022, %v1028
      %v1059 = vmul.f32 %v1023, %v1028
      %v1060 = vmul.f32 %v1024, %v1028
      %v1061 = vmul.f32 %v1025, %v1028
      %v1062 = vld [vmem:[%s2] sm:$0x1]
      %v1064 = vperm.slane %v1062, 0
      %v1066 = vadd.f32 %v1030, %v1064
      %v1067 = vadd.f32 %v1031, %v1064
      %v1068 = vadd.f32 %v1032, %v1064
      %v1069 = vadd.f32 %v1033, %v1064
      %v1070 = vadd.f32 %v1034, %v1064
      %v1071 = vadd.f32 %v1035, %v1064
      %v1072 = vadd.f32 %v1036, %v1064
      %v1073 = vadd.f32 %v1037, %v1064
      %v1074 = vadd.f32 %v1038, %v1064
      %v1075 = vadd.f32 %v1039, %v1064
      %v1076 = vadd.f32 %v1040, %v1064
      %v1077 = vadd.f32 %v1041, %v1064
      %v1078 = vadd.f32 %v1042, %v1064
      %v1079 = vadd.f32 %v1043, %v1064
      %v1080 = vadd.f32 %v1044, %v1064
      %v1081 = vadd.f32 %v1045, %v1064
      %v1082 = vadd.f32 %v1046, %v1064
      %v1083 = vadd.f32 %v1047, %v1064
      %v1084 = vadd.f32 %v1048, %v1064
      %v1085 = vadd.f32 %v1049, %v1064
      %v1086 = vadd.f32 %v1050, %v1064
      %v1087 = vadd.f32 %v1051, %v1064
      %v1088 = vadd.f32 %v1052, %v1064
      %v1089 = vadd.f32 %v1053, %v1064
      %v1090 = vadd.f32 %v1054, %v1064
      %v1091 = vadd.f32 %v1055, %v1064
      %v1092 = vadd.f32 %v1056, %v1064
      %v1093 = vadd.f32 %v1057, %v1064
      %v1094 = vadd.f32 %v1058, %v1064
      %v1095 = vadd.f32 %v1059, %v1064
      %v1096 = vadd.f32 %v1060, %v1064
      %v1097 = vadd.f32 %v1061, %v1064
      %v1098 = vld [vmem:[%s3] sm:$0xff]
      %v1099 = vld [vmem:[%s3 + $0x8] sm:$0xff]
      %v1100 = vld [vmem:[%s3 + $0x10] sm:$0xff]
      %v1101 = vld [vmem:[%s3 + $0x18] sm:$0xff]
      %v1102 = vld [vmem:[%s4] sm:$0x1]
      %v1104 = vperm.slane %v1102, 0
      %v1107 = vsel %vm314, %v1066, 0
      %v1110 = vsel %vm314, %v1067, 0
      %v1113 = vsel %vm314, %v1068, 0
      %v1116 = vsel %vm314, %v1069, 0
      %v1119 = vsel %vm314, %v1070, 0
      %v1122 = vsel %vm314, %v1071, 0
      %v1125 = vsel %vm314, %v1072, 0
      %v1128 = vsel %vm314, %v1073, 0
      %v1131 = vsel %vm314, %v1074, 0
      %v1134 = vsel %vm314, %v1075, 0
      %v1137 = vsel %vm314, %v1076, 0
      %v1140 = vsel %vm314, %v1077, 0
      %v1143 = vsel %vm314, %v1078, 0
      %v1146 = vsel %vm314, %v1079, 0
      %v1149 = vsel %vm314, %v1080, 0
      %v1152 = vsel %vm314, %v1081, 0
      %v1155 = vsel %vm314, %v1082, 0
      %v1158 = vsel %vm314, %v1083, 0
      %v1161 = vsel %vm314, %v1084, 0
      %v1164 = vsel %vm314, %v1085, 0
      %v1167 = vsel %vm314, %v1086, 0
      %v1170 = vsel %vm314, %v1087, 0
      %v1173 = vsel %vm314, %v1088, 0
      %v1176 = vsel %vm314, %v1089, 0
      %v1179 = vsel %vm314, %v1090, 0
      %v1182 = vsel %vm314, %v1091, 0
      %v1185 = vsel %vm314, %v1092, 0
      %v1188 = vsel %vm314, %v1093, 0
      %v1191 = vsel %vm314, %v1094, 0
      %v1194 = vsel %vm314, %v1095, 0
      %v1197 = vsel %vm314, %v1096, 0
      %v1200 = vsel %vm314, %v1097, 0
      %1202 = vmatpush.msra.mxu0 0.0
      %1203 = vmatpush.msra.mxu0 0.0
      %1204 = vmatpush.msra.mxu0 0.0
      %1205 = vmatpush.msra.mxu0 0.0
      %1206 = vmatpush.msra.mxu0 0.0
      %1207 = vmatpush.msra.mxu0 0.0
      %1208 = vmatpush.msra.mxu0 0.0
      %1209 = vmatpush.msra.mxu0 0.0
      %1210 = vmatpush.msra.mxu0 0.0
      %1211 = vmatpush.msra.mxu0 0.0
      %1212 = vmatpush.msra.mxu0 0.0
      %1213 = vmatpush.msra.mxu0 0.0
      %1214 = vmatpush.msra.mxu0 %v1101
      %1215 = vmatpush.msra.mxu0 %v1100
      %1216 = vmatpush.msra.mxu0 %v1099
      %1217 = vmatpush.msra.mxu0 %v1098
      %1218 = vmatmul.f32.gmra.mxu0 %v1107
      %v1219 = vpop.f32.mrf.mxu0
      %v1220 = vadd.f32 %v1104, %v1219
      %1221 = vmatmul.f32.gmra.mxu0 %v1110
      %v1222 = vpop.f32.mrf.mxu0
      %v1223 = vadd.f32 %v1104, %v1222
      %1224 = vmatmul.f32.gmra.mxu0 %v1113
      %v1225 = vpop.f32.mrf.mxu0
      %v1226 = vadd.f32 %v1104, %v1225
      %1227 = vmatmul.f32.gmra.mxu0 %v1116
      %v1228 = vpop.f32.mrf.mxu0
      %v1229 = vadd.f32 %v1104, %v1228
      %1230 = vmatmul.f32.gmra.mxu0 %v1119
      %v1231 = vpop.f32.mrf.mxu0
      %v1232 = vadd.f32 %v1104, %v1231
      %1233 = vmatmul.f32.gmra.mxu0 %v1122
      %v1234 = vpop.f32.mrf.mxu0
      %v1235 = vadd.f32 %v1104, %v1234
      %1236 = vmatmul.f32.gmra.mxu0 %v1125
      %v1237 = vpop.f32.mrf.mxu0
      %v1238 = vadd.f32 %v1104, %v1237
      %1239 = vmatmul.f32.gmra.mxu0 %v1128
      %v1240 = vpop.f32.mrf.mxu0
      %v1241 = vadd.f32 %v1104, %v1240
      %1242 = vmatmul.f32.gmra.mxu0 %v1131
      %v1243 = vpop.f32.mrf.mxu0
      %v1244 = vadd.f32 %v1104, %v1243
      %1245 = vmatmul.f32.gmra.mxu0 %v1134
      %v1246 = vpop.f32.mrf.mxu0
      %v1247 = vadd.f32 %v1104, %v1246
      %1248 = vmatmul.f32.gmra.mxu0 %v1137
      %v1249 = vpop.f32.mrf.mxu0
      %v1250 = vadd.f32 %v1104, %v1249
      %1251 = vmatmul.f32.gmra.mxu0 %v1140
      %v1252 = vpop.f32.mrf.mxu0
      %v1253 = vadd.f32 %v1104, %v1252
      %1254 = vmatmul.f32.gmra.mxu0 %v1143
      %v1255 = vpop.f32.mrf.mxu0
      %v1256 = vadd.f32 %v1104, %v1255
      %1257 = vmatmul.f32.gmra.mxu0 %v1146
      %v1258 = vpop.f32.mrf.mxu0
      %v1259 = vadd.f32 %v1104, %v1258
      %1260 = vmatmul.f32.gmra.mxu0 %v1149
      %v1261 = vpop.f32.mrf.mxu0
      %v1262 = vadd.f32 %v1104, %v1261
      %1263 = vmatmul.f32.gmra.mxu0 %v1152
      %v1264 = vpop.f32.mrf.mxu0
      %v1265 = vadd.f32 %v1104, %v1264
      %1266 = vmatmul.f32.gmra.mxu0 %v1155
      %v1267 = vpop.f32.mrf.mxu0
      %v1268 = vadd.f32 %v1104, %v1267
      %1269 = vmatmul.f32.gmra.mxu0 %v1158
      %v1270 = vpop.f32.mrf.mxu0
      %v1271 = vadd.f32 %v1104, %v1270
      %1272 = vmatmul.f32.gmra.mxu0 %v1161
      %v1273 = vpop.f32.mrf.mxu0
      %v1274 = vadd.f32 %v1104, %v1273
      %1275 = vmatmul.f32.gmra.mxu0 %v1164
      %v1276 = vpop.f32.mrf.mxu0
      %v1277 = vadd.f32 %v1104, %v1276
      %1278 = vmatmul.f32.gmra.mxu0 %v1167
      %v1279 = vpop.f32.mrf.mxu0
      %v1280 = vadd.f32 %v1104, %v1279
      %1281 = vmatmul.f32.gmra.mxu0 %v1170
      %v1282 = vpop.f32.mrf.mxu0
      %v1283 = vadd.f32 %v1104, %v1282
      %1284 = vmatmul.f32.gmra.mxu0 %v1173
      %v1285 = vpop.f32.mrf.mxu0
      %v1286 = vadd.f32 %v1104, %v1285
      %1287 = vmatmul.f32.gmra.mxu0 %v1176
      %v1288 = vpop.f32.mrf.mxu0
      %v1289 = vadd.f32 %v1104, %v1288
      %1290 = vmatmul.f32.gmra.mxu0 %v1179
      %v1291 = vpop.f32.mrf.mxu0
      %v1292 = vadd.f32 %v1104, %v1291
      %1293 = vmatmul.f32.gmra.mxu0 %v1182
      %v1294 = vpop.f32.mrf.mxu0
      %v1295 = vadd.f32 %v1104, %v1294
      %1296 = vmatmul.f32.gmra.mxu0 %v1185
      %v1297 = vpop.f32.mrf.mxu0
      %v1298 = vadd.f32 %v1104, %v1297
      %1299 = vmatmul.f32.gmra.mxu0 %v1188
      %v1300 = vpop.f32.mrf.mxu0
      %v1301 = vadd.f32 %v1104, %v1300
      %1302 = vmatmul.f32.gmra.mxu0 %v1191
      %v1303 = vpop.f32.mrf.mxu0
      %v1304 = vadd.f32 %v1104, %v1303
      %1305 = vmatmul.f32.gmra.mxu0 %v1194
      %v1306 = vpop.f32.mrf.mxu0
      %v1307 = vadd.f32 %v1104, %v1306
      %1308 = vmatmul.f32.gmra.mxu0 %v1197
      %v1309 = vpop.f32.mrf.mxu0
      %v1310 = vadd.f32 %v1104, %v1309
      %1311 = vmatmul.f32.gmra.mxu0 %v1200
      %v1312 = vpop.f32.mrf.mxu0
      %v1313 = vadd.f32 %v1104, %v1312
      %1314 = vdwg.mxu0
      %v1315 = vmul.f32 %v1220, %v1220
      %v1316 = vmul.f32 %v1223, %v1223
      %v1317 = vmul.f32 %v1226, %v1226
      %v1318 = vmul.f32 %v1229, %v1229
      %v1319 = vmul.f32 %v1232, %v1232
      %v1320 = vmul.f32 %v1235, %v1235
      %v1321 = vmul.f32 %v1238, %v1238
      %v1322 = vmul.f32 %v1241, %v1241
      %v1323 = vmul.f32 %v1244, %v1244
      %v1324 = vmul.f32 %v1247, %v1247
      %v1325 = vmul.f32 %v1250, %v1250
      %v1326 = vmul.f32 %v1253, %v1253
      %v1327 = vmul.f32 %v1256, %v1256
      %v1328 = vmul.f32 %v1259, %v1259
      %v1329 = vmul.f32 %v1262, %v1262
      %v1330 = vmul.f32 %v1265, %v1265
      %v1331 = vmul.f32 %v1268, %v1268
      %v1332 = vmul.f32 %v1271, %v1271
      %v1333 = vmul.f32 %v1274, %v1274
      %v1334 = vmul.f32 %v1277, %v1277
      %v1335 = vmul.f32 %v1280, %v1280
      %v1336 = vmul.f32 %v1283, %v1283
      %v1337 = vmul.f32 %v1286, %v1286
      %v1338 = vmul.f32 %v1289, %v1289
      %v1339 = vmul.f32 %v1292, %v1292
      %v1340 = vmul.f32 %v1295, %v1295
      %v1341 = vmul.f32 %v1298, %v1298
      %v1342 = vmul.f32 %v1301, %v1301
      %v1343 = vmul.f32 %v1304, %v1304
      %v1344 = vmul.f32 %v1307, %v1307
      %v1345 = vmul.f32 %v1310, %v1310
      %v1346 = vmul.f32 %v1313, %v1313
      %v1347 = vmul.f32 %v1220, %v1315
      %v1348 = vmul.f32 %v1223, %v1316
      %v1349 = vmul.f32 %v1226, %v1317
      %v1350 = vmul.f32 %v1229, %v1318
      %v1351 = vmul.f32 %v1232, %v1319
      %v1352 = vmul.f32 %v1235, %v1320
      %v1353 = vmul.f32 %v1238, %v1321
      %v1354 = vmul.f32 %v1241, %v1322
      %v1355 = vmul.f32 %v1244, %v1323
      %v1356 = vmul.f32 %v1247, %v1324
      %v1357 = vmul.f32 %v1250, %v1325
      %v1358 = vmul.f32 %v1253, %v1326
      %v1359 = vmul.f32 %v1256, %v1327
      %v1360 = vmul.f32 %v1259, %v1328
      %v1361 = vmul.f32 %v1262, %v1329
      %v1362 = vmul.f32 %v1265, %v1330
      %v1363 = vmul.f32 %v1268, %v1331
      %v1364 = vmul.f32 %v1271, %v1332
      %v1365 = vmul.f32 %v1274, %v1333
      %v1366 = vmul.f32 %v1277, %v1334
      %v1367 = vmul.f32 %v1280, %v1335
      %v1368 = vmul.f32 %v1283, %v1336
      %v1369 = vmul.f32 %v1286, %v1337
      %v1370 = vmul.f32 %v1289, %v1338
      %v1371 = vmul.f32 %v1292, %v1339
      %v1372 = vmul.f32 %v1295, %v1340
      %v1373 = vmul.f32 %v1298, %v1341
      %v1374 = vmul.f32 %v1301, %v1342
      %v1375 = vmul.f32 %v1304, %v1343
      %v1376 = vmul.f32 %v1307, %v1344
      %v1377 = vmul.f32 %v1310, %v1345
      %v1378 = vmul.f32 %v1313, %v1346
      %v1379 = vmul.f32 %v1347, 0.044715
      %v1380 = vmul.f32 %v1348, 0.044715
      %v1381 = vmul.f32 %v1349, 0.044715
      %v1382 = vmul.f32 %v1350, 0.044715
      %v1383 = vmul.f32 %v1351, 0.044715
      %v1384 = vmul.f32 %v1352, 0.044715
      %v1385 = vmul.f32 %v1353, 0.044715
      %v1386 = vmul.f32 %v1354, 0.044715
      %v1387 = vmul.f32 %v1355, 0.044715
      %v1388 = vmul.f32 %v1356, 0.044715
      %v1389 = vmul.f32 %v1357, 0.044715
      %v1390 = vmul.f32 %v1358, 0.044715
      %v1391 = vmul.f32 %v1359, 0.044715
      %v1392 = vmul.f32 %v1360, 0.044715
      %v1393 = vmul.f32 %v1361, 0.044715
      %v1394 = vmul.f32 %v1362, 0.044715
      %v1395 = vmul.f32 %v1363, 0.044715
      %v1396 = vmul.f32 %v1364, 0.044715
      %v1397 = vmul.f32 %v1365, 0.044715
      %v1398 = vmul.f32 %v1366, 0.044715
      %v1399 = vmul.f32 %v1367, 0.044715
      %v1400 = vmul.f32 %v1368, 0.044715
      %v1401 = vmul.f32 %v1369, 0.044715
      %v1402 = vmul.f32 %v1370, 0.044715
      %v1403 = vmul.f32 %v1371, 0.044715
      %v1404 = vmul.f32 %v1372, 0.044715
      %v1405 = vmul.f32 %v1373, 0.044715
      %v1406 = vmul.f32 %v1374, 0.044715
      %v1407 = vmul.f32 %v1375, 0.044715
      %v1408 = vmul.f32 %v1376, 0.044715
      %v1409 = vmul.f32 %v1377, 0.044715
      %v1410 = vmul.f32 %v1378, 0.044715
      %v1411 = vadd.f32 %v1220, %v1379
      %v1412 = vadd.f32 %v1223, %v1380
      %v1413 = vadd.f32 %v1226, %v1381
      %v1414 = vadd.f32 %v1229, %v1382
      %v1415 = vadd.f32 %v1232, %v1383
      %v1416 = vadd.f32 %v1235, %v1384
      %v1417 = vadd.f32 %v1238, %v1385
      %v1418 = vadd.f32 %v1241, %v1386
      %v1419 = vadd.f32 %v1244, %v1387
      %v1420 = vadd.f32 %v1247, %v1388
      %v1421 = vadd.f32 %v1250, %v1389
      %v1422 = vadd.f32 %v1253, %v1390
      %v1423 = vadd.f32 %v1256, %v1391
      %v1424 = vadd.f32 %v1259, %v1392
      %v1425 = vadd.f32 %v1262, %v1393
      %v1426 = vadd.f32 %v1265, %v1394
      %v1427 = vadd.f32 %v1268, %v1395
      %v1428 = vadd.f32 %v1271, %v1396
      %v1429 = vadd.f32 %v1274, %v1397
      %v1430 = vadd.f32 %v1277, %v1398
      %v1431 = vadd.f32 %v1280, %v1399
      %v1432 = vadd.f32 %v1283, %v1400
      %v1433 = vadd.f32 %v1286, %v1401
      %v1434 = vadd.f32 %v1289, %v1402
      %v1435 = vadd.f32 %v1292, %v1403
      %v1436 = vadd.f32 %v1295, %v1404
      %v1437 = vadd.f32 %v1298, %v1405
      %v1438 = vadd.f32 %v1301, %v1406
      %v1439 = vadd.f32 %v1304, %v1407
      %v1440 = vadd.f32 %v1307, %v1408
      %v1441 = vadd.f32 %v1310, %v1409
      %v1442 = vadd.f32 %v1313, %v1410
      %v1443 = vmul.f32 %v1411, 0.7978846
      %v1444 = vmul.f32 %v1412, 0.7978846
      %v1445 = vmul.f32 %v1413, 0.7978846
      %v1446 = vmul.f32 %v1414, 0.7978846
      %v1447 = vmul.f32 %v1415, 0.7978846
      %v1448 = vmul.f32 %v1416, 0.7978846
      %v1449 = vmul.f32 %v1417, 0.7978846
      %v1450 = vmul.f32 %v1418, 0.7978846
      %v1451 = vmul.f32 %v1419, 0.7978846
      %v1452 = vmul.f32 %v1420, 0.7978846
      %v1453 = vmul.f32 %v1421, 0.7978846
      %v1454 = vmul.f32 %v1422, 0.7978846
      %v1455 = vmul.f32 %v1423, 0.7978846
      %v1456 = vmul.f32 %v1424, 0.7978846
      %v1457 = vmul.f32 %v1425, 0.7978846
      %v1458 = vmul.f32 %v1426, 0.7978846
      %v1459 = vmul.f32 %v1427, 0.7978846
      %v1460 = vmul.f32 %v1428, 0.7978846
      %v1461 = vmul.f32 %v1429, 0.7978846
      %v1462 = vmul.f32 %v1430, 0.7978846
      %v1463 = vmul.f32 %v1431, 0.7978846
      %v1464 = vmul.f32 %v1432, 0.7978846
      %v1465 = vmul.f32 %v1433, 0.7978846
      %v1466 = vmul.f32 %v1434, 0.7978846
      %v1467 = vmul.f32 %v1435, 0.7978846
      %v1468 = vmul.f32 %v1436, 0.7978846
      %v1469 = vmul.f32 %v1437, 0.7978846
      %v1470 = vmul.f32 %v1438, 0.7978846
      %v1471 = vmul.f32 %v1439, 0.7978846
      %v1472 = vmul.f32 %v1440, 0.7978846
      %v1473 = vmul.f32 %v1441, 0.7978846
      %v1474 = vmul.f32 %v1442, 0.7978846
      %v1475 = vtanh.pop %v1443
      %v1476 = vtanh.pop %v1444
      %v1477 = vtanh.pop %v1445
      %v1478 = vtanh.pop %v1446
      %v1479 = vtanh.pop %v1447
      %v1480 = vtanh.pop %v1448
      %v1481 = vtanh.pop %v1449
      %v1482 = vtanh.pop %v1450
      %v1483 = vtanh.pop %v1451
      %v1484 = vtanh.pop %v1452
      %v1485 = vtanh.pop %v1453
      %v1486 = vtanh.pop %v1454
      %v1487 = vtanh.pop %v1455
      %v1488 = vtanh.pop %v1456
      %v1489 = vtanh.pop %v1457
      %v1490 = vtanh.pop %v1458
      %v1491 = vtanh.pop %v1459
      %v1492 = vtanh.pop %v1460
      %v1493 = vtanh.pop %v1461
      %v1494 = vtanh.pop %v1462
      %v1495 = vtanh.pop %v1463
      %v1496 = vtanh.pop %v1464
      %v1497 = vtanh.pop %v1465
      %v1498 = vtanh.pop %v1466
      %v1499 = vtanh.pop %v1467
      %v1500 = vtanh.pop %v1468
      %v1501 = vtanh.pop %v1469
      %v1502 = vtanh.pop %v1470
      %v1503 = vtanh.pop %v1471
      %v1504 = vtanh.pop %v1472
      %v1505 = vtanh.pop %v1473
      %v1506 = vtanh.pop %v1474
      %v1507 = vadd.f32 %v1475, 1.0
      %v1508 = vadd.f32 %v1476, 1.0
      %v1509 = vadd.f32 %v1477, 1.0
      %v1510 = vadd.f32 %v1478, 1.0
      %v1511 = vadd.f32 %v1479, 1.0
      %v1512 = vadd.f32 %v1480, 1.0
      %v1513 = vadd.f32 %v1481, 1.0
      %v1514 = vadd.f32 %v1482, 1.0
      %v1515 = vadd.f32 %v1483, 1.0
      %v1516 = vadd.f32 %v1484, 1.0
      %v1517 = vadd.f32 %v1485, 1.0
      %v1518 = vadd.f32 %v1486, 1.0
      %v1519 = vadd.f32 %v1487, 1.0
      %v1520 = vadd.f32 %v1488, 1.0
      %v1521 = vadd.f32 %v1489, 1.0
      %v1522 = vadd.f32 %v1490, 1.0
      %v1523 = vadd.f32 %v1491, 1.0
      %v1524 = vadd.f32 %v1492, 1.0
      %v1525 = vadd.f32 %v1493, 1.0
      %v1526 = vadd.f32 %v1494, 1.0
      %v1527 = vadd.f32 %v1495, 1.0
      %v1528 = vadd.f32 %v1496, 1.0
      %v1529 = vadd.f32 %v1497, 1.0
      %v1530 = vadd.f32 %v1498, 1.0
      %v1531 = vadd.f32 %v1499, 1.0
      %v1532 = vadd.f32 %v1500, 1.0
      %v1533 = vadd.f32 %v1501, 1.0
      %v1534 = vadd.f32 %v1502, 1.0
      %v1535 = vadd.f32 %v1503, 1.0
      %v1536 = vadd.f32 %v1504, 1.0
      %v1537 = vadd.f32 %v1505, 1.0
      %v1538 = vadd.f32 %v1506, 1.0
      %v1539 = vmul.f32 %v1507, 0.5
      %v1540 = vmul.f32 %v1508, 0.5
      %v1541 = vmul.f32 %v1509, 0.5
      %v1542 = vmul.f32 %v1510, 0.5
      %v1543 = vmul.f32 %v1511, 0.5
      %v1544 = vmul.f32 %v1512, 0.5
      %v1545 = vmul.f32 %v1513, 0.5
      %v1546 = vmul.f32 %v1514, 0.5
      %v1547 = vmul.f32 %v1515, 0.5
      %v1548 = vmul.f32 %v1516, 0.5
      %v1549 = vmul.f32 %v1517, 0.5
      %v1550 = vmul.f32 %v1518, 0.5
      %v1551 = vmul.f32 %v1519, 0.5
      %v1552 = vmul.f32 %v1520, 0.5
      %v1553 = vmul.f32 %v1521, 0.5
      %v1554 = vmul.f32 %v1522, 0.5
      %v1555 = vmul.f32 %v1523, 0.5
      %v1556 = vmul.f32 %v1524, 0.5
      %v1557 = vmul.f32 %v1525, 0.5
      %v1558 = vmul.f32 %v1526, 0.5
      %v1559 = vmul.f32 %v1527, 0.5
      %v1560 = vmul.f32 %v1528, 0.5
      %v1561 = vmul.f32 %v1529, 0.5
      %v1562 = vmul.f32 %v1530, 0.5
      %v1563 = vmul.f32 %v1531, 0.5
      %v1564 = vmul.f32 %v1532, 0.5
      %v1565 = vmul.f32 %v1533, 0.5
      %v1566 = vmul.f32 %v1534, 0.5
      %v1567 = vmul.f32 %v1535, 0.5
      %v1568 = vmul.f32 %v1536, 0.5
      %v1569 = vmul.f32 %v1537, 0.5
      %v1570 = vmul.f32 %v1538, 0.5
      %v1571 = vmul.f32 %v1220, %v1539
      %v1572 = vmul.f32 %v1223, %v1540
      %v1573 = vmul.f32 %v1226, %v1541
      %v1574 = vmul.f32 %v1229, %v1542
      %v1575 = vmul.f32 %v1232, %v1543
      %v1576 = vmul.f32 %v1235, %v1544
      %v1577 = vmul.f32 %v1238, %v1545
      %v1578 = vmul.f32 %v1241, %v1546
      %v1579 = vmul.f32 %v1244, %v1547
      %v1580 = vmul.f32 %v1247, %v1548
      %v1581 = vmul.f32 %v1250, %v1549
      %v1582 = vmul.f32 %v1253, %v1550
      %v1583 = vmul.f32 %v1256, %v1551
      %v1584 = vmul.f32 %v1259, %v1552
      %v1585 = vmul.f32 %v1262, %v1553
      %v1586 = vmul.f32 %v1265, %v1554
      %v1587 = vmul.f32 %v1268, %v1555
      %v1588 = vmul.f32 %v1271, %v1556
      %v1589 = vmul.f32 %v1274, %v1557
      %v1590 = vmul.f32 %v1277, %v1558
      %v1591 = vmul.f32 %v1280, %v1559
      %v1592 = vmul.f32 %v1283, %v1560
      %v1593 = vmul.f32 %v1286, %v1561
      %v1594 = vmul.f32 %v1289, %v1562
      %v1595 = vmul.f32 %v1292, %v1563
      %v1596 = vmul.f32 %v1295, %v1564
      %v1597 = vmul.f32 %v1298, %v1565
      %v1598 = vmul.f32 %v1301, %v1566
      %v1599 = vmul.f32 %v1304, %v1567
      %v1600 = vmul.f32 %v1307, %v1568
      %v1601 = vmul.f32 %v1310, %v1569
      %v1602 = vmul.f32 %v1313, %v1570
      %v1603 = vld [vmem:[%s5] sm:$0xff]
      %v1604 = vld [vmem:[%s5 + $0x8] sm:$0xff]
      %v1605 = vld [vmem:[%s5 + $0x10] sm:$0xff]
      %v1606 = vld [vmem:[%s5 + $0x18] sm:$0xff]
      %v1607 = vld [vmem:[%s5 + $0x20] sm:$0xff]
      %v1608 = vld [vmem:[%s5 + $0x28] sm:$0xff]
      %v1609 = vld [vmem:[%s5 + $0x30] sm:$0xff]
      %v1610 = vld [vmem:[%s5 + $0x38] sm:$0xff]
      %v1611 = vld [vmem:[%s5 + $0x40] sm:$0xff]
      %v1612 = vld [vmem:[%s5 + $0x48] sm:$0xff]
      %v1613 = vld [vmem:[%s5 + $0x50] sm:$0xff]
      %v1614 = vld [vmem:[%s5 + $0x58] sm:$0xff]
      %v1615 = vld [vmem:[%s5 + $0x60] sm:$0xff]
      %v1616 = vld [vmem:[%s5 + $0x68] sm:$0xff]
      %v1617 = vld [vmem:[%s5 + $0x70] sm:$0xff]
      %v1618 = vld [vmem:[%s5 + $0x78] sm:$0xff]
      %v1619 = vld [vmem:[%s6] sm:$0x1]
      %v1621 = vperm.slane %v1619, 0
      %1623 = vmatpush.msra.mxu0 %v1618
      %1624 = vmatpush.msra.mxu0 %v1617
      %1625 = vmatpush.msra.mxu0 %v1616
      %1626 = vmatpush.msra.mxu0 %v1615
      %1627 = vmatpush.msra.mxu0 %v1614
      %1628 = vmatpush.msra.mxu0 %v1613
      %1629 = vmatpush.msra.mxu0 %v1612
      %1630 = vmatpush.msra.mxu0 %v1611
      %1631 = vmatpush.msra.mxu0 %v1610
      %1632 = vmatpush.msra.mxu0 %v1609
      %1633 = vmatpush.msra.mxu0 %v1608
      %1634 = vmatpush.msra.mxu0 %v1607
      %1635 = vmatpush.msra.mxu0 %v1606
      %1636 = vmatpush.msra.mxu0 %v1605
      %1637 = vmatpush.msra.mxu0 %v1604
      %1638 = vmatpush.msra.mxu0 %v1603
      %1639 = vmatmul.f32.gmra.mxu0 %v1571
      %v1640 = vpop.f32.mrf.mxu0
      %v1641 = vadd.f32 %v1621, %v1640
      %1642 = vmatmul.f32.gmra.mxu0 %v1572
      %v1643 = vpop.f32.mrf.mxu0
      %v1644 = vadd.f32 %v1621, %v1643
      %1645 = vmatmul.f32.gmra.mxu0 %v1573
      %v1646 = vpop.f32.mrf.mxu0
      %v1647 = vadd.f32 %v1621, %v1646
      %1648 = vmatmul.f32.gmra.mxu0 %v1574
      %v1649 = vpop.f32.mrf.mxu0
      %v1650 = vadd.f32 %v1621, %v1649
      %1651 = vmatmul.f32.gmra.mxu0 %v1575
      %v1652 = vpop.f32.mrf.mxu0
      %v1653 = vadd.f32 %v1621, %v1652
      %1654 = vmatmul.f32.gmra.mxu0 %v1576
      %v1655 = vpop.f32.mrf.mxu0
      %v1656 = vadd.f32 %v1621, %v1655
      %1657 = vmatmul.f32.gmra.mxu0 %v1577
      %v1658 = vpop.f32.mrf.mxu0
      %v1659 = vadd.f32 %v1621, %v1658
      %1660 = vmatmul.f32.gmra.mxu0 %v1578
      %v1661 = vpop.f32.mrf.mxu0
      %v1662 = vadd.f32 %v1621, %v1661
      %1663 = vmatmul.f32.gmra.mxu0 %v1579
      %v1664 = vpop.f32.mrf.mxu0
      %v1665 = vadd.f32 %v1621, %v1664
      %1666 = vmatmul.f32.gmra.mxu0 %v1580
      %v1667 = vpop.f32.mrf.mxu0
      %v1668 = vadd.f32 %v1621, %v1667
      %1669 = vmatmul.f32.gmra.mxu0 %v1581
      %v1670 = vpop.f32.mrf.mxu0
      %v1671 = vadd.f32 %v1621, %v1670
      %1672 = vmatmul.f32.gmra.mxu0 %v1582
      %v1673 = vpop.f32.mrf.mxu0
      %v1674 = vadd.f32 %v1621, %v1673
      %1675 = vmatmul.f32.gmra.mxu0 %v1583
      %v1676 = vpop.f32.mrf.mxu0
      %v1677 = vadd.f32 %v1621, %v1676
      %1678 = vmatmul.f32.gmra.mxu0 %v1584
      %v1679 = vpop.f32.mrf.mxu0
      %v1680 = vadd.f32 %v1621, %v1679
      %1681 = vmatmul.f32.gmra.mxu0 %v1585
      %v1682 = vpop.f32.mrf.mxu0
      %v1683 = vadd.f32 %v1621, %v1682
      %1684 = vmatmul.f32.gmra.mxu0 %v1586
      %v1685 = vpop.f32.mrf.mxu0
      %v1686 = vadd.f32 %v1621, %v1685
      %1687 = vmatmul.f32.gmra.mxu0 %v1587
      %v1688 = vpop.f32.mrf.mxu0
      %v1689 = vadd.f32 %v1621, %v1688
      %1690 = vmatmul.f32.gmra.mxu0 %v1588
      %v1691 = vpop.f32.mrf.mxu0
      %v1692 = vadd.f32 %v1621, %v1691
      %1693 = vmatmul.f32.gmra.mxu0 %v1589
      %v1694 = vpop.f32.mrf.mxu0
      %v1695 = vadd.f32 %v1621, %v1694
      %1696 = vmatmul.f32.gmra.mxu0 %v1590
      %v1697 = vpop.f32.mrf.mxu0
      %v1698 = vadd.f32 %v1621, %v1697
      %1699 = vmatmul.f32.gmra.mxu0 %v1591
      %v1700 = vpop.f32.mrf.mxu0
      %v1701 = vadd.f32 %v1621, %v1700
      %1702 = vmatmul.f32.gmra.mxu0 %v1592
      %v1703 = vpop.f32.mrf.mxu0
      %v1704 = vadd.f32 %v1621, %v1703
      %1705 = vmatmul.f32.gmra.mxu0 %v1593
      %v1706 = vpop.f32.mrf.mxu0
      %v1707 = vadd.f32 %v1621, %v1706
      %1708 = vmatmul.f32.gmra.mxu0 %v1594
      %v1709 = vpop.f32.mrf.mxu0
      %v1710 = vadd.f32 %v1621, %v1709
      %1711 = vmatmul.f32.gmra.mxu0 %v1595
      %v1712 = vpop.f32.mrf.mxu0
      %v1713 = vadd.f32 %v1621, %v1712
      %1714 = vmatmul.f32.gmra.mxu0 %v1596
      %v1715 = vpop.f32.mrf.mxu0
      %v1716 = vadd.f32 %v1621, %v1715
      %1717 = vmatmul.f32.gmra.mxu0 %v1597
      %v1718 = vpop.f32.mrf.mxu0
      %v1719 = vadd.f32 %v1621, %v1718
      %1720 = vmatmul.f32.gmra.mxu0 %v1598
      %v1721 = vpop.f32.mrf.mxu0
      %v1722 = vadd.f32 %v1621, %v1721
      %1723 = vmatmul.f32.gmra.mxu0 %v1599
      %v1724 = vpop.f32.mrf.mxu0
      %v1725 = vadd.f32 %v1621, %v1724
      %1726 = vmatmul.f32.gmra.mxu0 %v1600
      %v1727 = vpop.f32.mrf.mxu0
      %v1728 = vadd.f32 %v1621, %v1727
      %1729 = vmatmul.f32.gmra.mxu0 %v1601
      %v1730 = vpop.f32.mrf.mxu0
      %v1731 = vadd.f32 %v1621, %v1730
      %1732 = vmatmul.f32.gmra.mxu0 %v1602
      %v1733 = vpop.f32.mrf.mxu0
      %v1734 = vadd.f32 %v1621, %v1733
      %1735 = vdwg.mxu0
      %v1736 = vadd.f32 %v282, %v1641
      %v1737 = vadd.f32 %v283, %v1644
      %v1738 = vadd.f32 %v284, %v1647
      %v1739 = vadd.f32 %v285, %v1650
      %v1740 = vadd.f32 %v286, %v1653
      %v1741 = vadd.f32 %v287, %v1656
      %v1742 = vadd.f32 %v288, %v1659
      %v1743 = vadd.f32 %v289, %v1662
      %v1744 = vadd.f32 %v290, %v1665
      %v1745 = vadd.f32 %v291, %v1668
      %v1746 = vadd.f32 %v292, %v1671
      %v1747 = vadd.f32 %v293, %v1674
      %v1748 = vadd.f32 %v294, %v1677
      %v1749 = vadd.f32 %v295, %v1680
      %v1750 = vadd.f32 %v296, %v1683
      %v1751 = vadd.f32 %v297, %v1686
      %v1752 = vadd.f32 %v298, %v1689
      %v1753 = vadd.f32 %v299, %v1692
      %v1754 = vadd.f32 %v300, %v1695
      %v1755 = vadd.f32 %v301, %v1698
      %v1756 = vadd.f32 %v302, %v1701
      %v1757 = vadd.f32 %v303, %v1704
      %v1758 = vadd.f32 %v304, %v1707
      %v1759 = vadd.f32 %v305, %v1710
      %v1760 = vadd.f32 %v306, %v1713
      %v1761 = vadd.f32 %v307, %v1716
      %v1762 = vadd.f32 %v308, %v1719
      %v1763 = vadd.f32 %v309, %v1722
      %v1764 = vadd.f32 %v310, %v1725
      %v1765 = vadd.f32 %v311, %v1728
      %v1766 = vadd.f32 %v312, %v1731
      %v1767 = vadd.f32 %v313, %v1734
      %1768 = vst.msk [vmem:[%s280] sm:$0xff] %vm314, %v1736
      %1769 = vst.msk [vmem:[%s280 + $0x8] sm:$0xff] %vm314, %v1737
      %1770 = vst.msk [vmem:[%s280 + $0x10] sm:$0xff] %vm314, %v1738
      %1771 = vst.msk [vmem:[%s280 + $0x18] sm:$0xff] %vm314, %v1739
      %1772 = vst.msk [vmem:[%s280 + $0x20] sm:$0xff] %vm314, %v1740
      %1773 = vst.msk [vmem:[%s280 + $0x28] sm:$0xff] %vm314, %v1741
      %1774 = vst.msk [vmem:[%s280 + $0x30] sm:$0xff] %vm314, %v1742
      %1775 = vst.msk [vmem:[%s280 + $0x38] sm:$0xff] %vm314, %v1743
      %1776 = vst.msk [vmem:[%s280 + $0x40] sm:$0xff] %vm314, %v1744
      %1777 = vst.msk [vmem:[%s280 + $0x48] sm:$0xff] %vm314, %v1745
      %1778 = vst.msk [vmem:[%s280 + $0x50] sm:$0xff] %vm314, %v1746
      %1779 = vst.msk [vmem:[%s280 + $0x58] sm:$0xff] %vm314, %v1747
      %1780 = vst.msk [vmem:[%s280 + $0x60] sm:$0xff] %vm314, %v1748
      %1781 = vst.msk [vmem:[%s280 + $0x68] sm:$0xff] %vm314, %v1749
      %1782 = vst.msk [vmem:[%s280 + $0x70] sm:$0xff] %vm314, %v1750
      %1783 = vst.msk [vmem:[%s280 + $0x78] sm:$0xff] %vm314, %v1751
      %1784 = vst.msk [vmem:[%s280 + $0x80] sm:$0xff] %vm314, %v1752
      %1785 = vst.msk [vmem:[%s280 + $0x88] sm:$0xff] %vm314, %v1753
      %1786 = vst.msk [vmem:[%s280 + $0x90] sm:$0xff] %vm314, %v1754
      %1787 = vst.msk [vmem:[%s280 + $0x98] sm:$0xff] %vm314, %v1755
      %1788 = vst.msk [vmem:[%s280 + $0xa0] sm:$0xff] %vm314, %v1756
      %1789 = vst.msk [vmem:[%s280 + $0xa8] sm:$0xff] %vm314, %v1757
      %1790 = vst.msk [vmem:[%s280 + $0xb0] sm:$0xff] %vm314, %v1758
      %1791 = vst.msk [vmem:[%s280 + $0xb8] sm:$0xff] %vm314, %v1759
      %1792 = vst.msk [vmem:[%s280 + $0xc0] sm:$0xff] %vm314, %v1760
      %1793 = vst.msk [vmem:[%s280 + $0xc8] sm:$0xff] %vm314, %v1761
      %1794 = vst.msk [vmem:[%s280 + $0xd0] sm:$0xff] %vm314, %v1762
      %1795 = vst.msk [vmem:[%s280 + $0xd8] sm:$0xff] %vm314, %v1763
      %1796 = vst.msk [vmem:[%s280 + $0xe0] sm:$0xff] %vm314, %v1764
      %1797 = vst.msk [vmem:[%s280 + $0xe8] sm:$0xff] %vm314, %v1765
      %1798 = vst.msk [vmem:[%s280 + $0xf0] sm:$0xff] %vm314, %v1766
      %1799 = vst.msk [vmem:[%s280 + $0xf8] sm:$0xff] %vm314, %v1767
      %s1800 = smul.u32 32, %s18
      %p1801 = scmp.lt.s32.totalorder %s1800, 63
      %s1802 = scalar_select %p1801, %s1800, 63
      %s1803 = smul.addr %s1802, 8
      %s1804 = scalar_lea.vmem %s7, %s1803
      // Predicated region
      $region49: #{swin_block_forward.3} parent=47 // pred_check
        %p1805 = pneg %p188
      $region50: #{swin_block_forward.3} parent=47 // pred_check_branch
        %1807 = sbr.rel (%p1805) target = $region52
      $region51: #{swin_block_forward.3} parent=47 // pred_region
        %s1808 = smul.u32 32, %s18
      $region52: #{swin_block_forward.3} parent=47 // pred_fallthru
        _
    $region48: #{swin_block_forward.3} parent=5 // pred_fallthru
      _
    %p1809 = scmp.le.s32.totalorder 2, %s13
    // Predicated region
    $region53: #{swin_block_forward.3} parent=5 // pred_check
      %p1810 = pneg %p1809
    $region54: #{swin_block_forward.3} parent=5 // pred_check_branch
      %1812 = sbr.rel (%p1810) target = $region56
    $region55: #{swin_block_forward.3} parent=5 // pred_region
      %s1813 = ssub.s32 %s13, 2
      // Predicated region
      $region57: #{swin_block_forward.3} parent=55 // pred_check
        %p1814 = pneg %p194
      $region58: #{swin_block_forward.3} parent=55 // pred_check_branch
        %1816 = sbr.rel (%p1814) target = $region60
      $region59: #{swin_block_forward.3} parent=55 // pred_region
        %s1817 = smul.u32 32, %s19
        %p1818 = scmp.lt.s32.totalorder %s1817, 63
        %s1819 = scalar_select %p1818, %s1817, 63
        %s1820 = smul.addr %s1819, 8
        %s1821 = scalar_lea.vmem %s7, %s1820
      $region60: #{swin_block_forward.3} parent=55 // pred_fallthru
        _
    $region56: #{swin_block_forward.3} parent=5 // pred_fallthru
      _
  $region6: #{swin_block_forward.3} parent=0 // loop_footer
    %s17 = sadd.s32 1, %s13
  $region7: #{swin_block_forward.3} parent=0 // loop_footer_branch
    %12 = sbr.rel target = $region3
  $region8: #{swin_block_forward.3} parent=0 // loop_exit
    _

// kernel: swin_block_forward.2
$region0: #{swin_block_forward.2}
  #allocation0 [shape = 'u32[]', space=smem, size = 0x4, offset = 0x4, fixed_abs, tag = 'smem constant byte address 0x4 - core index']
  #allocation1 [shape = 'u32[72,128]{1,0:T(1,128)}', space=vmem, size = 0x9000, scoped, tag = 'internal scratch']
  %s0 = inlined_call_operand.vmem [shape: f32[8,64,32], index: 0, kind: input, shape index: {}]
  %s1 = inlined_call_operand.vmem [shape: f32[1,32], index: 1, kind: input, shape index: {}]
  %s2 = inlined_call_operand.vmem [shape: f32[1,32], index: 2, kind: input, shape index: {}]
  %s3 = inlined_call_operand.vmem [shape: f32[32,96], index: 3, kind: input, shape index: {}]
  %s4 = inlined_call_operand.vmem [shape: f32[1,96], index: 4, kind: input, shape index: {}]
  %s5 = inlined_call_operand.vmem [shape: f32[4,1,64,64], index: 5, kind: input, shape index: {}]
  %s6 = inlined_call_operand.vmem [shape: f32[32,32], index: 6, kind: input, shape index: {}]
  %s7 = inlined_call_operand.vmem [shape: f32[1,32], index: 7, kind: input, shape index: {}]
  %s8 = inlined_call_operand.vmem [shape: f32[8,64,32], index: 8, kind: output, shape index: {}]
  %s9 = sld [smem:[#allocation0]]
  $region65: #{swin_block_forward.2} parent=0
    _
  %s11 = ssub.s32 1, %s9
  %s12 = scalar_select 0, %s11, %s9
  loop: start=0, step=1, limit=4
  $region2: #{swin_block_forward.2} parent=0 // loop_pre_header
    _
  $region3: #{swin_block_forward.2} parent=0 // loop_header
    %s14 = sphi 0, %s18
    %p15 = scmp.ge.s32.totalorder %s14, 4
    %s24 = sphi 0, %s26
    %s27 = sphi 0, %s24
    %s28 = sphi 0, %s27
    %s44 = sphi 0, %s28
    %s48 = sphi 0, %s48
    %s50 = sphi 0, %s48
    %s51 = sphi 0, %s50
    %s65 = sphi 0, %s51
    %s69 = sphi 0, %s69
    %s71 = sphi 0, %s69
    %s72 = sphi 0, %s71
    %s86 = sphi 0, %s72
    %s90 = sphi 0, %s90
    %s92 = sphi 0, %s90
    %s93 = sphi 0, %s92
    %s107 = sphi 0, %s93
    %s111 = sphi 0, %s111
    %s113 = sphi 0, %s111
    %s114 = sphi 0, %s113
    %s128 = sphi 0, %s114
    %s132 = sphi 0, %s132
    %s134 = sphi 0, %s132
    %s135 = sphi 0, %s134
    %s149 = sphi 0, %s135
    %s153 = sphi 0, %s153
    %s155 = sphi 0, %s153
    %s156 = sphi 0, %s155
    %s170 = sphi 0, %s156
    %s174 = sphi 0, %s174
    %s176 = sphi 0, %s174
    %s177 = sphi 0, %s176
    %s191 = sphi 0, %s177
    %s197 = sphi 0, %s199
    %s200 = sphi 0, %s197
    %s201 = sphi 0, %s200
    %s217 = sphi 0, %s201
  $region4: #{swin_block_forward.2} parent=0 // loop_header_branch
    %17 = sbr.rel (%p15) target = $region8
  $region5: #{swin_block_forward.2} parent=0 // loop_body
    %s19 = ssub.s32 %s14, 1
    %s20 = ssub.s32 %s14, 2
    %s21 = sadd.s32 %s14, 1
    %s22 = ssub.s32 %s14, %s21
    %p23 = scmp.eq.s32.totalorder %s22, 0
    %s25 = sadd.s32 %s24, 1
    %s26 = scalar_select %p23, %s24, %s25
    %p29 = pneg %p23
    %p30 = scmp.eq.s32.totalorder %s14, 1
    %p31 = por %p29, %p30
    %p32 = scmp.ne.s32.totalorder %s24, %s27
    %p33 = scmp.eq.s32.totalorder %s14, 0
    %p34 = por %p32, %p33
    %p35 = scmp.ne.s32.totalorder %s24, %s27
    %p36 = scmp.eq.s32.totalorder %s19, 1
    %p37 = por %p35, %p36
    %p38 = scmp.ne.s32.totalorder %s27, %s28
    %p39 = scmp.eq.s32.totalorder %s19, 0
    %p40 = por %p38, %p39
    %p41 = scmp.ne.s32.totalorder %s27, %s28
    %p42 = scmp.eq.s32.totalorder %s20, 1
    %p43 = por %p41, %p42
    %p45 = scmp.ne.s32.totalorder %s28, %s44
    %p46 = scmp.eq.s32.totalorder %s20, 0
    %p47 = por %p45, %p46
    %s49 = sadd.s32 %s48, 1
    %p52 = scmp.eq.s32.totalorder %s14, 1
    %p53 = scmp.ne.s32.totalorder %s48, %s50
    %p54 = scmp.eq.s32.totalorder %s14, 0
    %p55 = por %p53, %p54
    %p56 = scmp.ne.s32.totalorder %s48, %s50
    %p57 = scmp.eq.s32.totalorder %s19, 1
    %p58 = por %p56, %p57
    %p59 = scmp.ne.s32.totalorder %s50, %s51
    %p60 = scmp.eq.s32.totalorder %s19, 0
    %p61 = por %p59, %p60
    %p62 = scmp.ne.s32.totalorder %s50, %s51
    %p63 = scmp.eq.s32.totalorder %s20, 1
    %p64 = por %p62, %p63
    %p66 = scmp.ne.s32.totalorder %s51, %s65
    %p67 = scmp.eq.s32.totalorder %s20, 0
    %p68 = por %p66, %p67
    %s70 = sadd.s32 %s69, 1
    %p73 = scmp.eq.s32.totalorder %s14, 1
    %p74 = scmp.ne.s32.totalorder %s69, %s71
    %p75 = scmp.eq.s32.totalorder %s14, 0
    %p76 = por %p74, %p75
    %p77 = scmp.ne.s32.totalorder %s69, %s71
    %p78 = scmp.eq.s32.totalorder %s19, 1
    %p79 = por %p77, %p78
    %p80 = scmp.ne.s32.totalorder %s71, %s72
    %p81 = scmp.eq.s32.totalorder %s19, 0
    %p82 = por %p80, %p81
    %p83 = scmp.ne.s32.totalorder %s71, %s72
    %p84 = scmp.eq.s32.totalorder %s20, 1
    %p85 = por %p83, %p84
    %p87 = scmp.ne.s32.totalorder %s72, %s86
    %p88 = scmp.eq.s32.totalorder %s20, 0
    %p89 = por %p87, %p88
    %s91 = sadd.s32 %s90, 1
    %p94 = scmp.eq.s32.totalorder %s14, 1
    %p95 = scmp.ne.s32.totalorder %s90, %s92
    %p96 = scmp.eq.s32.totalorder %s14, 0
    %p97 = por %p95, %p96
    %p98 = scmp.ne.s32.totalorder %s90, %s92
    %p99 = scmp.eq.s32.totalorder %s19, 1
    %p100 = por %p98, %p99
    %p101 = scmp.ne.s32.totalorder %s92, %s93
    %p102 = scmp.eq.s32.totalorder %s19, 0
    %p103 = por %p101, %p102
    %p104 = scmp.ne.s32.totalorder %s92, %s93
    %p105 = scmp.eq.s32.totalorder %s20, 1
    %p106 = por %p104, %p105
    %p108 = scmp.ne.s32.totalorder %s93, %s107
    %p109 = scmp.eq.s32.totalorder %s20, 0
    %p110 = por %p108, %p109
    %s112 = sadd.s32 %s111, 1
    %p115 = scmp.eq.s32.totalorder %s14, 1
    %p116 = scmp.ne.s32.totalorder %s111, %s113
    %p117 = scmp.eq.s32.totalorder %s14, 0
    %p118 = por %p116, %p117
    %p119 = scmp.ne.s32.totalorder %s111, %s113
    %p120 = scmp.eq.s32.totalorder %s19, 1
    %p121 = por %p119, %p120
    %p122 = scmp.ne.s32.totalorder %s113, %s114
    %p123 = scmp.eq.s32.totalorder %s19, 0
    %p124 = por %p122, %p123
    %p125 = scmp.ne.s32.totalorder %s113, %s114
    %p126 = scmp.eq.s32.totalorder %s20, 1
    %p127 = por %p125, %p126
    %p129 = scmp.ne.s32.totalorder %s114, %s128
    %p130 = scmp.eq.s32.totalorder %s20, 0
    %p131 = por %p129, %p130
    %s133 = sadd.s32 %s132, 1
    %p136 = scmp.eq.s32.totalorder %s14, 1
    %p137 = scmp.ne.s32.totalorder %s132, %s134
    %p138 = scmp.eq.s32.totalorder %s14, 0
    %p139 = por %p137, %p138
    %p140 = scmp.ne.s32.totalorder %s132, %s134
    %p141 = scmp.eq.s32.totalorder %s19, 1
    %p142 = por %p140, %p141
    %p143 = scmp.ne.s32.totalorder %s134, %s135
    %p144 = scmp.eq.s32.totalorder %s19, 0
    %p145 = por %p143, %p144
    %p146 = scmp.ne.s32.totalorder %s134, %s135
    %p147 = scmp.eq.s32.totalorder %s20, 1
    %p148 = por %p146, %p147
    %p150 = scmp.ne.s32.totalorder %s135, %s149
    %p151 = scmp.eq.s32.totalorder %s20, 0
    %p152 = por %p150, %p151
    %s154 = sadd.s32 %s153, 1
    %p157 = scmp.eq.s32.totalorder %s14, 1
    %p158 = scmp.ne.s32.totalorder %s153, %s155
    %p159 = scmp.eq.s32.totalorder %s14, 0
    %p160 = por %p158, %p159
    %p161 = scmp.ne.s32.totalorder %s153, %s155
    %p162 = scmp.eq.s32.totalorder %s19, 1
    %p163 = por %p161, %p162
    %p164 = scmp.ne.s32.totalorder %s155, %s156
    %p165 = scmp.eq.s32.totalorder %s19, 0
    %p166 = por %p164, %p165
    %p167 = scmp.ne.s32.totalorder %s155, %s156
    %p168 = scmp.eq.s32.totalorder %s20, 1
    %p169 = por %p167, %p168
    %p171 = scmp.ne.s32.totalorder %s156, %s170
    %p172 = scmp.eq.s32.totalorder %s20, 0
    %p173 = por %p171, %p172
    %s175 = sadd.s32 %s174, 1
    %p178 = scmp.eq.s32.totalorder %s14, 1
    %p179 = scmp.ne.s32.totalorder %s174, %s176
    %p180 = scmp.eq.s32.totalorder %s14, 0
    %p181 = por %p179, %p180
    %p182 = scmp.ne.s32.totalorder %s174, %s176
    %p183 = scmp.eq.s32.totalorder %s19, 1
    %p184 = por %p182, %p183
    %p185 = scmp.ne.s32.totalorder %s176, %s177
    %p186 = scmp.eq.s32.totalorder %s19, 0
    %p187 = por %p185, %p186
    %p188 = scmp.ne.s32.totalorder %s176, %s177
    %p189 = scmp.eq.s32.totalorder %s20, 1
    %p190 = por %p188, %p189
    %p192 = scmp.ne.s32.totalorder %s177, %s191
    %p193 = scmp.eq.s32.totalorder %s20, 0
    %p194 = por %p192, %p193
    %s195 = ssub.s32 %s14, %s21
    %p196 = scmp.eq.s32.totalorder %s195, 0
    %s198 = sadd.s32 %s197, 1
    %s199 = scalar_select %p196, %s197, %s198
    %p202 = pneg %p196
    %p203 = scmp.eq.s32.totalorder %s14, 1
    %p204 = por %p202, %p203
    %p205 = scmp.ne.s32.totalorder %s197, %s200
    %p206 = scmp.eq.s32.totalorder %s14, 0
    %p207 = por %p205, %p206
    %p208 = scmp.ne.s32.totalorder %s197, %s200
    %p209 = scmp.eq.s32.totalorder %s19, 1
    %p210 = por %p208, %p209
    %p211 = scmp.ne.s32.totalorder %s200, %s201
    %p212 = scmp.eq.s32.totalorder %s19, 0
    %p213 = por %p211, %p212
    %p214 = scmp.ne.s32.totalorder %s200, %s201
    %p215 = scmp.eq.s32.totalorder %s20, 1
    %p216 = por %p214, %p215
    %p218 = scmp.ne.s32.totalorder %s201, %s217
    %p219 = scmp.eq.s32.totalorder %s20, 0
    %p220 = por %p218, %p219
    %p221 = scmp.le.s32.totalorder 1, %s14
    %p222 = scmp.lt.s32.totalorder %s14, 3
    %p223 = pnand %p221, %p222
    %p224 = pneg %p223
    // Predicated region
    $region9: #{swin_block_forward.2} parent=5 // pred_check
      _
    $region10: #{swin_block_forward.2} parent=5 // pred_check_branch
      %226 = sbr.rel (%p223) target = $region12
    $region11: #{swin_block_forward.2} parent=5 // pred_region
      %s227 = ssub.s32 %s14, 1
      // Predicated region
      $region13: #{swin_block_forward.2} parent=11 // pred_check
        %p228 = pneg %p61
      $region14: #{swin_block_forward.2} parent=11 // pred_check_branch
        %230 = sbr.rel (%p228) target = $region16
      $region15: #{swin_block_forward.2} parent=11 // pred_region
        _
      $region16: #{swin_block_forward.2} parent=11 // pred_fallthru
        _
      // Predicated region
      $region17: #{swin_block_forward.2} parent=11 // pred_check
        %p231 = pneg %p82
      $region18: #{swin_block_forward.2} parent=11 // pred_check_branch
        %233 = sbr.rel (%p231) target = $region20
      $region19: #{swin_block_forward.2} parent=11 // pred_region
        _
      $region20: #{swin_block_forward.2} parent=11 // pred_fallthru
        _
      // Predicated region
      $region21: #{swin_block_forward.2} parent=11 // pred_check
        %p234 = pneg %p103
      $region22: #{swin_block_forward.2} parent=11 // pred_check_branch
        %236 = sbr.rel (%p234) target = $region24
      $region23: #{swin_block_forward.2} parent=11 // pred_region
        _
      $region24: #{swin_block_forward.2} parent=11 // pred_fallthru
        _
      // Predicated region
      $region25: #{swin_block_forward.2} parent=11 // pred_check
        %p237 = pneg %p124
      $region26: #{swin_block_forward.2} parent=11 // pred_check_branch
        %239 = sbr.rel (%p237) target = $region28
      $region27: #{swin_block_forward.2} parent=11 // pred_region
        _
      $region28: #{swin_block_forward.2} parent=11 // pred_fallthru
        _
      // Predicated region
      $region29: #{swin_block_forward.2} parent=11 // pred_check
        %p240 = pneg %p145
      $region30: #{swin_block_forward.2} parent=11 // pred_check_branch
        %242 = sbr.rel (%p240) target = $region32
      $region31: #{swin_block_forward.2} parent=11 // pred_region
        _
      $region32: #{swin_block_forward.2} parent=11 // pred_fallthru
        _
      // Predicated region
      $region33: #{swin_block_forward.2} parent=11 // pred_check
        %p243 = pneg %p166
      $region34: #{swin_block_forward.2} parent=11 // pred_check_branch
        %245 = sbr.rel (%p243) target = $region36
      $region35: #{swin_block_forward.2} parent=11 // pred_region
        _
      $region36: #{swin_block_forward.2} parent=11 // pred_fallthru
        _
      // Predicated region
      $region37: #{swin_block_forward.2} parent=11 // pred_check
        %p246 = pneg %p187
      $region38: #{swin_block_forward.2} parent=11 // pred_check_branch
        %248 = sbr.rel (%p246) target = $region40
      $region39: #{swin_block_forward.2} parent=11 // pred_region
        _
      $region40: #{swin_block_forward.2} parent=11 // pred_fallthru
        _
    $region12: #{swin_block_forward.2} parent=5 // pred_fallthru
      _
    %p249 = scmp.lt.s32.totalorder %s14, 2
    // Predicated region
    $region41: #{swin_block_forward.2} parent=5 // pred_check
      %p250 = pneg %p249
    $region42: #{swin_block_forward.2} parent=5 // pred_check_branch
      %252 = sbr.rel (%p250) target = $region44
    $region43: #{swin_block_forward.2} parent=5 // pred_region
      // Predicated region
      $region45: #{swin_block_forward.2} parent=43 // pred_check
        %p253 = pneg %p34
      $region46: #{swin_block_forward.2} parent=43 // pred_check_branch
        %255 = sbr.rel (%p253) target = $region48
      $region47: #{swin_block_forward.2} parent=43 // pred_region
        %s256 = smul.u32 4, %s14
        %p257 = scmp.lt.s32.totalorder %s256, 7
        %s258 = scalar_select %p257, %s256, 7
        %s259 = smul.addr %s258, 8
        %s260 = smul.addr %s259, 8
        %s261 = scalar_lea.vmem %s0, %s260
        %s262 = smul.u32 4, %s14
      $region48: #{swin_block_forward.2} parent=43 // pred_fallthru
        _
    $region44: #{swin_block_forward.2} parent=5 // pred_fallthru
      _
    %p263 = scmp.le.s32.totalorder 1, %s14
    %p264 = scmp.lt.s32.totalorder %s14, 3
    %p265 = pnand %p263, %p264
    %p266 = pneg %p265
    // Predicated region
    $region49: #{swin_block_forward.2} parent=5 // pred_check
      _
    $region50: #{swin_block_forward.2} parent=5 // pred_check_branch
      %268 = sbr.rel (%p265) target = $region52
    $region51: #{swin_block_forward.2} parent=5 // pred_region
      %s269 = ssub.s32 %s14, 1
      %s270 = smul.u32 4, %s19
      %p271 = scmp.lt.s32.totalorder %s270, 7
      %s272 = scalar_select %p271, %s270, 7
      %s273 = smul.addr %s272, 8
      %s274 = smul.addr %s273, 8
      %s275 = scalar_lea.vmem %s0, %s274
      %p276 = pneg %p40
      %p277 = pneg %p37
      %p278 = pneg %p61
      %p279 = pneg %p58
      %p280 = pneg %p82
      %p281 = pneg %p79
      %p282 = pneg %p103
      %p283 = pneg %p100
      %p284 = pneg %p124
      %p285 = pneg %p121
      %p286 = pneg %p145
      %p287 = pneg %p142
      %p288 = pneg %p166
      %p289 = pneg %p163
      %p290 = pneg %p187
      %p291 = pneg %p184
      %p292 = pneg %p213
      %p293 = pneg %p210
      %s294 = smul.u32 4, %s19
      %p295 = scmp.lt.s32.totalorder %s294, 7
      %s296 = scalar_select %p295, %s294, 7
      %s297 = smul.addr %s296, 8
      %s298 = smul.addr %s297, 8
      %s299 = scalar_lea.vmem %s8, %s298
      %s300 = smul.u32 4, %s19
      %p301 = scmp.lt.s32.totalorder %s300, 7
      %s302 = scalar_select %p301, %s300, 7
      %s303 = smul.addr %s302, 8
      %s304 = smul.addr %s303, 8
      %s305 = scalar_lea.vmem %s0, %s304
      %s306 = smul.u32 4, %s19
      %s307 = smul.u32 4, %s19
      %p308 = scmp.lt.s32.totalorder %s307, 7
      %s309 = scalar_select %p308, %s307, 7
      %s310 = smul.addr %s309, 8
      %s311 = smul.addr %s310, 8
      %s312 = scalar_lea.vmem %s8, %s311
      %s313 = smul.u32 4, %s19
      %v314 = vld [vmem:[%s305] sm:$0xff]
      %v315 = vld [vmem:[%s305 + $0x8] sm:$0xff]
      %v316 = vld [vmem:[%s305 + $0x10] sm:$0xff]
      %v317 = vld [vmem:[%s305 + $0x18] sm:$0xff]
      %v318 = vld [vmem:[%s305 + $0x20] sm:$0xff]
      %v319 = vld [vmem:[%s305 + $0x28] sm:$0xff]
      %v320 = vld [vmem:[%s305 + $0x30] sm:$0xff]
      %v321 = vld [vmem:[%s305 + $0x38] sm:$0xff]
      %v322 = vld [vmem:[%s305 + $0x40] sm:$0xff]
      %v323 = vld [vmem:[%s305 + $0x48] sm:$0xff]
      %v324 = vld [vmem:[%s305 + $0x50] sm:$0xff]
      %v325 = vld [vmem:[%s305 + $0x58] sm:$0xff]
      %v326 = vld [vmem:[%s305 + $0x60] sm:$0xff]
      %v327 = vld [vmem:[%s305 + $0x68] sm:$0xff]
      %v328 = vld [vmem:[%s305 + $0x70] sm:$0xff]
      %v329 = vld [vmem:[%s305 + $0x78] sm:$0xff]
      %v330 = vld [vmem:[%s305 + $0x80] sm:$0xff]
      %v331 = vld [vmem:[%s305 + $0x88] sm:$0xff]
      %v332 = vld [vmem:[%s305 + $0x90] sm:$0xff]
      %v333 = vld [vmem:[%s305 + $0x98] sm:$0xff]
      %v334 = vld [vmem:[%s305 + $0xa0] sm:$0xff]
      %v335 = vld [vmem:[%s305 + $0xa8] sm:$0xff]
      %v336 = vld [vmem:[%s305 + $0xb0] sm:$0xff]
      %v337 = vld [vmem:[%s305 + $0xb8] sm:$0xff]
      %v338 = vld [vmem:[%s305 + $0xc0] sm:$0xff]
      %v339 = vld [vmem:[%s305 + $0xc8] sm:$0xff]
      %v340 = vld [vmem:[%s305 + $0xd0] sm:$0xff]
      %v341 = vld [vmem:[%s305 + $0xd8] sm:$0xff]
      %v342 = vld [vmem:[%s305 + $0xe0] sm:$0xff]
      %v343 = vld [vmem:[%s305 + $0xe8] sm:$0xff]
      %v344 = vld [vmem:[%s305 + $0xf0] sm:$0xff]
      %v345 = vld [vmem:[%s305 + $0xf8] sm:$0xff]
      %vm346 = vcmask 261120
      %v347 = vsel %vm346, %v314, 0.0
      %348 = vadd.xlane.f32.xlu0 %v347
      %v349 = vpop.xlane.xlu0 %348
      %v350 = vsel %vm346, %v315, 0.0
      %351 = vadd.xlane.f32.xlu0 %v350
      %v352 = vpop.xlane.xlu0 %351
      %v353 = vsel %vm346, %v316, 0.0
      %354 = vadd.xlane.f32.xlu0 %v353
      %v355 = vpop.xlane.xlu0 %354
      %v356 = vsel %vm346, %v317, 0.0
      %357 = vadd.xlane.f32.xlu0 %v356
      %v358 = vpop.xlane.xlu0 %357
      %v359 = vsel %vm346, %v318, 0.0
      %360 = vadd.xlane.f32.xlu0 %v359
      %v361 = vpop.xlane.xlu0 %360
      %v362 = vsel %vm346, %v319, 0.0
      %363 = vadd.xlane.f32.xlu0 %v362
      %v364 = vpop.xlane.xlu0 %363
      %v365 = vsel %vm346, %v320, 0.0
      %366 = vadd.xlane.f32.xlu0 %v365
      %v367 = vpop.xlane.xlu0 %366
      %v368 = vsel %vm346, %v321, 0.0
      %369 = vadd.xlane.f32.xlu0 %v368
      %v370 = vpop.xlane.xlu0 %369
      %v371 = vsel %vm346, %v322, 0.0
      %372 = vadd.xlane.f32.xlu0 %v371
      %v373 = vpop.xlane.xlu0 %372
      %v374 = vsel %vm346, %v323, 0.0
      %375 = vadd.xlane.f32.xlu0 %v374
      %v376 = vpop.xlane.xlu0 %375
      %v377 = vsel %vm346, %v324, 0.0
      %378 = vadd.xlane.f32.xlu0 %v377
      %v379 = vpop.xlane.xlu0 %378
      %v380 = vsel %vm346, %v325, 0.0
      %381 = vadd.xlane.f32.xlu0 %v380
      %v382 = vpop.xlane.xlu0 %381
      %v383 = vsel %vm346, %v326, 0.0
      %384 = vadd.xlane.f32.xlu0 %v383
      %v385 = vpop.xlane.xlu0 %384
      %v386 = vsel %vm346, %v327, 0.0
      %387 = vadd.xlane.f32.xlu0 %v386
      %v388 = vpop.xlane.xlu0 %387
      %v389 = vsel %vm346, %v328, 0.0
      %390 = vadd.xlane.f32.xlu0 %v389
      %v391 = vpop.xlane.xlu0 %390
      %v392 = vsel %vm346, %v329, 0.0
      %393 = vadd.xlane.f32.xlu0 %v392
      %v394 = vpop.xlane.xlu0 %393
      %v395 = vsel %vm346, %v330, 0.0
      %396 = vadd.xlane.f32.xlu0 %v395
      %v397 = vpop.xlane.xlu0 %396
      %v398 = vsel %vm346, %v331, 0.0
      %399 = vadd.xlane.f32.xlu0 %v398
      %v400 = vpop.xlane.xlu0 %399
      %v401 = vsel %vm346, %v332, 0.0
      %402 = vadd.xlane.f32.xlu0 %v401
      %v403 = vpop.xlane.xlu0 %402
      %v404 = vsel %vm346, %v333, 0.0
      %405 = vadd.xlane.f32.xlu0 %v404
      %v406 = vpop.xlane.xlu0 %405
      %v407 = vsel %vm346, %v334, 0.0
      %408 = vadd.xlane.f32.xlu0 %v407
      %v409 = vpop.xlane.xlu0 %408
      %v410 = vsel %vm346, %v335, 0.0
      %411 = vadd.xlane.f32.xlu0 %v410
      %v412 = vpop.xlane.xlu0 %411
      %v413 = vsel %vm346, %v336, 0.0
      %414 = vadd.xlane.f32.xlu0 %v413
      %v415 = vpop.xlane.xlu0 %414
      %v416 = vsel %vm346, %v337, 0.0
      %417 = vadd.xlane.f32.xlu0 %v416
      %v418 = vpop.xlane.xlu0 %417
      %v419 = vsel %vm346, %v338, 0.0
      %420 = vadd.xlane.f32.xlu0 %v419
      %v421 = vpop.xlane.xlu0 %420
      %v422 = vsel %vm346, %v339, 0.0
      %423 = vadd.xlane.f32.xlu0 %v422
      %v424 = vpop.xlane.xlu0 %423
      %v425 = vsel %vm346, %v340, 0.0
      %426 = vadd.xlane.f32.xlu0 %v425
      %v427 = vpop.xlane.xlu0 %426
      %v428 = vsel %vm346, %v341, 0.0
      %429 = vadd.xlane.f32.xlu0 %v428
      %v430 = vpop.xlane.xlu0 %429
      %v431 = vsel %vm346, %v342, 0.0
      %432 = vadd.xlane.f32.xlu0 %v431
      %v433 = vpop.xlane.xlu0 %432
      %v434 = vsel %vm346, %v343, 0.0
      %435 = vadd.xlane.f32.xlu0 %v434
      %v436 = vpop.xlane.xlu0 %435
      %v437 = vsel %vm346, %v344, 0.0
      %438 = vadd.xlane.f32.xlu0 %v437
      %v439 = vpop.xlane.xlu0 %438
      %v440 = vsel %vm346, %v345, 0.0
      %441 = vadd.xlane.f32.xlu0 %v440
      %v442 = vpop.xlane.xlu0 %441
      %v443 = vrcp.pop 32.0
      %v444 = vmul.f32 32.0, %v443
      %v445 = vsub.f32 1.0, %v444
      %v446 = vmul.f32 %v443, %v445
      %v447 = vadd.f32 %v443, %v446
      %vm448 = vweird.f32 %v443
      %v449 = vsel %vm448, %v443, %v447
      %v450 = vmul.f32 %v349, %v449
      %v451 = vmul.f32 %v352, %v449
      %v452 = vmul.f32 %v355, %v449
      %v453 = vmul.f32 %v358, %v449
      %v454 = vmul.f32 %v361, %v449
      %v455 = vmul.f32 %v364, %v449
      %v456 = vmul.f32 %v367, %v449
      %v457 = vmul.f32 %v370, %v449
      %v458 = vmul.f32 %v373, %v449
      %v459 = vmul.f32 %v376, %v449
      %v460 = vmul.f32 %v379, %v449
      %v461 = vmul.f32 %v382, %v449
      %v462 = vmul.f32 %v385, %v449
      %v463 = vmul.f32 %v388, %v449
      %v464 = vmul.f32 %v391, %v449
      %v465 = vmul.f32 %v394, %v449
      %v466 = vmul.f32 %v397, %v449
      %v467 = vmul.f32 %v400, %v449
      %v468 = vmul.f32 %v403, %v449
      %v469 = vmul.f32 %v406, %v449
      %v470 = vmul.f32 %v409, %v449
      %v471 = vmul.f32 %v412, %v449
      %v472 = vmul.f32 %v415, %v449
      %v473 = vmul.f32 %v418, %v449
      %v474 = vmul.f32 %v421, %v449
      %v475 = vmul.f32 %v424, %v449
      %v476 = vmul.f32 %v427, %v449
      %v477 = vmul.f32 %v430, %v449
      %v478 = vmul.f32 %v433, %v449
      %v479 = vmul.f32 %v436, %v449
      %v480 = vmul.f32 %v439, %v449
      %v481 = vmul.f32 %v442, %v449
      %v482 = vsub.f32 %v314, %v450
      %v483 = vsub.f32 %v315, %v451
      %v484 = vsub.f32 %v316, %v452
      %v485 = vsub.f32 %v317, %v453
      %v486 = vsub.f32 %v318, %v454
      %v487 = vsub.f32 %v319, %v455
      %v488 = vsub.f32 %v320, %v456
      %v489 = vsub.f32 %v321, %v457
      %v490 = vsub.f32 %v322, %v458
      %v491 = vsub.f32 %v323, %v459
      %v492 = vsub.f32 %v324, %v460
      %v493 = vsub.f32 %v325, %v461
      %v494 = vsub.f32 %v326, %v462
      %v495 = vsub.f32 %v327, %v463
      %v496 = vsub.f32 %v328, %v464
      %v497 = vsub.f32 %v329, %v465
      %v498 = vsub.f32 %v330, %v466
      %v499 = vsub.f32 %v331, %v467
      %v500 = vsub.f32 %v332, %v468
      %v501 = vsub.f32 %v333, %v469
      %v502 = vsub.f32 %v334, %v470
      %v503 = vsub.f32 %v335, %v471
      %v504 = vsub.f32 %v336, %v472
      %v505 = vsub.f32 %v337, %v473
      %v506 = vsub.f32 %v338, %v474
      %v507 = vsub.f32 %v339, %v475
      %v508 = vsub.f32 %v340, %v476
      %v509 = vsub.f32 %v341, %v477
      %v510 = vsub.f32 %v342, %v478
      %v511 = vsub.f32 %v343, %v479
      %v512 = vsub.f32 %v344, %v480
      %v513 = vsub.f32 %v345, %v481
      %v514 = vmul.f32 %v482, %v482
      %v515 = vmul.f32 %v483, %v483
      %v516 = vmul.f32 %v484, %v484
      %v517 = vmul.f32 %v485, %v485
      %v518 = vmul.f32 %v486, %v486
      %v519 = vmul.f32 %v487, %v487
      %v520 = vmul.f32 %v488, %v488
      %v521 = vmul.f32 %v489, %v489
      %v522 = vmul.f32 %v490, %v490
      %v523 = vmul.f32 %v491, %v491
      %v524 = vmul.f32 %v492, %v492
      %v525 = vmul.f32 %v493, %v493
      %v526 = vmul.f32 %v494, %v494
      %v527 = vmul.f32 %v495, %v495
      %v528 = vmul.f32 %v496, %v496
      %v529 = vmul.f32 %v497, %v497
      %v530 = vmul.f32 %v498, %v498
      %v531 = vmul.f32 %v499, %v499
      %v532 = vmul.f32 %v500, %v500
      %v533 = vmul.f32 %v501, %v501
      %v534 = vmul.f32 %v502, %v502
      %v535 = vmul.f32 %v503, %v503
      %v536 = vmul.f32 %v504, %v504
      %v537 = vmul.f32 %v505, %v505
      %v538 = vmul.f32 %v506, %v506
      %v539 = vmul.f32 %v507, %v507
      %v540 = vmul.f32 %v508, %v508
      %v541 = vmul.f32 %v509, %v509
      %v542 = vmul.f32 %v510, %v510
      %v543 = vmul.f32 %v511, %v511
      %v544 = vmul.f32 %v512, %v512
      %v545 = vmul.f32 %v513, %v513
      %v546 = vsel %vm346, %v514, 0.0
      %547 = vadd.xlane.f32.xlu0 %v546
      %v548 = vpop.xlane.xlu0 %547
      %v549 = vsel %vm346, %v515, 0.0
      %550 = vadd.xlane.f32.xlu0 %v549
      %v551 = vpop.xlane.xlu0 %550
      %v552 = vsel %vm346, %v516, 0.0
      %553 = vadd.xlane.f32.xlu0 %v552
      %v554 = vpop.xlane.xlu0 %553
      %v555 = vsel %vm346, %v517, 0.0
      %556 = vadd.xlane.f32.xlu0 %v555
      %v557 = vpop.xlane.xlu0 %556
      %v558 = vsel %vm346, %v518, 0.0
      %559 = vadd.xlane.f32.xlu0 %v558
      %v560 = vpop.xlane.xlu0 %559
      %v561 = vsel %vm346, %v519, 0.0
      %562 = vadd.xlane.f32.xlu0 %v561
      %v563 = vpop.xlane.xlu0 %562
      %v564 = vsel %vm346, %v520, 0.0
      %565 = vadd.xlane.f32.xlu0 %v564
      %v566 = vpop.xlane.xlu0 %565
      %v567 = vsel %vm346, %v521, 0.0
      %568 = vadd.xlane.f32.xlu0 %v567
      %v569 = vpop.xlane.xlu0 %568
      %v570 = vsel %vm346, %v522, 0.0
      %571 = vadd.xlane.f32.xlu0 %v570
      %v572 = vpop.xlane.xlu0 %571
      %v573 = vsel %vm346, %v523, 0.0
      %574 = vadd.xlane.f32.xlu0 %v573
      %v575 = vpop.xlane.xlu0 %574
      %v576 = vsel %vm346, %v524, 0.0
      %577 = vadd.xlane.f32.xlu0 %v576
      %v578 = vpop.xlane.xlu0 %577
      %v579 = vsel %vm346, %v525, 0.0
      %580 = vadd.xlane.f32.xlu0 %v579
      %v581 = vpop.xlane.xlu0 %580
      %v582 = vsel %vm346, %v526, 0.0
      %583 = vadd.xlane.f32.xlu0 %v582
      %v584 = vpop.xlane.xlu0 %583
      %v585 = vsel %vm346, %v527, 0.0
      %586 = vadd.xlane.f32.xlu0 %v585
      %v587 = vpop.xlane.xlu0 %586
      %v588 = vsel %vm346, %v528, 0.0
      %589 = vadd.xlane.f32.xlu0 %v588
      %v590 = vpop.xlane.xlu0 %589
      %v591 = vsel %vm346, %v529, 0.0
      %592 = vadd.xlane.f32.xlu0 %v591
      %v593 = vpop.xlane.xlu0 %592
      %v594 = vsel %vm346, %v530, 0.0
      %595 = vadd.xlane.f32.xlu0 %v594
      %v596 = vpop.xlane.xlu0 %595
      %v597 = vsel %vm346, %v531, 0.0
      %598 = vadd.xlane.f32.xlu0 %v597
      %v599 = vpop.xlane.xlu0 %598
      %v600 = vsel %vm346, %v532, 0.0
      %601 = vadd.xlane.f32.xlu0 %v600
      %v602 = vpop.xlane.xlu0 %601
      %v603 = vsel %vm346, %v533, 0.0
      %604 = vadd.xlane.f32.xlu0 %v603
      %v605 = vpop.xlane.xlu0 %604
      %v606 = vsel %vm346, %v534, 0.0
      %607 = vadd.xlane.f32.xlu0 %v606
      %v608 = vpop.xlane.xlu0 %607
      %v609 = vsel %vm346, %v535, 0.0
      %610 = vadd.xlane.f32.xlu0 %v609
      %v611 = vpop.xlane.xlu0 %610
      %v612 = vsel %vm346, %v536, 0.0
      %613 = vadd.xlane.f32.xlu0 %v612
      %v614 = vpop.xlane.xlu0 %613
      %v615 = vsel %vm346, %v537, 0.0
      %616 = vadd.xlane.f32.xlu0 %v615
      %v617 = vpop.xlane.xlu0 %616
      %v618 = vsel %vm346, %v538, 0.0
      %619 = vadd.xlane.f32.xlu0 %v618
      %v620 = vpop.xlane.xlu0 %619
      %v621 = vsel %vm346, %v539, 0.0
      %622 = vadd.xlane.f32.xlu0 %v621
      %v623 = vpop.xlane.xlu0 %622
      %v624 = vsel %vm346, %v540, 0.0
      %625 = vadd.xlane.f32.xlu0 %v624
      %v626 = vpop.xlane.xlu0 %625
      %v627 = vsel %vm346, %v541, 0.0
      %628 = vadd.xlane.f32.xlu0 %v627
      %v629 = vpop.xlane.xlu0 %628
      %v630 = vsel %vm346, %v542, 0.0
      %631 = vadd.xlane.f32.xlu0 %v630
      %v632 = vpop.xlane.xlu0 %631
      %v633 = vsel %vm346, %v543, 0.0
      %634 = vadd.xlane.f32.xlu0 %v633
      %v635 = vpop.xlane.xlu0 %634
      %v636 = vsel %vm346, %v544, 0.0
      %637 = vadd.xlane.f32.xlu0 %v636
      %v638 = vpop.xlane.xlu0 %637
      %v639 = vsel %vm346, %v545, 0.0
      %640 = vadd.xlane.f32.xlu0 %v639
      %v641 = vpop.xlane.xlu0 %640
      %v642 = vmul.f32 %v548, %v449
      %v643 = vmul.f32 %v551, %v449
      %v644 = vmul.f32 %v554, %v449
      %v645 = vmul.f32 %v557, %v449
      %v646 = vmul.f32 %v560, %v449
      %v647 = vmul.f32 %v563, %v449
      %v648 = vmul.f32 %v566, %v449
      %v649 = vmul.f32 %v569, %v449
      %v650 = vmul.f32 %v572, %v449
      %v651 = vmul.f32 %v575, %v449
      %v652 = vmul.f32 %v578, %v449
      %v653 = vmul.f32 %v581, %v449
      %v654 = vmul.f32 %v584, %v449
      %v655 = vmul.f32 %v587, %v449
      %v656 = vmul.f32 %v590, %v449
      %v657 = vmul.f32 %v593, %v449
      %v658 = vmul.f32 %v596, %v449
      %v659 = vmul.f32 %v599, %v449
      %v660 = vmul.f32 %v602, %v449
      %v661 = vmul.f32 %v605, %v449
      %v662 = vmul.f32 %v608, %v449
      %v663 = vmul.f32 %v611, %v449
      %v664 = vmul.f32 %v614, %v449
      %v665 = vmul.f32 %v617, %v449
      %v666 = vmul.f32 %v620, %v449
      %v667 = vmul.f32 %v623, %v449
      %v668 = vmul.f32 %v626, %v449
      %v669 = vmul.f32 %v629, %v449
      %v670 = vmul.f32 %v632, %v449
      %v671 = vmul.f32 %v635, %v449
      %v672 = vmul.f32 %v638, %v449
      %v673 = vmul.f32 %v641, %v449
      %v674 = vadd.f32 %v642, 1e-05
      %v675 = vadd.f32 %v643, 1e-05
      %v676 = vadd.f32 %v644, 1e-05
      %v677 = vadd.f32 %v645, 1e-05
      %v678 = vadd.f32 %v646, 1e-05
      %v679 = vadd.f32 %v647, 1e-05
      %v680 = vadd.f32 %v648, 1e-05
      %v681 = vadd.f32 %v649, 1e-05
      %v682 = vadd.f32 %v650, 1e-05
      %v683 = vadd.f32 %v651, 1e-05
      %v684 = vadd.f32 %v652, 1e-05
      %v685 = vadd.f32 %v653, 1e-05
      %v686 = vadd.f32 %v654, 1e-05
      %v687 = vadd.f32 %v655, 1e-05
      %v688 = vadd.f32 %v656, 1e-05
      %v689 = vadd.f32 %v657, 1e-05
      %v690 = vadd.f32 %v658, 1e-05
      %v691 = vadd.f32 %v659, 1e-05
      %v692 = vadd.f32 %v660, 1e-05
      %v693 = vadd.f32 %v661, 1e-05
      %v694 = vadd.f32 %v662, 1e-05
      %v695 = vadd.f32 %v663, 1e-05
      %v696 = vadd.f32 %v664, 1e-05
      %v697 = vadd.f32 %v665, 1e-05
      %v698 = vadd.f32 %v666, 1e-05
      %v699 = vadd.f32 %v667, 1e-05
      %v700 = vadd.f32 %v668, 1e-05
      %v701 = vadd.f32 %v669, 1e-05
      %v702 = vadd.f32 %v670, 1e-05
      %v703 = vadd.f32 %v671, 1e-05
      %v704 = vadd.f32 %v672, 1e-05
      %v705 = vadd.f32 %v673, 1e-05
      %v706 = vrsqrt.pop %v674
      %v707 = vmul.f32 %v706, %v674
      %v708 = vmul.f32 %v707, %v706
      %v709 = vmul.f32 0.5, %v708
      %v710 = vsub.f32 1.5, %v709
      %v711 = vmul.f32 %v706, %v710
      %vm712 = vweird.f32 %v674
      %vm713 = vweird.f32 %v706
      %vm714 = vmor %vm712, %vm713
      %v715 = vsel %vm714, %v706, %v711
      %v716 = vrsqrt.pop %v675
      %v717 = vmul.f32 %v716, %v675
      %v718 = vmul.f32 %v717, %v716
      %v719 = vmul.f32 0.5, %v718
      %v720 = vsub.f32 1.5, %v719
      %v721 = vmul.f32 %v716, %v720
      %vm722 = vweird.f32 %v675
      %vm723 = vweird.f32 %v716
      %vm724 = vmor %vm722, %vm723
      %v725 = vsel %vm724, %v716, %v721
      %v726 = vrsqrt.pop %v676
      %v727 = vmul.f32 %v726, %v676
      %v728 = vmul.f32 %v727, %v726
      %v729 = vmul.f32 0.5, %v728
      %v730 = vsub.f32 1.5, %v729
      %v731 = vmul.f32 %v726, %v730
      %vm732 = vweird.f32 %v676
      %vm733 = vweird.f32 %v726
      %vm734 = vmor %vm732, %vm733
      %v735 = vsel %vm734, %v726, %v731
      %v736 = vrsqrt.pop %v677
      %v737 = vmul.f32 %v736, %v677
      %v738 = vmul.f32 %v737, %v736
      %v739 = vmul.f32 0.5, %v738
      %v740 = vsub.f32 1.5, %v739
      %v741 = vmul.f32 %v736, %v740
      %vm742 = vweird.f32 %v677
      %vm743 = vweird.f32 %v736
      %vm744 = vmor %vm742, %vm743
      %v745 = vsel %vm744, %v736, %v741
      %v746 = vrsqrt.pop %v678
      %v747 = vmul.f32 %v746, %v678
      %v748 = vmul.f32 %v747, %v746
      %v749 = vmul.f32 0.5, %v748
      %v750 = vsub.f32 1.5, %v749
      %v751 = vmul.f32 %v746, %v750
      %vm752 = vweird.f32 %v678
      %vm753 = vweird.f32 %v746
      %vm754 = vmor %vm752, %vm753
      %v755 = vsel %vm754, %v746, %v751
      %v756 = vrsqrt.pop %v679
      %v757 = vmul.f32 %v756, %v679
      %v758 = vmul.f32 %v757, %v756
      %v759 = vmul.f32 0.5, %v758
      %v760 = vsub.f32 1.5, %v759
      %v761 = vmul.f32 %v756, %v760
      %vm762 = vweird.f32 %v679
      %vm763 = vweird.f32 %v756
      %vm764 = vmor %vm762, %vm763
      %v765 = vsel %vm764, %v756, %v761
      %v766 = vrsqrt.pop %v680
      %v767 = vmul.f32 %v766, %v680
      %v768 = vmul.f32 %v767, %v766
      %v769 = vmul.f32 0.5, %v768
      %v770 = vsub.f32 1.5, %v769
      %v771 = vmul.f32 %v766, %v770
      %vm772 = vweird.f32 %v680
      %vm773 = vweird.f32 %v766
      %vm774 = vmor %vm772, %vm773
      %v775 = vsel %vm774, %v766, %v771
      %v776 = vrsqrt.pop %v681
      %v777 = vmul.f32 %v776, %v681
      %v778 = vmul.f32 %v777, %v776
      %v779 = vmul.f32 0.5, %v778
      %v780 = vsub.f32 1.5, %v779
      %v781 = vmul.f32 %v776, %v780
      %vm782 = vweird.f32 %v681
      %vm783 = vweird.f32 %v776
      %vm784 = vmor %vm782, %vm783
      %v785 = vsel %vm784, %v776, %v781
      %v786 = vrsqrt.pop %v682
      %v787 = vmul.f32 %v786, %v682
      %v788 = vmul.f32 %v787, %v786
      %v789 = vmul.f32 0.5, %v788
      %v790 = vsub.f32 1.5, %v789
      %v791 = vmul.f32 %v786, %v790
      %vm792 = vweird.f32 %v682
      %vm793 = vweird.f32 %v786
      %vm794 = vmor %vm792, %vm793
      %v795 = vsel %vm794, %v786, %v791
      %v796 = vrsqrt.pop %v683
      %v797 = vmul.f32 %v796, %v683
      %v798 = vmul.f32 %v797, %v796
      %v799 = vmul.f32 0.5, %v798
      %v800 = vsub.f32 1.5, %v799
      %v801 = vmul.f32 %v796, %v800
      %vm802 = vweird.f32 %v683
      %vm803 = vweird.f32 %v796
      %vm804 = vmor %vm802, %vm803
      %v805 = vsel %vm804, %v796, %v801
      %v806 = vrsqrt.pop %v684
      %v807 = vmul.f32 %v806, %v684
      %v808 = vmul.f32 %v807, %v806
      %v809 = vmul.f32 0.5, %v808
      %v810 = vsub.f32 1.5, %v809
      %v811 = vmul.f32 %v806, %v810
      %vm812 = vweird.f32 %v684
      %vm813 = vweird.f32 %v806
      %vm814 = vmor %vm812, %vm813
      %v815 = vsel %vm814, %v806, %v811
      %v816 = vrsqrt.pop %v685
      %v817 = vmul.f32 %v816, %v685
      %v818 = vmul.f32 %v817, %v816
      %v819 = vmul.f32 0.5, %v818
      %v820 = vsub.f32 1.5, %v819
      %v821 = vmul.f32 %v816, %v820
      %vm822 = vweird.f32 %v685
      %vm823 = vweird.f32 %v816
      %vm824 = vmor %vm822, %vm823
      %v825 = vsel %vm824, %v816, %v821
      %v826 = vrsqrt.pop %v686
      %v827 = vmul.f32 %v826, %v686
      %v828 = vmul.f32 %v827, %v826
      %v829 = vmul.f32 0.5, %v828
      %v830 = vsub.f32 1.5, %v829
      %v831 = vmul.f32 %v826, %v830
      %vm832 = vweird.f32 %v686
      %vm833 = vweird.f32 %v826
      %vm834 = vmor %vm832, %vm833
      %v835 = vsel %vm834, %v826, %v831
      %v836 = vrsqrt.pop %v687
      %v837 = vmul.f32 %v836, %v687
      %v838 = vmul.f32 %v837, %v836
      %v839 = vmul.f32 0.5, %v838
      %v840 = vsub.f32 1.5, %v839
      %v841 = vmul.f32 %v836, %v840
      %vm842 = vweird.f32 %v687
      %vm843 = vweird.f32 %v836
      %vm844 = vmor %vm842, %vm843
      %v845 = vsel %vm844, %v836, %v841
      %v846 = vrsqrt.pop %v688
      %v847 = vmul.f32 %v846, %v688
      %v848 = vmul.f32 %v847, %v846
      %v849 = vmul.f32 0.5, %v848
      %v850 = vsub.f32 1.5, %v849
      %v851 = vmul.f32 %v846, %v850
      %vm852 = vweird.f32 %v688
      %vm853 = vweird.f32 %v846
      %vm854 = vmor %vm852, %vm853
      %v855 = vsel %vm854, %v846, %v851
      %v856 = vrsqrt.pop %v689
      %v857 = vmul.f32 %v856, %v689
      %v858 = vmul.f32 %v857, %v856
      %v859 = vmul.f32 0.5, %v858
      %v860 = vsub.f32 1.5, %v859
      %v861 = vmul.f32 %v856, %v860
      %vm862 = vweird.f32 %v689
      %vm863 = vweird.f32 %v856
      %vm864 = vmor %vm862, %vm863
      %v865 = vsel %vm864, %v856, %v861
      %v866 = vrsqrt.pop %v690
      %v867 = vmul.f32 %v866, %v690
      %v868 = vmul.f32 %v867, %v866
      %v869 = vmul.f32 0.5, %v868
      %v870 = vsub.f32 1.5, %v869
      %v871 = vmul.f32 %v866, %v870
      %vm872 = vweird.f32 %v690
      %vm873 = vweird.f32 %v866
      %vm874 = vmor %vm872, %vm873
      %v875 = vsel %vm874, %v866, %v871
      %v876 = vrsqrt.pop %v691
      %v877 = vmul.f32 %v876, %v691
      %v878 = vmul.f32 %v877, %v876
      %v879 = vmul.f32 0.5, %v878
      %v880 = vsub.f32 1.5, %v879
      %v881 = vmul.f32 %v876, %v880
      %vm882 = vweird.f32 %v691
      %vm883 = vweird.f32 %v876
      %vm884 = vmor %vm882, %vm883
      %v885 = vsel %vm884, %v876, %v881
      %v886 = vrsqrt.pop %v692
      %v887 = vmul.f32 %v886, %v692
      %v888 = vmul.f32 %v887, %v886
      %v889 = vmul.f32 0.5, %v888
      %v890 = vsub.f32 1.5, %v889
      %v891 = vmul.f32 %v886, %v890
      %vm892 = vweird.f32 %v692
      %vm893 = vweird.f32 %v886
      %vm894 = vmor %vm892, %vm893
      %v895 = vsel %vm894, %v886, %v891
      %v896 = vrsqrt.pop %v693
      %v897 = vmul.f32 %v896, %v693
      %v898 = vmul.f32 %v897, %v896
      %v899 = vmul.f32 0.5, %v898
      %v900 = vsub.f32 1.5, %v899
      %v901 = vmul.f32 %v896, %v900
      %vm902 = vweird.f32 %v693
      %vm903 = vweird.f32 %v896
      %vm904 = vmor %vm902, %vm903
      %v905 = vsel %vm904, %v896, %v901
      %v906 = vrsqrt.pop %v694
      %v907 = vmul.f32 %v906, %v694
      %v908 = vmul.f32 %v907, %v906
      %v909 = vmul.f32 0.5, %v908
      %v910 = vsub.f32 1.5, %v909
      %v911 = vmul.f32 %v906, %v910
      %vm912 = vweird.f32 %v694
      %vm913 = vweird.f32 %v906
      %vm914 = vmor %vm912, %vm913
      %v915 = vsel %vm914, %v906, %v911
      %v916 = vrsqrt.pop %v695
      %v917 = vmul.f32 %v916, %v695
      %v918 = vmul.f32 %v917, %v916
      %v919 = vmul.f32 0.5, %v918
      %v920 = vsub.f32 1.5, %v919
      %v921 = vmul.f32 %v916, %v920
      %vm922 = vweird.f32 %v695
      %vm923 = vweird.f32 %v916
      %vm924 = vmor %vm922, %vm923
      %v925 = vsel %vm924, %v916, %v921
      %v926 = vrsqrt.pop %v696
      %v927 = vmul.f32 %v926, %v696
      %v928 = vmul.f32 %v927, %v926
      %v929 = vmul.f32 0.5, %v928
      %v930 = vsub.f32 1.5, %v929
      %v931 = vmul.f32 %v926, %v930
      %vm932 = vweird.f32 %v696
      %vm933 = vweird.f32 %v926
      %vm934 = vmor %vm932, %vm933
      %v935 = vsel %vm934, %v926, %v931
      %v936 = vrsqrt.pop %v697
      %v937 = vmul.f32 %v936, %v697
      %v938 = vmul.f32 %v937, %v936
      %v939 = vmul.f32 0.5, %v938
      %v940 = vsub.f32 1.5, %v939
      %v941 = vmul.f32 %v936, %v940
      %vm942 = vweird.f32 %v697
      %vm943 = vweird.f32 %v936
      %vm944 = vmor %vm942, %vm943
      %v945 = vsel %vm944, %v936, %v941
      %v946 = vrsqrt.pop %v698
      %v947 = vmul.f32 %v946, %v698
      %v948 = vmul.f32 %v947, %v946
      %v949 = vmul.f32 0.5, %v948
      %v950 = vsub.f32 1.5, %v949
      %v951 = vmul.f32 %v946, %v950
      %vm952 = vweird.f32 %v698
      %vm953 = vweird.f32 %v946
      %vm954 = vmor %vm952, %vm953
      %v955 = vsel %vm954, %v946, %v951
      %v956 = vrsqrt.pop %v699
      %v957 = vmul.f32 %v956, %v699
      %v958 = vmul.f32 %v957, %v956
      %v959 = vmul.f32 0.5, %v958
      %v960 = vsub.f32 1.5, %v959
      %v961 = vmul.f32 %v956, %v960
      %vm962 = vweird.f32 %v699
      %vm963 = vweird.f32 %v956
      %vm964 = vmor %vm962, %vm963
      %v965 = vsel %vm964, %v956, %v961
      %v966 = vrsqrt.pop %v700
      %v967 = vmul.f32 %v966, %v700
      %v968 = vmul.f32 %v967, %v966
      %v969 = vmul.f32 0.5, %v968
      %v970 = vsub.f32 1.5, %v969
      %v971 = vmul.f32 %v966, %v970
      %vm972 = vweird.f32 %v700
      %vm973 = vweird.f32 %v966
      %vm974 = vmor %vm972, %vm973
      %v975 = vsel %vm974, %v966, %v971
      %v976 = vrsqrt.pop %v701
      %v977 = vmul.f32 %v976, %v701
      %v978 = vmul.f32 %v977, %v976
      %v979 = vmul.f32 0.5, %v978
      %v980 = vsub.f32 1.5, %v979
      %v981 = vmul.f32 %v976, %v980
      %vm982 = vweird.f32 %v701
      %vm983 = vweird.f32 %v976
      %vm984 = vmor %vm982, %vm983
      %v985 = vsel %vm984, %v976, %v981
      %v986 = vrsqrt.pop %v702
      %v987 = vmul.f32 %v986, %v702
      %v988 = vmul.f32 %v987, %v986
      %v989 = vmul.f32 0.5, %v988
      %v990 = vsub.f32 1.5, %v989
      %v991 = vmul.f32 %v986, %v990
      %vm992 = vweird.f32 %v702
      %vm993 = vweird.f32 %v986
      %vm994 = vmor %vm992, %vm993
      %v995 = vsel %vm994, %v986, %v991
      %v996 = vrsqrt.pop %v703
      %v997 = vmul.f32 %v996, %v703
      %v998 = vmul.f32 %v997, %v996
      %v999 = vmul.f32 0.5, %v998
      %v1000 = vsub.f32 1.5, %v999
      %v1001 = vmul.f32 %v996, %v1000
      %vm1002 = vweird.f32 %v703
      %vm1003 = vweird.f32 %v996
      %vm1004 = vmor %vm1002, %vm1003
      %v1005 = vsel %vm1004, %v996, %v1001
      %v1006 = vrsqrt.pop %v704
      %v1007 = vmul.f32 %v1006, %v704
      %v1008 = vmul.f32 %v1007, %v1006
      %v1009 = vmul.f32 0.5, %v1008
      %v1010 = vsub.f32 1.5, %v1009
      %v1011 = vmul.f32 %v1006, %v1010
      %vm1012 = vweird.f32 %v704
      %vm1013 = vweird.f32 %v1006
      %vm1014 = vmor %vm1012, %vm1013
      %v1015 = vsel %vm1014, %v1006, %v1011
      %v1016 = vrsqrt.pop %v705
      %v1017 = vmul.f32 %v1016, %v705
      %v1018 = vmul.f32 %v1017, %v1016
      %v1019 = vmul.f32 0.5, %v1018
      %v1020 = vsub.f32 1.5, %v1019
      %v1021 = vmul.f32 %v1016, %v1020
      %vm1022 = vweird.f32 %v705
      %vm1023 = vweird.f32 %v1016
      %vm1024 = vmor %vm1022, %vm1023
      %v1025 = vsel %vm1024, %v1016, %v1021
      %v1026 = vmul.f32 %v482, %v715
      %v1027 = vmul.f32 %v483, %v725
      %v1028 = vmul.f32 %v484, %v735
      %v1029 = vmul.f32 %v485, %v745
      %v1030 = vmul.f32 %v486, %v755
      %v1031 = vmul.f32 %v487, %v765
      %v1032 = vmul.f32 %v488, %v775
      %v1033 = vmul.f32 %v489, %v785
      %v1034 = vmul.f32 %v490, %v795
      %v1035 = vmul.f32 %v491, %v805
      %v1036 = vmul.f32 %v492, %v815
      %v1037 = vmul.f32 %v493, %v825
      %v1038 = vmul.f32 %v494, %v835
      %v1039 = vmul.f32 %v495, %v845
      %v1040 = vmul.f32 %v496, %v855
      %v1041 = vmul.f32 %v497, %v865
      %v1042 = vmul.f32 %v498, %v875
      %v1043 = vmul.f32 %v499, %v885
      %v1044 = vmul.f32 %v500, %v895
      %v1045 = vmul.f32 %v501, %v905
      %v1046 = vmul.f32 %v502, %v915
      %v1047 = vmul.f32 %v503, %v925
      %v1048 = vmul.f32 %v504, %v935
      %v1049 = vmul.f32 %v505, %v945
      %v1050 = vmul.f32 %v506, %v955
      %v1051 = vmul.f32 %v507, %v965
      %v1052 = vmul.f32 %v508, %v975
      %v1053 = vmul.f32 %v509, %v985
      %v1054 = vmul.f32 %v510, %v995
      %v1055 = vmul.f32 %v511, %v1005
      %v1056 = vmul.f32 %v512, %v1015
      %v1057 = vmul.f32 %v513, %v1025
      %v1058 = vld [vmem:[%s1] sm:$0x1]
      %v1060 = vperm.slane %v1058, 0
      %v1062 = vmul.f32 %v1026, %v1060
      %v1063 = vmul.f32 %v1027, %v1060
      %v1064 = vmul.f32 %v1028, %v1060
      %v1065 = vmul.f32 %v1029, %v1060
      %v1066 = vmul.f32 %v1030, %v1060
      %v1067 = vmul.f32 %v1031, %v1060
      %v1068 = vmul.f32 %v1032, %v1060
      %v1069 = vmul.f32 %v1033, %v1060
      %v1070 = vmul.f32 %v1034, %v1060
      %v1071 = vmul.f32 %v1035, %v1060
      %v1072 = vmul.f32 %v1036, %v1060
      %v1073 = vmul.f32 %v1037, %v1060
      %v1074 = vmul.f32 %v1038, %v1060
      %v1075 = vmul.f32 %v1039, %v1060
      %v1076 = vmul.f32 %v1040, %v1060
      %v1077 = vmul.f32 %v1041, %v1060
      %v1078 = vmul.f32 %v1042, %v1060
      %v1079 = vmul.f32 %v1043, %v1060
      %v1080 = vmul.f32 %v1044, %v1060
      %v1081 = vmul.f32 %v1045, %v1060
      %v1082 = vmul.f32 %v1046, %v1060
      %v1083 = vmul.f32 %v1047, %v1060
      %v1084 = vmul.f32 %v1048, %v1060
      %v1085 = vmul.f32 %v1049, %v1060
      %v1086 = vmul.f32 %v1050, %v1060
      %v1087 = vmul.f32 %v1051, %v1060
      %v1088 = vmul.f32 %v1052, %v1060
      %v1089 = vmul.f32 %v1053, %v1060
      %v1090 = vmul.f32 %v1054, %v1060
      %v1091 = vmul.f32 %v1055, %v1060
      %v1092 = vmul.f32 %v1056, %v1060
      %v1093 = vmul.f32 %v1057, %v1060
      %v1094 = vld [vmem:[%s2] sm:$0x1]
      %v1096 = vperm.slane %v1094, 0
      %v1098 = vadd.f32 %v1062, %v1096
      %v1099 = vadd.f32 %v1063, %v1096
      %v1100 = vadd.f32 %v1064, %v1096
      %v1101 = vadd.f32 %v1065, %v1096
      %v1102 = vadd.f32 %v1066, %v1096
      %v1103 = vadd.f32 %v1067, %v1096
      %v1104 = vadd.f32 %v1068, %v1096
      %v1105 = vadd.f32 %v1069, %v1096
      %v1106 = vadd.f32 %v1070, %v1096
      %v1107 = vadd.f32 %v1071, %v1096
      %v1108 = vadd.f32 %v1072, %v1096
      %v1109 = vadd.f32 %v1073, %v1096
      %v1110 = vadd.f32 %v1074, %v1096
      %v1111 = vadd.f32 %v1075, %v1096
      %v1112 = vadd.f32 %v1076, %v1096
      %v1113 = vadd.f32 %v1077, %v1096
      %v1114 = vadd.f32 %v1078, %v1096
      %v1115 = vadd.f32 %v1079, %v1096
      %v1116 = vadd.f32 %v1080, %v1096
      %v1117 = vadd.f32 %v1081, %v1096
      %v1118 = vadd.f32 %v1082, %v1096
      %v1119 = vadd.f32 %v1083, %v1096
      %v1120 = vadd.f32 %v1084, %v1096
      %v1121 = vadd.f32 %v1085, %v1096
      %v1122 = vadd.f32 %v1086, %v1096
      %v1123 = vadd.f32 %v1087, %v1096
      %v1124 = vadd.f32 %v1088, %v1096
      %v1125 = vadd.f32 %v1089, %v1096
      %v1126 = vadd.f32 %v1090, %v1096
      %v1127 = vadd.f32 %v1091, %v1096
      %v1128 = vadd.f32 %v1092, %v1096
      %v1129 = vadd.f32 %v1093, %v1096
      %v1130 = vld [vmem:[%s3] sm:$0xff]
      %v1131 = vld [vmem:[%s3 + $0x8] sm:$0xff]
      %v1132 = vld [vmem:[%s3 + $0x10] sm:$0xff]
      %v1133 = vld [vmem:[%s3 + $0x18] sm:$0xff]
      %v1134 = vld [vmem:[%s4] sm:$0x1]
      %v1136 = vperm.slane %v1134, 0
      %v1139 = vsel %vm346, %v1098, 0
      %v1142 = vsel %vm346, %v1099, 0
      %v1145 = vsel %vm346, %v1100, 0
      %v1148 = vsel %vm346, %v1101, 0
      %v1151 = vsel %vm346, %v1102, 0
      %v1154 = vsel %vm346, %v1103, 0
      %v1157 = vsel %vm346, %v1104, 0
      %v1160 = vsel %vm346, %v1105, 0
      %v1163 = vsel %vm346, %v1106, 0
      %v1166 = vsel %vm346, %v1107, 0
      %v1169 = vsel %vm346, %v1108, 0
      %v1172 = vsel %vm346, %v1109, 0
      %v1175 = vsel %vm346, %v1110, 0
      %v1178 = vsel %vm346, %v1111, 0
      %v1181 = vsel %vm346, %v1112, 0
      %v1184 = vsel %vm346, %v1113, 0
      %v1187 = vsel %vm346, %v1114, 0
      %v1190 = vsel %vm346, %v1115, 0
      %v1193 = vsel %vm346, %v1116, 0
      %v1196 = vsel %vm346, %v1117, 0
      %v1199 = vsel %vm346, %v1118, 0
      %v1202 = vsel %vm346, %v1119, 0
      %v1205 = vsel %vm346, %v1120, 0
      %v1208 = vsel %vm346, %v1121, 0
      %v1211 = vsel %vm346, %v1122, 0
      %v1214 = vsel %vm346, %v1123, 0
      %v1217 = vsel %vm346, %v1124, 0
      %v1220 = vsel %vm346, %v1125, 0
      %v1223 = vsel %vm346, %v1126, 0
      %v1226 = vsel %vm346, %v1127, 0
      %v1229 = vsel %vm346, %v1128, 0
      %v1232 = vsel %vm346, %v1129, 0
      %1234 = vmatpush.msra.mxu0 0.0
      %1235 = vmatpush.msra.mxu0 0.0
      %1236 = vmatpush.msra.mxu0 0.0
      %1237 = vmatpush.msra.mxu0 0.0
      %1238 = vmatpush.msra.mxu0 0.0
      %1239 = vmatpush.msra.mxu0 0.0
      %1240 = vmatpush.msra.mxu0 0.0
      %1241 = vmatpush.msra.mxu0 0.0
      %1242 = vmatpush.msra.mxu0 0.0
      %1243 = vmatpush.msra.mxu0 0.0
      %1244 = vmatpush.msra.mxu0 0.0
      %1245 = vmatpush.msra.mxu0 0.0
      %1246 = vmatpush.msra.mxu0 %v1133
      %1247 = vmatpush.msra.mxu0 %v1132
      %1248 = vmatpush.msra.mxu0 %v1131
      %1249 = vmatpush.msra.mxu0 %v1130
      %1250 = vmatmul.f32.gmra.mxu0 %v1139
      %v1251 = vpop.f32.mrf.mxu0
      %v1252 = vadd.f32 %v1136, %v1251
      %1253 = vmatmul.f32.gmra.mxu0 %v1142
      %v1254 = vpop.f32.mrf.mxu0
      %v1255 = vadd.f32 %v1136, %v1254
      %1256 = vmatmul.f32.gmra.mxu0 %v1145
      %v1257 = vpop.f32.mrf.mxu0
      %v1258 = vadd.f32 %v1136, %v1257
      %1259 = vmatmul.f32.gmra.mxu0 %v1148
      %v1260 = vpop.f32.mrf.mxu0
      %v1261 = vadd.f32 %v1136, %v1260
      %1262 = vmatmul.f32.gmra.mxu0 %v1151
      %v1263 = vpop.f32.mrf.mxu0
      %v1264 = vadd.f32 %v1136, %v1263
      %1265 = vmatmul.f32.gmra.mxu0 %v1154
      %v1266 = vpop.f32.mrf.mxu0
      %v1267 = vadd.f32 %v1136, %v1266
      %1268 = vmatmul.f32.gmra.mxu0 %v1157
      %v1269 = vpop.f32.mrf.mxu0
      %v1270 = vadd.f32 %v1136, %v1269
      %1271 = vmatmul.f32.gmra.mxu0 %v1160
      %v1272 = vpop.f32.mrf.mxu0
      %v1273 = vadd.f32 %v1136, %v1272
      %1274 = vmatmul.f32.gmra.mxu0 %v1163
      %v1275 = vpop.f32.mrf.mxu0
      %v1276 = vadd.f32 %v1136, %v1275
      %1277 = vmatmul.f32.gmra.mxu0 %v1166
      %v1278 = vpop.f32.mrf.mxu0
      %v1279 = vadd.f32 %v1136, %v1278
      %1280 = vmatmul.f32.gmra.mxu0 %v1169
      %v1281 = vpop.f32.mrf.mxu0
      %v1282 = vadd.f32 %v1136, %v1281
      %1283 = vmatmul.f32.gmra.mxu0 %v1172
      %v1284 = vpop.f32.mrf.mxu0
      %v1285 = vadd.f32 %v1136, %v1284
      %1286 = vmatmul.f32.gmra.mxu0 %v1175
      %v1287 = vpop.f32.mrf.mxu0
      %v1288 = vadd.f32 %v1136, %v1287
      %1289 = vmatmul.f32.gmra.mxu0 %v1178
      %v1290 = vpop.f32.mrf.mxu0
      %v1291 = vadd.f32 %v1136, %v1290
      %1292 = vmatmul.f32.gmra.mxu0 %v1181
      %v1293 = vpop.f32.mrf.mxu0
      %v1294 = vadd.f32 %v1136, %v1293
      %1295 = vmatmul.f32.gmra.mxu0 %v1184
      %v1296 = vpop.f32.mrf.mxu0
      %v1297 = vadd.f32 %v1136, %v1296
      %1298 = vmatmul.f32.gmra.mxu0 %v1187
      %v1299 = vpop.f32.mrf.mxu0
      %v1300 = vadd.f32 %v1136, %v1299
      %1301 = vmatmul.f32.gmra.mxu0 %v1190
      %v1302 = vpop.f32.mrf.mxu0
      %v1303 = vadd.f32 %v1136, %v1302
      %1304 = vmatmul.f32.gmra.mxu0 %v1193
      %v1305 = vpop.f32.mrf.mxu0
      %v1306 = vadd.f32 %v1136, %v1305
      %1307 = vmatmul.f32.gmra.mxu0 %v1196
      %v1308 = vpop.f32.mrf.mxu0
      %v1309 = vadd.f32 %v1136, %v1308
      %1310 = vmatmul.f32.gmra.mxu0 %v1199
      %v1311 = vpop.f32.mrf.mxu0
      %v1312 = vadd.f32 %v1136, %v1311
      %1313 = vmatmul.f32.gmra.mxu0 %v1202
      %v1314 = vpop.f32.mrf.mxu0
      %v1315 = vadd.f32 %v1136, %v1314
      %1316 = vmatmul.f32.gmra.mxu0 %v1205
      %v1317 = vpop.f32.mrf.mxu0
      %v1318 = vadd.f32 %v1136, %v1317
      %1319 = vmatmul.f32.gmra.mxu0 %v1208
      %v1320 = vpop.f32.mrf.mxu0
      %v1321 = vadd.f32 %v1136, %v1320
      %1322 = vmatmul.f32.gmra.mxu0 %v1211
      %v1323 = vpop.f32.mrf.mxu0
      %v1324 = vadd.f32 %v1136, %v1323
      %1325 = vmatmul.f32.gmra.mxu0 %v1214
      %v1326 = vpop.f32.mrf.mxu0
      %v1327 = vadd.f32 %v1136, %v1326
      %1328 = vmatmul.f32.gmra.mxu0 %v1217
      %v1329 = vpop.f32.mrf.mxu0
      %v1330 = vadd.f32 %v1136, %v1329
      %1331 = vmatmul.f32.gmra.mxu0 %v1220
      %v1332 = vpop.f32.mrf.mxu0
      %v1333 = vadd.f32 %v1136, %v1332
      %1334 = vmatmul.f32.gmra.mxu0 %v1223
      %v1335 = vpop.f32.mrf.mxu0
      %v1336 = vadd.f32 %v1136, %v1335
      %1337 = vmatmul.f32.gmra.mxu0 %v1226
      %v1338 = vpop.f32.mrf.mxu0
      %v1339 = vadd.f32 %v1136, %v1338
      %1340 = vmatmul.f32.gmra.mxu0 %v1229
      %v1341 = vpop.f32.mrf.mxu0
      %v1342 = vadd.f32 %v1136, %v1341
      %1343 = vmatmul.f32.gmra.mxu0 %v1232
      %v1344 = vpop.f32.mrf.mxu0
      %v1345 = vadd.f32 %v1136, %v1344
      %1346 = vdwg.mxu0
      %v1347 = vld [vmem:[%s5] sm:$0xff]
      %v1348 = vld [vmem:[%s5 + $0x8] sm:$0xff]
      %v1349 = vld [vmem:[%s5 + $0x10] sm:$0xff]
      %v1350 = vld [vmem:[%s5 + $0x18] sm:$0xff]
      %v1351 = vld [vmem:[%s5 + $0x20] sm:$0xff]
      %v1352 = vld [vmem:[%s5 + $0x28] sm:$0xff]
      %v1353 = vld [vmem:[%s5 + $0x30] sm:$0xff]
      %v1354 = vld [vmem:[%s5 + $0x38] sm:$0xff]
      %1363 = vrot.lane.b32.xlu0 %v1252, 96
      %v1364 = vpop.permute.xlu0 %1363
      %1365 = vrot.lane.b32.xlu0 %v1255, 96
      %v1366 = vpop.permute.xlu0 %1365
      %1367 = vrot.lane.b32.xlu0 %v1258, 96
      %v1368 = vpop.permute.xlu0 %1367
      %1369 = vrot.lane.b32.xlu0 %v1261, 96
      %v1370 = vpop.permute.xlu0 %1369
      %1371 = vrot.lane.b32.xlu0 %v1264, 96
      %v1372 = vpop.permute.xlu0 %1371
      %1373 = vrot.lane.b32.xlu0 %v1267, 96
      %v1374 = vpop.permute.xlu0 %1373
      %1375 = vrot.lane.b32.xlu0 %v1270, 96
      %v1376 = vpop.permute.xlu0 %1375
      %1377 = vrot.lane.b32.xlu0 %v1273, 96
      %v1378 = vpop.permute.xlu0 %1377
      %vm1379 = vcmask 64512
      %v1380 = vsel %vm1379, %v1252, 0
      %v1382 = vsel %vm1379, %v1255, 0
      %v1384 = vsel %vm1379, %v1258, 0
      %v1386 = vsel %vm1379, %v1261, 0
      %v1388 = vsel %vm1379, %v1264, 0
      %v1390 = vsel %vm1379, %v1267, 0
      %v1392 = vsel %vm1379, %v1270, 0
      %v1394 = vsel %vm1379, %v1273, 0
      %v1396 = vsel %vm1379, %v1364, 0
      %v1398 = vsel %vm1379, %v1366, 0
      %v1400 = vsel %vm1379, %v1368, 0
      %v1402 = vsel %vm1379, %v1370, 0
      %v1404 = vsel %vm1379, %v1372, 0
      %v1406 = vsel %vm1379, %v1374, 0
      %v1408 = vsel %vm1379, %v1376, 0
      %v1410 = vsel %vm1379, %v1378, 0
      %1412 = vmatpush.xpose.msra.mxu0 0.0
      %1413 = vmatpush.xpose.msra.mxu0 0.0
      %1414 = vmatpush.xpose.msra.mxu0 0.0
      %1415 = vmatpush.xpose.msra.mxu0 0.0
      %1416 = vmatpush.xpose.msra.mxu0 0.0
      %1417 = vmatpush.xpose.msra.mxu0 0.0
      %1418 = vmatpush.xpose.msra.mxu0 0.0
      %1419 = vmatpush.xpose.msra.mxu0 0.0
      %1420 = vmatpush.xpose.msra.mxu0 %v1410
      %1421 = vmatpush.xpose.msra.mxu0 %v1408
      %1422 = vmatpush.xpose.msra.mxu0 %v1406
      %1423 = vmatpush.xpose.msra.mxu0 %v1404
      %1424 = vmatpush.xpose.msra.mxu0 %v1402
      %1425 = vmatpush.xpose.msra.mxu0 %v1400
      %1426 = vmatpush.xpose.msra.mxu0 %v1398
      %1427 = vmatpush.xpose.msra.mxu0 %v1396
      %1428 = vmatmul.f32.gmra.mxu0 %v1380
      %v1429 = vpop.f32.mrf.mxu0
      %v1430 = vadd.f32 %v1347, %v1429
      %1431 = vmatmul.f32.gmra.mxu0 %v1382
      %v1432 = vpop.f32.mrf.mxu0
      %v1433 = vadd.f32 %v1348, %v1432
      %1434 = vmatmul.f32.gmra.mxu0 %v1384
      %v1435 = vpop.f32.mrf.mxu0
      %v1436 = vadd.f32 %v1349, %v1435
      %1437 = vmatmul.f32.gmra.mxu0 %v1386
      %v1438 = vpop.f32.mrf.mxu0
      %v1439 = vadd.f32 %v1350, %v1438
      %1440 = vmatmul.f32.gmra.mxu0 %v1388
      %v1441 = vpop.f32.mrf.mxu0
      %v1442 = vadd.f32 %v1351, %v1441
      %1443 = vmatmul.f32.gmra.mxu0 %v1390
      %v1444 = vpop.f32.mrf.mxu0
      %v1445 = vadd.f32 %v1352, %v1444
      %1446 = vmatmul.f32.gmra.mxu0 %v1392
      %v1447 = vpop.f32.mrf.mxu0
      %v1448 = vadd.f32 %v1353, %v1447
      %1449 = vmatmul.f32.gmra.mxu0 %v1394
      %v1450 = vpop.f32.mrf.mxu0
      %v1451 = vadd.f32 %v1354, %v1450
      %1452 = vdwg.mxu0
      %1461 = vrot.lane.b32.xlu0 %v1276, 96
      %v1462 = vpop.permute.xlu0 %1461
      %1463 = vrot.lane.b32.xlu0 %v1279, 96
      %v1464 = vpop.permute.xlu0 %1463
      %1465 = vrot.lane.b32.xlu0 %v1282, 96
      %v1466 = vpop.permute.xlu0 %1465
      %1467 = vrot.lane.b32.xlu0 %v1285, 96
      %v1468 = vpop.permute.xlu0 %1467
      %1469 = vrot.lane.b32.xlu0 %v1288, 96
      %v1470 = vpop.permute.xlu0 %1469
      %1471 = vrot.lane.b32.xlu0 %v1291, 96
      %v1472 = vpop.permute.xlu0 %1471
      %1473 = vrot.lane.b32.xlu0 %v1294, 96
      %v1474 = vpop.permute.xlu0 %1473
      %1475 = vrot.lane.b32.xlu0 %v1297, 96
      %v1476 = vpop.permute.xlu0 %1475
      %v1477 = vsel %vm1379, %v1276, 0
      %v1479 = vsel %vm1379, %v1279, 0
      %v1481 = vsel %vm1379, %v1282, 0
      %v1483 = vsel %vm1379, %v1285, 0
      %v1485 = vsel %vm1379, %v1288, 0
      %v1487 = vsel %vm1379, %v1291, 0
      %v1489 = vsel %vm1379, %v1294, 0
      %v1491 = vsel %vm1379, %v1297, 0
      %v1493 = vsel %vm1379, %v1462, 0
      %v1495 = vsel %vm1379, %v1464, 0
      %v1497 = vsel %vm1379, %v1466, 0
      %v1499 = vsel %vm1379, %v1468, 0
      %v1501 = vsel %vm1379, %v1470, 0
      %v1503 = vsel %vm1379, %v1472, 0
      %v1505 = vsel %vm1379, %v1474, 0
      %v1507 = vsel %vm1379, %v1476, 0
      %1509 = vmatpush.xpose.msra.mxu0 0.0
      %1510 = vmatpush.xpose.msra.mxu0 0.0
      %1511 = vmatpush.xpose.msra.mxu0 0.0
      %1512 = vmatpush.xpose.msra.mxu0 0.0
      %1513 = vmatpush.xpose.msra.mxu0 0.0
      %1514 = vmatpush.xpose.msra.mxu0 0.0
      %1515 = vmatpush.xpose.msra.mxu0 0.0
      %1516 = vmatpush.xpose.msra.mxu0 0.0
      %1517 = vmatpush.xpose.msra.mxu0 %v1507
      %1518 = vmatpush.xpose.msra.mxu0 %v1505
      %1519 = vmatpush.xpose.msra.mxu0 %v1503
      %1520 = vmatpush.xpose.msra.mxu0 %v1501
      %1521 = vmatpush.xpose.msra.mxu0 %v1499
      %1522 = vmatpush.xpose.msra.mxu0 %v1497
      %1523 = vmatpush.xpose.msra.mxu0 %v1495
      %1524 = vmatpush.xpose.msra.mxu0 %v1493
      %1525 = vmatmul.f32.gmra.mxu0 %v1477
      %v1526 = vpop.f32.mrf.mxu0
      %v1527 = vadd.f32 %v1347, %v1526
      %1528 = vmatmul.f32.gmra.mxu0 %v1479
      %v1529 = vpop.f32.mrf.mxu0
      %v1530 = vadd.f32 %v1348, %v1529
      %1531 = vmatmul.f32.gmra.mxu0 %v1481
      %v1532 = vpop.f32.mrf.mxu0
      %v1533 = vadd.f32 %v1349, %v1532
      %1534 = vmatmul.f32.gmra.mxu0 %v1483
      %v1535 = vpop.f32.mrf.mxu0
      %v1536 = vadd.f32 %v1350, %v1535
      %1537 = vmatmul.f32.gmra.mxu0 %v1485
      %v1538 = vpop.f32.mrf.mxu0
      %v1539 = vadd.f32 %v1351, %v1538
      %1540 = vmatmul.f32.gmra.mxu0 %v1487
      %v1541 = vpop.f32.mrf.mxu0
      %v1542 = vadd.f32 %v1352, %v1541
      %1543 = vmatmul.f32.gmra.mxu0 %v1489
      %v1544 = vpop.f32.mrf.mxu0
      %v1545 = vadd.f32 %v1353, %v1544
      %1546 = vmatmul.f32.gmra.mxu0 %v1491
      %v1547 = vpop.f32.mrf.mxu0
      %v1548 = vadd.f32 %v1354, %v1547
      %1549 = vdwg.mxu0
      %1558 = vrot.lane.b32.xlu0 %v1300, 96
      %v1559 = vpop.permute.xlu0 %1558
      %1560 = vrot.lane.b32.xlu0 %v1303, 96
      %v1561 = vpop.permute.xlu0 %1560
      %1562 = vrot.lane.b32.xlu0 %v1306, 96
      %v1563 = vpop.permute.xlu0 %1562
      %1564 = vrot.lane.b32.xlu0 %v1309, 96
      %v1565 = vpop.permute.xlu0 %1564
      %1566 = vrot.lane.b32.xlu0 %v1312, 96
      %v1567 = vpop.permute.xlu0 %1566
      %1568 = vrot.lane.b32.xlu0 %v1315, 96
      %v1569 = vpop.permute.xlu0 %1568
      %1570 = vrot.lane.b32.xlu0 %v1318, 96
      %v1571 = vpop.permute.xlu0 %1570
      %1572 = vrot.lane.b32.xlu0 %v1321, 96
      %v1573 = vpop.permute.xlu0 %1572
      %v1574 = vsel %vm1379, %v1300, 0
      %v1576 = vsel %vm1379, %v1303, 0
      %v1578 = vsel %vm1379, %v1306, 0
      %v1580 = vsel %vm1379, %v1309, 0
      %v1582 = vsel %vm1379, %v1312, 0
      %v1584 = vsel %vm1379, %v1315, 0
      %v1586 = vsel %vm1379, %v1318, 0
      %v1588 = vsel %vm1379, %v1321, 0
      %v1590 = vsel %vm1379, %v1559, 0
      %v1592 = vsel %vm1379, %v1561, 0
      %v1594 = vsel %vm1379, %v1563, 0
      %v1596 = vsel %vm1379, %v1565, 0
      %v1598 = vsel %vm1379, %v1567, 0
      %v1600 = vsel %vm1379, %v1569, 0
      %v1602 = vsel %vm1379, %v1571, 0
      %v1604 = vsel %vm1379, %v1573, 0
      %1606 = vmatpush.xpose.msra.mxu0 0.0
      %1607 = vmatpush.xpose.msra.mxu0 0.0
      %1608 = vmatpush.xpose.msra.mxu0 0.0
      %1609 = vmatpush.xpose.msra.mxu0 0.0
      %1610 = vmatpush.xpose.msra.mxu0 0.0
      %1611 = vmatpush.xpose.msra.mxu0 0.0
      %1612 = vmatpush.xpose.msra.mxu0 0.0
      %1613 = vmatpush.xpose.msra.mxu0 0.0
      %1614 = vmatpush.xpose.msra.mxu0 %v1604
      %1615 = vmatpush.xpose.msra.mxu0 %v1602
      %1616 = vmatpush.xpose.msra.mxu0 %v1600
      %1617 = vmatpush.xpose.msra.mxu0 %v1598
      %1618 = vmatpush.xpose.msra.mxu0 %v1596
      %1619 = vmatpush.xpose.msra.mxu0 %v1594
      %1620 = vmatpush.xpose.msra.mxu0 %v1592
      %1621 = vmatpush.xpose.msra.mxu0 %v1590
      %1622 = vmatmul.f32.gmra.mxu0 %v1574
      %v1623 = vpop.f32.mrf.mxu0
      %v1624 = vadd.f32 %v1347, %v1623
      %1625 = vmatmul.f32.gmra.mxu0 %v1576
      %v1626 = vpop.f32.mrf.mxu0
      %v1627 = vadd.f32 %v1348, %v1626
      %1628 = vmatmul.f32.gmra.mxu0 %v1578
      %v1629 = vpop.f32.mrf.mxu0
      %v1630 = vadd.f32 %v1349, %v1629
      %1631 = vmatmul.f32.gmra.mxu0 %v1580
      %v1632 = vpop.f32.mrf.mxu0
      %v1633 = vadd.f32 %v1350, %v1632
      %1634 = vmatmul.f32.gmra.mxu0 %v1582
      %v1635 = vpop.f32.mrf.mxu0
      %v1636 = vadd.f32 %v1351, %v1635
      %1637 = vmatmul.f32.gmra.mxu0 %v1584
      %v1638 = vpop.f32.mrf.mxu0
      %v1639 = vadd.f32 %v1352, %v1638
      %1640 = vmatmul.f32.gmra.mxu0 %v1586
      %v1641 = vpop.f32.mrf.mxu0
      %v1642 = vadd.f32 %v1353, %v1641
      %1643 = vmatmul.f32.gmra.mxu0 %v1588
      %v1644 = vpop.f32.mrf.mxu0
      %v1645 = vadd.f32 %v1354, %v1644
      %1646 = vdwg.mxu0
      %1655 = vrot.lane.b32.xlu0 %v1324, 96
      %v1656 = vpop.permute.xlu0 %1655
      %1657 = vrot.lane.b32.xlu0 %v1327, 96
      %v1658 = vpop.permute.xlu0 %1657
      %1659 = vrot.lane.b32.xlu0 %v1330, 96
      %v1660 = vpop.permute.xlu0 %1659
      %1661 = vrot.lane.b32.xlu0 %v1333, 96
      %v1662 = vpop.permute.xlu0 %1661
      %1663 = vrot.lane.b32.xlu0 %v1336, 96
      %v1664 = vpop.permute.xlu0 %1663
      %1665 = vrot.lane.b32.xlu0 %v1339, 96
      %v1666 = vpop.permute.xlu0 %1665
      %1667 = vrot.lane.b32.xlu0 %v1342, 96
      %v1668 = vpop.permute.xlu0 %1667
      %1669 = vrot.lane.b32.xlu0 %v1345, 96
      %v1670 = vpop.permute.xlu0 %1669
      %v1671 = vsel %vm1379, %v1324, 0
      %v1673 = vsel %vm1379, %v1327, 0
      %v1675 = vsel %vm1379, %v1330, 0
      %v1677 = vsel %vm1379, %v1333, 0
      %v1679 = vsel %vm1379, %v1336, 0
      %v1681 = vsel %vm1379, %v1339, 0
      %v1683 = vsel %vm1379, %v1342, 0
      %v1685 = vsel %vm1379, %v1345, 0
      %v1687 = vsel %vm1379, %v1656, 0
      %v1689 = vsel %vm1379, %v1658, 0
      %v1691 = vsel %vm1379, %v1660, 0
      %v1693 = vsel %vm1379, %v1662, 0
      %v1695 = vsel %vm1379, %v1664, 0
      %v1697 = vsel %vm1379, %v1666, 0
      %v1699 = vsel %vm1379, %v1668, 0
      %v1701 = vsel %vm1379, %v1670, 0
      %1703 = vmatpush.xpose.msra.mxu0 0.0
      %1704 = vmatpush.xpose.msra.mxu0 0.0
      %1705 = vmatpush.xpose.msra.mxu0 0.0
      %1706 = vmatpush.xpose.msra.mxu0 0.0
      %1707 = vmatpush.xpose.msra.mxu0 0.0
      %1708 = vmatpush.xpose.msra.mxu0 0.0
      %1709 = vmatpush.xpose.msra.mxu0 0.0
      %1710 = vmatpush.xpose.msra.mxu0 0.0
      %1711 = vmatpush.xpose.msra.mxu0 %v1701
      %1712 = vmatpush.xpose.msra.mxu0 %v1699
      %1713 = vmatpush.xpose.msra.mxu0 %v1697
      %1714 = vmatpush.xpose.msra.mxu0 %v1695
      %1715 = vmatpush.xpose.msra.mxu0 %v1693
      %1716 = vmatpush.xpose.msra.mxu0 %v1691
      %1717 = vmatpush.xpose.msra.mxu0 %v1689
      %1718 = vmatpush.xpose.msra.mxu0 %v1687
      %1719 = vmatmul.f32.gmra.mxu0 %v1671
      %v1720 = vpop.f32.mrf.mxu0
      %v1721 = vadd.f32 %v1347, %v1720
      %1722 = vmatmul.f32.gmra.mxu0 %v1673
      %v1723 = vpop.f32.mrf.mxu0
      %v1724 = vadd.f32 %v1348, %v1723
      %1725 = vmatmul.f32.gmra.mxu0 %v1675
      %v1726 = vpop.f32.mrf.mxu0
      %v1727 = vadd.f32 %v1349, %v1726
      %1728 = vmatmul.f32.gmra.mxu0 %v1677
      %v1729 = vpop.f32.mrf.mxu0
      %v1730 = vadd.f32 %v1350, %v1729
      %1731 = vmatmul.f32.gmra.mxu0 %v1679
      %v1732 = vpop.f32.mrf.mxu0
      %v1733 = vadd.f32 %v1351, %v1732
      %1734 = vmatmul.f32.gmra.mxu0 %v1681
      %v1735 = vpop.f32.mrf.mxu0
      %v1736 = vadd.f32 %v1352, %v1735
      %1737 = vmatmul.f32.gmra.mxu0 %v1683
      %v1738 = vpop.f32.mrf.mxu0
      %v1739 = vadd.f32 %v1353, %v1738
      %1740 = vmatmul.f32.gmra.mxu0 %v1685
      %v1741 = vpop.f32.mrf.mxu0
      %v1742 = vadd.f32 %v1354, %v1741
      %1743 = vdwg.mxu0
      %vm1744 = vcmask 523264
      %v1745 = vsel %vm1744, %v1430, -inf
      %1746 = vmax.xlane.f32.xlu0 %v1745
      %v1747 = vpop.xlane.xlu0 %1746
      %v1748 = vsel %vm1744, %v1433, -inf
      %1749 = vmax.xlane.f32.xlu0 %v1748
      %v1750 = vpop.xlane.xlu0 %1749
      %v1751 = vsel %vm1744, %v1436, -inf
      %1752 = vmax.xlane.f32.xlu0 %v1751
      %v1753 = vpop.xlane.xlu0 %1752
      %v1754 = vsel %vm1744, %v1439, -inf
      %1755 = vmax.xlane.f32.xlu0 %v1754
      %v1756 = vpop.xlane.xlu0 %1755
      %v1757 = vsel %vm1744, %v1442, -inf
      %1758 = vmax.xlane.f32.xlu0 %v1757
      %v1759 = vpop.xlane.xlu0 %1758
      %v1760 = vsel %vm1744, %v1445, -inf
      %1761 = vmax.xlane.f32.xlu0 %v1760
      %v1762 = vpop.xlane.xlu0 %1761
      %v1763 = vsel %vm1744, %v1448, -inf
      %1764 = vmax.xlane.f32.xlu0 %v1763
      %v1765 = vpop.xlane.xlu0 %1764
      %v1766 = vsel %vm1744, %v1451, -inf
      %1767 = vmax.xlane.f32.xlu0 %v1766
      %v1768 = vpop.xlane.xlu0 %1767
      %v1769 = vsel %vm1744, %v1527, -inf
      %1770 = vmax.xlane.f32.xlu0 %v1769
      %v1771 = vpop.xlane.xlu0 %1770
      %v1772 = vsel %vm1744, %v1530, -inf
      %1773 = vmax.xlane.f32.xlu0 %v1772
      %v1774 = vpop.xlane.xlu0 %1773
      %v1775 = vsel %vm1744, %v1533, -inf
      %1776 = vmax.xlane.f32.xlu0 %v1775
      %v1777 = vpop.xlane.xlu0 %1776
      %v1778 = vsel %vm1744, %v1536, -inf
      %1779 = vmax.xlane.f32.xlu0 %v1778
      %v1780 = vpop.xlane.xlu0 %1779
      %v1781 = vsel %vm1744, %v1539, -inf
      %1782 = vmax.xlane.f32.xlu0 %v1781
      %v1783 = vpop.xlane.xlu0 %1782
      %v1784 = vsel %vm1744, %v1542, -inf
      %1785 = vmax.xlane.f32.xlu0 %v1784
      %v1786 = vpop.xlane.xlu0 %1785
      %v1787 = vsel %vm1744, %v1545, -inf
      %1788 = vmax.xlane.f32.xlu0 %v1787
      %v1789 = vpop.xlane.xlu0 %1788
      %v1790 = vsel %vm1744, %v1548, -inf
      %1791 = vmax.xlane.f32.xlu0 %v1790
      %v1792 = vpop.xlane.xlu0 %1791
      %v1793 = vsel %vm1744, %v1624, -inf
      %1794 = vmax.xlane.f32.xlu0 %v1793
      %v1795 = vpop.xlane.xlu0 %1794
      %v1796 = vsel %vm1744, %v1627, -inf
      %1797 = vmax.xlane.f32.xlu0 %v1796
      %v1798 = vpop.xlane.xlu0 %1797
      %v1799 = vsel %vm1744, %v1630, -inf
      %1800 = vmax.xlane.f32.xlu0 %v1799
      %v1801 = vpop.xlane.xlu0 %1800
      %v1802 = vsel %vm1744, %v1633, -inf
      %1803 = vmax.xlane.f32.xlu0 %v1802
      %v1804 = vpop.xlane.xlu0 %1803
      %v1805 = vsel %vm1744, %v1636, -inf
      %1806 = vmax.xlane.f32.xlu0 %v1805
      %v1807 = vpop.xlane.xlu0 %1806
      %v1808 = vsel %vm1744, %v1639, -inf
      %1809 = vmax.xlane.f32.xlu0 %v1808
      %v1810 = vpop.xlane.xlu0 %1809
      %v1811 = vsel %vm1744, %v1642, -inf
      %1812 = vmax.xlane.f32.xlu0 %v1811
      %v1813 = vpop.xlane.xlu0 %1812
      %v1814 = vsel %vm1744, %v1645, -inf
      %1815 = vmax.xlane.f32.xlu0 %v1814
      %v1816 = vpop.xlane.xlu0 %1815
      %v1817 = vsel %vm1744, %v1721, -inf
      %1818 = vmax.xlane.f32.xlu0 %v1817
      %v1819 = vpop.xlane.xlu0 %1818
      %v1820 = vsel %vm1744, %v1724, -inf
      %1821 = vmax.xlane.f32.xlu0 %v1820
      %v1822 = vpop.xlane.xlu0 %1821
      %v1823 = vsel %vm1744, %v1727, -inf
      %1824 = vmax.xlane.f32.xlu0 %v1823
      %v1825 = vpop.xlane.xlu0 %1824
      %v1826 = vsel %vm1744, %v1730, -inf
      %1827 = vmax.xlane.f32.xlu0 %v1826
      %v1828 = vpop.xlane.xlu0 %1827
      %v1829 = vsel %vm1744, %v1733, -inf
      %1830 = vmax.xlane.f32.xlu0 %v1829
      %v1831 = vpop.xlane.xlu0 %1830
      %v1832 = vsel %vm1744, %v1736, -inf
      %1833 = vmax.xlane.f32.xlu0 %v1832
      %v1834 = vpop.xlane.xlu0 %1833
      %v1835 = vsel %vm1744, %v1739, -inf
      %1836 = vmax.xlane.f32.xlu0 %v1835
      %v1837 = vpop.xlane.xlu0 %1836
      %v1838 = vsel %vm1744, %v1742, -inf
      %1839 = vmax.xlane.f32.xlu0 %v1838
      %v1840 = vpop.xlane.xlu0 %1839
      %v1841 = vsub.f32 %v1430, %v1747
      %v1842 = vsub.f32 %v1433, %v1750
      %v1843 = vsub.f32 %v1436, %v1753
      %v1844 = vsub.f32 %v1439, %v1756
      %v1845 = vsub.f32 %v1442, %v1759
      %v1846 = vsub.f32 %v1445, %v1762
      %v1847 = vsub.f32 %v1448, %v1765
      %v1848 = vsub.f32 %v1451, %v1768
      %v1849 = vsub.f32 %v1527, %v1771
      %v1850 = vsub.f32 %v1530, %v1774
      %v1851 = vsub.f32 %v1533, %v1777
      %v1852 = vsub.f32 %v1536, %v1780
      %v1853 = vsub.f32 %v1539, %v1783
      %v1854 = vsub.f32 %v1542, %v1786
      %v1855 = vsub.f32 %v1545, %v1789
      %v1856 = vsub.f32 %v1548, %v1792
      %v1857 = vsub.f32 %v1624, %v1795
      %v1858 = vsub.f32 %v1627, %v1798
      %v1859 = vsub.f32 %v1630, %v1801
      %v1860 = vsub.f32 %v1633, %v1804
      %v1861 = vsub.f32 %v1636, %v1807
      %v1862 = vsub.f32 %v1639, %v1810
      %v1863 = vsub.f32 %v1642, %v1813
      %v1864 = vsub.f32 %v1645, %v1816
      %v1865 = vsub.f32 %v1721, %v1819
      %v1866 = vsub.f32 %v1724, %v1822
      %v1867 = vsub.f32 %v1727, %v1825
      %v1868 = vsub.f32 %v1730, %v1828
      %v1869 = vsub.f32 %v1733, %v1831
      %v1870 = vsub.f32 %v1736, %v1834
      %v1871 = vsub.f32 %v1739, %v1837
      %v1872 = vsub.f32 %v1742, %v1840
      %v1873 = vmul.f32 %v1841, 1.442695
      %v1874 = vpow.pop %v1873
      %v1875 = vmul.f32 %v1842, 1.442695
      %v1876 = vpow.pop %v1875
      %v1877 = vmul.f32 %v1843, 1.442695
      %v1878 = vpow.pop %v1877
      %v1879 = vmul.f32 %v1844, 1.442695
      %v1880 = vpow.pop %v1879
      %v1881 = vmul.f32 %v1845, 1.442695
      %v1882 = vpow.pop %v1881
      %v1883 = vmul.f32 %v1846, 1.442695
      %v1884 = vpow.pop %v1883
      %v1885 = vmul.f32 %v1847, 1.442695
      %v1886 = vpow.pop %v1885
      %v1887 = vmul.f32 %v1848, 1.442695
      %v1888 = vpow.pop %v1887
      %v1889 = vmul.f32 %v1849, 1.442695
      %v1890 = vpow.pop %v1889
      %v1891 = vmul.f32 %v1850, 1.442695
      %v1892 = vpow.pop %v1891
      %v1893 = vmul.f32 %v1851, 1.442695
      %v1894 = vpow.pop %v1893
      %v1895 = vmul.f32 %v1852, 1.442695
      %v1896 = vpow.pop %v1895
      %v1897 = vmul.f32 %v1853, 1.442695
      %v1898 = vpow.pop %v1897
      %v1899 = vmul.f32 %v1854, 1.442695
      %v1900 = vpow.pop %v1899
      %v1901 = vmul.f32 %v1855, 1.442695
      %v1902 = vpow.pop %v1901
      %v1903 = vmul.f32 %v1856, 1.442695
      %v1904 = vpow.pop %v1903
      %v1905 = vmul.f32 %v1857, 1.442695
      %v1906 = vpow.pop %v1905
      %v1907 = vmul.f32 %v1858, 1.442695
      %v1908 = vpow.pop %v1907
      %v1909 = vmul.f32 %v1859, 1.442695
      %v1910 = vpow.pop %v1909
      %v1911 = vmul.f32 %v1860, 1.442695
      %v1912 = vpow.pop %v1911
      %v1913 = vmul.f32 %v1861, 1.442695
      %v1914 = vpow.pop %v1913
      %v1915 = vmul.f32 %v1862, 1.442695
      %v1916 = vpow.pop %v1915
      %v1917 = vmul.f32 %v1863, 1.442695
      %v1918 = vpow.pop %v1917
      %v1919 = vmul.f32 %v1864, 1.442695
      %v1920 = vpow.pop %v1919
      %v1921 = vmul.f32 %v1865, 1.442695
      %v1922 = vpow.pop %v1921
      %v1923 = vmul.f32 %v1866, 1.442695
      %v1924 = vpow.pop %v1923
      %v1925 = vmul.f32 %v1867, 1.442695
      %v1926 = vpow.pop %v1925
      %v1927 = vmul.f32 %v1868, 1.442695
      %v1928 = vpow.pop %v1927
      %v1929 = vmul.f32 %v1869, 1.442695
      %v1930 = vpow.pop %v1929
      %v1931 = vmul.f32 %v1870, 1.442695
      %v1932 = vpow.pop %v1931
      %v1933 = vmul.f32 %v1871, 1.442695
      %v1934 = vpow.pop %v1933
      %v1935 = vmul.f32 %v1872, 1.442695
      %v1936 = vpow.pop %v1935
      %v1937 = vsel %vm1744, %v1874, 0.0
      %1938 = vadd.xlane.f32.xlu0 %v1937
      %v1939 = vpop.xlane.xlu0 %1938
      %v1940 = vsel %vm1744, %v1876, 0.0
      %1941 = vadd.xlane.f32.xlu0 %v1940
      %v1942 = vpop.xlane.xlu0 %1941
      %v1943 = vsel %vm1744, %v1878, 0.0
      %1944 = vadd.xlane.f32.xlu0 %v1943
      %v1945 = vpop.xlane.xlu0 %1944
      %v1946 = vsel %vm1744, %v1880, 0.0
      %1947 = vadd.xlane.f32.xlu0 %v1946
      %v1948 = vpop.xlane.xlu0 %1947
      %v1949 = vsel %vm1744, %v1882, 0.0
      %1950 = vadd.xlane.f32.xlu0 %v1949
      %v1951 = vpop.xlane.xlu0 %1950
      %v1952 = vsel %vm1744, %v1884, 0.0
      %1953 = vadd.xlane.f32.xlu0 %v1952
      %v1954 = vpop.xlane.xlu0 %1953
      %v1955 = vsel %vm1744, %v1886, 0.0
      %1956 = vadd.xlane.f32.xlu0 %v1955
      %v1957 = vpop.xlane.xlu0 %1956
      %v1958 = vsel %vm1744, %v1888, 0.0
      %1959 = vadd.xlane.f32.xlu0 %v1958
      %v1960 = vpop.xlane.xlu0 %1959
      %v1961 = vsel %vm1744, %v1890, 0.0
      %1962 = vadd.xlane.f32.xlu0 %v1961
      %v1963 = vpop.xlane.xlu0 %1962
      %v1964 = vsel %vm1744, %v1892, 0.0
      %1965 = vadd.xlane.f32.xlu0 %v1964
      %v1966 = vpop.xlane.xlu0 %1965
      %v1967 = vsel %vm1744, %v1894, 0.0
      %1968 = vadd.xlane.f32.xlu0 %v1967
      %v1969 = vpop.xlane.xlu0 %1968
      %v1970 = vsel %vm1744, %v1896, 0.0
      %1971 = vadd.xlane.f32.xlu0 %v1970
      %v1972 = vpop.xlane.xlu0 %1971
      %v1973 = vsel %vm1744, %v1898, 0.0
      %1974 = vadd.xlane.f32.xlu0 %v1973
      %v1975 = vpop.xlane.xlu0 %1974
      %v1976 = vsel %vm1744, %v1900, 0.0
      %1977 = vadd.xlane.f32.xlu0 %v1976
      %v1978 = vpop.xlane.xlu0 %1977
      %v1979 = vsel %vm1744, %v1902, 0.0
      %1980 = vadd.xlane.f32.xlu0 %v1979
      %v1981 = vpop.xlane.xlu0 %1980
      %v1982 = vsel %vm1744, %v1904, 0.0
      %1983 = vadd.xlane.f32.xlu0 %v1982
      %v1984 = vpop.xlane.xlu0 %1983
      %v1985 = vsel %vm1744, %v1906, 0.0
      %1986 = vadd.xlane.f32.xlu0 %v1985
      %v1987 = vpop.xlane.xlu0 %1986
      %v1988 = vsel %vm1744, %v1908, 0.0
      %1989 = vadd.xlane.f32.xlu0 %v1988
      %v1990 = vpop.xlane.xlu0 %1989
      %v1991 = vsel %vm1744, %v1910, 0.0
      %1992 = vadd.xlane.f32.xlu0 %v1991
      %v1993 = vpop.xlane.xlu0 %1992
      %v1994 = vsel %vm1744, %v1912, 0.0
      %1995 = vadd.xlane.f32.xlu0 %v1994
      %v1996 = vpop.xlane.xlu0 %1995
      %v1997 = vsel %vm1744, %v1914, 0.0
      %1998 = vadd.xlane.f32.xlu0 %v1997
      %v1999 = vpop.xlane.xlu0 %1998
      %v2000 = vsel %vm1744, %v1916, 0.0
      %2001 = vadd.xlane.f32.xlu0 %v2000
      %v2002 = vpop.xlane.xlu0 %2001
      %v2003 = vsel %vm1744, %v1918, 0.0
      %2004 = vadd.xlane.f32.xlu0 %v2003
      %v2005 = vpop.xlane.xlu0 %2004
      %v2006 = vsel %vm1744, %v1920, 0.0
      %2007 = vadd.xlane.f32.xlu0 %v2006
      %v2008 = vpop.xlane.xlu0 %2007
      %v2009 = vsel %vm1744, %v1922, 0.0
      %2010 = vadd.xlane.f32.xlu0 %v2009
      %v2011 = vpop.xlane.xlu0 %2010
      %v2012 = vsel %vm1744, %v1924, 0.0
      %2013 = vadd.xlane.f32.xlu0 %v2012
      %v2014 = vpop.xlane.xlu0 %2013
      %v2015 = vsel %vm1744, %v1926, 0.0
      %2016 = vadd.xlane.f32.xlu0 %v2015
      %v2017 = vpop.xlane.xlu0 %2016
      %v2018 = vsel %vm1744, %v1928, 0.0
      %2019 = vadd.xlane.f32.xlu0 %v2018
      %v2020 = vpop.xlane.xlu0 %2019
      %v2021 = vsel %vm1744, %v1930, 0.0
      %2022 = vadd.xlane.f32.xlu0 %v2021
      %v2023 = vpop.xlane.xlu0 %2022
      %v2024 = vsel %vm1744, %v1932, 0.0
      %2025 = vadd.xlane.f32.xlu0 %v2024
      %v2026 = vpop.xlane.xlu0 %2025
      %v2027 = vsel %vm1744, %v1934, 0.0
      %2028 = vadd.xlane.f32.xlu0 %v2027
      %v2029 = vpop.xlane.xlu0 %2028
      %v2030 = vsel %vm1744, %v1936, 0.0
      %2031 = vadd.xlane.f32.xlu0 %v2030
      %v2032 = vpop.xlane.xlu0 %2031
      %v2033 = vrcp.pop %v1939
      %v2034 = vmul.f32 %v1939, %v2033
      %v2035 = vsub.f32 1.0, %v2034
      %v2036 = vmul.f32 %v2033, %v2035
      %v2037 = vadd.f32 %v2033, %v2036
      %vm2038 = vweird.f32 %v1939
      %vm2039 = vweird.f32 %v2033
      %vm2040 = vmor %vm2038, %vm2039
      %v2041 = vsel %vm2040, %v2033, %v2037
      %v2042 = vand.u32 2147483647, %v1939
      %vm2043 = vcmp.eq.f32.partialorder %v2042, 8.507059e+37
      %v2044 = vand.u32 %v1939, 2147483648
      %v2045 = vor.u32 1.1754944e-38, %v2044
      %v2046 = vsel %vm2043, %v2045, %v2041
      %v2047 = vrcp.pop %v1942
      %v2048 = vmul.f32 %v1942, %v2047
      %v2049 = vsub.f32 1.0, %v2048
      %v2050 = vmul.f32 %v2047, %v2049
      %v2051 = vadd.f32 %v2047, %v2050
      %vm2052 = vweird.f32 %v1942
      %vm2053 = vweird.f32 %v2047
      %vm2054 = vmor %vm2052, %vm2053
      %v2055 = vsel %vm2054, %v2047, %v2051
      %v2056 = vand.u32 2147483647, %v1942
      %vm2057 = vcmp.eq.f32.partialorder %v2056, 8.507059e+37
      %v2058 = vand.u32 %v1942, 2147483648
      %v2059 = vor.u32 1.1754944e-38, %v2058
      %v2060 = vsel %vm2057, %v2059, %v2055
      %v2061 = vrcp.pop %v1945
      %v2062 = vmul.f32 %v1945, %v2061
      %v2063 = vsub.f32 1.0, %v2062
      %v2064 = vmul.f32 %v2061, %v2063
      %v2065 = vadd.f32 %v2061, %v2064
      %vm2066 = vweird.f32 %v1945
      %vm2067 = vweird.f32 %v2061
      %vm2068 = vmor %vm2066, %vm2067
      %v2069 = vsel %vm2068, %v2061, %v2065
      %v2070 = vand.u32 2147483647, %v1945
      %vm2071 = vcmp.eq.f32.partialorder %v2070, 8.507059e+37
      %v2072 = vand.u32 %v1945, 2147483648
      %v2073 = vor.u32 1.1754944e-38, %v2072
      %v2074 = vsel %vm2071, %v2073, %v2069
      %v2075 = vrcp.pop %v1948
      %v2076 = vmul.f32 %v1948, %v2075
      %v2077 = vsub.f32 1.0, %v2076
      %v2078 = vmul.f32 %v2075, %v2077
      %v2079 = vadd.f32 %v2075, %v2078
      %vm2080 = vweird.f32 %v1948
      %vm2081 = vweird.f32 %v2075
      %vm2082 = vmor %vm2080, %vm2081
      %v2083 = vsel %vm2082, %v2075, %v2079
      %v2084 = vand.u32 2147483647, %v1948
      %vm2085 = vcmp.eq.f32.partialorder %v2084, 8.507059e+37
      %v2086 = vand.u32 %v1948, 2147483648
      %v2087 = vor.u32 1.1754944e-38, %v2086
      %v2088 = vsel %vm2085, %v2087, %v2083
      %v2089 = vrcp.pop %v1951
      %v2090 = vmul.f32 %v1951, %v2089
      %v2091 = vsub.f32 1.0, %v2090
      %v2092 = vmul.f32 %v2089, %v2091
      %v2093 = vadd.f32 %v2089, %v2092
      %vm2094 = vweird.f32 %v1951
      %vm2095 = vweird.f32 %v2089
      %vm2096 = vmor %vm2094, %vm2095
      %v2097 = vsel %vm2096, %v2089, %v2093
      %v2098 = vand.u32 2147483647, %v1951
      %vm2099 = vcmp.eq.f32.partialorder %v2098, 8.507059e+37
      %v2100 = vand.u32 %v1951, 2147483648
      %v2101 = vor.u32 1.1754944e-38, %v2100
      %v2102 = vsel %vm2099, %v2101, %v2097
      %v2103 = vrcp.pop %v1954
      %v2104 = vmul.f32 %v1954, %v2103
      %v2105 = vsub.f32 1.0, %v2104
      %v2106 = vmul.f32 %v2103, %v2105
      %v2107 = vadd.f32 %v2103, %v2106
      %vm2108 = vweird.f32 %v1954
      %vm2109 = vweird.f32 %v2103
      %vm2110 = vmor %vm2108, %vm2109
      %v2111 = vsel %vm2110, %v2103, %v2107
      %v2112 = vand.u32 2147483647, %v1954
      %vm2113 = vcmp.eq.f32.partialorder %v2112, 8.507059e+37
      %v2114 = vand.u32 %v1954, 2147483648
      %v2115 = vor.u32 1.1754944e-38, %v2114
      %v2116 = vsel %vm2113, %v2115, %v2111
      %v2117 = vrcp.pop %v1957
      %v2118 = vmul.f32 %v1957, %v2117
      %v2119 = vsub.f32 1.0, %v2118
      %v2120 = vmul.f32 %v2117, %v2119
      %v2121 = vadd.f32 %v2117, %v2120
      %vm2122 = vweird.f32 %v1957
      %vm2123 = vweird.f32 %v2117
      %vm2124 = vmor %vm2122, %vm2123
      %v2125 = vsel %vm2124, %v2117, %v2121
      %v2126 = vand.u32 2147483647, %v1957
      %vm2127 = vcmp.eq.f32.partialorder %v2126, 8.507059e+37
      %v2128 = vand.u32 %v1957, 2147483648
      %v2129 = vor.u32 1.1754944e-38, %v2128
      %v2130 = vsel %vm2127, %v2129, %v2125
      %v2131 = vrcp.pop %v1960
      %v2132 = vmul.f32 %v1960, %v2131
      %v2133 = vsub.f32 1.0, %v2132
      %v2134 = vmul.f32 %v2131, %v2133
      %v2135 = vadd.f32 %v2131, %v2134
      %vm2136 = vweird.f32 %v1960
      %vm2137 = vweird.f32 %v2131
      %vm2138 = vmor %vm2136, %vm2137
      %v2139 = vsel %vm2138, %v2131, %v2135
      %v2140 = vand.u32 2147483647, %v1960
      %vm2141 = vcmp.eq.f32.partialorder %v2140, 8.507059e+37
      %v2142 = vand.u32 %v1960, 2147483648
      %v2143 = vor.u32 1.1754944e-38, %v2142
      %v2144 = vsel %vm2141, %v2143, %v2139
      %v2145 = vrcp.pop %v1963
      %v2146 = vmul.f32 %v1963, %v2145
      %v2147 = vsub.f32 1.0, %v2146
      %v2148 = vmul.f32 %v2145, %v2147
      %v2149 = vadd.f32 %v2145, %v2148
      %vm2150 = vweird.f32 %v1963
      %vm2151 = vweird.f32 %v2145
      %vm2152 = vmor %vm2150, %vm2151
      %v2153 = vsel %vm2152, %v2145, %v2149
      %v2154 = vand.u32 2147483647, %v1963
      %vm2155 = vcmp.eq.f32.partialorder %v2154, 8.507059e+37
      %v2156 = vand.u32 %v1963, 2147483648
      %v2157 = vor.u32 1.1754944e-38, %v2156
      %v2158 = vsel %vm2155, %v2157, %v2153
      %v2159 = vrcp.pop %v1966
      %v2160 = vmul.f32 %v1966, %v2159
      %v2161 = vsub.f32 1.0, %v2160
      %v2162 = vmul.f32 %v2159, %v2161
      %v2163 = vadd.f32 %v2159, %v2162
      %vm2164 = vweird.f32 %v1966
      %vm2165 = vweird.f32 %v2159
      %vm2166 = vmor %vm2164, %vm2165
      %v2167 = vsel %vm2166, %v2159, %v2163
      %v2168 = vand.u32 2147483647, %v1966
      %vm2169 = vcmp.eq.f32.partialorder %v2168, 8.507059e+37
      %v2170 = vand.u32 %v1966, 2147483648
      %v2171 = vor.u32 1.1754944e-38, %v2170
      %v2172 = vsel %vm2169, %v2171, %v2167
      %v2173 = vrcp.pop %v1969
      %v2174 = vmul.f32 %v1969, %v2173
      %v2175 = vsub.f32 1.0, %v2174
      %v2176 = vmul.f32 %v2173, %v2175
      %v2177 = vadd.f32 %v2173, %v2176
      %vm2178 = vweird.f32 %v1969
      %vm2179 = vweird.f32 %v2173
      %vm2180 = vmor %vm2178, %vm2179
      %v2181 = vsel %vm2180, %v2173, %v2177
      %v2182 = vand.u32 2147483647, %v1969
      %vm2183 = vcmp.eq.f32.partialorder %v2182, 8.507059e+37
      %v2184 = vand.u32 %v1969, 2147483648
      %v2185 = vor.u32 1.1754944e-38, %v2184
      %v2186 = vsel %vm2183, %v2185, %v2181
      %v2187 = vrcp.pop %v1972
      %v2188 = vmul.f32 %v1972, %v2187
      %v2189 = vsub.f32 1.0, %v2188
      %v2190 = vmul.f32 %v2187, %v2189
      %v2191 = vadd.f32 %v2187, %v2190
      %vm2192 = vweird.f32 %v1972
      %vm2193 = vweird.f32 %v2187
      %vm2194 = vmor %vm2192, %vm2193
      %v2195 = vsel %vm2194, %v2187, %v2191
      %v2196 = vand.u32 2147483647, %v1972
      %vm2197 = vcmp.eq.f32.partialorder %v2196, 8.507059e+37
      %v2198 = vand.u32 %v1972, 2147483648
      %v2199 = vor.u32 1.1754944e-38, %v2198
      %v2200 = vsel %vm2197, %v2199, %v2195
      %v2201 = vrcp.pop %v1975
      %v2202 = vmul.f32 %v1975, %v2201
      %v2203 = vsub.f32 1.0, %v2202
      %v2204 = vmul.f32 %v2201, %v2203
      %v2205 = vadd.f32 %v2201, %v2204
      %vm2206 = vweird.f32 %v1975
      %vm2207 = vweird.f32 %v2201
      %vm2208 = vmor %vm2206, %vm2207
      %v2209 = vsel %vm2208, %v2201, %v2205
      %v2210 = vand.u32 2147483647, %v1975
      %vm2211 = vcmp.eq.f32.partialorder %v2210, 8.507059e+37
      %v2212 = vand.u32 %v1975, 2147483648
      %v2213 = vor.u32 1.1754944e-38, %v2212
      %v2214 = vsel %vm2211, %v2213, %v2209
      %v2215 = vrcp.pop %v1978
      %v2216 = vmul.f32 %v1978, %v2215
      %v2217 = vsub.f32 1.0, %v2216
      %v2218 = vmul.f32 %v2215, %v2217
      %v2219 = vadd.f32 %v2215, %v2218
      %vm2220 = vweird.f32 %v1978
      %vm2221 = vweird.f32 %v2215
      %vm2222 = vmor %vm2220, %vm2221
      %v2223 = vsel %vm2222, %v2215, %v2219
      %v2224 = vand.u32 2147483647, %v1978
      %vm2225 = vcmp.eq.f32.partialorder %v2224, 8.507059e+37
      %v2226 = vand.u32 %v1978, 2147483648
      %v2227 = vor.u32 1.1754944e-38, %v2226
      %v2228 = vsel %vm2225, %v2227, %v2223
      %v2229 = vrcp.pop %v1981
      %v2230 = vmul.f32 %v1981, %v2229
      %v2231 = vsub.f32 1.0, %v2230
      %v2232 = vmul.f32 %v2229, %v2231
      %v2233 = vadd.f32 %v2229, %v2232
      %vm2234 = vweird.f32 %v1981
      %vm2235 = vweird.f32 %v2229
      %vm2236 = vmor %vm2234, %vm2235
      %v2237 = vsel %vm2236, %v2229, %v2233
      %v2238 = vand.u32 2147483647, %v1981
      %vm2239 = vcmp.eq.f32.partialorder %v2238, 8.507059e+37
      %v2240 = vand.u32 %v1981, 2147483648
      %v2241 = vor.u32 1.1754944e-38, %v2240
      %v2242 = vsel %vm2239, %v2241, %v2237
      %v2243 = vrcp.pop %v1984
      %v2244 = vmul.f32 %v1984, %v2243
      %v2245 = vsub.f32 1.0, %v2244
      %v2246 = vmul.f32 %v2243, %v2245
      %v2247 = vadd.f32 %v2243, %v2246
      %vm2248 = vweird.f32 %v1984
      %vm2249 = vweird.f32 %v2243
      %vm2250 = vmor %vm2248, %vm2249
      %v2251 = vsel %vm2250, %v2243, %v2247
      %v2252 = vand.u32 2147483647, %v1984
      %vm2253 = vcmp.eq.f32.partialorder %v2252, 8.507059e+37
      %v2254 = vand.u32 %v1984, 2147483648
      %v2255 = vor.u32 1.1754944e-38, %v2254
      %v2256 = vsel %vm2253, %v2255, %v2251
      %v2257 = vrcp.pop %v1987
      %v2258 = vmul.f32 %v1987, %v2257
      %v2259 = vsub.f32 1.0, %v2258
      %v2260 = vmul.f32 %v2257, %v2259
      %v2261 = vadd.f32 %v2257, %v2260
      %vm2262 = vweird.f32 %v1987
      %vm2263 = vweird.f32 %v2257
      %vm2264 = vmor %vm2262, %vm2263
      %v2265 = vsel %vm2264, %v2257, %v2261
      %v2266 = vand.u32 2147483647, %v1987
      %vm2267 = vcmp.eq.f32.partialorder %v2266, 8.507059e+37
      %v2268 = vand.u32 %v1987, 2147483648
      %v2269 = vor.u32 1.1754944e-38, %v2268
      %v2270 = vsel %vm2267, %v2269, %v2265
      %v2271 = vrcp.pop %v1990
      %v2272 = vmul.f32 %v1990, %v2271
      %v2273 = vsub.f32 1.0, %v2272
      %v2274 = vmul.f32 %v2271, %v2273
      %v2275 = vadd.f32 %v2271, %v2274
      %vm2276 = vweird.f32 %v1990
      %vm2277 = vweird.f32 %v2271
      %vm2278 = vmor %vm2276, %vm2277
      %v2279 = vsel %vm2278, %v2271, %v2275
      %v2280 = vand.u32 2147483647, %v1990
      %vm2281 = vcmp.eq.f32.partialorder %v2280, 8.507059e+37
      %v2282 = vand.u32 %v1990, 2147483648
      %v2283 = vor.u32 1.1754944e-38, %v2282
      %v2284 = vsel %vm2281, %v2283, %v2279
      %v2285 = vrcp.pop %v1993
      %v2286 = vmul.f32 %v1993, %v2285
      %v2287 = vsub.f32 1.0, %v2286
      %v2288 = vmul.f32 %v2285, %v2287
      %v2289 = vadd.f32 %v2285, %v2288
      %vm2290 = vweird.f32 %v1993
      %vm2291 = vweird.f32 %v2285
      %vm2292 = vmor %vm2290, %vm2291
      %v2293 = vsel %vm2292, %v2285, %v2289
      %v2294 = vand.u32 2147483647, %v1993
      %vm2295 = vcmp.eq.f32.partialorder %v2294, 8.507059e+37
      %v2296 = vand.u32 %v1993, 2147483648
      %v2297 = vor.u32 1.1754944e-38, %v2296
      %v2298 = vsel %vm2295, %v2297, %v2293
      %v2299 = vrcp.pop %v1996
      %v2300 = vmul.f32 %v1996, %v2299
      %v2301 = vsub.f32 1.0, %v2300
      %v2302 = vmul.f32 %v2299, %v2301
      %v2303 = vadd.f32 %v2299, %v2302
      %vm2304 = vweird.f32 %v1996
      %vm2305 = vweird.f32 %v2299
      %vm2306 = vmor %vm2304, %vm2305
      %v2307 = vsel %vm2306, %v2299, %v2303
      %v2308 = vand.u32 2147483647, %v1996
      %vm2309 = vcmp.eq.f32.partialorder %v2308, 8.507059e+37
      %v2310 = vand.u32 %v1996, 2147483648
      %v2311 = vor.u32 1.1754944e-38, %v2310
      %v2312 = vsel %vm2309, %v2311, %v2307
      %v2313 = vrcp.pop %v1999
      %v2314 = vmul.f32 %v1999, %v2313
      %v2315 = vsub.f32 1.0, %v2314
      %v2316 = vmul.f32 %v2313, %v2315
      %v2317 = vadd.f32 %v2313, %v2316
      %vm2318 = vweird.f32 %v1999
      %vm2319 = vweird.f32 %v2313
      %vm2320 = vmor %vm2318, %vm2319
      %v2321 = vsel %vm2320, %v2313, %v2317
      %v2322 = vand.u32 2147483647, %v1999
      %vm2323 = vcmp.eq.f32.partialorder %v2322, 8.507059e+37
      %v2324 = vand.u32 %v1999, 2147483648
      %v2325 = vor.u32 1.1754944e-38, %v2324
      %v2326 = vsel %vm2323, %v2325, %v2321
      %v2327 = vrcp.pop %v2002
      %v2328 = vmul.f32 %v2002, %v2327
      %v2329 = vsub.f32 1.0, %v2328
      %v2330 = vmul.f32 %v2327, %v2329
      %v2331 = vadd.f32 %v2327, %v2330
      %vm2332 = vweird.f32 %v2002
      %vm2333 = vweird.f32 %v2327
      %vm2334 = vmor %vm2332, %vm2333
      %v2335 = vsel %vm2334, %v2327, %v2331
      %v2336 = vand.u32 2147483647, %v2002
      %vm2337 = vcmp.eq.f32.partialorder %v2336, 8.507059e+37
      %v2338 = vand.u32 %v2002, 2147483648
      %v2339 = vor.u32 1.1754944e-38, %v2338
      %v2340 = vsel %vm2337, %v2339, %v2335
      %v2341 = vrcp.pop %v2005
      %v2342 = vmul.f32 %v2005, %v2341
      %v2343 = vsub.f32 1.0, %v2342
      %v2344 = vmul.f32 %v2341, %v2343
      %v2345 = vadd.f32 %v2341, %v2344
      %vm2346 = vweird.f32 %v2005
      %vm2347 = vweird.f32 %v2341
      %vm2348 = vmor %vm2346, %vm2347
      %v2349 = vsel %vm2348, %v2341, %v2345
      %v2350 = vand.u32 2147483647, %v2005
      %vm2351 = vcmp.eq.f32.partialorder %v2350, 8.507059e+37
      %v2352 = vand.u32 %v2005, 2147483648
      %v2353 = vor.u32 1.1754944e-38, %v2352
      %v2354 = vsel %vm2351, %v2353, %v2349
      %v2355 = vrcp.pop %v2008
      %v2356 = vmul.f32 %v2008, %v2355
      %v2357 = vsub.f32 1.0, %v2356
      %v2358 = vmul.f32 %v2355, %v2357
      %v2359 = vadd.f32 %v2355, %v2358
      %vm2360 = vweird.f32 %v2008
      %vm2361 = vweird.f32 %v2355
      %vm2362 = vmor %vm2360, %vm2361
      %v2363 = vsel %vm2362, %v2355, %v2359
      %v2364 = vand.u32 2147483647, %v2008
      %vm2365 = vcmp.eq.f32.partialorder %v2364, 8.507059e+37
      %v2366 = vand.u32 %v2008, 2147483648
      %v2367 = vor.u32 1.1754944e-38, %v2366
      %v2368 = vsel %vm2365, %v2367, %v2363
      %v2369 = vrcp.pop %v2011
      %v2370 = vmul.f32 %v2011, %v2369
      %v2371 = vsub.f32 1.0, %v2370
      %v2372 = vmul.f32 %v2369, %v2371
      %v2373 = vadd.f32 %v2369, %v2372
      %vm2374 = vweird.f32 %v2011
      %vm2375 = vweird.f32 %v2369
      %vm2376 = vmor %vm2374, %vm2375
      %v2377 = vsel %vm2376, %v2369, %v2373
      %v2378 = vand.u32 2147483647, %v2011
      %vm2379 = vcmp.eq.f32.partialorder %v2378, 8.507059e+37
      %v2380 = vand.u32 %v2011, 2147483648
      %v2381 = vor.u32 1.1754944e-38, %v2380
      %v2382 = vsel %vm2379, %v2381, %v2377
      %v2383 = vrcp.pop %v2014
      %v2384 = vmul.f32 %v2014, %v2383
      %v2385 = vsub.f32 1.0, %v2384
      %v2386 = vmul.f32 %v2383, %v2385
      %v2387 = vadd.f32 %v2383, %v2386
      %vm2388 = vweird.f32 %v2014
      %vm2389 = vweird.f32 %v2383
      %vm2390 = vmor %vm2388, %vm2389
      %v2391 = vsel %vm2390, %v2383, %v2387
      %v2392 = vand.u32 2147483647, %v2014
      %vm2393 = vcmp.eq.f32.partialorder %v2392, 8.507059e+37
      %v2394 = vand.u32 %v2014, 2147483648
      %v2395 = vor.u32 1.1754944e-38, %v2394
      %v2396 = vsel %vm2393, %v2395, %v2391
      %v2397 = vrcp.pop %v2017
      %v2398 = vmul.f32 %v2017, %v2397
      %v2399 = vsub.f32 1.0, %v2398
      %v2400 = vmul.f32 %v2397, %v2399
      %v2401 = vadd.f32 %v2397, %v2400
      %vm2402 = vweird.f32 %v2017
      %vm2403 = vweird.f32 %v2397
      %vm2404 = vmor %vm2402, %vm2403
      %v2405 = vsel %vm2404, %v2397, %v2401
      %v2406 = vand.u32 2147483647, %v2017
      %vm2407 = vcmp.eq.f32.partialorder %v2406, 8.507059e+37
      %v2408 = vand.u32 %v2017, 2147483648
      %v2409 = vor.u32 1.1754944e-38, %v2408
      %v2410 = vsel %vm2407, %v2409, %v2405
      %v2411 = vrcp.pop %v2020
      %v2412 = vmul.f32 %v2020, %v2411
      %v2413 = vsub.f32 1.0, %v2412
      %v2414 = vmul.f32 %v2411, %v2413
      %v2415 = vadd.f32 %v2411, %v2414
      %vm2416 = vweird.f32 %v2020
      %vm2417 = vweird.f32 %v2411
      %vm2418 = vmor %vm2416, %vm2417
      %v2419 = vsel %vm2418, %v2411, %v2415
      %v2420 = vand.u32 2147483647, %v2020
      %vm2421 = vcmp.eq.f32.partialorder %v2420, 8.507059e+37
      %v2422 = vand.u32 %v2020, 2147483648
      %v2423 = vor.u32 1.1754944e-38, %v2422
      %v2424 = vsel %vm2421, %v2423, %v2419
      %v2425 = vrcp.pop %v2023
      %v2426 = vmul.f32 %v2023, %v2425
      %v2427 = vsub.f32 1.0, %v2426
      %v2428 = vmul.f32 %v2425, %v2427
      %v2429 = vadd.f32 %v2425, %v2428
      %vm2430 = vweird.f32 %v2023
      %vm2431 = vweird.f32 %v2425
      %vm2432 = vmor %vm2430, %vm2431
      %v2433 = vsel %vm2432, %v2425, %v2429
      %v2434 = vand.u32 2147483647, %v2023
      %vm2435 = vcmp.eq.f32.partialorder %v2434, 8.507059e+37
      %v2436 = vand.u32 %v2023, 2147483648
      %v2437 = vor.u32 1.1754944e-38, %v2436
      %v2438 = vsel %vm2435, %v2437, %v2433
      %v2439 = vrcp.pop %v2026
      %v2440 = vmul.f32 %v2026, %v2439
      %v2441 = vsub.f32 1.0, %v2440
      %v2442 = vmul.f32 %v2439, %v2441
      %v2443 = vadd.f32 %v2439, %v2442
      %vm2444 = vweird.f32 %v2026
      %vm2445 = vweird.f32 %v2439
      %vm2446 = vmor %vm2444, %vm2445
      %v2447 = vsel %vm2446, %v2439, %v2443
      %v2448 = vand.u32 2147483647, %v2026
      %vm2449 = vcmp.eq.f32.partialorder %v2448, 8.507059e+37
      %v2450 = vand.u32 %v2026, 2147483648
      %v2451 = vor.u32 1.1754944e-38, %v2450
      %v2452 = vsel %vm2449, %v2451, %v2447
      %v2453 = vrcp.pop %v2029
      %v2454 = vmul.f32 %v2029, %v2453
      %v2455 = vsub.f32 1.0, %v2454
      %v2456 = vmul.f32 %v2453, %v2455
      %v2457 = vadd.f32 %v2453, %v2456
      %vm2458 = vweird.f32 %v2029
      %vm2459 = vweird.f32 %v2453
      %vm2460 = vmor %vm2458, %vm2459
      %v2461 = vsel %vm2460, %v2453, %v2457
      %v2462 = vand.u32 2147483647, %v2029
      %vm2463 = vcmp.eq.f32.partialorder %v2462, 8.507059e+37
      %v2464 = vand.u32 %v2029, 2147483648
      %v2465 = vor.u32 1.1754944e-38, %v2464
      %v2466 = vsel %vm2463, %v2465, %v2461
      %v2467 = vrcp.pop %v2032
      %v2468 = vmul.f32 %v2032, %v2467
      %v2469 = vsub.f32 1.0, %v2468
      %v2470 = vmul.f32 %v2467, %v2469
      %v2471 = vadd.f32 %v2467, %v2470
      %vm2472 = vweird.f32 %v2032
      %vm2473 = vweird.f32 %v2467
      %vm2474 = vmor %vm2472, %vm2473
      %v2475 = vsel %vm2474, %v2467, %v2471
      %v2476 = vand.u32 2147483647, %v2032
      %vm2477 = vcmp.eq.f32.partialorder %v2476, 8.507059e+37
      %v2478 = vand.u32 %v2032, 2147483648
      %v2479 = vor.u32 1.1754944e-38, %v2478
      %v2480 = vsel %vm2477, %v2479, %v2475
      %v2481 = vmul.f32 %v1874, %v2046
      %v2482 = vmul.f32 %v1876, %v2060
      %v2483 = vmul.f32 %v1878, %v2074
      %v2484 = vmul.f32 %v1880, %v2088
      %v2485 = vmul.f32 %v1882, %v2102
      %v2486 = vmul.f32 %v1884, %v2116
      %v2487 = vmul.f32 %v1886, %v2130
      %v2488 = vmul.f32 %v1888, %v2144
      %v2489 = vmul.f32 %v1890, %v2158
      %v2490 = vmul.f32 %v1892, %v2172
      %v2491 = vmul.f32 %v1894, %v2186
      %v2492 = vmul.f32 %v1896, %v2200
      %v2493 = vmul.f32 %v1898, %v2214
      %v2494 = vmul.f32 %v1900, %v2228
      %v2495 = vmul.f32 %v1902, %v2242
      %v2496 = vmul.f32 %v1904, %v2256
      %v2497 = vmul.f32 %v1906, %v2270
      %v2498 = vmul.f32 %v1908, %v2284
      %v2499 = vmul.f32 %v1910, %v2298
      %v2500 = vmul.f32 %v1912, %v2312
      %v2501 = vmul.f32 %v1914, %v2326
      %v2502 = vmul.f32 %v1916, %v2340
      %v2503 = vmul.f32 %v1918, %v2354
      %v2504 = vmul.f32 %v1920, %v2368
      %v2505 = vmul.f32 %v1922, %v2382
      %v2506 = vmul.f32 %v1924, %v2396
      %v2507 = vmul.f32 %v1926, %v2410
      %v2508 = vmul.f32 %v1928, %v2424
      %v2509 = vmul.f32 %v1930, %v2438
      %v2510 = vmul.f32 %v1932, %v2452
      %v2511 = vmul.f32 %v1934, %v2466
      %v2512 = vmul.f32 %v1936, %v2480
      %2513 = vrot.lane.b32.xlu0 %v1252, 64
      %v2514 = vpop.permute.xlu0 %2513
      %2515 = vrot.lane.b32.xlu0 %v1255, 64
      %v2516 = vpop.permute.xlu0 %2515
      %2517 = vrot.lane.b32.xlu0 %v1258, 64
      %v2518 = vpop.permute.xlu0 %2517
      %2519 = vrot.lane.b32.xlu0 %v1261, 64
      %v2520 = vpop.permute.xlu0 %2519
      %2521 = vrot.lane.b32.xlu0 %v1264, 64
      %v2522 = vpop.permute.xlu0 %2521
      %2523 = vrot.lane.b32.xlu0 %v1267, 64
      %v2524 = vpop.permute.xlu0 %2523
      %2525 = vrot.lane.b32.xlu0 %v1270, 64
      %v2526 = vpop.permute.xlu0 %2525
      %2527 = vrot.lane.b32.xlu0 %v1273, 64
      %v2528 = vpop.permute.xlu0 %2527
      %v2538 = vsel %vm1744, %v2481, 0
      %v2541 = vsel %vm1744, %v2482, 0
      %v2544 = vsel %vm1744, %v2483, 0
      %v2547 = vsel %vm1744, %v2484, 0
      %v2550 = vsel %vm1744, %v2485, 0
      %v2553 = vsel %vm1744, %v2486, 0
      %v2556 = vsel %vm1744, %v2487, 0
      %v2559 = vsel %vm1744, %v2488, 0
      %2561 = vmatpush.msra.mxu0 0.0
      %2562 = vmatpush.msra.mxu0 0.0
      %2563 = vmatpush.msra.mxu0 0.0
      %2564 = vmatpush.msra.mxu0 0.0
      %2565 = vmatpush.msra.mxu0 0.0
      %2566 = vmatpush.msra.mxu0 0.0
      %2567 = vmatpush.msra.mxu0 0.0
      %2568 = vmatpush.msra.mxu0 0.0
      %2569 = vmatpush.msra.mxu0 %v2528
      %2570 = vmatpush.msra.mxu0 %v2526
      %2571 = vmatpush.msra.mxu0 %v2524
      %2572 = vmatpush.msra.mxu0 %v2522
      %2573 = vmatpush.msra.mxu0 %v2520
      %2574 = vmatpush.msra.mxu0 %v2518
      %2575 = vmatpush.msra.mxu0 %v2516
      %2576 = vmatpush.msra.mxu0 %v2514
      %2577 = vmatmul.f32.gmra.mxu0 %v2538
      %v2578 = vpop.f32.mrf.mxu0
      %v2579 = vadd.f32 0.0, %v2578
      %2580 = vmatmul.f32.gmra.mxu0 %v2541
      %v2581 = vpop.f32.mrf.mxu0
      %v2582 = vadd.f32 0.0, %v2581
      %2583 = vmatmul.f32.gmra.mxu0 %v2544
      %v2584 = vpop.f32.mrf.mxu0
      %v2585 = vadd.f32 0.0, %v2584
      %2586 = vmatmul.f32.gmra.mxu0 %v2547
      %v2587 = vpop.f32.mrf.mxu0
      %v2588 = vadd.f32 0.0, %v2587
      %2589 = vmatmul.f32.gmra.mxu0 %v2550
      %v2590 = vpop.f32.mrf.mxu0
      %v2591 = vadd.f32 0.0, %v2590
      %2592 = vmatmul.f32.gmra.mxu0 %v2553
      %v2593 = vpop.f32.mrf.mxu0
      %v2594 = vadd.f32 0.0, %v2593
      %2595 = vmatmul.f32.gmra.mxu0 %v2556
      %v2596 = vpop.f32.mrf.mxu0
      %v2597 = vadd.f32 0.0, %v2596
      %2598 = vmatmul.f32.gmra.mxu0 %v2559
      %v2599 = vpop.f32.mrf.mxu0
      %v2600 = vadd.f32 0.0, %v2599
      %2601 = vdwg.mxu0
      %2602 = vrot.lane.b32.xlu0 %v1276, 64
      %v2603 = vpop.permute.xlu0 %2602
      %2604 = vrot.lane.b32.xlu0 %v1279, 64
      %v2605 = vpop.permute.xlu0 %2604
      %2606 = vrot.lane.b32.xlu0 %v1282, 64
      %v2607 = vpop.permute.xlu0 %2606
      %2608 = vrot.lane.b32.xlu0 %v1285, 64
      %v2609 = vpop.permute.xlu0 %2608
      %2610 = vrot.lane.b32.xlu0 %v1288, 64
      %v2611 = vpop.permute.xlu0 %2610
      %2612 = vrot.lane.b32.xlu0 %v1291, 64
      %v2613 = vpop.permute.xlu0 %2612
      %2614 = vrot.lane.b32.xlu0 %v1294, 64
      %v2615 = vpop.permute.xlu0 %2614
      %2616 = vrot.lane.b32.xlu0 %v1297, 64
      %v2617 = vpop.permute.xlu0 %2616
      %v2627 = vsel %vm1744, %v2489, 0
      %v2630 = vsel %vm1744, %v2490, 0
      %v2633 = vsel %vm1744, %v2491, 0
      %v2636 = vsel %vm1744, %v2492, 0
      %v2639 = vsel %vm1744, %v2493, 0
      %v2642 = vsel %vm1744, %v2494, 0
      %v2645 = vsel %vm1744, %v2495, 0
      %v2648 = vsel %vm1744, %v2496, 0
      %2650 = vmatpush.msra.mxu0 0.0
      %2651 = vmatpush.msra.mxu0 0.0
      %2652 = vmatpush.msra.mxu0 0.0
      %2653 = vmatpush.msra.mxu0 0.0
      %2654 = vmatpush.msra.mxu0 0.0
      %2655 = vmatpush.msra.mxu0 0.0
      %2656 = vmatpush.msra.mxu0 0.0
      %2657 = vmatpush.msra.mxu0 0.0
      %2658 = vmatpush.msra.mxu0 %v2617
      %2659 = vmatpush.msra.mxu0 %v2615
      %2660 = vmatpush.msra.mxu0 %v2613
      %2661 = vmatpush.msra.mxu0 %v2611
      %2662 = vmatpush.msra.mxu0 %v2609
      %2663 = vmatpush.msra.mxu0 %v2607
      %2664 = vmatpush.msra.mxu0 %v2605
      %2665 = vmatpush.msra.mxu0 %v2603
      %2666 = vmatmul.f32.gmra.mxu0 %v2627
      %v2667 = vpop.f32.mrf.mxu0
      %v2668 = vadd.f32 0.0, %v2667
      %2669 = vmatmul.f32.gmra.mxu0 %v2630
      %v2670 = vpop.f32.mrf.mxu0
      %v2671 = vadd.f32 0.0, %v2670
      %2672 = vmatmul.f32.gmra.mxu0 %v2633
      %v2673 = vpop.f32.mrf.mxu0
      %v2674 = vadd.f32 0.0, %v2673
      %2675 = vmatmul.f32.gmra.mxu0 %v2636
      %v2676 = vpop.f32.mrf.mxu0
      %v2677 = vadd.f32 0.0, %v2676
      %2678 = vmatmul.f32.gmra.mxu0 %v2639
      %v2679 = vpop.f32.mrf.mxu0
      %v2680 = vadd.f32 0.0, %v2679
      %2681 = vmatmul.f32.gmra.mxu0 %v2642
      %v2682 = vpop.f32.mrf.mxu0
      %v2683 = vadd.f32 0.0, %v2682
      %2684 = vmatmul.f32.gmra.mxu0 %v2645
      %v2685 = vpop.f32.mrf.mxu0
      %v2686 = vadd.f32 0.0, %v2685
      %2687 = vmatmul.f32.gmra.mxu0 %v2648
      %v2688 = vpop.f32.mrf.mxu0
      %v2689 = vadd.f32 0.0, %v2688
      %2690 = vdwg.mxu0
      %2691 = vrot.lane.b32.xlu0 %v1300, 64
      %v2692 = vpop.permute.xlu0 %2691
      %2693 = vrot.lane.b32.xlu0 %v1303, 64
      %v2694 = vpop.permute.xlu0 %2693
      %2695 = vrot.lane.b32.xlu0 %v1306, 64
      %v2696 = vpop.permute.xlu0 %2695
      %2697 = vrot.lane.b32.xlu0 %v1309, 64
      %v2698 = vpop.permute.xlu0 %2697
      %2699 = vrot.lane.b32.xlu0 %v1312, 64
      %v2700 = vpop.permute.xlu0 %2699
      %2701 = vrot.lane.b32.xlu0 %v1315, 64
      %v2702 = vpop.permute.xlu0 %2701
      %2703 = vrot.lane.b32.xlu0 %v1318, 64
      %v2704 = vpop.permute.xlu0 %2703
      %2705 = vrot.lane.b32.xlu0 %v1321, 64
      %v2706 = vpop.permute.xlu0 %2705
      %v2716 = vsel %vm1744, %v2497, 0
      %v2719 = vsel %vm1744, %v2498, 0
      %v2722 = vsel %vm1744, %v2499, 0
      %v2725 = vsel %vm1744, %v2500, 0
      %v2728 = vsel %vm1744, %v2501, 0
      %v2731 = vsel %vm1744, %v2502, 0
      %v2734 = vsel %vm1744, %v2503, 0
      %v2737 = vsel %vm1744, %v2504, 0
      %2739 = vmatpush.msra.mxu0 0.0
      %2740 = vmatpush.msra.mxu0 0.0
      %2741 = vmatpush.msra.mxu0 0.0
      %2742 = vmatpush.msra.mxu0 0.0
      %2743 = vmatpush.msra.mxu0 0.0
      %2744 = vmatpush.msra.mxu0 0.0
      %2745 = vmatpush.msra.mxu0 0.0
      %2746 = vmatpush.msra.mxu0 0.0
      %2747 = vmatpush.msra.mxu0 %v2706
      %2748 = vmatpush.msra.mxu0 %v2704
      %2749 = vmatpush.msra.mxu0 %v2702
      %2750 = vmatpush.msra.mxu0 %v2700
      %2751 = vmatpush.msra.mxu0 %v2698
      %2752 = vmatpush.msra.mxu0 %v2696
      %2753 = vmatpush.msra.mxu0 %v2694
      %2754 = vmatpush.msra.mxu0 %v2692
      %2755 = vmatmul.f32.gmra.mxu0 %v2716
      %v2756 = vpop.f32.mrf.mxu0
      %v2757 = vadd.f32 0.0, %v2756
      %2758 = vmatmul.f32.gmra.mxu0 %v2719
      %v2759 = vpop.f32.mrf.mxu0
      %v2760 = vadd.f32 0.0, %v2759
      %2761 = vmatmul.f32.gmra.mxu0 %v2722
      %v2762 = vpop.f32.mrf.mxu0
      %v2763 = vadd.f32 0.0, %v2762
      %2764 = vmatmul.f32.gmra.mxu0 %v2725
      %v2765 = vpop.f32.mrf.mxu0
      %v2766 = vadd.f32 0.0, %v2765
      %2767 = vmatmul.f32.gmra.mxu0 %v2728
      %v2768 = vpop.f32.mrf.mxu0
      %v2769 = vadd.f32 0.0, %v2768
      %2770 = vmatmul.f32.gmra.mxu0 %v2731
      %v2771 = vpop.f32.mrf.mxu0
      %v2772 = vadd.f32 0.0, %v2771
      %2773 = vmatmul.f32.gmra.mxu0 %v2734
      %v2774 = vpop.f32.mrf.mxu0
      %v2775 = vadd.f32 0.0, %v2774
      %2776 = vmatmul.f32.gmra.mxu0 %v2737
      %v2777 = vpop.f32.mrf.mxu0
      %v2778 = vadd.f32 0.0, %v2777
      %2779 = vdwg.mxu0
      %2780 = vrot.lane.b32.xlu0 %v1324, 64
      %v2781 = vpop.permute.xlu0 %2780
      %2782 = vrot.lane.b32.xlu0 %v1327, 64
      %v2783 = vpop.permute.xlu0 %2782
      %2784 = vrot.lane.b32.xlu0 %v1330, 64
      %v2785 = vpop.permute.xlu0 %2784
      %2786 = vrot.lane.b32.xlu0 %v1333, 64
      %v2787 = vpop.permute.xlu0 %2786
      %2788 = vrot.lane.b32.xlu0 %v1336, 64
      %v2789 = vpop.permute.xlu0 %2788
      %2790 = vrot.lane.b32.xlu0 %v1339, 64
      %v2791 = vpop.permute.xlu0 %2790
      %2792 = vrot.lane.b32.xlu0 %v1342, 64
      %v2793 = vpop.permute.xlu0 %2792
      %2794 = vrot.lane.b32.xlu0 %v1345, 64
      %v2795 = vpop.permute.xlu0 %2794
      %v2805 = vsel %vm1744, %v2505, 0
      %v2808 = vsel %vm1744, %v2506, 0
      %v2811 = vsel %vm1744, %v2507, 0
      %v2814 = vsel %vm1744, %v2508, 0
      %v2817 = vsel %vm1744, %v2509, 0
      %v2820 = vsel %vm1744, %v2510, 0
      %v2823 = vsel %vm1744, %v2511, 0
      %v2826 = vsel %vm1744, %v2512, 0
      %2828 = vmatpush.msra.mxu0 0.0
      %2829 = vmatpush.msra.mxu0 0.0
      %2830 = vmatpush.msra.mxu0 0.0
      %2831 = vmatpush.msra.mxu0 0.0
      %2832 = vmatpush.msra.mxu0 0.0
      %2833 = vmatpush.msra.mxu0 0.0
      %2834 = vmatpush.msra.mxu0 0.0
      %2835 = vmatpush.msra.mxu0 0.0
      %2836 = vmatpush.msra.mxu0 %v2795
      %2837 = vmatpush.msra.mxu0 %v2793
      %2838 = vmatpush.msra.mxu0 %v2791
      %2839 = vmatpush.msra.mxu0 %v2789
      %2840 = vmatpush.msra.mxu0 %v2787
      %2841 = vmatpush.msra.mxu0 %v2785
      %2842 = vmatpush.msra.mxu0 %v2783
      %2843 = vmatpush.msra.mxu0 %v2781
      %2844 = vmatmul.f32.gmra.mxu0 %v2805
      %v2845 = vpop.f32.mrf.mxu0
      %v2846 = vadd.f32 0.0, %v2845
      %2847 = vmatmul.f32.gmra.mxu0 %v2808
      %v2848 = vpop.f32.mrf.mxu0
      %v2849 = vadd.f32 0.0, %v2848
      %2850 = vmatmul.f32.gmra.mxu0 %v2811
      %v2851 = vpop.f32.mrf.mxu0
      %v2852 = vadd.f32 0.0, %v2851
      %2853 = vmatmul.f32.gmra.mxu0 %v2814
      %v2854 = vpop.f32.mrf.mxu0
      %v2855 = vadd.f32 0.0, %v2854
      %2856 = vmatmul.f32.gmra.mxu0 %v2817
      %v2857 = vpop.f32.mrf.mxu0
      %v2858 = vadd.f32 0.0, %v2857
      %2859 = vmatmul.f32.gmra.mxu0 %v2820
      %v2860 = vpop.f32.mrf.mxu0
      %v2861 = vadd.f32 0.0, %v2860
      %2862 = vmatmul.f32.gmra.mxu0 %v2823
      %v2863 = vpop.f32.mrf.mxu0
      %v2864 = vadd.f32 0.0, %v2863
      %2865 = vmatmul.f32.gmra.mxu0 %v2826
      %v2866 = vpop.f32.mrf.mxu0
      %v2867 = vadd.f32 0.0, %v2866
      %2868 = vdwg.mxu0
      %s2869 = scalar_lea.vmem %s5, 64
      %v2870 = vld [vmem:[%s2869] sm:$0xff]
      %v2871 = vld [vmem:[%s2869 + $0x8] sm:$0xff]
      %v2872 = vld [vmem:[%s2869 + $0x10] sm:$0xff]
      %v2873 = vld [vmem:[%s2869 + $0x18] sm:$0xff]
      %v2874 = vld [vmem:[%s2869 + $0x20] sm:$0xff]
      %v2875 = vld [vmem:[%s2869 + $0x28] sm:$0xff]
      %v2876 = vld [vmem:[%s2869 + $0x30] sm:$0xff]
      %v2877 = vld [vmem:[%s2869 + $0x38] sm:$0xff]
      %2878 = vrot.lane.b32.xlu0 %v1252, 120
      %v2879 = vpop.permute.xlu0 %2878
      %2880 = vrot.lane.b32.xlu0 %v1255, 120
      %v2881 = vpop.permute.xlu0 %2880
      %2882 = vrot.lane.b32.xlu0 %v1258, 120
      %v2883 = vpop.permute.xlu0 %2882
      %2884 = vrot.lane.b32.xlu0 %v1261, 120
      %v2885 = vpop.permute.xlu0 %2884
      %2886 = vrot.lane.b32.xlu0 %v1264, 120
      %v2887 = vpop.permute.xlu0 %2886
      %2888 = vrot.lane.b32.xlu0 %v1267, 120
      %v2889 = vpop.permute.xlu0 %2888
      %2890 = vrot.lane.b32.xlu0 %v1270, 120
      %v2891 = vpop.permute.xlu0 %2890
      %2892 = vrot.lane.b32.xlu0 %v1273, 120
      %v2893 = vpop.permute.xlu0 %2892
      %2894 = vrot.lane.b32.xlu0 %v1252, 88
      %v2895 = vpop.permute.xlu0 %2894
      %2896 = vrot.lane.b32.xlu0 %v1255, 88
      %v2897 = vpop.permute.xlu0 %2896
      %2898 = vrot.lane.b32.xlu0 %v1258, 88
      %v2899 = vpop.permute.xlu0 %2898
      %2900 = vrot.lane.b32.xlu0 %v1261, 88
      %v2901 = vpop.permute.xlu0 %2900
      %2902 = vrot.lane.b32.xlu0 %v1264, 88
      %v2903 = vpop.permute.xlu0 %2902
      %2904 = vrot.lane.b32.xlu0 %v1267, 88
      %v2905 = vpop.permute.xlu0 %2904
      %2906 = vrot.lane.b32.xlu0 %v1270, 88
      %v2907 = vpop.permute.xlu0 %2906
      %2908 = vrot.lane.b32.xlu0 %v1273, 88
      %v2909 = vpop.permute.xlu0 %2908
      %v2910 = vsel %vm1379, %v2879, 0
      %v2912 = vsel %vm1379, %v2881, 0
      %v2914 = vsel %vm1379, %v2883, 0
      %v2916 = vsel %vm1379, %v2885, 0
      %v2918 = vsel %vm1379, %v2887, 0
      %v2920 = vsel %vm1379, %v2889, 0
      %v2922 = vsel %vm1379, %v2891, 0
      %v2924 = vsel %vm1379, %v2893, 0
      %v2926 = vsel %vm1379, %v2895, 0
      %v2928 = vsel %vm1379, %v2897, 0
      %v2930 = vsel %vm1379, %v2899, 0
      %v2932 = vsel %vm1379, %v2901, 0
      %v2934 = vsel %vm1379, %v2903, 0
      %v2936 = vsel %vm1379, %v2905, 0
      %v2938 = vsel %vm1379, %v2907, 0
      %v2940 = vsel %vm1379, %v2909, 0
      %2942 = vmatpush.xpose.msra.mxu0 0.0
      %2943 = vmatpush.xpose.msra.mxu0 0.0
      %2944 = vmatpush.xpose.msra.mxu0 0.0
      %2945 = vmatpush.xpose.msra.mxu0 0.0
      %2946 = vmatpush.xpose.msra.mxu0 0.0
      %2947 = vmatpush.xpose.msra.mxu0 0.0
      %2948 = vmatpush.xpose.msra.mxu0 0.0
      %2949 = vmatpush.xpose.msra.mxu0 0.0
      %2950 = vmatpush.xpose.msra.mxu0 %v2940
      %2951 = vmatpush.xpose.msra.mxu0 %v2938
      %2952 = vmatpush.xpose.msra.mxu0 %v2936
      %2953 = vmatpush.xpose.msra.mxu0 %v2934
      %2954 = vmatpush.xpose.msra.mxu0 %v2932
      %2955 = vmatpush.xpose.msra.mxu0 %v2930
      %2956 = vmatpush.xpose.msra.mxu0 %v2928
      %2957 = vmatpush.xpose.msra.mxu0 %v2926
      %2958 = vmatmul.f32.gmra.mxu0 %v2910
      %v2959 = vpop.f32.mrf.mxu0
      %v2960 = vadd.f32 %v2870, %v2959
      %2961 = vmatmul.f32.gmra.mxu0 %v2912
      %v2962 = vpop.f32.mrf.mxu0
      %v2963 = vadd.f32 %v2871, %v2962
      %2964 = vmatmul.f32.gmra.mxu0 %v2914
      %v2965 = vpop.f32.mrf.mxu0
      %v2966 = vadd.f32 %v2872, %v2965
      %2967 = vmatmul.f32.gmra.mxu0 %v2916
      %v2968 = vpop.f32.mrf.mxu0
      %v2969 = vadd.f32 %v2873, %v2968
      %2970 = vmatmul.f32.gmra.mxu0 %v2918
      %v2971 = vpop.f32.mrf.mxu0
      %v2972 = vadd.f32 %v2874, %v2971
      %2973 = vmatmul.f32.gmra.mxu0 %v2920
      %v2974 = vpop.f32.mrf.mxu0
      %v2975 = vadd.f32 %v2875, %v2974
      %2976 = vmatmul.f32.gmra.mxu0 %v2922
      %v2977 = vpop.f32.mrf.mxu0
      %v2978 = vadd.f32 %v2876, %v2977
      %2979 = vmatmul.f32.gmra.mxu0 %v2924
      %v2980 = vpop.f32.mrf.mxu0
      %v2981 = vadd.f32 %v2877, %v2980
      %2982 = vdwg.mxu0
      %2983 = vrot.lane.b32.xlu0 %v1276, 120
      %v2984 = vpop.permute.xlu0 %2983
      %2985 = vrot.lane.b32.xlu0 %v1279, 120
      %v2986 = vpop.permute.xlu0 %2985
      %2987 = vrot.lane.b32.xlu0 %v1282, 120
      %v2988 = vpop.permute.xlu0 %2987
      %2989 = vrot.lane.b32.xlu0 %v1285, 120
      %v2990 = vpop.permute.xlu0 %2989
      %2991 = vrot.lane.b32.xlu0 %v1288, 120
      %v2992 = vpop.permute.xlu0 %2991
      %2993 = vrot.lane.b32.xlu0 %v1291, 120
      %v2994 = vpop.permute.xlu0 %2993
      %2995 = vrot.lane.b32.xlu0 %v1294, 120
      %v2996 = vpop.permute.xlu0 %2995
      %2997 = vrot.lane.b32.xlu0 %v1297, 120
      %v2998 = vpop.permute.xlu0 %2997
      %2999 = vrot.lane.b32.xlu0 %v1276, 88
      %v3000 = vpop.permute.xlu0 %2999
      %3001 = vrot.lane.b32.xlu0 %v1279, 88
      %v3002 = vpop.permute.xlu0 %3001
      %3003 = vrot.lane.b32.xlu0 %v1282, 88
      %v3004 = vpop.permute.xlu0 %3003
      %3005 = vrot.lane.b32.xlu0 %v1285, 88
      %v3006 = vpop.permute.xlu0 %3005
      %3007 = vrot.lane.b32.xlu0 %v1288, 88
      %v3008 = vpop.permute.xlu0 %3007
      %3009 = vrot.lane.b32.xlu0 %v1291, 88
      %v3010 = vpop.permute.xlu0 %3009
      %3011 = vrot.lane.b32.xlu0 %v1294, 88
      %v3012 = vpop.permute.xlu0 %3011
      %3013 = vrot.lane.b32.xlu0 %v1297, 88
      %v3014 = vpop.permute.xlu0 %3013
      %v3015 = vsel %vm1379, %v2984, 0
      %v3017 = vsel %vm1379, %v2986, 0
      %v3019 = vsel %vm1379, %v2988, 0
      %v3021 = vsel %vm1379, %v2990, 0
      %v3023 = vsel %vm1379, %v2992, 0
      %v3025 = vsel %vm1379, %v2994, 0
      %v3027 = vsel %vm1379, %v2996, 0
      %v3029 = vsel %vm1379, %v2998, 0
      %v3031 = vsel %vm1379, %v3000, 0
      %v3033 = vsel %vm1379, %v3002, 0
      %v3035 = vsel %vm1379, %v3004, 0
      %v3037 = vsel %vm1379, %v3006, 0
      %v3039 = vsel %vm1379, %v3008, 0
      %v3041 = vsel %vm1379, %v3010, 0
      %v3043 = vsel %vm1379, %v3012, 0
      %v3045 = vsel %vm1379, %v3014, 0
      %3047 = vmatpush.xpose.msra.mxu0 0.0
      %3048 = vmatpush.xpose.msra.mxu0 0.0
      %3049 = vmatpush.xpose.msra.mxu0 0.0
      %3050 = vmatpush.xpose.msra.mxu0 0.0
      %3051 = vmatpush.xpose.msra.mxu0 0.0
      %3052 = vmatpush.xpose.msra.mxu0 0.0
      %3053 = vmatpush.xpose.msra.mxu0 0.0
      %3054 = vmatpush.xpose.msra.mxu0 0.0
      %3055 = vmatpush.xpose.msra.mxu0 %v3045
      %3056 = vmatpush.xpose.msra.mxu0 %v3043
      %3057 = vmatpush.xpose.msra.mxu0 %v3041
      %3058 = vmatpush.xpose.msra.mxu0 %v3039
      %3059 = vmatpush.xpose.msra.mxu0 %v3037
      %3060 = vmatpush.xpose.msra.mxu0 %v3035
      %3061 = vmatpush.xpose.msra.mxu0 %v3033
      %3062 = vmatpush.xpose.msra.mxu0 %v3031
      %3063 = vmatmul.f32.gmra.mxu0 %v3015
      %v3064 = vpop.f32.mrf.mxu0
      %v3065 = vadd.f32 %v2870, %v3064
      %3066 = vmatmul.f32.gmra.mxu0 %v3017
      %v3067 = vpop.f32.mrf.mxu0
      %v3068 = vadd.f32 %v2871, %v3067
      %3069 = vmatmul.f32.gmra.mxu0 %v3019
      %v3070 = vpop.f32.mrf.mxu0
      %v3071 = vadd.f32 %v2872, %v3070
      %3072 = vmatmul.f32.gmra.mxu0 %v3021
      %v3073 = vpop.f32.mrf.mxu0
      %v3074 = vadd.f32 %v2873, %v3073
      %3075 = vmatmul.f32.gmra.mxu0 %v3023
      %v3076 = vpop.f32.mrf.mxu0
      %v3077 = vadd.f32 %v2874, %v3076
      %3078 = vmatmul.f32.gmra.mxu0 %v3025
      %v3079 = vpop.f32.mrf.mxu0
      %v3080 = vadd.f32 %v2875, %v3079
      %3081 = vmatmul.f32.gmra.mxu0 %v3027
      %v3082 = vpop.f32.mrf.mxu0
      %v3083 = vadd.f32 %v2876, %v3082
      %3084 = vmatmul.f32.gmra.mxu0 %v3029
      %v3085 = vpop.f32.mrf.mxu0
      %v3086 = vadd.f32 %v2877, %v3085
      %3087 = vdwg.mxu0
      %3088 = vrot.lane.b32.xlu0 %v1300, 120
      %v3089 = vpop.permute.xlu0 %3088
      %3090 = vrot.lane.b32.xlu0 %v1303, 120
      %v3091 = vpop.permute.xlu0 %3090
      %3092 = vrot.lane.b32.xlu0 %v1306, 120
      %v3093 = vpop.permute.xlu0 %3092
      %3094 = vrot.lane.b32.xlu0 %v1309, 120
      %v3095 = vpop.permute.xlu0 %3094
      %3096 = vrot.lane.b32.xlu0 %v1312, 120
      %v3097 = vpop.permute.xlu0 %3096
      %3098 = vrot.lane.b32.xlu0 %v1315, 120
      %v3099 = vpop.permute.xlu0 %3098
      %3100 = vrot.lane.b32.xlu0 %v1318, 120
      %v3101 = vpop.permute.xlu0 %3100
      %3102 = vrot.lane.b32.xlu0 %v1321, 120
      %v3103 = vpop.permute.xlu0 %3102
      %3104 = vrot.lane.b32.xlu0 %v1300, 88
      %v3105 = vpop.permute.xlu0 %3104
      %3106 = vrot.lane.b32.xlu0 %v1303, 88
      %v3107 = vpop.permute.xlu0 %3106
      %3108 = vrot.lane.b32.xlu0 %v1306, 88
      %v3109 = vpop.permute.xlu0 %3108
      %3110 = vrot.lane.b32.xlu0 %v1309, 88
      %v3111 = vpop.permute.xlu0 %3110
      %3112 = vrot.lane.b32.xlu0 %v1312, 88
      %v3113 = vpop.permute.xlu0 %3112
      %3114 = vrot.lane.b32.xlu0 %v1315, 88
      %v3115 = vpop.permute.xlu0 %3114
      %3116 = vrot.lane.b32.xlu0 %v1318, 88
      %v3117 = vpop.permute.xlu0 %3116
      %3118 = vrot.lane.b32.xlu0 %v1321, 88
      %v3119 = vpop.permute.xlu0 %3118
      %v3120 = vsel %vm1379, %v3089, 0
      %v3122 = vsel %vm1379, %v3091, 0
      %v3124 = vsel %vm1379, %v3093, 0
      %v3126 = vsel %vm1379, %v3095, 0
      %v3128 = vsel %vm1379, %v3097, 0
      %v3130 = vsel %vm1379, %v3099, 0
      %v3132 = vsel %vm1379, %v3101, 0
      %v3134 = vsel %vm1379, %v3103, 0
      %v3136 = vsel %vm1379, %v3105, 0
      %v3138 = vsel %vm1379, %v3107, 0
      %v3140 = vsel %vm1379, %v3109, 0
      %v3142 = vsel %vm1379, %v3111, 0
      %v3144 = vsel %vm1379, %v3113, 0
      %v3146 = vsel %vm1379, %v3115, 0
      %v3148 = vsel %vm1379, %v3117, 0
      %v3150 = vsel %vm1379, %v3119, 0
      %3152 = vmatpush.xpose.msra.mxu0 0.0
      %3153 = vmatpush.xpose.msra.mxu0 0.0
      %3154 = vmatpush.xpose.msra.mxu0 0.0
      %3155 = vmatpush.xpose.msra.mxu0 0.0
      %3156 = vmatpush.xpose.msra.mxu0 0.0
      %3157 = vmatpush.xpose.msra.mxu0 0.0
      %3158 = vmatpush.xpose.msra.mxu0 0.0
      %3159 = vmatpush.xpose.msra.mxu0 0.0
      %3160 = vmatpush.xpose.msra.mxu0 %v3150
      %3161 = vmatpush.xpose.msra.mxu0 %v3148
      %3162 = vmatpush.xpose.msra.mxu0 %v3146
      %3163 = vmatpush.xpose.msra.mxu0 %v3144
      %3164 = vmatpush.xpose.msra.mxu0 %v3142
      %3165 = vmatpush.xpose.msra.mxu0 %v3140
      %3166 = vmatpush.xpose.msra.mxu0 %v3138
      %3167 = vmatpush.xpose.msra.mxu0 %v3136
      %3168 = vmatmul.f32.gmra.mxu0 %v3120
      %v3169 = vpop.f32.mrf.mxu0
      %v3170 = vadd.f32 %v2870, %v3169
      %3171 = vmatmul.f32.gmra.mxu0 %v3122
      %v3172 = vpop.f32.mrf.mxu0
      %v3173 = vadd.f32 %v2871, %v3172
      %3174 = vmatmul.f32.gmra.mxu0 %v3124
      %v3175 = vpop.f32.mrf.mxu0
      %v3176 = vadd.f32 %v2872, %v3175
      %3177 = vmatmul.f32.gmra.mxu0 %v3126
      %v3178 = vpop.f32.mrf.mxu0
      %v3179 = vadd.f32 %v2873, %v3178
      %3180 = vmatmul.f32.gmra.mxu0 %v3128
      %v3181 = vpop.f32.mrf.mxu0
      %v3182 = vadd.f32 %v2874, %v3181
      %3183 = vmatmul.f32.gmra.mxu0 %v3130
      %v3184 = vpop.f32.mrf.mxu0
      %v3185 = vadd.f32 %v2875, %v3184
      %3186 = vmatmul.f32.gmra.mxu0 %v3132
      %v3187 = vpop.f32.mrf.mxu0
      %v3188 = vadd.f32 %v2876, %v3187
      %3189 = vmatmul.f32.gmra.mxu0 %v3134
      %v3190 = vpop.f32.mrf.mxu0
      %v3191 = vadd.f32 %v2877, %v3190
      %3192 = vdwg.mxu0
      %3193 = vrot.lane.b32.xlu0 %v1324, 120
      %v3194 = vpop.permute.xlu0 %3193
      %3195 = vrot.lane.b32.xlu0 %v1327, 120
      %v3196 = vpop.permute.xlu0 %3195
      %3197 = vrot.lane.b32.xlu0 %v1330, 120
      %v3198 = vpop.permute.xlu0 %3197
      %3199 = vrot.lane.b32.xlu0 %v1333, 120
      %v3200 = vpop.permute.xlu0 %3199
      %3201 = vrot.lane.b32.xlu0 %v1336, 120
      %v3202 = vpop.permute.xlu0 %3201
      %3203 = vrot.lane.b32.xlu0 %v1339, 120
      %v3204 = vpop.permute.xlu0 %3203
      %3205 = vrot.lane.b32.xlu0 %v1342, 120
      %v3206 = vpop.permute.xlu0 %3205
      %3207 = vrot.lane.b32.xlu0 %v1345, 120
      %v3208 = vpop.permute.xlu0 %3207
      %3209 = vrot.lane.b32.xlu0 %v1324, 88
      %v3210 = vpop.permute.xlu0 %3209
      %3211 = vrot.lane.b32.xlu0 %v1327, 88
      %v3212 = vpop.permute.xlu0 %3211
      %3213 = vrot.lane.b32.xlu0 %v1330, 88
      %v3214 = vpop.permute.xlu0 %3213
      %3215 = vrot.lane.b32.xlu0 %v1333, 88
      %v3216 = vpop.permute.xlu0 %3215
      %3217 = vrot.lane.b32.xlu0 %v1336, 88
      %v3218 = vpop.permute.xlu0 %3217
      %3219 = vrot.lane.b32.xlu0 %v1339, 88
      %v3220 = vpop.permute.xlu0 %3219
      %3221 = vrot.lane.b32.xlu0 %v1342, 88
      %v3222 = vpop.permute.xlu0 %3221
      %3223 = vrot.lane.b32.xlu0 %v1345, 88
      %v3224 = vpop.permute.xlu0 %3223
      %v3225 = vsel %vm1379, %v3194, 0
      %v3227 = vsel %vm1379, %v3196, 0
      %v3229 = vsel %vm1379, %v3198, 0
      %v3231 = vsel %vm1379, %v3200, 0
      %v3233 = vsel %vm1379, %v3202, 0
      %v3235 = vsel %vm1379, %v3204, 0
      %v3237 = vsel %vm1379, %v3206, 0
      %v3239 = vsel %vm1379, %v3208, 0
      %v3241 = vsel %vm1379, %v3210, 0
      %v3243 = vsel %vm1379, %v3212, 0
      %v3245 = vsel %vm1379, %v3214, 0
      %v3247 = vsel %vm1379, %v3216, 0
      %v3249 = vsel %vm1379, %v3218, 0
      %v3251 = vsel %vm1379, %v3220, 0
      %v3253 = vsel %vm1379, %v3222, 0
      %v3255 = vsel %vm1379, %v3224, 0
      %3257 = vmatpush.xpose.msra.mxu0 0.0
      %3258 = vmatpush.xpose.msra.mxu0 0.0
      %3259 = vmatpush.xpose.msra.mxu0 0.0
      %3260 = vmatpush.xpose.msra.mxu0 0.0
      %3261 = vmatpush.xpose.msra.mxu0 0.0
      %3262 = vmatpush.xpose.msra.mxu0 0.0
      %3263 = vmatpush.xpose.msra.mxu0 0.0
      %3264 = vmatpush.xpose.msra.mxu0 0.0
      %3265 = vmatpush.xpose.msra.mxu0 %v3255
      %3266 = vmatpush.xpose.msra.mxu0 %v3253
      %3267 = vmatpush.xpose.msra.mxu0 %v3251
      %3268 = vmatpush.xpose.msra.mxu0 %v3249
      %3269 = vmatpush.xpose.msra.mxu0 %v3247
      %3270 = vmatpush.xpose.msra.mxu0 %v3245
      %3271 = vmatpush.xpose.msra.mxu0 %v3243
      %3272 = vmatpush.xpose.msra.mxu0 %v3241
      %3273 = vmatmul.f32.gmra.mxu0 %v3225
      %v3274 = vpop.f32.mrf.mxu0
      %v3275 = vadd.f32 %v2870, %v3274
      %3276 = vmatmul.f32.gmra.mxu0 %v3227
      %v3277 = vpop.f32.mrf.mxu0
      %v3278 = vadd.f32 %v2871, %v3277
      %3279 = vmatmul.f32.gmra.mxu0 %v3229
      %v3280 = vpop.f32.mrf.mxu0
      %v3281 = vadd.f32 %v2872, %v3280
      %3282 = vmatmul.f32.gmra.mxu0 %v3231
      %v3283 = vpop.f32.mrf.mxu0
      %v3284 = vadd.f32 %v2873, %v3283
      %3285 = vmatmul.f32.gmra.mxu0 %v3233
      %v3286 = vpop.f32.mrf.mxu0
      %v3287 = vadd.f32 %v2874, %v3286
      %3288 = vmatmul.f32.gmra.mxu0 %v3235
      %v3289 = vpop.f32.mrf.mxu0
      %v3290 = vadd.f32 %v2875, %v3289
      %3291 = vmatmul.f32.gmra.mxu0 %v3237
      %v3292 = vpop.f32.mrf.mxu0
      %v3293 = vadd.f32 %v2876, %v3292
      %3294 = vmatmul.f32.gmra.mxu0 %v3239
      %v3295 = vpop.f32.mrf.mxu0
      %v3296 = vadd.f32 %v2877, %v3295
      %3297 = vdwg.mxu0
      %v3298 = vsel %vm1744, %v2960, -inf
      %3299 = vmax.xlane.f32.xlu0 %v3298
      %v3300 = vpop.xlane.xlu0 %3299
      %v3301 = vsel %vm1744, %v2963, -inf
      %3302 = vmax.xlane.f32.xlu0 %v3301
      %v3303 = vpop.xlane.xlu0 %3302
      %v3304 = vsel %vm1744, %v2966, -inf
      %3305 = vmax.xlane.f32.xlu0 %v3304
      %v3306 = vpop.xlane.xlu0 %3305
      %v3307 = vsel %vm1744, %v2969, -inf
      %3308 = vmax.xlane.f32.xlu0 %v3307
      %v3309 = vpop.xlane.xlu0 %3308
      %v3310 = vsel %vm1744, %v2972, -inf
      %3311 = vmax.xlane.f32.xlu0 %v3310
      %v3312 = vpop.xlane.xlu0 %3311
      %v3313 = vsel %vm1744, %v2975, -inf
      %3314 = vmax.xlane.f32.xlu0 %v3313
      %v3315 = vpop.xlane.xlu0 %3314
      %v3316 = vsel %vm1744, %v2978, -inf
      %3317 = vmax.xlane.f32.xlu0 %v3316
      %v3318 = vpop.xlane.xlu0 %3317
      %v3319 = vsel %vm1744, %v2981, -inf
      %3320 = vmax.xlane.f32.xlu0 %v3319
      %v3321 = vpop.xlane.xlu0 %3320
      %v3322 = vsel %vm1744, %v3065, -inf
      %3323 = vmax.xlane.f32.xlu0 %v3322
      %v3324 = vpop.xlane.xlu0 %3323
      %v3325 = vsel %vm1744, %v3068, -inf
      %3326 = vmax.xlane.f32.xlu0 %v3325
      %v3327 = vpop.xlane.xlu0 %3326
      %v3328 = vsel %vm1744, %v3071, -inf
      %3329 = vmax.xlane.f32.xlu0 %v3328
      %v3330 = vpop.xlane.xlu0 %3329
      %v3331 = vsel %vm1744, %v3074, -inf
      %3332 = vmax.xlane.f32.xlu0 %v3331
      %v3333 = vpop.xlane.xlu0 %3332
      %v3334 = vsel %vm1744, %v3077, -inf
      %3335 = vmax.xlane.f32.xlu0 %v3334
      %v3336 = vpop.xlane.xlu0 %3335
      %v3337 = vsel %vm1744, %v3080, -inf
      %3338 = vmax.xlane.f32.xlu0 %v3337
      %v3339 = vpop.xlane.xlu0 %3338
      %v3340 = vsel %vm1744, %v3083, -inf
      %3341 = vmax.xlane.f32.xlu0 %v3340
      %v3342 = vpop.xlane.xlu0 %3341
      %v3343 = vsel %vm1744, %v3086, -inf
      %3344 = vmax.xlane.f32.xlu0 %v3343
      %v3345 = vpop.xlane.xlu0 %3344
      %v3346 = vsel %vm1744, %v3170, -inf
      %3347 = vmax.xlane.f32.xlu0 %v3346
      %v3348 = vpop.xlane.xlu0 %3347
      %v3349 = vsel %vm1744, %v3173, -inf
      %3350 = vmax.xlane.f32.xlu0 %v3349
      %v3351 = vpop.xlane.xlu0 %3350
      %v3352 = vsel %vm1744, %v3176, -inf
      %3353 = vmax.xlane.f32.xlu0 %v3352
      %v3354 = vpop.xlane.xlu0 %3353
      %v3355 = vsel %vm1744, %v3179, -inf
      %3356 = vmax.xlane.f32.xlu0 %v3355
      %v3357 = vpop.xlane.xlu0 %3356
      %v3358 = vsel %vm1744, %v3182, -inf
      %3359 = vmax.xlane.f32.xlu0 %v3358
      %v3360 = vpop.xlane.xlu0 %3359
      %v3361 = vsel %vm1744, %v3185, -inf
      %3362 = vmax.xlane.f32.xlu0 %v3361
      %v3363 = vpop.xlane.xlu0 %3362
      %v3364 = vsel %vm1744, %v3188, -inf
      %3365 = vmax.xlane.f32.xlu0 %v3364
      %v3366 = vpop.xlane.xlu0 %3365
      %v3367 = vsel %vm1744, %v3191, -inf
      %3368 = vmax.xlane.f32.xlu0 %v3367
      %v3369 = vpop.xlane.xlu0 %3368
      %v3370 = vsel %vm1744, %v3275, -inf
      %3371 = vmax.xlane.f32.xlu0 %v3370
      %v3372 = vpop.xlane.xlu0 %3371
      %v3373 = vsel %vm1744, %v3278, -inf
      %3374 = vmax.xlane.f32.xlu0 %v3373
      %v3375 = vpop.xlane.xlu0 %3374
      %v3376 = vsel %vm1744, %v3281, -inf
      %3377 = vmax.xlane.f32.xlu0 %v3376
      %v3378 = vpop.xlane.xlu0 %3377
      %v3379 = vsel %vm1744, %v3284, -inf
      %3380 = vmax.xlane.f32.xlu0 %v3379
      %v3381 = vpop.xlane.xlu0 %3380
      %v3382 = vsel %vm1744, %v3287, -inf
      %3383 = vmax.xlane.f32.xlu0 %v3382
      %v3384 = vpop.xlane.xlu0 %3383
      %v3385 = vsel %vm1744, %v3290, -inf
      %3386 = vmax.xlane.f32.xlu0 %v3385
      %v3387 = vpop.xlane.xlu0 %3386
      %v3388 = vsel %vm1744, %v3293, -inf
      %3389 = vmax.xlane.f32.xlu0 %v3388
      %v3390 = vpop.xlane.xlu0 %3389
      %v3391 = vsel %vm1744, %v3296, -inf
      %3392 = vmax.xlane.f32.xlu0 %v3391
      %v3393 = vpop.xlane.xlu0 %3392
      %v3394 = vsub.f32 %v2960, %v3300
      %v3395 = vsub.f32 %v2963, %v3303
      %v3396 = vsub.f32 %v2966, %v3306
      %v3397 = vsub.f32 %v2969, %v3309
      %v3398 = vsub.f32 %v2972, %v3312
      %v3399 = vsub.f32 %v2975, %v3315
      %v3400 = vsub.f32 %v2978, %v3318
      %v3401 = vsub.f32 %v2981, %v3321
      %v3402 = vsub.f32 %v3065, %v3324
      %v3403 = vsub.f32 %v3068, %v3327
      %v3404 = vsub.f32 %v3071, %v3330
      %v3405 = vsub.f32 %v3074, %v3333
      %v3406 = vsub.f32 %v3077, %v3336
      %v3407 = vsub.f32 %v3080, %v3339
      %v3408 = vsub.f32 %v3083, %v3342
      %v3409 = vsub.f32 %v3086, %v3345
      %v3410 = vsub.f32 %v3170, %v3348
      %v3411 = vsub.f32 %v3173, %v3351
      %v3412 = vsub.f32 %v3176, %v3354
      %v3413 = vsub.f32 %v3179, %v3357
      %v3414 = vsub.f32 %v3182, %v3360
      %v3415 = vsub.f32 %v3185, %v3363
      %v3416 = vsub.f32 %v3188, %v3366
      %v3417 = vsub.f32 %v3191, %v3369
      %v3418 = vsub.f32 %v3275, %v3372
      %v3419 = vsub.f32 %v3278, %v3375
      %v3420 = vsub.f32 %v3281, %v3378
      %v3421 = vsub.f32 %v3284, %v3381
      %v3422 = vsub.f32 %v3287, %v3384
      %v3423 = vsub.f32 %v3290, %v3387
      %v3424 = vsub.f32 %v3293, %v3390
      %v3425 = vsub.f32 %v3296, %v3393
      %v3426 = vmul.f32 %v3394, 1.442695
      %v3427 = vpow.pop %v3426
      %v3428 = vmul.f32 %v3395, 1.442695
      %v3429 = vpow.pop %v3428
      %v3430 = vmul.f32 %v3396, 1.442695
      %v3431 = vpow.pop %v3430
      %v3432 = vmul.f32 %v3397, 1.442695
      %v3433 = vpow.pop %v3432
      %v3434 = vmul.f32 %v3398, 1.442695
      %v3435 = vpow.pop %v3434
      %v3436 = vmul.f32 %v3399, 1.442695
      %v3437 = vpow.pop %v3436
      %v3438 = vmul.f32 %v3400, 1.442695
      %v3439 = vpow.pop %v3438
      %v3440 = vmul.f32 %v3401, 1.442695
      %v3441 = vpow.pop %v3440
      %v3442 = vmul.f32 %v3402, 1.442695
      %v3443 = vpow.pop %v3442
      %v3444 = vmul.f32 %v3403, 1.442695
      %v3445 = vpow.pop %v3444
      %v3446 = vmul.f32 %v3404, 1.442695
      %v3447 = vpow.pop %v3446
      %v3448 = vmul.f32 %v3405, 1.442695
      %v3449 = vpow.pop %v3448
      %v3450 = vmul.f32 %v3406, 1.442695
      %v3451 = vpow.pop %v3450
      %v3452 = vmul.f32 %v3407, 1.442695
      %v3453 = vpow.pop %v3452
      %v3454 = vmul.f32 %v3408, 1.442695
      %v3455 = vpow.pop %v3454
      %v3456 = vmul.f32 %v3409, 1.442695
      %v3457 = vpow.pop %v3456
      %v3458 = vmul.f32 %v3410, 1.442695
      %v3459 = vpow.pop %v3458
      %v3460 = vmul.f32 %v3411, 1.442695
      %v3461 = vpow.pop %v3460
      %v3462 = vmul.f32 %v3412, 1.442695
      %v3463 = vpow.pop %v3462
      %v3464 = vmul.f32 %v3413, 1.442695
      %v3465 = vpow.pop %v3464
      %v3466 = vmul.f32 %v3414, 1.442695
      %v3467 = vpow.pop %v3466
      %v3468 = vmul.f32 %v3415, 1.442695
      %v3469 = vpow.pop %v3468
      %v3470 = vmul.f32 %v3416, 1.442695
      %v3471 = vpow.pop %v3470
      %v3472 = vmul.f32 %v3417, 1.442695
      %v3473 = vpow.pop %v3472
      %v3474 = vmul.f32 %v3418, 1.442695
      %v3475 = vpow.pop %v3474
      %v3476 = vmul.f32 %v3419, 1.442695
      %v3477 = vpow.pop %v3476
      %v3478 = vmul.f32 %v3420, 1.442695
      %v3479 = vpow.pop %v3478
      %v3480 = vmul.f32 %v3421, 1.442695
      %v3481 = vpow.pop %v3480
      %v3482 = vmul.f32 %v3422, 1.442695
      %v3483 = vpow.pop %v3482
      %v3484 = vmul.f32 %v3423, 1.442695
      %v3485 = vpow.pop %v3484
      %v3486 = vmul.f32 %v3424, 1.442695
      %v3487 = vpow.pop %v3486
      %v3488 = vmul.f32 %v3425, 1.442695
      %v3489 = vpow.pop %v3488
      %v3490 = vsel %vm1744, %v3427, 0.0
      %3491 = vadd.xlane.f32.xlu0 %v3490
      %v3492 = vpop.xlane.xlu0 %3491
      %v3493 = vsel %vm1744, %v3429, 0.0
      %3494 = vadd.xlane.f32.xlu0 %v3493
      %v3495 = vpop.xlane.xlu0 %3494
      %v3496 = vsel %vm1744, %v3431, 0.0
      %3497 = vadd.xlane.f32.xlu0 %v3496
      %v3498 = vpop.xlane.xlu0 %3497
      %v3499 = vsel %vm1744, %v3433, 0.0
      %3500 = vadd.xlane.f32.xlu0 %v3499
      %v3501 = vpop.xlane.xlu0 %3500
      %v3502 = vsel %vm1744, %v3435, 0.0
      %3503 = vadd.xlane.f32.xlu0 %v3502
      %v3504 = vpop.xlane.xlu0 %3503
      %v3505 = vsel %vm1744, %v3437, 0.0
      %3506 = vadd.xlane.f32.xlu0 %v3505
      %v3507 = vpop.xlane.xlu0 %3506
      %v3508 = vsel %vm1744, %v3439, 0.0
      %3509 = vadd.xlane.f32.xlu0 %v3508
      %v3510 = vpop.xlane.xlu0 %3509
      %v3511 = vsel %vm1744, %v3441, 0.0
      %3512 = vadd.xlane.f32.xlu0 %v3511
      %v3513 = vpop.xlane.xlu0 %3512
      %v3514 = vsel %vm1744, %v3443, 0.0
      %3515 = vadd.xlane.f32.xlu0 %v3514
      %v3516 = vpop.xlane.xlu0 %3515
      %v3517 = vsel %vm1744, %v3445, 0.0
      %3518 = vadd.xlane.f32.xlu0 %v3517
      %v3519 = vpop.xlane.xlu0 %3518
      %v3520 = vsel %vm1744, %v3447, 0.0
      %3521 = vadd.xlane.f32.xlu0 %v3520
      %v3522 = vpop.xlane.xlu0 %3521
      %v3523 = vsel %vm1744, %v3449, 0.0
      %3524 = vadd.xlane.f32.xlu0 %v3523
      %v3525 = vpop.xlane.xlu0 %3524
      %v3526 = vsel %vm1744, %v3451, 0.0
      %3527 = vadd.xlane.f32.xlu0 %v3526
      %v3528 = vpop.xlane.xlu0 %3527
      %v3529 = vsel %vm1744, %v3453, 0.0
      %3530 = vadd.xlane.f32.xlu0 %v3529
      %v3531 = vpop.xlane.xlu0 %3530
      %v3532 = vsel %vm1744, %v3455, 0.0
      %3533 = vadd.xlane.f32.xlu0 %v3532
      %v3534 = vpop.xlane.xlu0 %3533
      %v3535 = vsel %vm1744, %v3457, 0.0
      %3536 = vadd.xlane.f32.xlu0 %v3535
      %v3537 = vpop.xlane.xlu0 %3536
      %v3538 = vsel %vm1744, %v3459, 0.0
      %3539 = vadd.xlane.f32.xlu0 %v3538
      %v3540 = vpop.xlane.xlu0 %3539
      %v3541 = vsel %vm1744, %v3461, 0.0
      %3542 = vadd.xlane.f32.xlu0 %v3541
      %v3543 = vpop.xlane.xlu0 %3542
      %v3544 = vsel %vm1744, %v3463, 0.0
      %3545 = vadd.xlane.f32.xlu0 %v3544
      %v3546 = vpop.xlane.xlu0 %3545
      %v3547 = vsel %vm1744, %v3465, 0.0
      %3548 = vadd.xlane.f32.xlu0 %v3547
      %v3549 = vpop.xlane.xlu0 %3548
      %v3550 = vsel %vm1744, %v3467, 0.0
      %3551 = vadd.xlane.f32.xlu0 %v3550
      %v3552 = vpop.xlane.xlu0 %3551
      %v3553 = vsel %vm1744, %v3469, 0.0
      %3554 = vadd.xlane.f32.xlu0 %v3553
      %v3555 = vpop.xlane.xlu0 %3554
      %v3556 = vsel %vm1744, %v3471, 0.0
      %3557 = vadd.xlane.f32.xlu0 %v3556
      %v3558 = vpop.xlane.xlu0 %3557
      %v3559 = vsel %vm1744, %v3473, 0.0
      %3560 = vadd.xlane.f32.xlu0 %v3559
      %v3561 = vpop.xlane.xlu0 %3560
      %v3562 = vsel %vm1744, %v3475, 0.0
      %3563 = vadd.xlane.f32.xlu0 %v3562
      %v3564 = vpop.xlane.xlu0 %3563
      %v3565 = vsel %vm1744, %v3477, 0.0
      %3566 = vadd.xlane.f32.xlu0 %v3565
      %v3567 = vpop.xlane.xlu0 %3566
      %v3568 = vsel %vm1744, %v3479, 0.0
      %3569 = vadd.xlane.f32.xlu0 %v3568
      %v3570 = vpop.xlane.xlu0 %3569
      %v3571 = vsel %vm1744, %v3481, 0.0
      %3572 = vadd.xlane.f32.xlu0 %v3571
      %v3573 = vpop.xlane.xlu0 %3572
      %v3574 = vsel %vm1744, %v3483, 0.0
      %3575 = vadd.xlane.f32.xlu0 %v3574
      %v3576 = vpop.xlane.xlu0 %3575
      %v3577 = vsel %vm1744, %v3485, 0.0
      %3578 = vadd.xlane.f32.xlu0 %v3577
      %v3579 = vpop.xlane.xlu0 %3578
      %v3580 = vsel %vm1744, %v3487, 0.0
      %3581 = vadd.xlane.f32.xlu0 %v3580
      %v3582 = vpop.xlane.xlu0 %3581
      %v3583 = vsel %vm1744, %v3489, 0.0
      %3584 = vadd.xlane.f32.xlu0 %v3583
      %v3585 = vpop.xlane.xlu0 %3584
      %v3586 = vrcp.pop %v3492
      %v3587 = vmul.f32 %v3492, %v3586
      %v3588 = vsub.f32 1.0, %v3587
      %v3589 = vmul.f32 %v3586, %v3588
      %v3590 = vadd.f32 %v3586, %v3589
      %vm3591 = vweird.f32 %v3492
      %vm3592 = vweird.f32 %v3586
      %vm3593 = vmor %vm3591, %vm3592
      %v3594 = vsel %vm3593, %v3586, %v3590
      %v3595 = vand.u32 2147483647, %v3492
      %vm3596 = vcmp.eq.f32.partialorder %v3595, 8.507059e+37
      %v3597 = vand.u32 %v3492, 2147483648
      %v3598 = vor.u32 1.1754944e-38, %v3597
      %v3599 = vsel %vm3596, %v3598, %v3594
      %v3600 = vrcp.pop %v3495
      %v3601 = vmul.f32 %v3495, %v3600
      %v3602 = vsub.f32 1.0, %v3601
      %v3603 = vmul.f32 %v3600, %v3602
      %v3604 = vadd.f32 %v3600, %v3603
      %vm3605 = vweird.f32 %v3495
      %vm3606 = vweird.f32 %v3600
      %vm3607 = vmor %vm3605, %vm3606
      %v3608 = vsel %vm3607, %v3600, %v3604
      %v3609 = vand.u32 2147483647, %v3495
      %vm3610 = vcmp.eq.f32.partialorder %v3609, 8.507059e+37
      %v3611 = vand.u32 %v3495, 2147483648
      %v3612 = vor.u32 1.1754944e-38, %v3611
      %v3613 = vsel %vm3610, %v3612, %v3608
      %v3614 = vrcp.pop %v3498
      %v3615 = vmul.f32 %v3498, %v3614
      %v3616 = vsub.f32 1.0, %v3615
      %v3617 = vmul.f32 %v3614, %v3616
      %v3618 = vadd.f32 %v3614, %v3617
      %vm3619 = vweird.f32 %v3498
      %vm3620 = vweird.f32 %v3614
      %vm3621 = vmor %vm3619, %vm3620
      %v3622 = vsel %vm3621, %v3614, %v3618
      %v3623 = vand.u32 2147483647, %v3498
      %vm3624 = vcmp.eq.f32.partialorder %v3623, 8.507059e+37
      %v3625 = vand.u32 %v3498, 2147483648
      %v3626 = vor.u32 1.1754944e-38, %v3625
      %v3627 = vsel %vm3624, %v3626, %v3622
      %v3628 = vrcp.pop %v3501
      %v3629 = vmul.f32 %v3501, %v3628
      %v3630 = vsub.f32 1.0, %v3629
      %v3631 = vmul.f32 %v3628, %v3630
      %v3632 = vadd.f32 %v3628, %v3631
      %vm3633 = vweird.f32 %v3501
      %vm3634 = vweird.f32 %v3628
      %vm3635 = vmor %vm3633, %vm3634
      %v3636 = vsel %vm3635, %v3628, %v3632
      %v3637 = vand.u32 2147483647, %v3501
      %vm3638 = vcmp.eq.f32.partialorder %v3637, 8.507059e+37
      %v3639 = vand.u32 %v3501, 2147483648
      %v3640 = vor.u32 1.1754944e-38, %v3639
      %v3641 = vsel %vm3638, %v3640, %v3636
      %v3642 = vrcp.pop %v3504
      %v3643 = vmul.f32 %v3504, %v3642
      %v3644 = vsub.f32 1.0, %v3643
      %v3645 = vmul.f32 %v3642, %v3644
      %v3646 = vadd.f32 %v3642, %v3645
      %vm3647 = vweird.f32 %v3504
      %vm3648 = vweird.f32 %v3642
      %vm3649 = vmor %vm3647, %vm3648
      %v3650 = vsel %vm3649, %v3642, %v3646
      %v3651 = vand.u32 2147483647, %v3504
      %vm3652 = vcmp.eq.f32.partialorder %v3651, 8.507059e+37
      %v3653 = vand.u32 %v3504, 2147483648
      %v3654 = vor.u32 1.1754944e-38, %v3653
      %v3655 = vsel %vm3652, %v3654, %v3650
      %v3656 = vrcp.pop %v3507
      %v3657 = vmul.f32 %v3507, %v3656
      %v3658 = vsub.f32 1.0, %v3657
      %v3659 = vmul.f32 %v3656, %v3658
      %v3660 = vadd.f32 %v3656, %v3659
      %vm3661 = vweird.f32 %v3507
      %vm3662 = vweird.f32 %v3656
      %vm3663 = vmor %vm3661, %vm3662
      %v3664 = vsel %vm3663, %v3656, %v3660
      %v3665 = vand.u32 2147483647, %v3507
      %vm3666 = vcmp.eq.f32.partialorder %v3665, 8.507059e+37
      %v3667 = vand.u32 %v3507, 2147483648
      %v3668 = vor.u32 1.1754944e-38, %v3667
      %v3669 = vsel %vm3666, %v3668, %v3664
      %v3670 = vrcp.pop %v3510
      %v3671 = vmul.f32 %v3510, %v3670
      %v3672 = vsub.f32 1.0, %v3671
      %v3673 = vmul.f32 %v3670, %v3672
      %v3674 = vadd.f32 %v3670, %v3673
      %vm3675 = vweird.f32 %v3510
      %vm3676 = vweird.f32 %v3670
      %vm3677 = vmor %vm3675, %vm3676
      %v3678 = vsel %vm3677, %v3670, %v3674
      %v3679 = vand.u32 2147483647, %v3510
      %vm3680 = vcmp.eq.f32.partialorder %v3679, 8.507059e+37
      %v3681 = vand.u32 %v3510, 2147483648
      %v3682 = vor.u32 1.1754944e-38, %v3681
      %v3683 = vsel %vm3680, %v3682, %v3678
      %v3684 = vrcp.pop %v3513
      %v3685 = vmul.f32 %v3513, %v3684
      %v3686 = vsub.f32 1.0, %v3685
      %v3687 = vmul.f32 %v3684, %v3686
      %v3688 = vadd.f32 %v3684, %v3687
      %vm3689 = vweird.f32 %v3513
      %vm3690 = vweird.f32 %v3684
      %vm3691 = vmor %vm3689, %vm3690
      %v3692 = vsel %vm3691, %v3684, %v3688
      %v3693 = vand.u32 2147483647, %v3513
      %vm3694 = vcmp.eq.f32.partialorder %v3693, 8.507059e+37
      %v3695 = vand.u32 %v3513, 2147483648
      %v3696 = vor.u32 1.1754944e-38, %v3695
      %v3697 = vsel %vm3694, %v3696, %v3692
      %v3698 = vrcp.pop %v3516
      %v3699 = vmul.f32 %v3516, %v3698
      %v3700 = vsub.f32 1.0, %v3699
      %v3701 = vmul.f32 %v3698, %v3700
      %v3702 = vadd.f32 %v3698, %v3701
      %vm3703 = vweird.f32 %v3516
      %vm3704 = vweird.f32 %v3698
      %vm3705 = vmor %vm3703, %vm3704
      %v3706 = vsel %vm3705, %v3698, %v3702
      %v3707 = vand.u32 2147483647, %v3516
      %vm3708 = vcmp.eq.f32.partialorder %v3707, 8.507059e+37
      %v3709 = vand.u32 %v3516, 2147483648
      %v3710 = vor.u32 1.1754944e-38, %v3709
      %v3711 = vsel %vm3708, %v3710, %v3706
      %v3712 = vrcp.pop %v3519
      %v3713 = vmul.f32 %v3519, %v3712
      %v3714 = vsub.f32 1.0, %v3713
      %v3715 = vmul.f32 %v3712, %v3714
      %v3716 = vadd.f32 %v3712, %v3715
      %vm3717 = vweird.f32 %v3519
      %vm3718 = vweird.f32 %v3712
      %vm3719 = vmor %vm3717, %vm3718
      %v3720 = vsel %vm3719, %v3712, %v3716
      %v3721 = vand.u32 2147483647, %v3519
      %vm3722 = vcmp.eq.f32.partialorder %v3721, 8.507059e+37
      %v3723 = vand.u32 %v3519, 2147483648
      %v3724 = vor.u32 1.1754944e-38, %v3723
      %v3725 = vsel %vm3722, %v3724, %v3720
      %v3726 = vrcp.pop %v3522
      %v3727 = vmul.f32 %v3522, %v3726
      %v3728 = vsub.f32 1.0, %v3727
      %v3729 = vmul.f32 %v3726, %v3728
      %v3730 = vadd.f32 %v3726, %v3729
      %vm3731 = vweird.f32 %v3522
      %vm3732 = vweird.f32 %v3726
      %vm3733 = vmor %vm3731, %vm3732
      %v3734 = vsel %vm3733, %v3726, %v3730
      %v3735 = vand.u32 2147483647, %v3522
      %vm3736 = vcmp.eq.f32.partialorder %v3735, 8.507059e+37
      %v3737 = vand.u32 %v3522, 2147483648
      %v3738 = vor.u32 1.1754944e-38, %v3737
      %v3739 = vsel %vm3736, %v3738, %v3734
      %v3740 = vrcp.pop %v3525
      %v3741 = vmul.f32 %v3525, %v3740
      %v3742 = vsub.f32 1.0, %v3741
      %v3743 = vmul.f32 %v3740, %v3742
      %v3744 = vadd.f32 %v3740, %v3743
      %vm3745 = vweird.f32 %v3525
      %vm3746 = vweird.f32 %v3740
      %vm3747 = vmor %vm3745, %vm3746
      %v3748 = vsel %vm3747, %v3740, %v3744
      %v3749 = vand.u32 2147483647, %v3525
      %vm3750 = vcmp.eq.f32.partialorder %v3749, 8.507059e+37
      %v3751 = vand.u32 %v3525, 2147483648
      %v3752 = vor.u32 1.1754944e-38, %v3751
      %v3753 = vsel %vm3750, %v3752, %v3748
      %v3754 = vrcp.pop %v3528
      %v3755 = vmul.f32 %v3528, %v3754
      %v3756 = vsub.f32 1.0, %v3755
      %v3757 = vmul.f32 %v3754, %v3756
      %v3758 = vadd.f32 %v3754, %v3757
      %vm3759 = vweird.f32 %v3528
      %vm3760 = vweird.f32 %v3754
      %vm3761 = vmor %vm3759, %vm3760
      %v3762 = vsel %vm3761, %v3754, %v3758
      %v3763 = vand.u32 2147483647, %v3528
      %vm3764 = vcmp.eq.f32.partialorder %v3763, 8.507059e+37
      %v3765 = vand.u32 %v3528, 2147483648
      %v3766 = vor.u32 1.1754944e-38, %v3765
      %v3767 = vsel %vm3764, %v3766, %v3762
      %v3768 = vrcp.pop %v3531
      %v3769 = vmul.f32 %v3531, %v3768
      %v3770 = vsub.f32 1.0, %v3769
      %v3771 = vmul.f32 %v3768, %v3770
      %v3772 = vadd.f32 %v3768, %v3771
      %vm3773 = vweird.f32 %v3531
      %vm3774 = vweird.f32 %v3768
      %vm3775 = vmor %vm3773, %vm3774
      %v3776 = vsel %vm3775, %v3768, %v3772
      %v3777 = vand.u32 2147483647, %v3531
      %vm3778 = vcmp.eq.f32.partialorder %v3777, 8.507059e+37
      %v3779 = vand.u32 %v3531, 2147483648
      %v3780 = vor.u32 1.1754944e-38, %v3779
      %v3781 = vsel %vm3778, %v3780, %v3776
      %v3782 = vrcp.pop %v3534
      %v3783 = vmul.f32 %v3534, %v3782
      %v3784 = vsub.f32 1.0, %v3783
      %v3785 = vmul.f32 %v3782, %v3784
      %v3786 = vadd.f32 %v3782, %v3785
      %vm3787 = vweird.f32 %v3534
      %vm3788 = vweird.f32 %v3782
      %vm3789 = vmor %vm3787, %vm3788
      %v3790 = vsel %vm3789, %v3782, %v3786
      %v3791 = vand.u32 2147483647, %v3534
      %vm3792 = vcmp.eq.f32.partialorder %v3791, 8.507059e+37
      %v3793 = vand.u32 %v3534, 2147483648
      %v3794 = vor.u32 1.1754944e-38, %v3793
      %v3795 = vsel %vm3792, %v3794, %v3790
      %v3796 = vrcp.pop %v3537
      %v3797 = vmul.f32 %v3537, %v3796
      %v3798 = vsub.f32 1.0, %v3797
      %v3799 = vmul.f32 %v3796, %v3798
      %v3800 = vadd.f32 %v3796, %v3799
      %vm3801 = vweird.f32 %v3537
      %vm3802 = vweird.f32 %v3796
      %vm3803 = vmor %vm3801, %vm3802
      %v3804 = vsel %vm3803, %v3796, %v3800
      %v3805 = vand.u32 2147483647, %v3537
      %vm3806 = vcmp.eq.f32.partialorder %v3805, 8.507059e+37
      %v3807 = vand.u32 %v3537, 2147483648
      %v3808 = vor.u32 1.1754944e-38, %v3807
      %v3809 = vsel %vm3806, %v3808, %v3804
      %v3810 = vrcp.pop %v3540
      %v3811 = vmul.f32 %v3540, %v3810
      %v3812 = vsub.f32 1.0, %v3811
      %v3813 = vmul.f32 %v3810, %v3812
      %v3814 = vadd.f32 %v3810, %v3813
      %vm3815 = vweird.f32 %v3540
      %vm3816 = vweird.f32 %v3810
      %vm3817 = vmor %vm3815, %vm3816
      %v3818 = vsel %vm3817, %v3810, %v3814
      %v3819 = vand.u32 2147483647, %v3540
      %vm3820 = vcmp.eq.f32.partialorder %v3819, 8.507059e+37
      %v3821 = vand.u32 %v3540, 2147483648
      %v3822 = vor.u32 1.1754944e-38, %v3821
      %v3823 = vsel %vm3820, %v3822, %v3818
      %v3824 = vrcp.pop %v3543
      %v3825 = vmul.f32 %v3543, %v3824
      %v3826 = vsub.f32 1.0, %v3825
      %v3827 = vmul.f32 %v3824, %v3826
      %v3828 = vadd.f32 %v3824, %v3827
      %vm3829 = vweird.f32 %v3543
      %vm3830 = vweird.f32 %v3824
      %vm3831 = vmor %vm3829, %vm3830
      %v3832 = vsel %vm3831, %v3824, %v3828
      %v3833 = vand.u32 2147483647, %v3543
      %vm3834 = vcmp.eq.f32.partialorder %v3833, 8.507059e+37
      %v3835 = vand.u32 %v3543, 2147483648
      %v3836 = vor.u32 1.1754944e-38, %v3835
      %v3837 = vsel %vm3834, %v3836, %v3832
      %v3838 = vrcp.pop %v3546
      %v3839 = vmul.f32 %v3546, %v3838
      %v3840 = vsub.f32 1.0, %v3839
      %v3841 = vmul.f32 %v3838, %v3840
      %v3842 = vadd.f32 %v3838, %v3841
      %vm3843 = vweird.f32 %v3546
      %vm3844 = vweird.f32 %v3838
      %vm3845 = vmor %vm3843, %vm3844
      %v3846 = vsel %vm3845, %v3838, %v3842
      %v3847 = vand.u32 2147483647, %v3546
      %vm3848 = vcmp.eq.f32.partialorder %v3847, 8.507059e+37
      %v3849 = vand.u32 %v3546, 2147483648
      %v3850 = vor.u32 1.1754944e-38, %v3849
      %v3851 = vsel %vm3848, %v3850, %v3846
      %v3852 = vrcp.pop %v3549
      %v3853 = vmul.f32 %v3549, %v3852
      %v3854 = vsub.f32 1.0, %v3853
      %v3855 = vmul.f32 %v3852, %v3854
      %v3856 = vadd.f32 %v3852, %v3855
      %vm3857 = vweird.f32 %v3549
      %vm3858 = vweird.f32 %v3852
      %vm3859 = vmor %vm3857, %vm3858
      %v3860 = vsel %vm3859, %v3852, %v3856
      %v3861 = vand.u32 2147483647, %v3549
      %vm3862 = vcmp.eq.f32.partialorder %v3861, 8.507059e+37
      %v3863 = vand.u32 %v3549, 2147483648
      %v3864 = vor.u32 1.1754944e-38, %v3863
      %v3865 = vsel %vm3862, %v3864, %v3860
      %v3866 = vrcp.pop %v3552
      %v3867 = vmul.f32 %v3552, %v3866
      %v3868 = vsub.f32 1.0, %v3867
      %v3869 = vmul.f32 %v3866, %v3868
      %v3870 = vadd.f32 %v3866, %v3869
      %vm3871 = vweird.f32 %v3552
      %vm3872 = vweird.f32 %v3866
      %vm3873 = vmor %vm3871, %vm3872
      %v3874 = vsel %vm3873, %v3866, %v3870
      %v3875 = vand.u32 2147483647, %v3552
      %vm3876 = vcmp.eq.f32.partialorder %v3875, 8.507059e+37
      %v3877 = vand.u32 %v3552, 2147483648
      %v3878 = vor.u32 1.1754944e-38, %v3877
      %v3879 = vsel %vm3876, %v3878, %v3874
      %v3880 = vrcp.pop %v3555
      %v3881 = vmul.f32 %v3555, %v3880
      %v3882 = vsub.f32 1.0, %v3881
      %v3883 = vmul.f32 %v3880, %v3882
      %v3884 = vadd.f32 %v3880, %v3883
      %vm3885 = vweird.f32 %v3555
      %vm3886 = vweird.f32 %v3880
      %vm3887 = vmor %vm3885, %vm3886
      %v3888 = vsel %vm3887, %v3880, %v3884
      %v3889 = vand.u32 2147483647, %v3555
      %vm3890 = vcmp.eq.f32.partialorder %v3889, 8.507059e+37
      %v3891 = vand.u32 %v3555, 2147483648
      %v3892 = vor.u32 1.1754944e-38, %v3891
      %v3893 = vsel %vm3890, %v3892, %v3888
      %v3894 = vrcp.pop %v3558
      %v3895 = vmul.f32 %v3558, %v3894
      %v3896 = vsub.f32 1.0, %v3895
      %v3897 = vmul.f32 %v3894, %v3896
      %v3898 = vadd.f32 %v3894, %v3897
      %vm3899 = vweird.f32 %v3558
      %vm3900 = vweird.f32 %v3894
      %vm3901 = vmor %vm3899, %vm3900
      %v3902 = vsel %vm3901, %v3894, %v3898
      %v3903 = vand.u32 2147483647, %v3558
      %vm3904 = vcmp.eq.f32.partialorder %v3903, 8.507059e+37
      %v3905 = vand.u32 %v3558, 2147483648
      %v3906 = vor.u32 1.1754944e-38, %v3905
      %v3907 = vsel %vm3904, %v3906, %v3902
      %v3908 = vrcp.pop %v3561
      %v3909 = vmul.f32 %v3561, %v3908
      %v3910 = vsub.f32 1.0, %v3909
      %v3911 = vmul.f32 %v3908, %v3910
      %v3912 = vadd.f32 %v3908, %v3911
      %vm3913 = vweird.f32 %v3561
      %vm3914 = vweird.f32 %v3908
      %vm3915 = vmor %vm3913, %vm3914
      %v3916 = vsel %vm3915, %v3908, %v3912
      %v3917 = vand.u32 2147483647, %v3561
      %vm3918 = vcmp.eq.f32.partialorder %v3917, 8.507059e+37
      %v3919 = vand.u32 %v3561, 2147483648
      %v3920 = vor.u32 1.1754944e-38, %v3919
      %v3921 = vsel %vm3918, %v3920, %v3916
      %v3922 = vrcp.pop %v3564
      %v3923 = vmul.f32 %v3564, %v3922
      %v3924 = vsub.f32 1.0, %v3923
      %v3925 = vmul.f32 %v3922, %v3924
      %v3926 = vadd.f32 %v3922, %v3925
      %vm3927 = vweird.f32 %v3564
      %vm3928 = vweird.f32 %v3922
      %vm3929 = vmor %vm3927, %vm3928
      %v3930 = vsel %vm3929, %v3922, %v3926
      %v3931 = vand.u32 2147483647, %v3564
      %vm3932 = vcmp.eq.f32.partialorder %v3931, 8.507059e+37
      %v3933 = vand.u32 %v3564, 2147483648
      %v3934 = vor.u32 1.1754944e-38, %v3933
      %v3935 = vsel %vm3932, %v3934, %v3930
      %v3936 = vrcp.pop %v3567
      %v3937 = vmul.f32 %v3567, %v3936
      %v3938 = vsub.f32 1.0, %v3937
      %v3939 = vmul.f32 %v3936, %v3938
      %v3940 = vadd.f32 %v3936, %v3939
      %vm3941 = vweird.f32 %v3567
      %vm3942 = vweird.f32 %v3936
      %vm3943 = vmor %vm3941, %vm3942
      %v3944 = vsel %vm3943, %v3936, %v3940
      %v3945 = vand.u32 2147483647, %v3567
      %vm3946 = vcmp.eq.f32.partialorder %v3945, 8.507059e+37
      %v3947 = vand.u32 %v3567, 2147483648
      %v3948 = vor.u32 1.1754944e-38, %v3947
      %v3949 = vsel %vm3946, %v3948, %v3944
      %v3950 = vrcp.pop %v3570
      %v3951 = vmul.f32 %v3570, %v3950
      %v3952 = vsub.f32 1.0, %v3951
      %v3953 = vmul.f32 %v3950, %v3952
      %v3954 = vadd.f32 %v3950, %v3953
      %vm3955 = vweird.f32 %v3570
      %vm3956 = vweird.f32 %v3950
      %vm3957 = vmor %vm3955, %vm3956
      %v3958 = vsel %vm3957, %v3950, %v3954
      %v3959 = vand.u32 2147483647, %v3570
      %vm3960 = vcmp.eq.f32.partialorder %v3959, 8.507059e+37
      %v3961 = vand.u32 %v3570, 2147483648
      %v3962 = vor.u32 1.1754944e-38, %v3961
      %v3963 = vsel %vm3960, %v3962, %v3958
      %v3964 = vrcp.pop %v3573
      %v3965 = vmul.f32 %v3573, %v3964
      %v3966 = vsub.f32 1.0, %v3965
      %v3967 = vmul.f32 %v3964, %v3966
      %v3968 = vadd.f32 %v3964, %v3967
      %vm3969 = vweird.f32 %v3573
      %vm3970 = vweird.f32 %v3964
      %vm3971 = vmor %vm3969, %vm3970
      %v3972 = vsel %vm3971, %v3964, %v3968
      %v3973 = vand.u32 2147483647, %v3573
      %vm3974 = vcmp.eq.f32.partialorder %v3973, 8.507059e+37
      %v3975 = vand.u32 %v3573, 2147483648
      %v3976 = vor.u32 1.1754944e-38, %v3975
      %v3977 = vsel %vm3974, %v3976, %v3972
      %v3978 = vrcp.pop %v3576
      %v3979 = vmul.f32 %v3576, %v3978
      %v3980 = vsub.f32 1.0, %v3979
      %v3981 = vmul.f32 %v3978, %v3980
      %v3982 = vadd.f32 %v3978, %v3981
      %vm3983 = vweird.f32 %v3576
      %vm3984 = vweird.f32 %v3978
      %vm3985 = vmor %vm3983, %vm3984
      %v3986 = vsel %vm3985, %v3978, %v3982
      %v3987 = vand.u32 2147483647, %v3576
      %vm3988 = vcmp.eq.f32.partialorder %v3987, 8.507059e+37
      %v3989 = vand.u32 %v3576, 2147483648
      %v3990 = vor.u32 1.1754944e-38, %v3989
      %v3991 = vsel %vm3988, %v3990, %v3986
      %v3992 = vrcp.pop %v3579
      %v3993 = vmul.f32 %v3579, %v3992
      %v3994 = vsub.f32 1.0, %v3993
      %v3995 = vmul.f32 %v3992, %v3994
      %v3996 = vadd.f32 %v3992, %v3995
      %vm3997 = vweird.f32 %v3579
      %vm3998 = vweird.f32 %v3992
      %vm3999 = vmor %vm3997, %vm3998
      %v4000 = vsel %vm3999, %v3992, %v3996
      %v4001 = vand.u32 2147483647, %v3579
      %vm4002 = vcmp.eq.f32.partialorder %v4001, 8.507059e+37
      %v4003 = vand.u32 %v3579, 2147483648
      %v4004 = vor.u32 1.1754944e-38, %v4003
      %v4005 = vsel %vm4002, %v4004, %v4000
      %v4006 = vrcp.pop %v3582
      %v4007 = vmul.f32 %v3582, %v4006
      %v4008 = vsub.f32 1.0, %v4007
      %v4009 = vmul.f32 %v4006, %v4008
      %v4010 = vadd.f32 %v4006, %v4009
      %vm4011 = vweird.f32 %v3582
      %vm4012 = vweird.f32 %v4006
      %vm4013 = vmor %vm4011, %vm4012
      %v4014 = vsel %vm4013, %v4006, %v4010
      %v4015 = vand.u32 2147483647, %v3582
      %vm4016 = vcmp.eq.f32.partialorder %v4015, 8.507059e+37
      %v4017 = vand.u32 %v3582, 2147483648
      %v4018 = vor.u32 1.1754944e-38, %v4017
      %v4019 = vsel %vm4016, %v4018, %v4014
      %v4020 = vrcp.pop %v3585
      %v4021 = vmul.f32 %v3585, %v4020
      %v4022 = vsub.f32 1.0, %v4021
      %v4023 = vmul.f32 %v4020, %v4022
      %v4024 = vadd.f32 %v4020, %v4023
      %vm4025 = vweird.f32 %v3585
      %vm4026 = vweird.f32 %v4020
      %vm4027 = vmor %vm4025, %vm4026
      %v4028 = vsel %vm4027, %v4020, %v4024
      %v4029 = vand.u32 2147483647, %v3585
      %vm4030 = vcmp.eq.f32.partialorder %v4029, 8.507059e+37
      %v4031 = vand.u32 %v3585, 2147483648
      %v4032 = vor.u32 1.1754944e-38, %v4031
      %v4033 = vsel %vm4030, %v4032, %v4028
      %v4034 = vmul.f32 %v3427, %v3599
      %v4035 = vmul.f32 %v3429, %v3613
      %v4036 = vmul.f32 %v3431, %v3627
      %v4037 = vmul.f32 %v3433, %v3641
      %v4038 = vmul.f32 %v3435, %v3655
      %v4039 = vmul.f32 %v3437, %v3669
      %v4040 = vmul.f32 %v3439, %v3683
      %v4041 = vmul.f32 %v3441, %v3697
      %v4042 = vmul.f32 %v3443, %v3711
      %v4043 = vmul.f32 %v3445, %v3725
      %v4044 = vmul.f32 %v3447, %v3739
      %v4045 = vmul.f32 %v3449, %v3753
      %v4046 = vmul.f32 %v3451, %v3767
      %v4047 = vmul.f32 %v3453, %v3781
      %v4048 = vmul.f32 %v3455, %v3795
      %v4049 = vmul.f32 %v3457, %v3809
      %v4050 = vmul.f32 %v3459, %v3823
      %v4051 = vmul.f32 %v3461, %v3837
      %v4052 = vmul.f32 %v3463, %v3851
      %v4053 = vmul.f32 %v3465, %v3865
      %v4054 = vmul.f32 %v3467, %v3879
      %v4055 = vmul.f32 %v3469, %v3893
      %v4056 = vmul.f32 %v3471, %v3907
      %v4057 = vmul.f32 %v3473, %v3921
      %v4058 = vmul.f32 %v3475, %v3935
      %v4059 = vmul.f32 %v3477, %v3949
      %v4060 = vmul.f32 %v3479, %v3963
      %v4061 = vmul.f32 %v3481, %v3977
      %v4062 = vmul.f32 %v3483, %v3991
      %v4063 = vmul.f32 %v3485, %v4005
      %v4064 = vmul.f32 %v3487, %v4019
      %v4065 = vmul.f32 %v3489, %v4033
      %4066 = vrot.lane.b32.xlu0 %v1252, 56
      %v4067 = vpop.permute.xlu0 %4066
      %4068 = vrot.lane.b32.xlu0 %v1255, 56
      %v4069 = vpop.permute.xlu0 %4068
      %4070 = vrot.lane.b32.xlu0 %v1258, 56
      %v4071 = vpop.permute.xlu0 %4070
      %4072 = vrot.lane.b32.xlu0 %v1261, 56
      %v4073 = vpop.permute.xlu0 %4072
      %4074 = vrot.lane.b32.xlu0 %v1264, 56
      %v4075 = vpop.permute.xlu0 %4074
      %4076 = vrot.lane.b32.xlu0 %v1267, 56
      %v4077 = vpop.permute.xlu0 %4076
      %4078 = vrot.lane.b32.xlu0 %v1270, 56
      %v4079 = vpop.permute.xlu0 %4078
      %4080 = vrot.lane.b32.xlu0 %v1273, 56
      %v4081 = vpop.permute.xlu0 %4080
      %v4091 = vsel %vm1744, %v4034, 0
      %v4094 = vsel %vm1744, %v4035, 0
      %v4097 = vsel %vm1744, %v4036, 0
      %v4100 = vsel %vm1744, %v4037, 0
      %v4103 = vsel %vm1744, %v4038, 0
      %v4106 = vsel %vm1744, %v4039, 0
      %v4109 = vsel %vm1744, %v4040, 0
      %v4112 = vsel %vm1744, %v4041, 0
      %4114 = vmatpush.msra.mxu0 0.0
      %4115 = vmatpush.msra.mxu0 0.0
      %4116 = vmatpush.msra.mxu0 0.0
      %4117 = vmatpush.msra.mxu0 0.0
      %4118 = vmatpush.msra.mxu0 0.0
      %4119 = vmatpush.msra.mxu0 0.0
      %4120 = vmatpush.msra.mxu0 0.0
      %4121 = vmatpush.msra.mxu0 0.0
      %4122 = vmatpush.msra.mxu0 %v4081
      %4123 = vmatpush.msra.mxu0 %v4079
      %4124 = vmatpush.msra.mxu0 %v4077
      %4125 = vmatpush.msra.mxu0 %v4075
      %4126 = vmatpush.msra.mxu0 %v4073
      %4127 = vmatpush.msra.mxu0 %v4071
      %4128 = vmatpush.msra.mxu0 %v4069
      %4129 = vmatpush.msra.mxu0 %v4067
      %4130 = vmatmul.f32.gmra.mxu0 %v4091
      %v4131 = vpop.f32.mrf.mxu0
      %v4132 = vadd.f32 0.0, %v4131
      %4133 = vmatmul.f32.gmra.mxu0 %v4094
      %v4134 = vpop.f32.mrf.mxu0
      %v4135 = vadd.f32 0.0, %v4134
      %4136 = vmatmul.f32.gmra.mxu0 %v4097
      %v4137 = vpop.f32.mrf.mxu0
      %v4138 = vadd.f32 0.0, %v4137
      %4139 = vmatmul.f32.gmra.mxu0 %v4100
      %v4140 = vpop.f32.mrf.mxu0
      %v4141 = vadd.f32 0.0, %v4140
      %4142 = vmatmul.f32.gmra.mxu0 %v4103
      %v4143 = vpop.f32.mrf.mxu0
      %v4144 = vadd.f32 0.0, %v4143
      %4145 = vmatmul.f32.gmra.mxu0 %v4106
      %v4146 = vpop.f32.mrf.mxu0
      %v4147 = vadd.f32 0.0, %v4146
      %4148 = vmatmul.f32.gmra.mxu0 %v4109
      %v4149 = vpop.f32.mrf.mxu0
      %v4150 = vadd.f32 0.0, %v4149
      %4151 = vmatmul.f32.gmra.mxu0 %v4112
      %v4152 = vpop.f32.mrf.mxu0
      %v4153 = vadd.f32 0.0, %v4152
      %4154 = vdwg.mxu0
      %4155 = vrot.lane.b32.xlu0 %v1276, 56
      %v4156 = vpop.permute.xlu0 %4155
      %4157 = vrot.lane.b32.xlu0 %v1279, 56
      %v4158 = vpop.permute.xlu0 %4157
      %4159 = vrot.lane.b32.xlu0 %v1282, 56
      %v4160 = vpop.permute.xlu0 %4159
      %4161 = vrot.lane.b32.xlu0 %v1285, 56
      %v4162 = vpop.permute.xlu0 %4161
      %4163 = vrot.lane.b32.xlu0 %v1288, 56
      %v4164 = vpop.permute.xlu0 %4163
      %4165 = vrot.lane.b32.xlu0 %v1291, 56
      %v4166 = vpop.permute.xlu0 %4165
      %4167 = vrot.lane.b32.xlu0 %v1294, 56
      %v4168 = vpop.permute.xlu0 %4167
      %4169 = vrot.lane.b32.xlu0 %v1297, 56
      %v4170 = vpop.permute.xlu0 %4169
      %v4180 = vsel %vm1744, %v4042, 0
      %v4183 = vsel %vm1744, %v4043, 0
      %v4186 = vsel %vm1744, %v4044, 0
      %v4189 = vsel %vm1744, %v4045, 0
      %v4192 = vsel %vm1744, %v4046, 0
      %v4195 = vsel %vm1744, %v4047, 0
      %v4198 = vsel %vm1744, %v4048, 0
      %v4201 = vsel %vm1744, %v4049, 0
      %4203 = vmatpush.msra.mxu0 0.0
      %4204 = vmatpush.msra.mxu0 0.0
      %4205 = vmatpush.msra.mxu0 0.0
      %4206 = vmatpush.msra.mxu0 0.0
      %4207 = vmatpush.msra.mxu0 0.0
      %4208 = vmatpush.msra.mxu0 0.0
      %4209 = vmatpush.msra.mxu0 0.0
      %4210 = vmatpush.msra.mxu0 0.0
      %4211 = vmatpush.msra.mxu0 %v4170
      %4212 = vmatpush.msra.mxu0 %v4168
      %4213 = vmatpush.msra.mxu0 %v4166
      %4214 = vmatpush.msra.mxu0 %v4164
      %4215 = vmatpush.msra.mxu0 %v4162
      %4216 = vmatpush.msra.mxu0 %v4160
      %4217 = vmatpush.msra.mxu0 %v4158
      %4218 = vmatpush.msra.mxu0 %v4156
      %4219 = vmatmul.f32.gmra.mxu0 %v4180
      %v4220 = vpop.f32.mrf.mxu0
      %v4221 = vadd.f32 0.0, %v4220
      %4222 = vmatmul.f32.gmra.mxu0 %v4183
      %v4223 = vpop.f32.mrf.mxu0
      %v4224 = vadd.f32 0.0, %v4223
      %4225 = vmatmul.f32.gmra.mxu0 %v4186
      %v4226 = vpop.f32.mrf.mxu0
      %v4227 = vadd.f32 0.0, %v4226
      %4228 = vmatmul.f32.gmra.mxu0 %v4189
      %v4229 = vpop.f32.mrf.mxu0
      %v4230 = vadd.f32 0.0, %v4229
      %4231 = vmatmul.f32.gmra.mxu0 %v4192
      %v4232 = vpop.f32.mrf.mxu0
      %v4233 = vadd.f32 0.0, %v4232
      %4234 = vmatmul.f32.gmra.mxu0 %v4195
      %v4235 = vpop.f32.mrf.mxu0
      %v4236 = vadd.f32 0.0, %v4235
      %4237 = vmatmul.f32.gmra.mxu0 %v4198
      %v4238 = vpop.f32.mrf.mxu0
      %v4239 = vadd.f32 0.0, %v4238
      %4240 = vmatmul.f32.gmra.mxu0 %v4201
      %v4241 = vpop.f32.mrf.mxu0
      %v4242 = vadd.f32 0.0, %v4241
      %4243 = vdwg.mxu0
      %4244 = vrot.lane.b32.xlu0 %v1300, 56
      %v4245 = vpop.permute.xlu0 %4244
      %4246 = vrot.lane.b32.xlu0 %v1303, 56
      %v4247 = vpop.permute.xlu0 %4246
      %4248 = vrot.lane.b32.xlu0 %v1306, 56
      %v4249 = vpop.permute.xlu0 %4248
      %4250 = vrot.lane.b32.xlu0 %v1309, 56
      %v4251 = vpop.permute.xlu0 %4250
      %4252 = vrot.lane.b32.xlu0 %v1312, 56
      %v4253 = vpop.permute.xlu0 %4252
      %4254 = vrot.lane.b32.xlu0 %v1315, 56
      %v4255 = vpop.permute.xlu0 %4254
      %4256 = vrot.lane.b32.xlu0 %v1318, 56
      %v4257 = vpop.permute.xlu0 %4256
      %4258 = vrot.lane.b32.xlu0 %v1321, 56
      %v4259 = vpop.permute.xlu0 %4258
      %v4269 = vsel %vm1744, %v4050, 0
      %v4272 = vsel %vm1744, %v4051, 0
      %v4275 = vsel %vm1744, %v4052, 0
      %v4278 = vsel %vm1744, %v4053, 0
      %v4281 = vsel %vm1744, %v4054, 0
      %v4284 = vsel %vm1744, %v4055, 0
      %v4287 = vsel %vm1744, %v4056, 0
      %v4290 = vsel %vm1744, %v4057, 0
      %4292 = vmatpush.msra.mxu0 0.0
      %4293 = vmatpush.msra.mxu0 0.0
      %4294 = vmatpush.msra.mxu0 0.0
      %4295 = vmatpush.msra.mxu0 0.0
      %4296 = vmatpush.msra.mxu0 0.0
      %4297 = vmatpush.msra.mxu0 0.0
      %4298 = vmatpush.msra.mxu0 0.0
      %4299 = vmatpush.msra.mxu0 0.0
      %4300 = vmatpush.msra.mxu0 %v4259
      %4301 = vmatpush.msra.mxu0 %v4257
      %4302 = vmatpush.msra.mxu0 %v4255
      %4303 = vmatpush.msra.mxu0 %v4253
      %4304 = vmatpush.msra.mxu0 %v4251
      %4305 = vmatpush.msra.mxu0 %v4249
      %4306 = vmatpush.msra.mxu0 %v4247
      %4307 = vmatpush.msra.mxu0 %v4245
      %4308 = vmatmul.f32.gmra.mxu0 %v4269
      %v4309 = vpop.f32.mrf.mxu0
      %v4310 = vadd.f32 0.0, %v4309
      %4311 = vmatmul.f32.gmra.mxu0 %v4272
      %v4312 = vpop.f32.mrf.mxu0
      %v4313 = vadd.f32 0.0, %v4312
      %4314 = vmatmul.f32.gmra.mxu0 %v4275
      %v4315 = vpop.f32.mrf.mxu0
      %v4316 = vadd.f32 0.0, %v4315
      %4317 = vmatmul.f32.gmra.mxu0 %v4278
      %v4318 = vpop.f32.mrf.mxu0
      %v4319 = vadd.f32 0.0, %v4318
      %4320 = vmatmul.f32.gmra.mxu0 %v4281
      %v4321 = vpop.f32.mrf.mxu0
      %v4322 = vadd.f32 0.0, %v4321
      %4323 = vmatmul.f32.gmra.mxu0 %v4284
      %v4324 = vpop.f32.mrf.mxu0
      %v4325 = vadd.f32 0.0, %v4324
      %4326 = vmatmul.f32.gmra.mxu0 %v4287
      %v4327 = vpop.f32.mrf.mxu0
      %v4328 = vadd.f32 0.0, %v4327
      %4329 = vmatmul.f32.gmra.mxu0 %v4290
      %v4330 = vpop.f32.mrf.mxu0
      %v4331 = vadd.f32 0.0, %v4330
      %4332 = vdwg.mxu0
      %4333 = vrot.lane.b32.xlu0 %v1324, 56
      %v4334 = vpop.permute.xlu0 %4333
      %4335 = vrot.lane.b32.xlu0 %v1327, 56
      %v4336 = vpop.permute.xlu0 %4335
      %4337 = vrot.lane.b32.xlu0 %v1330, 56
      %v4338 = vpop.permute.xlu0 %4337
      %4339 = vrot.lane.b32.xlu0 %v1333, 56
      %v4340 = vpop.permute.xlu0 %4339
      %4341 = vrot.lane.b32.xlu0 %v1336, 56
      %v4342 = vpop.permute.xlu0 %4341
      %4343 = vrot.lane.b32.xlu0 %v1339, 56
      %v4344 = vpop.permute.xlu0 %4343
      %4345 = vrot.lane.b32.xlu0 %v1342, 56
      %v4346 = vpop.permute.xlu0 %4345
      %4347 = vrot.lane.b32.xlu0 %v1345, 56
      %v4348 = vpop.permute.xlu0 %4347
      %v4358 = vsel %vm1744, %v4058, 0
      %v4361 = vsel %vm1744, %v4059, 0
      %v4364 = vsel %vm1744, %v4060, 0
      %v4367 = vsel %vm1744, %v4061, 0
      %v4370 = vsel %vm1744, %v4062, 0
      %v4373 = vsel %vm1744, %v4063, 0
      %v4376 = vsel %vm1744, %v4064, 0
      %v4379 = vsel %vm1744, %v4065, 0
      %4381 = vmatpush.msra.mxu0 0.0
      %4382 = vmatpush.msra.mxu0 0.0
      %4383 = vmatpush.msra.mxu0 0.0
      %4384 = vmatpush.msra.mxu0 0.0
      %4385 = vmatpush.msra.mxu0 0.0
      %4386 = vmatpush.msra.mxu0 0.0
      %4387 = vmatpush.msra.mxu0 0.0
      %4388 = vmatpush.msra.mxu0 0.0
      %4389 = vmatpush.msra.mxu0 %v4348
      %4390 = vmatpush.msra.mxu0 %v4346
      %4391 = vmatpush.msra.mxu0 %v4344
      %4392 = vmatpush.msra.mxu0 %v4342
      %4393 = vmatpush.msra.mxu0 %v4340
      %4394 = vmatpush.msra.mxu0 %v4338
      %4395 = vmatpush.msra.mxu0 %v4336
      %4396 = vmatpush.msra.mxu0 %v4334
      %4397 = vmatmul.f32.gmra.mxu0 %v4358
      %v4398 = vpop.f32.mrf.mxu0
      %v4399 = vadd.f32 0.0, %v4398
      %4400 = vmatmul.f32.gmra.mxu0 %v4361
      %v4401 = vpop.f32.mrf.mxu0
      %v4402 = vadd.f32 0.0, %v4401
      %4403 = vmatmul.f32.gmra.mxu0 %v4364
      %v4404 = vpop.f32.mrf.mxu0
      %v4405 = vadd.f32 0.0, %v4404
      %4406 = vmatmul.f32.gmra.mxu0 %v4367
      %v4407 = vpop.f32.mrf.mxu0
      %v4408 = vadd.f32 0.0, %v4407
      %4409 = vmatmul.f32.gmra.mxu0 %v4370
      %v4410 = vpop.f32.mrf.mxu0
      %v4411 = vadd.f32 0.0, %v4410
      %4412 = vmatmul.f32.gmra.mxu0 %v4373
      %v4413 = vpop.f32.mrf.mxu0
      %v4414 = vadd.f32 0.0, %v4413
      %4415 = vmatmul.f32.gmra.mxu0 %v4376
      %v4416 = vpop.f32.mrf.mxu0
      %v4417 = vadd.f32 0.0, %v4416
      %4418 = vmatmul.f32.gmra.mxu0 %v4379
      %v4419 = vpop.f32.mrf.mxu0
      %v4420 = vadd.f32 0.0, %v4419
      %4421 = vdwg.mxu0
      %s4422 = scalar_lea.vmem %s5, 128
      %v4423 = vld [vmem:[%s4422] sm:$0xff]
      %v4424 = vld [vmem:[%s4422 + $0x8] sm:$0xff]
      %v4425 = vld [vmem:[%s4422 + $0x10] sm:$0xff]
      %v4426 = vld [vmem:[%s4422 + $0x18] sm:$0xff]
      %v4427 = vld [vmem:[%s4422 + $0x20] sm:$0xff]
      %v4428 = vld [vmem:[%s4422 + $0x28] sm:$0xff]
      %v4429 = vld [vmem:[%s4422 + $0x30] sm:$0xff]
      %v4430 = vld [vmem:[%s4422 + $0x38] sm:$0xff]
      %4431 = vrot.lane.b32.xlu0 %v1252, 112
      %v4432 = vpop.permute.xlu0 %4431
      %4433 = vrot.lane.b32.xlu0 %v1255, 112
      %v4434 = vpop.permute.xlu0 %4433
      %4435 = vrot.lane.b32.xlu0 %v1258, 112
      %v4436 = vpop.permute.xlu0 %4435
      %4437 = vrot.lane.b32.xlu0 %v1261, 112
      %v4438 = vpop.permute.xlu0 %4437
      %4439 = vrot.lane.b32.xlu0 %v1264, 112
      %v4440 = vpop.permute.xlu0 %4439
      %4441 = vrot.lane.b32.xlu0 %v1267, 112
      %v4442 = vpop.permute.xlu0 %4441
      %4443 = vrot.lane.b32.xlu0 %v1270, 112
      %v4444 = vpop.permute.xlu0 %4443
      %4445 = vrot.lane.b32.xlu0 %v1273, 112
      %v4446 = vpop.permute.xlu0 %4445
      %4447 = vrot.lane.b32.xlu0 %v1252, 80
      %v4448 = vpop.permute.xlu0 %4447
      %4449 = vrot.lane.b32.xlu0 %v1255, 80
      %v4450 = vpop.permute.xlu0 %4449
      %4451 = vrot.lane.b32.xlu0 %v1258, 80
      %v4452 = vpop.permute.xlu0 %4451
      %4453 = vrot.lane.b32.xlu0 %v1261, 80
      %v4454 = vpop.permute.xlu0 %4453
      %4455 = vrot.lane.b32.xlu0 %v1264, 80
      %v4456 = vpop.permute.xlu0 %4455
      %4457 = vrot.lane.b32.xlu0 %v1267, 80
      %v4458 = vpop.permute.xlu0 %4457
      %4459 = vrot.lane.b32.xlu0 %v1270, 80
      %v4460 = vpop.permute.xlu0 %4459
      %4461 = vrot.lane.b32.xlu0 %v1273, 80
      %v4462 = vpop.permute.xlu0 %4461
      %v4463 = vsel %vm1379, %v4432, 0
      %v4465 = vsel %vm1379, %v4434, 0
      %v4467 = vsel %vm1379, %v4436, 0
      %v4469 = vsel %vm1379, %v4438, 0
      %v4471 = vsel %vm1379, %v4440, 0
      %v4473 = vsel %vm1379, %v4442, 0
      %v4475 = vsel %vm1379, %v4444, 0
      %v4477 = vsel %vm1379, %v4446, 0
      %v4479 = vsel %vm1379, %v4448, 0
      %v4481 = vsel %vm1379, %v4450, 0
      %v4483 = vsel %vm1379, %v4452, 0
      %v4485 = vsel %vm1379, %v4454, 0
      %v4487 = vsel %vm1379, %v4456, 0
      %v4489 = vsel %vm1379, %v4458, 0
      %v4491 = vsel %vm1379, %v4460, 0
      %v4493 = vsel %vm1379, %v4462, 0
      %4495 = vmatpush.xpose.msra.mxu0 0.0
      %4496 = vmatpush.xpose.msra.mxu0 0.0
      %4497 = vmatpush.xpose.msra.mxu0 0.0
      %4498 = vmatpush.xpose.msra.mxu0 0.0
      %4499 = vmatpush.xpose.msra.mxu0 0.0
      %4500 = vmatpush.xpose.msra.mxu0 0.0
      %4501 = vmatpush.xpose.msra.mxu0 0.0
      %4502 = vmatpush.xpose.msra.mxu0 0.0
      %4503 = vmatpush.xpose.msra.mxu0 %v4493
      %4504 = vmatpush.xpose.msra.mxu0 %v4491
      %4505 = vmatpush.xpose.msra.mxu0 %v4489
      %4506 = vmatpush.xpose.msra.mxu0 %v4487
      %4507 = vmatpush.xpose.msra.mxu0 %v4485
      %4508 = vmatpush.xpose.msra.mxu0 %v4483
      %4509 = vmatpush.xpose.msra.mxu0 %v4481
      %4510 = vmatpush.xpose.msra.mxu0 %v4479
      %4511 = vmatmul.f32.gmra.mxu0 %v4463
      %v4512 = vpop.f32.mrf.mxu0
      %v4513 = vadd.f32 %v4423, %v4512
      %4514 = vmatmul.f32.gmra.mxu0 %v4465
      %v4515 = vpop.f32.mrf.mxu0
      %v4516 = vadd.f32 %v4424, %v4515
      %4517 = vmatmul.f32.gmra.mxu0 %v4467
      %v4518 = vpop.f32.mrf.mxu0
      %v4519 = vadd.f32 %v4425, %v4518
      %4520 = vmatmul.f32.gmra.mxu0 %v4469
      %v4521 = vpop.f32.mrf.mxu0
      %v4522 = vadd.f32 %v4426, %v4521
      %4523 = vmatmul.f32.gmra.mxu0 %v4471
      %v4524 = vpop.f32.mrf.mxu0
      %v4525 = vadd.f32 %v4427, %v4524
      %4526 = vmatmul.f32.gmra.mxu0 %v4473
      %v4527 = vpop.f32.mrf.mxu0
      %v4528 = vadd.f32 %v4428, %v4527
      %4529 = vmatmul.f32.gmra.mxu0 %v4475
      %v4530 = vpop.f32.mrf.mxu0
      %v4531 = vadd.f32 %v4429, %v4530
      %4532 = vmatmul.f32.gmra.mxu0 %v4477
      %v4533 = vpop.f32.mrf.mxu0
      %v4534 = vadd.f32 %v4430, %v4533
      %4535 = vdwg.mxu0
      %4536 = vrot.lane.b32.xlu0 %v1276, 112
      %v4537 = vpop.permute.xlu0 %4536
      %4538 = vrot.lane.b32.xlu0 %v1279, 112
      %v4539 = vpop.permute.xlu0 %4538
      %4540 = vrot.lane.b32.xlu0 %v1282, 112
      %v4541 = vpop.permute.xlu0 %4540
      %4542 = vrot.lane.b32.xlu0 %v1285, 112
      %v4543 = vpop.permute.xlu0 %4542
      %4544 = vrot.lane.b32.xlu0 %v1288, 112
      %v4545 = vpop.permute.xlu0 %4544
      %4546 = vrot.lane.b32.xlu0 %v1291, 112
      %v4547 = vpop.permute.xlu0 %4546
      %4548 = vrot.lane.b32.xlu0 %v1294, 112
      %v4549 = vpop.permute.xlu0 %4548
      %4550 = vrot.lane.b32.xlu0 %v1297, 112
      %v4551 = vpop.permute.xlu0 %4550
      %4552 = vrot.lane.b32.xlu0 %v1276, 80
      %v4553 = vpop.permute.xlu0 %4552
      %4554 = vrot.lane.b32.xlu0 %v1279, 80
      %v4555 = vpop.permute.xlu0 %4554
      %4556 = vrot.lane.b32.xlu0 %v1282, 80
      %v4557 = vpop.permute.xlu0 %4556
      %4558 = vrot.lane.b32.xlu0 %v1285, 80
      %v4559 = vpop.permute.xlu0 %4558
      %4560 = vrot.lane.b32.xlu0 %v1288, 80
      %v4561 = vpop.permute.xlu0 %4560
      %4562 = vrot.lane.b32.xlu0 %v1291, 80
      %v4563 = vpop.permute.xlu0 %4562
      %4564 = vrot.lane.b32.xlu0 %v1294, 80
      %v4565 = vpop.permute.xlu0 %4564
      %4566 = vrot.lane.b32.xlu0 %v1297, 80
      %v4567 = vpop.permute.xlu0 %4566
      %v4568 = vsel %vm1379, %v4537, 0
      %v4570 = vsel %vm1379, %v4539, 0
      %v4572 = vsel %vm1379, %v4541, 0
      %v4574 = vsel %vm1379, %v4543, 0
      %v4576 = vsel %vm1379, %v4545, 0
      %v4578 = vsel %vm1379, %v4547, 0
      %v4580 = vsel %vm1379, %v4549, 0
      %v4582 = vsel %vm1379, %v4551, 0
      %v4584 = vsel %vm1379, %v4553, 0
      %v4586 = vsel %vm1379, %v4555, 0
      %v4588 = vsel %vm1379, %v4557, 0
      %v4590 = vsel %vm1379, %v4559, 0
      %v4592 = vsel %vm1379, %v4561, 0
      %v4594 = vsel %vm1379, %v4563, 0
      %v4596 = vsel %vm1379, %v4565, 0
      %v4598 = vsel %vm1379, %v4567, 0
      %4600 = vmatpush.xpose.msra.mxu0 0.0
      %4601 = vmatpush.xpose.msra.mxu0 0.0
      %4602 = vmatpush.xpose.msra.mxu0 0.0
      %4603 = vmatpush.xpose.msra.mxu0 0.0
      %4604 = vmatpush.xpose.msra.mxu0 0.0
      %4605 = vmatpush.xpose.msra.mxu0 0.0
      %4606 = vmatpush.xpose.msra.mxu0 0.0
      %4607 = vmatpush.xpose.msra.mxu0 0.0
      %4608 = vmatpush.xpose.msra.mxu0 %v4598
      %4609 = vmatpush.xpose.msra.mxu0 %v4596
      %4610 = vmatpush.xpose.msra.mxu0 %v4594
      %4611 = vmatpush.xpose.msra.mxu0 %v4592
      %4612 = vmatpush.xpose.msra.mxu0 %v4590
      %4613 = vmatpush.xpose.msra.mxu0 %v4588
      %4614 = vmatpush.xpose.msra.mxu0 %v4586
      %4615 = vmatpush.xpose.msra.mxu0 %v4584
      %4616 = vmatmul.f32.gmra.mxu0 %v4568
      %v4617 = vpop.f32.mrf.mxu0
      %v4618 = vadd.f32 %v4423, %v4617
      %4619 = vmatmul.f32.gmra.mxu0 %v4570
      %v4620 = vpop.f32.mrf.mxu0
      %v4621 = vadd.f32 %v4424, %v4620
      %4622 = vmatmul.f32.gmra.mxu0 %v4572
      %v4623 = vpop.f32.mrf.mxu0
      %v4624 = vadd.f32 %v4425, %v4623
      %4625 = vmatmul.f32.gmra.mxu0 %v4574
      %v4626 = vpop.f32.mrf.mxu0
      %v4627 = vadd.f32 %v4426, %v4626
      %4628 = vmatmul.f32.gmra.mxu0 %v4576
      %v4629 = vpop.f32.mrf.mxu0
      %v4630 = vadd.f32 %v4427, %v4629
      %4631 = vmatmul.f32.gmra.mxu0 %v4578
      %v4632 = vpop.f32.mrf.mxu0
      %v4633 = vadd.f32 %v4428, %v4632
      %4634 = vmatmul.f32.gmra.mxu0 %v4580
      %v4635 = vpop.f32.mrf.mxu0
      %v4636 = vadd.f32 %v4429, %v4635
      %4637 = vmatmul.f32.gmra.mxu0 %v4582
      %v4638 = vpop.f32.mrf.mxu0
      %v4639 = vadd.f32 %v4430, %v4638
      %4640 = vdwg.mxu0
      %4641 = vrot.lane.b32.xlu0 %v1300, 112
      %v4642 = vpop.permute.xlu0 %4641
      %4643 = vrot.lane.b32.xlu0 %v1303, 112
      %v4644 = vpop.permute.xlu0 %4643
      %4645 = vrot.lane.b32.xlu0 %v1306, 112
      %v4646 = vpop.permute.xlu0 %4645
      %4647 = vrot.lane.b32.xlu0 %v1309, 112
      %v4648 = vpop.permute.xlu0 %4647
      %4649 = vrot.lane.b32.xlu0 %v1312, 112
      %v4650 = vpop.permute.xlu0 %4649
      %4651 = vrot.lane.b32.xlu0 %v1315, 112
      %v4652 = vpop.permute.xlu0 %4651
      %4653 = vrot.lane.b32.xlu0 %v1318, 112
      %v4654 = vpop.permute.xlu0 %4653
      %4655 = vrot.lane.b32.xlu0 %v1321, 112
      %v4656 = vpop.permute.xlu0 %4655
      %4657 = vrot.lane.b32.xlu0 %v1300, 80
      %v4658 = vpop.permute.xlu0 %4657
      %4659 = vrot.lane.b32.xlu0 %v1303, 80
      %v4660 = vpop.permute.xlu0 %4659
      %4661 = vrot.lane.b32.xlu0 %v1306, 80
      %v4662 = vpop.permute.xlu0 %4661
      %4663 = vrot.lane.b32.xlu0 %v1309, 80
      %v4664 = vpop.permute.xlu0 %4663
      %4665 = vrot.lane.b32.xlu0 %v1312, 80
      %v4666 = vpop.permute.xlu0 %4665
      %4667 = vrot.lane.b32.xlu0 %v1315, 80
      %v4668 = vpop.permute.xlu0 %4667
      %4669 = vrot.lane.b32.xlu0 %v1318, 80
      %v4670 = vpop.permute.xlu0 %4669
      %4671 = vrot.lane.b32.xlu0 %v1321, 80
      %v4672 = vpop.permute.xlu0 %4671
      %v4673 = vsel %vm1379, %v4642, 0
      %v4675 = vsel %vm1379, %v4644, 0
      %v4677 = vsel %vm1379, %v4646, 0
      %v4679 = vsel %vm1379, %v4648, 0
      %v4681 = vsel %vm1379, %v4650, 0
      %v4683 = vsel %vm1379, %v4652, 0
      %v4685 = vsel %vm1379, %v4654, 0
      %v4687 = vsel %vm1379, %v4656, 0
      %v4689 = vsel %vm1379, %v4658, 0
      %v4691 = vsel %vm1379, %v4660, 0
      %v4693 = vsel %vm1379, %v4662, 0
      %v4695 = vsel %vm1379, %v4664, 0
      %v4697 = vsel %vm1379, %v4666, 0
      %v4699 = vsel %vm1379, %v4668, 0
      %v4701 = vsel %vm1379, %v4670, 0
      %v4703 = vsel %vm1379, %v4672, 0
      %4705 = vmatpush.xpose.msra.mxu0 0.0
      %4706 = vmatpush.xpose.msra.mxu0 0.0
      %4707 = vmatpush.xpose.msra.mxu0 0.0
      %4708 = vmatpush.xpose.msra.mxu0 0.0
      %4709 = vmatpush.xpose.msra.mxu0 0.0
      %4710 = vmatpush.xpose.msra.mxu0 0.0
      %4711 = vmatpush.xpose.msra.mxu0 0.0
      %4712 = vmatpush.xpose.msra.mxu0 0.0
      %4713 = vmatpush.xpose.msra.mxu0 %v4703
      %4714 = vmatpush.xpose.msra.mxu0 %v4701
      %4715 = vmatpush.xpose.msra.mxu0 %v4699
      %4716 = vmatpush.xpose.msra.mxu0 %v4697
      %4717 = vmatpush.xpose.msra.mxu0 %v4695
      %4718 = vmatpush.xpose.msra.mxu0 %v4693
      %4719 = vmatpush.xpose.msra.mxu0 %v4691
      %4720 = vmatpush.xpose.msra.mxu0 %v4689
      %4721 = vmatmul.f32.gmra.mxu0 %v4673
      %v4722 = vpop.f32.mrf.mxu0
      %v4723 = vadd.f32 %v4423, %v4722
      %4724 = vmatmul.f32.gmra.mxu0 %v4675
      %v4725 = vpop.f32.mrf.mxu0
      %v4726 = vadd.f32 %v4424, %v4725
      %4727 = vmatmul.f32.gmra.mxu0 %v4677
      %v4728 = vpop.f32.mrf.mxu0
      %v4729 = vadd.f32 %v4425, %v4728
      %4730 = vmatmul.f32.gmra.mxu0 %v4679
      %v4731 = vpop.f32.mrf.mxu0
      %v4732 = vadd.f32 %v4426, %v4731
      %4733 = vmatmul.f32.gmra.mxu0 %v4681
      %v4734 = vpop.f32.mrf.mxu0
      %v4735 = vadd.f32 %v4427, %v4734
      %4736 = vmatmul.f32.gmra.mxu0 %v4683
      %v4737 = vpop.f32.mrf.mxu0
      %v4738 = vadd.f32 %v4428, %v4737
      %4739 = vmatmul.f32.gmra.mxu0 %v4685
      %v4740 = vpop.f32.mrf.mxu0
      %v4741 = vadd.f32 %v4429, %v4740
      %4742 = vmatmul.f32.gmra.mxu0 %v4687
      %v4743 = vpop.f32.mrf.mxu0
      %v4744 = vadd.f32 %v4430, %v4743
      %4745 = vdwg.mxu0
      %4746 = vrot.lane.b32.xlu0 %v1324, 112
      %v4747 = vpop.permute.xlu0 %4746
      %4748 = vrot.lane.b32.xlu0 %v1327, 112
      %v4749 = vpop.permute.xlu0 %4748
      %4750 = vrot.lane.b32.xlu0 %v1330, 112
      %v4751 = vpop.permute.xlu0 %4750
      %4752 = vrot.lane.b32.xlu0 %v1333, 112
      %v4753 = vpop.permute.xlu0 %4752
      %4754 = vrot.lane.b32.xlu0 %v1336, 112
      %v4755 = vpop.permute.xlu0 %4754
      %4756 = vrot.lane.b32.xlu0 %v1339, 112
      %v4757 = vpop.permute.xlu0 %4756
      %4758 = vrot.lane.b32.xlu0 %v1342, 112
      %v4759 = vpop.permute.xlu0 %4758
      %4760 = vrot.lane.b32.xlu0 %v1345, 112
      %v4761 = vpop.permute.xlu0 %4760
      %4762 = vrot.lane.b32.xlu0 %v1324, 80
      %v4763 = vpop.permute.xlu0 %4762
      %4764 = vrot.lane.b32.xlu0 %v1327, 80
      %v4765 = vpop.permute.xlu0 %4764
      %4766 = vrot.lane.b32.xlu0 %v1330, 80
      %v4767 = vpop.permute.xlu0 %4766
      %4768 = vrot.lane.b32.xlu0 %v1333, 80
      %v4769 = vpop.permute.xlu0 %4768
      %4770 = vrot.lane.b32.xlu0 %v1336, 80
      %v4771 = vpop.permute.xlu0 %4770
      %4772 = vrot.lane.b32.xlu0 %v1339, 80
      %v4773 = vpop.permute.xlu0 %4772
      %4774 = vrot.lane.b32.xlu0 %v1342, 80
      %v4775 = vpop.permute.xlu0 %4774
      %4776 = vrot.lane.b32.xlu0 %v1345, 80
      %v4777 = vpop.permute.xlu0 %4776
      %v4778 = vsel %vm1379, %v4747, 0
      %v4780 = vsel %vm1379, %v4749, 0
      %v4782 = vsel %vm1379, %v4751, 0
      %v4784 = vsel %vm1379, %v4753, 0
      %v4786 = vsel %vm1379, %v4755, 0
      %v4788 = vsel %vm1379, %v4757, 0
      %v4790 = vsel %vm1379, %v4759, 0
      %v4792 = vsel %vm1379, %v4761, 0
      %v4794 = vsel %vm1379, %v4763, 0
      %v4796 = vsel %vm1379, %v4765, 0
      %v4798 = vsel %vm1379, %v4767, 0
      %v4800 = vsel %vm1379, %v4769, 0
      %v4802 = vsel %vm1379, %v4771, 0
      %v4804 = vsel %vm1379, %v4773, 0
      %v4806 = vsel %vm1379, %v4775, 0
      %v4808 = vsel %vm1379, %v4777, 0
      %4810 = vmatpush.xpose.msra.mxu0 0.0
      %4811 = vmatpush.xpose.msra.mxu0 0.0
      %4812 = vmatpush.xpose.msra.mxu0 0.0
      %4813 = vmatpush.xpose.msra.mxu0 0.0
      %4814 = vmatpush.xpose.msra.mxu0 0.0
      %4815 = vmatpush.xpose.msra.mxu0 0.0
      %4816 = vmatpush.xpose.msra.mxu0 0.0
      %4817 = vmatpush.xpose.msra.mxu0 0.0
      %4818 = vmatpush.xpose.msra.mxu0 %v4808
      %4819 = vmatpush.xpose.msra.mxu0 %v4806
      %4820 = vmatpush.xpose.msra.mxu0 %v4804
      %4821 = vmatpush.xpose.msra.mxu0 %v4802
      %4822 = vmatpush.xpose.msra.mxu0 %v4800
      %4823 = vmatpush.xpose.msra.mxu0 %v4798
      %4824 = vmatpush.xpose.msra.mxu0 %v4796
      %4825 = vmatpush.xpose.msra.mxu0 %v4794
      %4826 = vmatmul.f32.gmra.mxu0 %v4778
      %v4827 = vpop.f32.mrf.mxu0
      %v4828 = vadd.f32 %v4423, %v4827
      %4829 = vmatmul.f32.gmra.mxu0 %v4780
      %v4830 = vpop.f32.mrf.mxu0
      %v4831 = vadd.f32 %v4424, %v4830
      %4832 = vmatmul.f32.gmra.mxu0 %v4782
      %v4833 = vpop.f32.mrf.mxu0
      %v4834 = vadd.f32 %v4425, %v4833
      %4835 = vmatmul.f32.gmra.mxu0 %v4784
      %v4836 = vpop.f32.mrf.mxu0
      %v4837 = vadd.f32 %v4426, %v4836
      %4838 = vmatmul.f32.gmra.mxu0 %v4786
      %v4839 = vpop.f32.mrf.mxu0
      %v4840 = vadd.f32 %v4427, %v4839
      %4841 = vmatmul.f32.gmra.mxu0 %v4788
      %v4842 = vpop.f32.mrf.mxu0
      %v4843 = vadd.f32 %v4428, %v4842
      %4844 = vmatmul.f32.gmra.mxu0 %v4790
      %v4845 = vpop.f32.mrf.mxu0
      %v4846 = vadd.f32 %v4429, %v4845
      %4847 = vmatmul.f32.gmra.mxu0 %v4792
      %v4848 = vpop.f32.mrf.mxu0
      %v4849 = vadd.f32 %v4430, %v4848
      %4850 = vdwg.mxu0
      %v4851 = vsel %vm1744, %v4513, -inf
      %4852 = vmax.xlane.f32.xlu0 %v4851
      %v4853 = vpop.xlane.xlu0 %4852
      %v4854 = vsel %vm1744, %v4516, -inf
      %4855 = vmax.xlane.f32.xlu0 %v4854
      %v4856 = vpop.xlane.xlu0 %4855
      %v4857 = vsel %vm1744, %v4519, -inf
      %4858 = vmax.xlane.f32.xlu0 %v4857
      %v4859 = vpop.xlane.xlu0 %4858
      %v4860 = vsel %vm1744, %v4522, -inf
      %4861 = vmax.xlane.f32.xlu0 %v4860
      %v4862 = vpop.xlane.xlu0 %4861
      %v4863 = vsel %vm1744, %v4525, -inf
      %4864 = vmax.xlane.f32.xlu0 %v4863
      %v4865 = vpop.xlane.xlu0 %4864
      %v4866 = vsel %vm1744, %v4528, -inf
      %4867 = vmax.xlane.f32.xlu0 %v4866
      %v4868 = vpop.xlane.xlu0 %4867
      %v4869 = vsel %vm1744, %v4531, -inf
      %4870 = vmax.xlane.f32.xlu0 %v4869
      %v4871 = vpop.xlane.xlu0 %4870
      %v4872 = vsel %vm1744, %v4534, -inf
      %4873 = vmax.xlane.f32.xlu0 %v4872
      %v4874 = vpop.xlane.xlu0 %4873
      %v4875 = vsel %vm1744, %v4618, -inf
      %4876 = vmax.xlane.f32.xlu0 %v4875
      %v4877 = vpop.xlane.xlu0 %4876
      %v4878 = vsel %vm1744, %v4621, -inf
      %4879 = vmax.xlane.f32.xlu0 %v4878
      %v4880 = vpop.xlane.xlu0 %4879
      %v4881 = vsel %vm1744, %v4624, -inf
      %4882 = vmax.xlane.f32.xlu0 %v4881
      %v4883 = vpop.xlane.xlu0 %4882
      %v4884 = vsel %vm1744, %v4627, -inf
      %4885 = vmax.xlane.f32.xlu0 %v4884
      %v4886 = vpop.xlane.xlu0 %4885
      %v4887 = vsel %vm1744, %v4630, -inf
      %4888 = vmax.xlane.f32.xlu0 %v4887
      %v4889 = vpop.xlane.xlu0 %4888
      %v4890 = vsel %vm1744, %v4633, -inf
      %4891 = vmax.xlane.f32.xlu0 %v4890
      %v4892 = vpop.xlane.xlu0 %4891
      %v4893 = vsel %vm1744, %v4636, -inf
      %4894 = vmax.xlane.f32.xlu0 %v4893
      %v4895 = vpop.xlane.xlu0 %4894
      %v4896 = vsel %vm1744, %v4639, -inf
      %4897 = vmax.xlane.f32.xlu0 %v4896
      %v4898 = vpop.xlane.xlu0 %4897
      %v4899 = vsel %vm1744, %v4723, -inf
      %4900 = vmax.xlane.f32.xlu0 %v4899
      %v4901 = vpop.xlane.xlu0 %4900
      %v4902 = vsel %vm1744, %v4726, -inf
      %4903 = vmax.xlane.f32.xlu0 %v4902
      %v4904 = vpop.xlane.xlu0 %4903
      %v4905 = vsel %vm1744, %v4729, -inf
      %4906 = vmax.xlane.f32.xlu0 %v4905
      %v4907 = vpop.xlane.xlu0 %4906
      %v4908 = vsel %vm1744, %v4732, -inf
      %4909 = vmax.xlane.f32.xlu0 %v4908
      %v4910 = vpop.xlane.xlu0 %4909
      %v4911 = vsel %vm1744, %v4735, -inf
      %4912 = vmax.xlane.f32.xlu0 %v4911
      %v4913 = vpop.xlane.xlu0 %4912
      %v4914 = vsel %vm1744, %v4738, -inf
      %4915 = vmax.xlane.f32.xlu0 %v4914
      %v4916 = vpop.xlane.xlu0 %4915
      %v4917 = vsel %vm1744, %v4741, -inf
      %4918 = vmax.xlane.f32.xlu0 %v4917
      %v4919 = vpop.xlane.xlu0 %4918
      %v4920 = vsel %vm1744, %v4744, -inf
      %4921 = vmax.xlane.f32.xlu0 %v4920
      %v4922 = vpop.xlane.xlu0 %4921
      %v4923 = vsel %vm1744, %v4828, -inf
      %4924 = vmax.xlane.f32.xlu0 %v4923
      %v4925 = vpop.xlane.xlu0 %4924
      %v4926 = vsel %vm1744, %v4831, -inf
      %4927 = vmax.xlane.f32.xlu0 %v4926
      %v4928 = vpop.xlane.xlu0 %4927
      %v4929 = vsel %vm1744, %v4834, -inf
      %4930 = vmax.xlane.f32.xlu0 %v4929
      %v4931 = vpop.xlane.xlu0 %4930
      %v4932 = vsel %vm1744, %v4837, -inf
      %4933 = vmax.xlane.f32.xlu0 %v4932
      %v4934 = vpop.xlane.xlu0 %4933
      %v4935 = vsel %vm1744, %v4840, -inf
      %4936 = vmax.xlane.f32.xlu0 %v4935
      %v4937 = vpop.xlane.xlu0 %4936
      %v4938 = vsel %vm1744, %v4843, -inf
      %4939 = vmax.xlane.f32.xlu0 %v4938
      %v4940 = vpop.xlane.xlu0 %4939
      %v4941 = vsel %vm1744, %v4846, -inf
      %4942 = vmax.xlane.f32.xlu0 %v4941
      %v4943 = vpop.xlane.xlu0 %4942
      %v4944 = vsel %vm1744, %v4849, -inf
      %4945 = vmax.xlane.f32.xlu0 %v4944
      %v4946 = vpop.xlane.xlu0 %4945
      %v4947 = vsub.f32 %v4513, %v4853
      %v4948 = vsub.f32 %v4516, %v4856
      %v4949 = vsub.f32 %v4519, %v4859
      %v4950 = vsub.f32 %v4522, %v4862
      %v4951 = vsub.f32 %v4525, %v4865
      %v4952 = vsub.f32 %v4528, %v4868
      %v4953 = vsub.f32 %v4531, %v4871
      %v4954 = vsub.f32 %v4534, %v4874
      %v4955 = vsub.f32 %v4618, %v4877
      %v4956 = vsub.f32 %v4621, %v4880
      %v4957 = vsub.f32 %v4624, %v4883
      %v4958 = vsub.f32 %v4627, %v4886
      %v4959 = vsub.f32 %v4630, %v4889
      %v4960 = vsub.f32 %v4633, %v4892
      %v4961 = vsub.f32 %v4636, %v4895
      %v4962 = vsub.f32 %v4639, %v4898
      %v4963 = vsub.f32 %v4723, %v4901
      %v4964 = vsub.f32 %v4726, %v4904
      %v4965 = vsub.f32 %v4729, %v4907
      %v4966 = vsub.f32 %v4732, %v4910
      %v4967 = vsub.f32 %v4735, %v4913
      %v4968 = vsub.f32 %v4738, %v4916
      %v4969 = vsub.f32 %v4741, %v4919
      %v4970 = vsub.f32 %v4744, %v4922
      %v4971 = vsub.f32 %v4828, %v4925
      %v4972 = vsub.f32 %v4831, %v4928
      %v4973 = vsub.f32 %v4834, %v4931
      %v4974 = vsub.f32 %v4837, %v4934
      %v4975 = vsub.f32 %v4840, %v4937
      %v4976 = vsub.f32 %v4843, %v4940
      %v4977 = vsub.f32 %v4846, %v4943
      %v4978 = vsub.f32 %v4849, %v4946
      %v4979 = vmul.f32 %v4947, 1.442695
      %v4980 = vpow.pop %v4979
      %v4981 = vmul.f32 %v4948, 1.442695
      %v4982 = vpow.pop %v4981
      %v4983 = vmul.f32 %v4949, 1.442695
      %v4984 = vpow.pop %v4983
      %v4985 = vmul.f32 %v4950, 1.442695
      %v4986 = vpow.pop %v4985
      %v4987 = vmul.f32 %v4951, 1.442695
      %v4988 = vpow.pop %v4987
      %v4989 = vmul.f32 %v4952, 1.442695
      %v4990 = vpow.pop %v4989
      %v4991 = vmul.f32 %v4953, 1.442695
      %v4992 = vpow.pop %v4991
      %v4993 = vmul.f32 %v4954, 1.442695
      %v4994 = vpow.pop %v4993
      %v4995 = vmul.f32 %v4955, 1.442695
      %v4996 = vpow.pop %v4995
      %v4997 = vmul.f32 %v4956, 1.442695
      %v4998 = vpow.pop %v4997
      %v4999 = vmul.f32 %v4957, 1.442695
      %v5000 = vpow.pop %v4999
      %v5001 = vmul.f32 %v4958, 1.442695
      %v5002 = vpow.pop %v5001
      %v5003 = vmul.f32 %v4959, 1.442695
      %v5004 = vpow.pop %v5003
      %v5005 = vmul.f32 %v4960, 1.442695
      %v5006 = vpow.pop %v5005
      %v5007 = vmul.f32 %v4961, 1.442695
      %v5008 = vpow.pop %v5007
      %v5009 = vmul.f32 %v4962, 1.442695
      %v5010 = vpow.pop %v5009
      %v5011 = vmul.f32 %v4963, 1.442695
      %v5012 = vpow.pop %v5011
      %v5013 = vmul.f32 %v4964, 1.442695
      %v5014 = vpow.pop %v5013
      %v5015 = vmul.f32 %v4965, 1.442695
      %v5016 = vpow.pop %v5015
      %v5017 = vmul.f32 %v4966, 1.442695
      %v5018 = vpow.pop %v5017
      %v5019 = vmul.f32 %v4967, 1.442695
      %v5020 = vpow.pop %v5019
      %v5021 = vmul.f32 %v4968, 1.442695
      %v5022 = vpow.pop %v5021
      %v5023 = vmul.f32 %v4969, 1.442695
      %v5024 = vpow.pop %v5023
      %v5025 = vmul.f32 %v4970, 1.442695
      %v5026 = vpow.pop %v5025
      %v5027 = vmul.f32 %v4971, 1.442695
      %v5028 = vpow.pop %v5027
      %v5029 = vmul.f32 %v4972, 1.442695
      %v5030 = vpow.pop %v5029
      %v5031 = vmul.f32 %v4973, 1.442695
      %v5032 = vpow.pop %v5031
      %v5033 = vmul.f32 %v4974, 1.442695
      %v5034 = vpow.pop %v5033
      %v5035 = vmul.f32 %v4975, 1.442695
      %v5036 = vpow.pop %v5035
      %v5037 = vmul.f32 %v4976, 1.442695
      %v5038 = vpow.pop %v5037
      %v5039 = vmul.f32 %v4977, 1.442695
      %v5040 = vpow.pop %v5039
      %v5041 = vmul.f32 %v4978, 1.442695
      %v5042 = vpow.pop %v5041
      %v5043 = vsel %vm1744, %v4980, 0.0
      %5044 = vadd.xlane.f32.xlu0 %v5043
      %v5045 = vpop.xlane.xlu0 %5044
      %v5046 = vsel %vm1744, %v4982, 0.0
      %5047 = vadd.xlane.f32.xlu0 %v5046
      %v5048 = vpop.xlane.xlu0 %5047
      %v5049 = vsel %vm1744, %v4984, 0.0
      %5050 = vadd.xlane.f32.xlu0 %v5049
      %v5051 = vpop.xlane.xlu0 %5050
      %v5052 = vsel %vm1744, %v4986, 0.0
      %5053 = vadd.xlane.f32.xlu0 %v5052
      %v5054 = vpop.xlane.xlu0 %5053
      %v5055 = vsel %vm1744, %v4988, 0.0
      %5056 = vadd.xlane.f32.xlu0 %v5055
      %v5057 = vpop.xlane.xlu0 %5056
      %v5058 = vsel %vm1744, %v4990, 0.0
      %5059 = vadd.xlane.f32.xlu0 %v5058
      %v5060 = vpop.xlane.xlu0 %5059
      %v5061 = vsel %vm1744, %v4992, 0.0
      %5062 = vadd.xlane.f32.xlu0 %v5061
      %v5063 = vpop.xlane.xlu0 %5062
      %v5064 = vsel %vm1744, %v4994, 0.0
      %5065 = vadd.xlane.f32.xlu0 %v5064
      %v5066 = vpop.xlane.xlu0 %5065
      %v5067 = vsel %vm1744, %v4996, 0.0
      %5068 = vadd.xlane.f32.xlu0 %v5067
      %v5069 = vpop.xlane.xlu0 %5068
      %v5070 = vsel %vm1744, %v4998, 0.0
      %5071 = vadd.xlane.f32.xlu0 %v5070
      %v5072 = vpop.xlane.xlu0 %5071
      %v5073 = vsel %vm1744, %v5000, 0.0
      %5074 = vadd.xlane.f32.xlu0 %v5073
      %v5075 = vpop.xlane.xlu0 %5074
      %v5076 = vsel %vm1744, %v5002, 0.0
      %5077 = vadd.xlane.f32.xlu0 %v5076
      %v5078 = vpop.xlane.xlu0 %5077
      %v5079 = vsel %vm1744, %v5004, 0.0
      %5080 = vadd.xlane.f32.xlu0 %v5079
      %v5081 = vpop.xlane.xlu0 %5080
      %v5082 = vsel %vm1744, %v5006, 0.0
      %5083 = vadd.xlane.f32.xlu0 %v5082
      %v5084 = vpop.xlane.xlu0 %5083
      %v5085 = vsel %vm1744, %v5008, 0.0
      %5086 = vadd.xlane.f32.xlu0 %v5085
      %v5087 = vpop.xlane.xlu0 %5086
      %v5088 = vsel %vm1744, %v5010, 0.0
      %5089 = vadd.xlane.f32.xlu0 %v5088
      %v5090 = vpop.xlane.xlu0 %5089
      %v5091 = vsel %vm1744, %v5012, 0.0
      %5092 = vadd.xlane.f32.xlu0 %v5091
      %v5093 = vpop.xlane.xlu0 %5092
      %v5094 = vsel %vm1744, %v5014, 0.0
      %5095 = vadd.xlane.f32.xlu0 %v5094
      %v5096 = vpop.xlane.xlu0 %5095
      %v5097 = vsel %vm1744, %v5016, 0.0
      %5098 = vadd.xlane.f32.xlu0 %v5097
      %v5099 = vpop.xlane.xlu0 %5098
      %v5100 = vsel %vm1744, %v5018, 0.0
      %5101 = vadd.xlane.f32.xlu0 %v5100
      %v5102 = vpop.xlane.xlu0 %5101
      %v5103 = vsel %vm1744, %v5020, 0.0
      %5104 = vadd.xlane.f32.xlu0 %v5103
      %v5105 = vpop.xlane.xlu0 %5104
      %v5106 = vsel %vm1744, %v5022, 0.0
      %5107 = vadd.xlane.f32.xlu0 %v5106
      %v5108 = vpop.xlane.xlu0 %5107
      %v5109 = vsel %vm1744, %v5024, 0.0
      %5110 = vadd.xlane.f32.xlu0 %v5109
      %v5111 = vpop.xlane.xlu0 %5110
      %v5112 = vsel %vm1744, %v5026, 0.0
      %5113 = vadd.xlane.f32.xlu0 %v5112
      %v5114 = vpop.xlane.xlu0 %5113
      %v5115 = vsel %vm1744, %v5028, 0.0
      %5116 = vadd.xlane.f32.xlu0 %v5115
      %v5117 = vpop.xlane.xlu0 %5116
      %v5118 = vsel %vm1744, %v5030, 0.0
      %5119 = vadd.xlane.f32.xlu0 %v5118
      %v5120 = vpop.xlane.xlu0 %5119
      %v5121 = vsel %vm1744, %v5032, 0.0
      %5122 = vadd.xlane.f32.xlu0 %v5121
      %v5123 = vpop.xlane.xlu0 %5122
      %v5124 = vsel %vm1744, %v5034, 0.0
      %5125 = vadd.xlane.f32.xlu0 %v5124
      %v5126 = vpop.xlane.xlu0 %5125
      %v5127 = vsel %vm1744, %v5036, 0.0
      %5128 = vadd.xlane.f32.xlu0 %v5127
      %v5129 = vpop.xlane.xlu0 %5128
      %v5130 = vsel %vm1744, %v5038, 0.0
      %5131 = vadd.xlane.f32.xlu0 %v5130
      %v5132 = vpop.xlane.xlu0 %5131
      %v5133 = vsel %vm1744, %v5040, 0.0
      %5134 = vadd.xlane.f32.xlu0 %v5133
      %v5135 = vpop.xlane.xlu0 %5134
      %v5136 = vsel %vm1744, %v5042, 0.0
      %5137 = vadd.xlane.f32.xlu0 %v5136
      %v5138 = vpop.xlane.xlu0 %5137
      %v5139 = vrcp.pop %v5045
      %v5140 = vmul.f32 %v5045, %v5139
      %v5141 = vsub.f32 1.0, %v5140
      %v5142 = vmul.f32 %v5139, %v5141
      %v5143 = vadd.f32 %v5139, %v5142
      %vm5144 = vweird.f32 %v5045
      %vm5145 = vweird.f32 %v5139
      %vm5146 = vmor %vm5144, %vm5145
      %v5147 = vsel %vm5146, %v5139, %v5143
      %v5148 = vand.u32 2147483647, %v5045
      %vm5149 = vcmp.eq.f32.partialorder %v5148, 8.507059e+37
      %v5150 = vand.u32 %v5045, 2147483648
      %v5151 = vor.u32 1.1754944e-38, %v5150
      %v5152 = vsel %vm5149, %v5151, %v5147
      %v5153 = vrcp.pop %v5048
      %v5154 = vmul.f32 %v5048, %v5153
      %v5155 = vsub.f32 1.0, %v5154
      %v5156 = vmul.f32 %v5153, %v5155
      %v5157 = vadd.f32 %v5153, %v5156
      %vm5158 = vweird.f32 %v5048
      %vm5159 = vweird.f32 %v5153
      %vm5160 = vmor %vm5158, %vm5159
      %v5161 = vsel %vm5160, %v5153, %v5157
      %v5162 = vand.u32 2147483647, %v5048
      %vm5163 = vcmp.eq.f32.partialorder %v5162, 8.507059e+37
      %v5164 = vand.u32 %v5048, 2147483648
      %v5165 = vor.u32 1.1754944e-38, %v5164
      %v5166 = vsel %vm5163, %v5165, %v5161
      %v5167 = vrcp.pop %v5051
      %v5168 = vmul.f32 %v5051, %v5167
      %v5169 = vsub.f32 1.0, %v5168
      %v5170 = vmul.f32 %v5167, %v5169
      %v5171 = vadd.f32 %v5167, %v5170
      %vm5172 = vweird.f32 %v5051
      %vm5173 = vweird.f32 %v5167
      %vm5174 = vmor %vm5172, %vm5173
      %v5175 = vsel %vm5174, %v5167, %v5171
      %v5176 = vand.u32 2147483647, %v5051
      %vm5177 = vcmp.eq.f32.partialorder %v5176, 8.507059e+37
      %v5178 = vand.u32 %v5051, 2147483648
      %v5179 = vor.u32 1.1754944e-38, %v5178
      %v5180 = vsel %vm5177, %v5179, %v5175
      %v5181 = vrcp.pop %v5054
      %v5182 = vmul.f32 %v5054, %v5181
      %v5183 = vsub.f32 1.0, %v5182
      %v5184 = vmul.f32 %v5181, %v5183
      %v5185 = vadd.f32 %v5181, %v5184
      %vm5186 = vweird.f32 %v5054
      %vm5187 = vweird.f32 %v5181
      %vm5188 = vmor %vm5186, %vm5187
      %v5189 = vsel %vm5188, %v5181, %v5185
      %v5190 = vand.u32 2147483647, %v5054
      %vm5191 = vcmp.eq.f32.partialorder %v5190, 8.507059e+37
      %v5192 = vand.u32 %v5054, 2147483648
      %v5193 = vor.u32 1.1754944e-38, %v5192
      %v5194 = vsel %vm5191, %v5193, %v5189
      %v5195 = vrcp.pop %v5057
      %v5196 = vmul.f32 %v5057, %v5195
      %v5197 = vsub.f32 1.0, %v5196
      %v5198 = vmul.f32 %v5195, %v5197
      %v5199 = vadd.f32 %v5195, %v5198
      %vm5200 = vweird.f32 %v5057
      %vm5201 = vweird.f32 %v5195
      %vm5202 = vmor %vm5200, %vm5201
      %v5203 = vsel %vm5202, %v5195, %v5199
      %v5204 = vand.u32 2147483647, %v5057
      %vm5205 = vcmp.eq.f32.partialorder %v5204, 8.507059e+37
      %v5206 = vand.u32 %v5057, 2147483648
      %v5207 = vor.u32 1.1754944e-38, %v5206
      %v5208 = vsel %vm5205, %v5207, %v5203
      %v5209 = vrcp.pop %v5060
      %v5210 = vmul.f32 %v5060, %v5209
      %v5211 = vsub.f32 1.0, %v5210
      %v5212 = vmul.f32 %v5209, %v5211
      %v5213 = vadd.f32 %v5209, %v5212
      %vm5214 = vweird.f32 %v5060
      %vm5215 = vweird.f32 %v5209
      %vm5216 = vmor %vm5214, %vm5215
      %v5217 = vsel %vm5216, %v5209, %v5213
      %v5218 = vand.u32 2147483647, %v5060
      %vm5219 = vcmp.eq.f32.partialorder %v5218, 8.507059e+37
      %v5220 = vand.u32 %v5060, 2147483648
      %v5221 = vor.u32 1.1754944e-38, %v5220
      %v5222 = vsel %vm5219, %v5221, %v5217
      %v5223 = vrcp.pop %v5063
      %v5224 = vmul.f32 %v5063, %v5223
      %v5225 = vsub.f32 1.0, %v5224
      %v5226 = vmul.f32 %v5223, %v5225
      %v5227 = vadd.f32 %v5223, %v5226
      %vm5228 = vweird.f32 %v5063
      %vm5229 = vweird.f32 %v5223
      %vm5230 = vmor %vm5228, %vm5229
      %v5231 = vsel %vm5230, %v5223, %v5227
      %v5232 = vand.u32 2147483647, %v5063
      %vm5233 = vcmp.eq.f32.partialorder %v5232, 8.507059e+37
      %v5234 = vand.u32 %v5063, 2147483648
      %v5235 = vor.u32 1.1754944e-38, %v5234
      %v5236 = vsel %vm5233, %v5235, %v5231
      %v5237 = vrcp.pop %v5066
      %v5238 = vmul.f32 %v5066, %v5237
      %v5239 = vsub.f32 1.0, %v5238
      %v5240 = vmul.f32 %v5237, %v5239
      %v5241 = vadd.f32 %v5237, %v5240
      %vm5242 = vweird.f32 %v5066
      %vm5243 = vweird.f32 %v5237
      %vm5244 = vmor %vm5242, %vm5243
      %v5245 = vsel %vm5244, %v5237, %v5241
      %v5246 = vand.u32 2147483647, %v5066
      %vm5247 = vcmp.eq.f32.partialorder %v5246, 8.507059e+37
      %v5248 = vand.u32 %v5066, 2147483648
      %v5249 = vor.u32 1.1754944e-38, %v5248
      %v5250 = vsel %vm5247, %v5249, %v5245
      %v5251 = vrcp.pop %v5069
      %v5252 = vmul.f32 %v5069, %v5251
      %v5253 = vsub.f32 1.0, %v5252
      %v5254 = vmul.f32 %v5251, %v5253
      %v5255 = vadd.f32 %v5251, %v5254
      %vm5256 = vweird.f32 %v5069
      %vm5257 = vweird.f32 %v5251
      %vm5258 = vmor %vm5256, %vm5257
      %v5259 = vsel %vm5258, %v5251, %v5255
      %v5260 = vand.u32 2147483647, %v5069
      %vm5261 = vcmp.eq.f32.partialorder %v5260, 8.507059e+37
      %v5262 = vand.u32 %v5069, 2147483648
      %v5263 = vor.u32 1.1754944e-38, %v5262
      %v5264 = vsel %vm5261, %v5263, %v5259
      %v5265 = vrcp.pop %v5072
      %v5266 = vmul.f32 %v5072, %v5265
      %v5267 = vsub.f32 1.0, %v5266
      %v5268 = vmul.f32 %v5265, %v5267
      %v5269 = vadd.f32 %v5265, %v5268
      %vm5270 = vweird.f32 %v5072
      %vm5271 = vweird.f32 %v5265
      %vm5272 = vmor %vm5270, %vm5271
      %v5273 = vsel %vm5272, %v5265, %v5269
      %v5274 = vand.u32 2147483647, %v5072
      %vm5275 = vcmp.eq.f32.partialorder %v5274, 8.507059e+37
      %v5276 = vand.u32 %v5072, 2147483648
      %v5277 = vor.u32 1.1754944e-38, %v5276
      %v5278 = vsel %vm5275, %v5277, %v5273
      %v5279 = vrcp.pop %v5075
      %v5280 = vmul.f32 %v5075, %v5279
      %v5281 = vsub.f32 1.0, %v5280
      %v5282 = vmul.f32 %v5279, %v5281
      %v5283 = vadd.f32 %v5279, %v5282
      %vm5284 = vweird.f32 %v5075
      %vm5285 = vweird.f32 %v5279
      %vm5286 = vmor %vm5284, %vm5285
      %v5287 = vsel %vm5286, %v5279, %v5283
      %v5288 = vand.u32 2147483647, %v5075
      %vm5289 = vcmp.eq.f32.partialorder %v5288, 8.507059e+37
      %v5290 = vand.u32 %v5075, 2147483648
      %v5291 = vor.u32 1.1754944e-38, %v5290
      %v5292 = vsel %vm5289, %v5291, %v5287
      %v5293 = vrcp.pop %v5078
      %v5294 = vmul.f32 %v5078, %v5293
      %v5295 = vsub.f32 1.0, %v5294
      %v5296 = vmul.f32 %v5293, %v5295
      %v5297 = vadd.f32 %v5293, %v5296
      %vm5298 = vweird.f32 %v5078
      %vm5299 = vweird.f32 %v5293
      %vm5300 = vmor %vm5298, %vm5299
      %v5301 = vsel %vm5300, %v5293, %v5297
      %v5302 = vand.u32 2147483647, %v5078
      %vm5303 = vcmp.eq.f32.partialorder %v5302, 8.507059e+37
      %v5304 = vand.u32 %v5078, 2147483648
      %v5305 = vor.u32 1.1754944e-38, %v5304
      %v5306 = vsel %vm5303, %v5305, %v5301
      %v5307 = vrcp.pop %v5081
      %v5308 = vmul.f32 %v5081, %v5307
      %v5309 = vsub.f32 1.0, %v5308
      %v5310 = vmul.f32 %v5307, %v5309
      %v5311 = vadd.f32 %v5307, %v5310
      %vm5312 = vweird.f32 %v5081
      %vm5313 = vweird.f32 %v5307
      %vm5314 = vmor %vm5312, %vm5313
      %v5315 = vsel %vm5314, %v5307, %v5311
      %v5316 = vand.u32 2147483647, %v5081
      %vm5317 = vcmp.eq.f32.partialorder %v5316, 8.507059e+37
      %v5318 = vand.u32 %v5081, 2147483648
      %v5319 = vor.u32 1.1754944e-38, %v5318
      %v5320 = vsel %vm5317, %v5319, %v5315
      %v5321 = vrcp.pop %v5084
      %v5322 = vmul.f32 %v5084, %v5321
      %v5323 = vsub.f32 1.0, %v5322
      %v5324 = vmul.f32 %v5321, %v5323
      %v5325 = vadd.f32 %v5321, %v5324
      %vm5326 = vweird.f32 %v5084
      %vm5327 = vweird.f32 %v5321
      %vm5328 = vmor %vm5326, %vm5327
      %v5329 = vsel %vm5328, %v5321, %v5325
      %v5330 = vand.u32 2147483647, %v5084
      %vm5331 = vcmp.eq.f32.partialorder %v5330, 8.507059e+37
      %v5332 = vand.u32 %v5084, 2147483648
      %v5333 = vor.u32 1.1754944e-38, %v5332
      %v5334 = vsel %vm5331, %v5333, %v5329
      %v5335 = vrcp.pop %v5087
      %v5336 = vmul.f32 %v5087, %v5335
      %v5337 = vsub.f32 1.0, %v5336
      %v5338 = vmul.f32 %v5335, %v5337
      %v5339 = vadd.f32 %v5335, %v5338
      %vm5340 = vweird.f32 %v5087
      %vm5341 = vweird.f32 %v5335
      %vm5342 = vmor %vm5340, %vm5341
      %v5343 = vsel %vm5342, %v5335, %v5339
      %v5344 = vand.u32 2147483647, %v5087
      %vm5345 = vcmp.eq.f32.partialorder %v5344, 8.507059e+37
      %v5346 = vand.u32 %v5087, 2147483648
      %v5347 = vor.u32 1.1754944e-38, %v5346
      %v5348 = vsel %vm5345, %v5347, %v5343
      %v5349 = vrcp.pop %v5090
      %v5350 = vmul.f32 %v5090, %v5349
      %v5351 = vsub.f32 1.0, %v5350
      %v5352 = vmul.f32 %v5349, %v5351
      %v5353 = vadd.f32 %v5349, %v5352
      %vm5354 = vweird.f32 %v5090
      %vm5355 = vweird.f32 %v5349
      %vm5356 = vmor %vm5354, %vm5355
      %v5357 = vsel %vm5356, %v5349, %v5353
      %v5358 = vand.u32 2147483647, %v5090
      %vm5359 = vcmp.eq.f32.partialorder %v5358, 8.507059e+37
      %v5360 = vand.u32 %v5090, 2147483648
      %v5361 = vor.u32 1.1754944e-38, %v5360
      %v5362 = vsel %vm5359, %v5361, %v5357
      %v5363 = vrcp.pop %v5093
      %v5364 = vmul.f32 %v5093, %v5363
      %v5365 = vsub.f32 1.0, %v5364
      %v5366 = vmul.f32 %v5363, %v5365
      %v5367 = vadd.f32 %v5363, %v5366
      %vm5368 = vweird.f32 %v5093
      %vm5369 = vweird.f32 %v5363
      %vm5370 = vmor %vm5368, %vm5369
      %v5371 = vsel %vm5370, %v5363, %v5367
      %v5372 = vand.u32 2147483647, %v5093
      %vm5373 = vcmp.eq.f32.partialorder %v5372, 8.507059e+37
      %v5374 = vand.u32 %v5093, 2147483648
      %v5375 = vor.u32 1.1754944e-38, %v5374
      %v5376 = vsel %vm5373, %v5375, %v5371
      %v5377 = vrcp.pop %v5096
      %v5378 = vmul.f32 %v5096, %v5377
      %v5379 = vsub.f32 1.0, %v5378
      %v5380 = vmul.f32 %v5377, %v5379
      %v5381 = vadd.f32 %v5377, %v5380
      %vm5382 = vweird.f32 %v5096
      %vm5383 = vweird.f32 %v5377
      %vm5384 = vmor %vm5382, %vm5383
      %v5385 = vsel %vm5384, %v5377, %v5381
      %v5386 = vand.u32 2147483647, %v5096
      %vm5387 = vcmp.eq.f32.partialorder %v5386, 8.507059e+37
      %v5388 = vand.u32 %v5096, 2147483648
      %v5389 = vor.u32 1.1754944e-38, %v5388
      %v5390 = vsel %vm5387, %v5389, %v5385
      %v5391 = vrcp.pop %v5099
      %v5392 = vmul.f32 %v5099, %v5391
      %v5393 = vsub.f32 1.0, %v5392
      %v5394 = vmul.f32 %v5391, %v5393
      %v5395 = vadd.f32 %v5391, %v5394
      %vm5396 = vweird.f32 %v5099
      %vm5397 = vweird.f32 %v5391
      %vm5398 = vmor %vm5396, %vm5397
      %v5399 = vsel %vm5398, %v5391, %v5395
      %v5400 = vand.u32 2147483647, %v5099
      %vm5401 = vcmp.eq.f32.partialorder %v5400, 8.507059e+37
      %v5402 = vand.u32 %v5099, 2147483648
      %v5403 = vor.u32 1.1754944e-38, %v5402
      %v5404 = vsel %vm5401, %v5403, %v5399
      %v5405 = vrcp.pop %v5102
      %v5406 = vmul.f32 %v5102, %v5405
      %v5407 = vsub.f32 1.0, %v5406
      %v5408 = vmul.f32 %v5405, %v5407
      %v5409 = vadd.f32 %v5405, %v5408
      %vm5410 = vweird.f32 %v5102
      %vm5411 = vweird.f32 %v5405
      %vm5412 = vmor %vm5410, %vm5411
      %v5413 = vsel %vm5412, %v5405, %v5409
      %v5414 = vand.u32 2147483647, %v5102
      %vm5415 = vcmp.eq.f32.partialorder %v5414, 8.507059e+37
      %v5416 = vand.u32 %v5102, 2147483648
      %v5417 = vor.u32 1.1754944e-38, %v5416
      %v5418 = vsel %vm5415, %v5417, %v5413
      %v5419 = vrcp.pop %v5105
      %v5420 = vmul.f32 %v5105, %v5419
      %v5421 = vsub.f32 1.0, %v5420
      %v5422 = vmul.f32 %v5419, %v5421
      %v5423 = vadd.f32 %v5419, %v5422
      %vm5424 = vweird.f32 %v5105
      %vm5425 = vweird.f32 %v5419
      %vm5426 = vmor %vm5424, %vm5425
      %v5427 = vsel %vm5426, %v5419, %v5423
      %v5428 = vand.u32 2147483647, %v5105
      %vm5429 = vcmp.eq.f32.partialorder %v5428, 8.507059e+37
      %v5430 = vand.u32 %v5105, 2147483648
      %v5431 = vor.u32 1.1754944e-38, %v5430
      %v5432 = vsel %vm5429, %v5431, %v5427
      %v5433 = vrcp.pop %v5108
      %v5434 = vmul.f32 %v5108, %v5433
      %v5435 = vsub.f32 1.0, %v5434
      %v5436 = vmul.f32 %v5433, %v5435
      %v5437 = vadd.f32 %v5433, %v5436
      %vm5438 = vweird.f32 %v5108
      %vm5439 = vweird.f32 %v5433
      %vm5440 = vmor %vm5438, %vm5439
      %v5441 = vsel %vm5440, %v5433, %v5437
      %v5442 = vand.u32 2147483647, %v5108
      %vm5443 = vcmp.eq.f32.partialorder %v5442, 8.507059e+37
      %v5444 = vand.u32 %v5108, 2147483648
      %v5445 = vor.u32 1.1754944e-38, %v5444
      %v5446 = vsel %vm5443, %v5445, %v5441
      %v5447 = vrcp.pop %v5111
      %v5448 = vmul.f32 %v5111, %v5447
      %v5449 = vsub.f32 1.0, %v5448
      %v5450 = vmul.f32 %v5447, %v5449
      %v5451 = vadd.f32 %v5447, %v5450
      %vm5452 = vweird.f32 %v5111
      %vm5453 = vweird.f32 %v5447
      %vm5454 = vmor %vm5452, %vm5453
      %v5455 = vsel %vm5454, %v5447, %v5451
      %v5456 = vand.u32 2147483647, %v5111
      %vm5457 = vcmp.eq.f32.partialorder %v5456, 8.507059e+37
      %v5458 = vand.u32 %v5111, 2147483648
      %v5459 = vor.u32 1.1754944e-38, %v5458
      %v5460 = vsel %vm5457, %v5459, %v5455
      %v5461 = vrcp.pop %v5114
      %v5462 = vmul.f32 %v5114, %v5461
      %v5463 = vsub.f32 1.0, %v5462
      %v5464 = vmul.f32 %v5461, %v5463
      %v5465 = vadd.f32 %v5461, %v5464
      %vm5466 = vweird.f32 %v5114
      %vm5467 = vweird.f32 %v5461
      %vm5468 = vmor %vm5466, %vm5467
      %v5469 = vsel %vm5468, %v5461, %v5465
      %v5470 = vand.u32 2147483647, %v5114
      %vm5471 = vcmp.eq.f32.partialorder %v5470, 8.507059e+37
      %v5472 = vand.u32 %v5114, 2147483648
      %v5473 = vor.u32 1.1754944e-38, %v5472
      %v5474 = vsel %vm5471, %v5473, %v5469
      %v5475 = vrcp.pop %v5117
      %v5476 = vmul.f32 %v5117, %v5475
      %v5477 = vsub.f32 1.0, %v5476
      %v5478 = vmul.f32 %v5475, %v5477
      %v5479 = vadd.f32 %v5475, %v5478
      %vm5480 = vweird.f32 %v5117
      %vm5481 = vweird.f32 %v5475
      %vm5482 = vmor %vm5480, %vm5481
      %v5483 = vsel %vm5482, %v5475, %v5479
      %v5484 = vand.u32 2147483647, %v5117
      %vm5485 = vcmp.eq.f32.partialorder %v5484, 8.507059e+37
      %v5486 = vand.u32 %v5117, 2147483648
      %v5487 = vor.u32 1.1754944e-38, %v5486
      %v5488 = vsel %vm5485, %v5487, %v5483
      %v5489 = vrcp.pop %v5120
      %v5490 = vmul.f32 %v5120, %v5489
      %v5491 = vsub.f32 1.0, %v5490
      %v5492 = vmul.f32 %v5489, %v5491
      %v5493 = vadd.f32 %v5489, %v5492
      %vm5494 = vweird.f32 %v5120
      %vm5495 = vweird.f32 %v5489
      %vm5496 = vmor %vm5494, %vm5495
      %v5497 = vsel %vm5496, %v5489, %v5493
      %v5498 = vand.u32 2147483647, %v5120
      %vm5499 = vcmp.eq.f32.partialorder %v5498, 8.507059e+37
      %v5500 = vand.u32 %v5120, 2147483648
      %v5501 = vor.u32 1.1754944e-38, %v5500
      %v5502 = vsel %vm5499, %v5501, %v5497
      %v5503 = vrcp.pop %v5123
      %v5504 = vmul.f32 %v5123, %v5503
      %v5505 = vsub.f32 1.0, %v5504
      %v5506 = vmul.f32 %v5503, %v5505
      %v5507 = vadd.f32 %v5503, %v5506
      %vm5508 = vweird.f32 %v5123
      %vm5509 = vweird.f32 %v5503
      %vm5510 = vmor %vm5508, %vm5509
      %v5511 = vsel %vm5510, %v5503, %v5507
      %v5512 = vand.u32 2147483647, %v5123
      %vm5513 = vcmp.eq.f32.partialorder %v5512, 8.507059e+37
      %v5514 = vand.u32 %v5123, 2147483648
      %v5515 = vor.u32 1.1754944e-38, %v5514
      %v5516 = vsel %vm5513, %v5515, %v5511
      %v5517 = vrcp.pop %v5126
      %v5518 = vmul.f32 %v5126, %v5517
      %v5519 = vsub.f32 1.0, %v5518
      %v5520 = vmul.f32 %v5517, %v5519
      %v5521 = vadd.f32 %v5517, %v5520
      %vm5522 = vweird.f32 %v5126
      %vm5523 = vweird.f32 %v5517
      %vm5524 = vmor %vm5522, %vm5523
      %v5525 = vsel %vm5524, %v5517, %v5521
      %v5526 = vand.u32 2147483647, %v5126
      %vm5527 = vcmp.eq.f32.partialorder %v5526, 8.507059e+37
      %v5528 = vand.u32 %v5126, 2147483648
      %v5529 = vor.u32 1.1754944e-38, %v5528
      %v5530 = vsel %vm5527, %v5529, %v5525
      %v5531 = vrcp.pop %v5129
      %v5532 = vmul.f32 %v5129, %v5531
      %v5533 = vsub.f32 1.0, %v5532
      %v5534 = vmul.f32 %v5531, %v5533
      %v5535 = vadd.f32 %v5531, %v5534
      %vm5536 = vweird.f32 %v5129
      %vm5537 = vweird.f32 %v5531
      %vm5538 = vmor %vm5536, %vm5537
      %v5539 = vsel %vm5538, %v5531, %v5535
      %v5540 = vand.u32 2147483647, %v5129
      %vm5541 = vcmp.eq.f32.partialorder %v5540, 8.507059e+37
      %v5542 = vand.u32 %v5129, 2147483648
      %v5543 = vor.u32 1.1754944e-38, %v5542
      %v5544 = vsel %vm5541, %v5543, %v5539
      %v5545 = vrcp.pop %v5132
      %v5546 = vmul.f32 %v5132, %v5545
      %v5547 = vsub.f32 1.0, %v5546
      %v5548 = vmul.f32 %v5545, %v5547
      %v5549 = vadd.f32 %v5545, %v5548
      %vm5550 = vweird.f32 %v5132
      %vm5551 = vweird.f32 %v5545
      %vm5552 = vmor %vm5550, %vm5551
      %v5553 = vsel %vm5552, %v5545, %v5549
      %v5554 = vand.u32 2147483647, %v5132
      %vm5555 = vcmp.eq.f32.partialorder %v5554, 8.507059e+37
      %v5556 = vand.u32 %v5132, 2147483648
      %v5557 = vor.u32 1.1754944e-38, %v5556
      %v5558 = vsel %vm5555, %v5557, %v5553
      %v5559 = vrcp.pop %v5135
      %v5560 = vmul.f32 %v5135, %v5559
      %v5561 = vsub.f32 1.0, %v5560
      %v5562 = vmul.f32 %v5559, %v5561
      %v5563 = vadd.f32 %v5559, %v5562
      %vm5564 = vweird.f32 %v5135
      %vm5565 = vweird.f32 %v5559
      %vm5566 = vmor %vm5564, %vm5565
      %v5567 = vsel %vm5566, %v5559, %v5563
      %v5568 = vand.u32 2147483647, %v5135
      %vm5569 = vcmp.eq.f32.partialorder %v5568, 8.507059e+37
      %v5570 = vand.u32 %v5135, 2147483648
      %v5571 = vor.u32 1.1754944e-38, %v5570
      %v5572 = vsel %vm5569, %v5571, %v5567
      %v5573 = vrcp.pop %v5138
      %v5574 = vmul.f32 %v5138, %v5573
      %v5575 = vsub.f32 1.0, %v5574
      %v5576 = vmul.f32 %v5573, %v5575
      %v5577 = vadd.f32 %v5573, %v5576
      %vm5578 = vweird.f32 %v5138
      %vm5579 = vweird.f32 %v5573
      %vm5580 = vmor %vm5578, %vm5579
      %v5581 = vsel %vm5580, %v5573, %v5577
      %v5582 = vand.u32 2147483647, %v5138
      %vm5583 = vcmp.eq.f32.partialorder %v5582, 8.507059e+37
      %v5584 = vand.u32 %v5138, 2147483648
      %v5585 = vor.u32 1.1754944e-38, %v5584
      %v5586 = vsel %vm5583, %v5585, %v5581
      %v5587 = vmul.f32 %v4980, %v5152
      %v5588 = vmul.f32 %v4982, %v5166
      %v5589 = vmul.f32 %v4984, %v5180
      %v5590 = vmul.f32 %v4986, %v5194
      %v5591 = vmul.f32 %v4988, %v5208
      %v5592 = vmul.f32 %v4990, %v5222
      %v5593 = vmul.f32 %v4992, %v5236
      %v5594 = vmul.f32 %v4994, %v5250
      %v5595 = vmul.f32 %v4996, %v5264
      %v5596 = vmul.f32 %v4998, %v5278
      %v5597 = vmul.f32 %v5000, %v5292
      %v5598 = vmul.f32 %v5002, %v5306
      %v5599 = vmul.f32 %v5004, %v5320
      %v5600 = vmul.f32 %v5006, %v5334
      %v5601 = vmul.f32 %v5008, %v5348
      %v5602 = vmul.f32 %v5010, %v5362
      %v5603 = vmul.f32 %v5012, %v5376
      %v5604 = vmul.f32 %v5014, %v5390
      %v5605 = vmul.f32 %v5016, %v5404
      %v5606 = vmul.f32 %v5018, %v5418
      %v5607 = vmul.f32 %v5020, %v5432
      %v5608 = vmul.f32 %v5022, %v5446
      %v5609 = vmul.f32 %v5024, %v5460
      %v5610 = vmul.f32 %v5026, %v5474
      %v5611 = vmul.f32 %v5028, %v5488
      %v5612 = vmul.f32 %v5030, %v5502
      %v5613 = vmul.f32 %v5032, %v5516
      %v5614 = vmul.f32 %v5034, %v5530
      %v5615 = vmul.f32 %v5036, %v5544
      %v5616 = vmul.f32 %v5038, %v5558
      %v5617 = vmul.f32 %v5040, %v5572
      %v5618 = vmul.f32 %v5042, %v5586
      %5619 = vrot.lane.b32.xlu0 %v1252, 48
      %v5620 = vpop.permute.xlu0 %5619
      %5621 = vrot.lane.b32.xlu0 %v1255, 48
      %v5622 = vpop.permute.xlu0 %5621
      %5623 = vrot.lane.b32.xlu0 %v1258, 48
      %v5624 = vpop.permute.xlu0 %5623
      %5625 = vrot.lane.b32.xlu0 %v1261, 48
      %v5626 = vpop.permute.xlu0 %5625
      %5627 = vrot.lane.b32.xlu0 %v1264, 48
      %v5628 = vpop.permute.xlu0 %5627
      %5629 = vrot.lane.b32.xlu0 %v1267, 48
      %v5630 = vpop.permute.xlu0 %5629
      %5631 = vrot.lane.b32.xlu0 %v1270, 48
      %v5632 = vpop.permute.xlu0 %5631
      %5633 = vrot.lane.b32.xlu0 %v1273, 48
      %v5634 = vpop.permute.xlu0 %5633
      %v5644 = vsel %vm1744, %v5587, 0
      %v5647 = vsel %vm1744, %v5588, 0
      %v5650 = vsel %vm1744, %v5589, 0
      %v5653 = vsel %vm1744, %v5590, 0
      %v5656 = vsel %vm1744, %v5591, 0
      %v5659 = vsel %vm1744, %v5592, 0
      %v5662 = vsel %vm1744, %v5593, 0
      %v5665 = vsel %vm1744, %v5594, 0
      %5667 = vmatpush.msra.mxu0 0.0
      %5668 = vmatpush.msra.mxu0 0.0
      %5669 = vmatpush.msra.mxu0 0.0
      %5670 = vmatpush.msra.mxu0 0.0
      %5671 = vmatpush.msra.mxu0 0.0
      %5672 = vmatpush.msra.mxu0 0.0
      %5673 = vmatpush.msra.mxu0 0.0
      %5674 = vmatpush.msra.mxu0 0.0
      %5675 = vmatpush.msra.mxu0 %v5634
      %5676 = vmatpush.msra.mxu0 %v5632
      %5677 = vmatpush.msra.mxu0 %v5630
      %5678 = vmatpush.msra.mxu0 %v5628
      %5679 = vmatpush.msra.mxu0 %v5626
      %5680 = vmatpush.msra.mxu0 %v5624
      %5681 = vmatpush.msra.mxu0 %v5622
      %5682 = vmatpush.msra.mxu0 %v5620
      %5683 = vmatmul.f32.gmra.mxu0 %v5644
      %v5684 = vpop.f32.mrf.mxu0
      %v5685 = vadd.f32 0.0, %v5684
      %5686 = vmatmul.f32.gmra.mxu0 %v5647
      %v5687 = vpop.f32.mrf.mxu0
      %v5688 = vadd.f32 0.0, %v5687
      %5689 = vmatmul.f32.gmra.mxu0 %v5650
      %v5690 = vpop.f32.mrf.mxu0
      %v5691 = vadd.f32 0.0, %v5690
      %5692 = vmatmul.f32.gmra.mxu0 %v5653
      %v5693 = vpop.f32.mrf.mxu0
      %v5694 = vadd.f32 0.0, %v5693
      %5695 = vmatmul.f32.gmra.mxu0 %v5656
      %v5696 = vpop.f32.mrf.mxu0
      %v5697 = vadd.f32 0.0, %v5696
      %5698 = vmatmul.f32.gmra.mxu0 %v5659
      %v5699 = vpop.f32.mrf.mxu0
      %v5700 = vadd.f32 0.0, %v5699
      %5701 = vmatmul.f32.gmra.mxu0 %v5662
      %v5702 = vpop.f32.mrf.mxu0
      %v5703 = vadd.f32 0.0, %v5702
      %5704 = vmatmul.f32.gmra.mxu0 %v5665
      %v5705 = vpop.f32.mrf.mxu0
      %v5706 = vadd.f32 0.0, %v5705
      %5707 = vdwg.mxu0
      %5708 = vrot.lane.b32.xlu0 %v1276, 48
      %v5709 = vpop.permute.xlu0 %5708
      %5710 = vrot.lane.b32.xlu0 %v1279, 48
      %v5711 = vpop.permute.xlu0 %5710
      %5712 = vrot.lane.b32.xlu0 %v1282, 48
      %v5713 = vpop.permute.xlu0 %5712
      %5714 = vrot.lane.b32.xlu0 %v1285, 48
      %v5715 = vpop.permute.xlu0 %5714
      %5716 = vrot.lane.b32.xlu0 %v1288, 48
      %v5717 = vpop.permute.xlu0 %5716
      %5718 = vrot.lane.b32.xlu0 %v1291, 48
      %v5719 = vpop.permute.xlu0 %5718
      %5720 = vrot.lane.b32.xlu0 %v1294, 48
      %v5721 = vpop.permute.xlu0 %5720
      %5722 = vrot.lane.b32.xlu0 %v1297, 48
      %v5723 = vpop.permute.xlu0 %5722
      %v5733 = vsel %vm1744, %v5595, 0
      %v5736 = vsel %vm1744, %v5596, 0
      %v5739 = vsel %vm1744, %v5597, 0
      %v5742 = vsel %vm1744, %v5598, 0
      %v5745 = vsel %vm1744, %v5599, 0
      %v5748 = vsel %vm1744, %v5600, 0
      %v5751 = vsel %vm1744, %v5601, 0
      %v5754 = vsel %vm1744, %v5602, 0
      %5756 = vmatpush.msra.mxu0 0.0
      %5757 = vmatpush.msra.mxu0 0.0
      %5758 = vmatpush.msra.mxu0 0.0
      %5759 = vmatpush.msra.mxu0 0.0
      %5760 = vmatpush.msra.mxu0 0.0
      %5761 = vmatpush.msra.mxu0 0.0
      %5762 = vmatpush.msra.mxu0 0.0
      %5763 = vmatpush.msra.mxu0 0.0
      %5764 = vmatpush.msra.mxu0 %v5723
      %5765 = vmatpush.msra.mxu0 %v5721
      %5766 = vmatpush.msra.mxu0 %v5719
      %5767 = vmatpush.msra.mxu0 %v5717
      %5768 = vmatpush.msra.mxu0 %v5715
      %5769 = vmatpush.msra.mxu0 %v5713
      %5770 = vmatpush.msra.mxu0 %v5711
      %5771 = vmatpush.msra.mxu0 %v5709
      %5772 = vmatmul.f32.gmra.mxu0 %v5733
      %v5773 = vpop.f32.mrf.mxu0
      %v5774 = vadd.f32 0.0, %v5773
      %5775 = vmatmul.f32.gmra.mxu0 %v5736
      %v5776 = vpop.f32.mrf.mxu0
      %v5777 = vadd.f32 0.0, %v5776
      %5778 = vmatmul.f32.gmra.mxu0 %v5739
      %v5779 = vpop.f32.mrf.mxu0
      %v5780 = vadd.f32 0.0, %v5779
      %5781 = vmatmul.f32.gmra.mxu0 %v5742
      %v5782 = vpop.f32.mrf.mxu0
      %v5783 = vadd.f32 0.0, %v5782
      %5784 = vmatmul.f32.gmra.mxu0 %v5745
      %v5785 = vpop.f32.mrf.mxu0
      %v5786 = vadd.f32 0.0, %v5785
      %5787 = vmatmul.f32.gmra.mxu0 %v5748
      %v5788 = vpop.f32.mrf.mxu0
      %v5789 = vadd.f32 0.0, %v5788
      %5790 = vmatmul.f32.gmra.mxu0 %v5751
      %v5791 = vpop.f32.mrf.mxu0
      %v5792 = vadd.f32 0.0, %v5791
      %5793 = vmatmul.f32.gmra.mxu0 %v5754
      %v5794 = vpop.f32.mrf.mxu0
      %v5795 = vadd.f32 0.0, %v5794
      %5796 = vdwg.mxu0
      %5797 = vrot.lane.b32.xlu0 %v1300, 48
      %v5798 = vpop.permute.xlu0 %5797
      %5799 = vrot.lane.b32.xlu0 %v1303, 48
      %v5800 = vpop.permute.xlu0 %5799
      %5801 = vrot.lane.b32.xlu0 %v1306, 48
      %v5802 = vpop.permute.xlu0 %5801
      %5803 = vrot.lane.b32.xlu0 %v1309, 48
      %v5804 = vpop.permute.xlu0 %5803
      %5805 = vrot.lane.b32.xlu0 %v1312, 48
      %v5806 = vpop.permute.xlu0 %5805
      %5807 = vrot.lane.b32.xlu0 %v1315, 48
      %v5808 = vpop.permute.xlu0 %5807
      %5809 = vrot.lane.b32.xlu0 %v1318, 48
      %v5810 = vpop.permute.xlu0 %5809
      %5811 = vrot.lane.b32.xlu0 %v1321, 48
      %v5812 = vpop.permute.xlu0 %5811
      %v5822 = vsel %vm1744, %v5603, 0
      %v5825 = vsel %vm1744, %v5604, 0
      %v5828 = vsel %vm1744, %v5605, 0
      %v5831 = vsel %vm1744, %v5606, 0
      %v5834 = vsel %vm1744, %v5607, 0
      %v5837 = vsel %vm1744, %v5608, 0
      %v5840 = vsel %vm1744, %v5609, 0
      %v5843 = vsel %vm1744, %v5610, 0
      %5845 = vmatpush.msra.mxu0 0.0
      %5846 = vmatpush.msra.mxu0 0.0
      %5847 = vmatpush.msra.mxu0 0.0
      %5848 = vmatpush.msra.mxu0 0.0
      %5849 = vmatpush.msra.mxu0 0.0
      %5850 = vmatpush.msra.mxu0 0.0
      %5851 = vmatpush.msra.mxu0 0.0
      %5852 = vmatpush.msra.mxu0 0.0
      %5853 = vmatpush.msra.mxu0 %v5812
      %5854 = vmatpush.msra.mxu0 %v5810
      %5855 = vmatpush.msra.mxu0 %v5808
      %5856 = vmatpush.msra.mxu0 %v5806
      %5857 = vmatpush.msra.mxu0 %v5804
      %5858 = vmatpush.msra.mxu0 %v5802
      %5859 = vmatpush.msra.mxu0 %v5800
      %5860 = vmatpush.msra.mxu0 %v5798
      %5861 = vmatmul.f32.gmra.mxu0 %v5822
      %v5862 = vpop.f32.mrf.mxu0
      %v5863 = vadd.f32 0.0, %v5862
      %5864 = vmatmul.f32.gmra.mxu0 %v5825
      %v5865 = vpop.f32.mrf.mxu0
      %v5866 = vadd.f32 0.0, %v5865
      %5867 = vmatmul.f32.gmra.mxu0 %v5828
      %v5868 = vpop.f32.mrf.mxu0
      %v5869 = vadd.f32 0.0, %v5868
      %5870 = vmatmul.f32.gmra.mxu0 %v5831
      %v5871 = vpop.f32.mrf.mxu0
      %v5872 = vadd.f32 0.0, %v5871
      %5873 = vmatmul.f32.gmra.mxu0 %v5834
      %v5874 = vpop.f32.mrf.mxu0
      %v5875 = vadd.f32 0.0, %v5874
      %5876 = vmatmul.f32.gmra.mxu0 %v5837
      %v5877 = vpop.f32.mrf.mxu0
      %v5878 = vadd.f32 0.0, %v5877
      %5879 = vmatmul.f32.gmra.mxu0 %v5840
      %v5880 = vpop.f32.mrf.mxu0
      %v5881 = vadd.f32 0.0, %v5880
      %5882 = vmatmul.f32.gmra.mxu0 %v5843
      %v5883 = vpop.f32.mrf.mxu0
      %v5884 = vadd.f32 0.0, %v5883
      %5885 = vdwg.mxu0
      %5886 = vrot.lane.b32.xlu0 %v1324, 48
      %v5887 = vpop.permute.xlu0 %5886
      %5888 = vrot.lane.b32.xlu0 %v1327, 48
      %v5889 = vpop.permute.xlu0 %5888
      %5890 = vrot.lane.b32.xlu0 %v1330, 48
      %v5891 = vpop.permute.xlu0 %5890
      %5892 = vrot.lane.b32.xlu0 %v1333, 48
      %v5893 = vpop.permute.xlu0 %5892
      %5894 = vrot.lane.b32.xlu0 %v1336, 48
      %v5895 = vpop.permute.xlu0 %5894
      %5896 = vrot.lane.b32.xlu0 %v1339, 48
      %v5897 = vpop.permute.xlu0 %5896
      %5898 = vrot.lane.b32.xlu0 %v1342, 48
      %v5899 = vpop.permute.xlu0 %5898
      %5900 = vrot.lane.b32.xlu0 %v1345, 48
      %v5901 = vpop.permute.xlu0 %5900
      %v5911 = vsel %vm1744, %v5611, 0
      %v5914 = vsel %vm1744, %v5612, 0
      %v5917 = vsel %vm1744, %v5613, 0
      %v5920 = vsel %vm1744, %v5614, 0
      %v5923 = vsel %vm1744, %v5615, 0
      %v5926 = vsel %vm1744, %v5616, 0
      %v5929 = vsel %vm1744, %v5617, 0
      %v5932 = vsel %vm1744, %v5618, 0
      %5934 = vmatpush.msra.mxu0 0.0
      %5935 = vmatpush.msra.mxu0 0.0
      %5936 = vmatpush.msra.mxu0 0.0
      %5937 = vmatpush.msra.mxu0 0.0
      %5938 = vmatpush.msra.mxu0 0.0
      %5939 = vmatpush.msra.mxu0 0.0
      %5940 = vmatpush.msra.mxu0 0.0
      %5941 = vmatpush.msra.mxu0 0.0
      %5942 = vmatpush.msra.mxu0 %v5901
      %5943 = vmatpush.msra.mxu0 %v5899
      %5944 = vmatpush.msra.mxu0 %v5897
      %5945 = vmatpush.msra.mxu0 %v5895
      %5946 = vmatpush.msra.mxu0 %v5893
      %5947 = vmatpush.msra.mxu0 %v5891
      %5948 = vmatpush.msra.mxu0 %v5889
      %5949 = vmatpush.msra.mxu0 %v5887
      %5950 = vmatmul.f32.gmra.mxu0 %v5911
      %v5951 = vpop.f32.mrf.mxu0
      %v5952 = vadd.f32 0.0, %v5951
      %5953 = vmatmul.f32.gmra.mxu0 %v5914
      %v5954 = vpop.f32.mrf.mxu0
      %v5955 = vadd.f32 0.0, %v5954
      %5956 = vmatmul.f32.gmra.mxu0 %v5917
      %v5957 = vpop.f32.mrf.mxu0
      %v5958 = vadd.f32 0.0, %v5957
      %5959 = vmatmul.f32.gmra.mxu0 %v5920
      %v5960 = vpop.f32.mrf.mxu0
      %v5961 = vadd.f32 0.0, %v5960
      %5962 = vmatmul.f32.gmra.mxu0 %v5923
      %v5963 = vpop.f32.mrf.mxu0
      %v5964 = vadd.f32 0.0, %v5963
      %5965 = vmatmul.f32.gmra.mxu0 %v5926
      %v5966 = vpop.f32.mrf.mxu0
      %v5967 = vadd.f32 0.0, %v5966
      %5968 = vmatmul.f32.gmra.mxu0 %v5929
      %v5969 = vpop.f32.mrf.mxu0
      %v5970 = vadd.f32 0.0, %v5969
      %5971 = vmatmul.f32.gmra.mxu0 %v5932
      %v5972 = vpop.f32.mrf.mxu0
      %v5973 = vadd.f32 0.0, %v5972
      %5974 = vdwg.mxu0
      %s5975 = scalar_lea.vmem %s5, 192
      %v5976 = vld [vmem:[%s5975] sm:$0xff]
      %v5977 = vld [vmem:[%s5975 + $0x8] sm:$0xff]
      %v5978 = vld [vmem:[%s5975 + $0x10] sm:$0xff]
      %v5979 = vld [vmem:[%s5975 + $0x18] sm:$0xff]
      %v5980 = vld [vmem:[%s5975 + $0x20] sm:$0xff]
      %v5981 = vld [vmem:[%s5975 + $0x28] sm:$0xff]
      %v5982 = vld [vmem:[%s5975 + $0x30] sm:$0xff]
      %v5983 = vld [vmem:[%s5975 + $0x38] sm:$0xff]
      %5984 = vrot.lane.b32.xlu0 %v1252, 104
      %v5985 = vpop.permute.xlu0 %5984
      %5986 = vrot.lane.b32.xlu0 %v1255, 104
      %v5987 = vpop.permute.xlu0 %5986
      %5988 = vrot.lane.b32.xlu0 %v1258, 104
      %v5989 = vpop.permute.xlu0 %5988
      %5990 = vrot.lane.b32.xlu0 %v1261, 104
      %v5991 = vpop.permute.xlu0 %5990
      %5992 = vrot.lane.b32.xlu0 %v1264, 104
      %v5993 = vpop.permute.xlu0 %5992
      %5994 = vrot.lane.b32.xlu0 %v1267, 104
      %v5995 = vpop.permute.xlu0 %5994
      %5996 = vrot.lane.b32.xlu0 %v1270, 104
      %v5997 = vpop.permute.xlu0 %5996
      %5998 = vrot.lane.b32.xlu0 %v1273, 104
      %v5999 = vpop.permute.xlu0 %5998
      %6000 = vrot.lane.b32.xlu0 %v1252, 72
      %v6001 = vpop.permute.xlu0 %6000
      %6002 = vrot.lane.b32.xlu0 %v1255, 72
      %v6003 = vpop.permute.xlu0 %6002
      %6004 = vrot.lane.b32.xlu0 %v1258, 72
      %v6005 = vpop.permute.xlu0 %6004
      %6006 = vrot.lane.b32.xlu0 %v1261, 72
      %v6007 = vpop.permute.xlu0 %6006
      %6008 = vrot.lane.b32.xlu0 %v1264, 72
      %v6009 = vpop.permute.xlu0 %6008
      %6010 = vrot.lane.b32.xlu0 %v1267, 72
      %v6011 = vpop.permute.xlu0 %6010
      %6012 = vrot.lane.b32.xlu0 %v1270, 72
      %v6013 = vpop.permute.xlu0 %6012
      %6014 = vrot.lane.b32.xlu0 %v1273, 72
      %v6015 = vpop.permute.xlu0 %6014
      %v6016 = vsel %vm1379, %v5985, 0
      %v6018 = vsel %vm1379, %v5987, 0
      %v6020 = vsel %vm1379, %v5989, 0
      %v6022 = vsel %vm1379, %v5991, 0
      %v6024 = vsel %vm1379, %v5993, 0
      %v6026 = vsel %vm1379, %v5995, 0
      %v6028 = vsel %vm1379, %v5997, 0
      %v6030 = vsel %vm1379, %v5999, 0
      %v6032 = vsel %vm1379, %v6001, 0
      %v6034 = vsel %vm1379, %v6003, 0
      %v6036 = vsel %vm1379, %v6005, 0
      %v6038 = vsel %vm1379, %v6007, 0
      %v6040 = vsel %vm1379, %v6009, 0
      %v6042 = vsel %vm1379, %v6011, 0
      %v6044 = vsel %vm1379, %v6013, 0
      %v6046 = vsel %vm1379, %v6015, 0
      %6048 = vmatpush.xpose.msra.mxu0 0.0
      %6049 = vmatpush.xpose.msra.mxu0 0.0
      %6050 = vmatpush.xpose.msra.mxu0 0.0
      %6051 = vmatpush.xpose.msra.mxu0 0.0
      %6052 = vmatpush.xpose.msra.mxu0 0.0
      %6053 = vmatpush.xpose.msra.mxu0 0.0
      %6054 = vmatpush.xpose.msra.mxu0 0.0
      %6055 = vmatpush.xpose.msra.mxu0 0.0
      %6056 = vmatpush.xpose.msra.mxu0 %v6046
      %6057 = vmatpush.xpose.msra.mxu0 %v6044
      %6058 = vmatpush.xpose.msra.mxu0 %v6042
      %6059 = vmatpush.xpose.msra.mxu0 %v6040
      %6060 = vmatpush.xpose.msra.mxu0 %v6038
      %6061 = vmatpush.xpose.msra.mxu0 %v6036
      %6062 = vmatpush.xpose.msra.mxu0 %v6034
      %6063 = vmatpush.xpose.msra.mxu0 %v6032
      %6064 = vmatmul.f32.gmra.mxu0 %v6016
      %v6065 = vpop.f32.mrf.mxu0
      %v6066 = vadd.f32 %v5976, %v6065
      %6067 = vmatmul.f32.gmra.mxu0 %v6018
      %v6068 = vpop.f32.mrf.mxu0
      %v6069 = vadd.f32 %v5977, %v6068
      %6070 = vmatmul.f32.gmra.mxu0 %v6020
      %v6071 = vpop.f32.mrf.mxu0
      %v6072 = vadd.f32 %v5978, %v6071
      %6073 = vmatmul.f32.gmra.mxu0 %v6022
      %v6074 = vpop.f32.mrf.mxu0
      %v6075 = vadd.f32 %v5979, %v6074
      %6076 = vmatmul.f32.gmra.mxu0 %v6024
      %v6077 = vpop.f32.mrf.mxu0
      %v6078 = vadd.f32 %v5980, %v6077
      %6079 = vmatmul.f32.gmra.mxu0 %v6026
      %v6080 = vpop.f32.mrf.mxu0
      %v6081 = vadd.f32 %v5981, %v6080
      %6082 = vmatmul.f32.gmra.mxu0 %v6028
      %v6083 = vpop.f32.mrf.mxu0
      %v6084 = vadd.f32 %v5982, %v6083
      %6085 = vmatmul.f32.gmra.mxu0 %v6030
      %v6086 = vpop.f32.mrf.mxu0
      %v6087 = vadd.f32 %v5983, %v6086
      %6088 = vdwg.mxu0
      %6089 = vrot.lane.b32.xlu0 %v1276, 104
      %v6090 = vpop.permute.xlu0 %6089
      %6091 = vrot.lane.b32.xlu0 %v1279, 104
      %v6092 = vpop.permute.xlu0 %6091
      %6093 = vrot.lane.b32.xlu0 %v1282, 104
      %v6094 = vpop.permute.xlu0 %6093
      %6095 = vrot.lane.b32.xlu0 %v1285, 104
      %v6096 = vpop.permute.xlu0 %6095
      %6097 = vrot.lane.b32.xlu0 %v1288, 104
      %v6098 = vpop.permute.xlu0 %6097
      %6099 = vrot.lane.b32.xlu0 %v1291, 104
      %v6100 = vpop.permute.xlu0 %6099
      %6101 = vrot.lane.b32.xlu0 %v1294, 104
      %v6102 = vpop.permute.xlu0 %6101
      %6103 = vrot.lane.b32.xlu0 %v1297, 104
      %v6104 = vpop.permute.xlu0 %6103
      %6105 = vrot.lane.b32.xlu0 %v1276, 72
      %v6106 = vpop.permute.xlu0 %6105
      %6107 = vrot.lane.b32.xlu0 %v1279, 72
      %v6108 = vpop.permute.xlu0 %6107
      %6109 = vrot.lane.b32.xlu0 %v1282, 72
      %v6110 = vpop.permute.xlu0 %6109
      %6111 = vrot.lane.b32.xlu0 %v1285, 72
      %v6112 = vpop.permute.xlu0 %6111
      %6113 = vrot.lane.b32.xlu0 %v1288, 72
      %v6114 = vpop.permute.xlu0 %6113
      %6115 = vrot.lane.b32.xlu0 %v1291, 72
      %v6116 = vpop.permute.xlu0 %6115
      %6117 = vrot.lane.b32.xlu0 %v1294, 72
      %v6118 = vpop.permute.xlu0 %6117
      %6119 = vrot.lane.b32.xlu0 %v1297, 72
      %v6120 = vpop.permute.xlu0 %6119
      %v6121 = vsel %vm1379, %v6090, 0
      %v6123 = vsel %vm1379, %v6092, 0
      %v6125 = vsel %vm1379, %v6094, 0
      %v6127 = vsel %vm1379, %v6096, 0
      %v6129 = vsel %vm1379, %v6098, 0
      %v6131 = vsel %vm1379, %v6100, 0
      %v6133 = vsel %vm1379, %v6102, 0
      %v6135 = vsel %vm1379, %v6104, 0
      %v6137 = vsel %vm1379, %v6106, 0
      %v6139 = vsel %vm1379, %v6108, 0
      %v6141 = vsel %vm1379, %v6110, 0
      %v6143 = vsel %vm1379, %v6112, 0
      %v6145 = vsel %vm1379, %v6114, 0
      %v6147 = vsel %vm1379, %v6116, 0
      %v6149 = vsel %vm1379, %v6118, 0
      %v6151 = vsel %vm1379, %v6120, 0
      %6153 = vmatpush.xpose.msra.mxu0 0.0
      %6154 = vmatpush.xpose.msra.mxu0 0.0
      %6155 = vmatpush.xpose.msra.mxu0 0.0
      %6156 = vmatpush.xpose.msra.mxu0 0.0
      %6157 = vmatpush.xpose.msra.mxu0 0.0
      %6158 = vmatpush.xpose.msra.mxu0 0.0
      %6159 = vmatpush.xpose.msra.mxu0 0.0
      %6160 = vmatpush.xpose.msra.mxu0 0.0
      %6161 = vmatpush.xpose.msra.mxu0 %v6151
      %6162 = vmatpush.xpose.msra.mxu0 %v6149
      %6163 = vmatpush.xpose.msra.mxu0 %v6147
      %6164 = vmatpush.xpose.msra.mxu0 %v6145
      %6165 = vmatpush.xpose.msra.mxu0 %v6143
      %6166 = vmatpush.xpose.msra.mxu0 %v6141
      %6167 = vmatpush.xpose.msra.mxu0 %v6139
      %6168 = vmatpush.xpose.msra.mxu0 %v6137
      %6169 = vmatmul.f32.gmra.mxu0 %v6121
      %v6170 = vpop.f32.mrf.mxu0
      %v6171 = vadd.f32 %v5976, %v6170
      %6172 = vmatmul.f32.gmra.mxu0 %v6123
      %v6173 = vpop.f32.mrf.mxu0
      %v6174 = vadd.f32 %v5977, %v6173
      %6175 = vmatmul.f32.gmra.mxu0 %v6125
      %v6176 = vpop.f32.mrf.mxu0
      %v6177 = vadd.f32 %v5978, %v6176
      %6178 = vmatmul.f32.gmra.mxu0 %v6127
      %v6179 = vpop.f32.mrf.mxu0
      %v6180 = vadd.f32 %v5979, %v6179
      %6181 = vmatmul.f32.gmra.mxu0 %v6129
      %v6182 = vpop.f32.mrf.mxu0
      %v6183 = vadd.f32 %v5980, %v6182
      %6184 = vmatmul.f32.gmra.mxu0 %v6131
      %v6185 = vpop.f32.mrf.mxu0
      %v6186 = vadd.f32 %v5981, %v6185
      %6187 = vmatmul.f32.gmra.mxu0 %v6133
      %v6188 = vpop.f32.mrf.mxu0
      %v6189 = vadd.f32 %v5982, %v6188
      %6190 = vmatmul.f32.gmra.mxu0 %v6135
      %v6191 = vpop.f32.mrf.mxu0
      %v6192 = vadd.f32 %v5983, %v6191
      %6193 = vdwg.mxu0
      %6194 = vrot.lane.b32.xlu0 %v1300, 104
      %v6195 = vpop.permute.xlu0 %6194
      %6196 = vrot.lane.b32.xlu0 %v1303, 104
      %v6197 = vpop.permute.xlu0 %6196
      %6198 = vrot.lane.b32.xlu0 %v1306, 104
      %v6199 = vpop.permute.xlu0 %6198
      %6200 = vrot.lane.b32.xlu0 %v1309, 104
      %v6201 = vpop.permute.xlu0 %6200
      %6202 = vrot.lane.b32.xlu0 %v1312, 104
      %v6203 = vpop.permute.xlu0 %6202
      %6204 = vrot.lane.b32.xlu0 %v1315, 104
      %v6205 = vpop.permute.xlu0 %6204
      %6206 = vrot.lane.b32.xlu0 %v1318, 104
      %v6207 = vpop.permute.xlu0 %6206
      %6208 = vrot.lane.b32.xlu0 %v1321, 104
      %v6209 = vpop.permute.xlu0 %6208
      %6210 = vrot.lane.b32.xlu0 %v1300, 72
      %v6211 = vpop.permute.xlu0 %6210
      %6212 = vrot.lane.b32.xlu0 %v1303, 72
      %v6213 = vpop.permute.xlu0 %6212
      %6214 = vrot.lane.b32.xlu0 %v1306, 72
      %v6215 = vpop.permute.xlu0 %6214
      %6216 = vrot.lane.b32.xlu0 %v1309, 72
      %v6217 = vpop.permute.xlu0 %6216
      %6218 = vrot.lane.b32.xlu0 %v1312, 72
      %v6219 = vpop.permute.xlu0 %6218
      %6220 = vrot.lane.b32.xlu0 %v1315, 72
      %v6221 = vpop.permute.xlu0 %6220
      %6222 = vrot.lane.b32.xlu0 %v1318, 72
      %v6223 = vpop.permute.xlu0 %6222
      %6224 = vrot.lane.b32.xlu0 %v1321, 72
      %v6225 = vpop.permute.xlu0 %6224
      %v6226 = vsel %vm1379, %v6195, 0
      %v6228 = vsel %vm1379, %v6197, 0
      %v6230 = vsel %vm1379, %v6199, 0
      %v6232 = vsel %vm1379, %v6201, 0
      %v6234 = vsel %vm1379, %v6203, 0
      %v6236 = vsel %vm1379, %v6205, 0
      %v6238 = vsel %vm1379, %v6207, 0
      %v6240 = vsel %vm1379, %v6209, 0
      %v6242 = vsel %vm1379, %v6211, 0
      %v6244 = vsel %vm1379, %v6213, 0
      %v6246 = vsel %vm1379, %v6215, 0
      %v6248 = vsel %vm1379, %v6217, 0
      %v6250 = vsel %vm1379, %v6219, 0
      %v6252 = vsel %vm1379, %v6221, 0
      %v6254 = vsel %vm1379, %v6223, 0
      %v6256 = vsel %vm1379, %v6225, 0
      %6258 = vmatpush.xpose.msra.mxu0 0.0
      %6259 = vmatpush.xpose.msra.mxu0 0.0
      %6260 = vmatpush.xpose.msra.mxu0 0.0
      %6261 = vmatpush.xpose.msra.mxu0 0.0
      %6262 = vmatpush.xpose.msra.mxu0 0.0
      %6263 = vmatpush.xpose.msra.mxu0 0.0
      %6264 = vmatpush.xpose.msra.mxu0 0.0
      %6265 = vmatpush.xpose.msra.mxu0 0.0
      %6266 = vmatpush.xpose.msra.mxu0 %v6256
      %6267 = vmatpush.xpose.msra.mxu0 %v6254
      %6268 = vmatpush.xpose.msra.mxu0 %v6252
      %6269 = vmatpush.xpose.msra.mxu0 %v6250
      %6270 = vmatpush.xpose.msra.mxu0 %v6248
      %6271 = vmatpush.xpose.msra.mxu0 %v6246
      %6272 = vmatpush.xpose.msra.mxu0 %v6244
      %6273 = vmatpush.xpose.msra.mxu0 %v6242
      %6274 = vmatmul.f32.gmra.mxu0 %v6226
      %v6275 = vpop.f32.mrf.mxu0
      %v6276 = vadd.f32 %v5976, %v6275
      %6277 = vmatmul.f32.gmra.mxu0 %v6228
      %v6278 = vpop.f32.mrf.mxu0
      %v6279 = vadd.f32 %v5977, %v6278
      %6280 = vmatmul.f32.gmra.mxu0 %v6230
      %v6281 = vpop.f32.mrf.mxu0
      %v6282 = vadd.f32 %v5978, %v6281
      %6283 = vmatmul.f32.gmra.mxu0 %v6232
      %v6284 = vpop.f32.mrf.mxu0
      %v6285 = vadd.f32 %v5979, %v6284
      %6286 = vmatmul.f32.gmra.mxu0 %v6234
      %v6287 = vpop.f32.mrf.mxu0
      %v6288 = vadd.f32 %v5980, %v6287
      %6289 = vmatmul.f32.gmra.mxu0 %v6236
      %v6290 = vpop.f32.mrf.mxu0
      %v6291 = vadd.f32 %v5981, %v6290
      %6292 = vmatmul.f32.gmra.mxu0 %v6238
      %v6293 = vpop.f32.mrf.mxu0
      %v6294 = vadd.f32 %v5982, %v6293
      %6295 = vmatmul.f32.gmra.mxu0 %v6240
      %v6296 = vpop.f32.mrf.mxu0
      %v6297 = vadd.f32 %v5983, %v6296
      %6298 = vdwg.mxu0
      %6299 = vrot.lane.b32.xlu0 %v1324, 104
      %v6300 = vpop.permute.xlu0 %6299
      %6301 = vrot.lane.b32.xlu0 %v1327, 104
      %v6302 = vpop.permute.xlu0 %6301
      %6303 = vrot.lane.b32.xlu0 %v1330, 104
      %v6304 = vpop.permute.xlu0 %6303
      %6305 = vrot.lane.b32.xlu0 %v1333, 104
      %v6306 = vpop.permute.xlu0 %6305
      %6307 = vrot.lane.b32.xlu0 %v1336, 104
      %v6308 = vpop.permute.xlu0 %6307
      %6309 = vrot.lane.b32.xlu0 %v1339, 104
      %v6310 = vpop.permute.xlu0 %6309
      %6311 = vrot.lane.b32.xlu0 %v1342, 104
      %v6312 = vpop.permute.xlu0 %6311
      %6313 = vrot.lane.b32.xlu0 %v1345, 104
      %v6314 = vpop.permute.xlu0 %6313
      %6315 = vrot.lane.b32.xlu0 %v1324, 72
      %v6316 = vpop.permute.xlu0 %6315
      %6317 = vrot.lane.b32.xlu0 %v1327, 72
      %v6318 = vpop.permute.xlu0 %6317
      %6319 = vrot.lane.b32.xlu0 %v1330, 72
      %v6320 = vpop.permute.xlu0 %6319
      %6321 = vrot.lane.b32.xlu0 %v1333, 72
      %v6322 = vpop.permute.xlu0 %6321
      %6323 = vrot.lane.b32.xlu0 %v1336, 72
      %v6324 = vpop.permute.xlu0 %6323
      %6325 = vrot.lane.b32.xlu0 %v1339, 72
      %v6326 = vpop.permute.xlu0 %6325
      %6327 = vrot.lane.b32.xlu0 %v1342, 72
      %v6328 = vpop.permute.xlu0 %6327
      %6329 = vrot.lane.b32.xlu0 %v1345, 72
      %v6330 = vpop.permute.xlu0 %6329
      %v6331 = vsel %vm1379, %v6300, 0
      %v6333 = vsel %vm1379, %v6302, 0
      %v6335 = vsel %vm1379, %v6304, 0
      %v6337 = vsel %vm1379, %v6306, 0
      %v6339 = vsel %vm1379, %v6308, 0
      %v6341 = vsel %vm1379, %v6310, 0
      %v6343 = vsel %vm1379, %v6312, 0
      %v6345 = vsel %vm1379, %v6314, 0
      %v6347 = vsel %vm1379, %v6316, 0
      %v6349 = vsel %vm1379, %v6318, 0
      %v6351 = vsel %vm1379, %v6320, 0
      %v6353 = vsel %vm1379, %v6322, 0
      %v6355 = vsel %vm1379, %v6324, 0
      %v6357 = vsel %vm1379, %v6326, 0
      %v6359 = vsel %vm1379, %v6328, 0
      %v6361 = vsel %vm1379, %v6330, 0
      %6363 = vmatpush.xpose.msra.mxu0 0.0
      %6364 = vmatpush.xpose.msra.mxu0 0.0
      %6365 = vmatpush.xpose.msra.mxu0 0.0
      %6366 = vmatpush.xpose.msra.mxu0 0.0
      %6367 = vmatpush.xpose.msra.mxu0 0.0
      %6368 = vmatpush.xpose.msra.mxu0 0.0
      %6369 = vmatpush.xpose.msra.mxu0 0.0
      %6370 = vmatpush.xpose.msra.mxu0 0.0
      %6371 = vmatpush.xpose.msra.mxu0 %v6361
      %6372 = vmatpush.xpose.msra.mxu0 %v6359
      %6373 = vmatpush.xpose.msra.mxu0 %v6357
      %6374 = vmatpush.xpose.msra.mxu0 %v6355
      %6375 = vmatpush.xpose.msra.mxu0 %v6353
      %6376 = vmatpush.xpose.msra.mxu0 %v6351
      %6377 = vmatpush.xpose.msra.mxu0 %v6349
      %6378 = vmatpush.xpose.msra.mxu0 %v6347
      %6379 = vmatmul.f32.gmra.mxu0 %v6331
      %v6380 = vpop.f32.mrf.mxu0
      %v6381 = vadd.f32 %v5976, %v6380
      %6382 = vmatmul.f32.gmra.mxu0 %v6333
      %v6383 = vpop.f32.mrf.mxu0
      %v6384 = vadd.f32 %v5977, %v6383
      %6385 = vmatmul.f32.gmra.mxu0 %v6335
      %v6386 = vpop.f32.mrf.mxu0
      %v6387 = vadd.f32 %v5978, %v6386
      %6388 = vmatmul.f32.gmra.mxu0 %v6337
      %v6389 = vpop.f32.mrf.mxu0
      %v6390 = vadd.f32 %v5979, %v6389
      %6391 = vmatmul.f32.gmra.mxu0 %v6339
      %v6392 = vpop.f32.mrf.mxu0
      %v6393 = vadd.f32 %v5980, %v6392
      %6394 = vmatmul.f32.gmra.mxu0 %v6341
      %v6395 = vpop.f32.mrf.mxu0
      %v6396 = vadd.f32 %v5981, %v6395
      %6397 = vmatmul.f32.gmra.mxu0 %v6343
      %v6398 = vpop.f32.mrf.mxu0
      %v6399 = vadd.f32 %v5982, %v6398
      %6400 = vmatmul.f32.gmra.mxu0 %v6345
      %v6401 = vpop.f32.mrf.mxu0
      %v6402 = vadd.f32 %v5983, %v6401
      %6403 = vdwg.mxu0
      %v6404 = vsel %vm1744, %v6066, -inf
      %6405 = vmax.xlane.f32.xlu0 %v6404
      %v6406 = vpop.xlane.xlu0 %6405
      %v6407 = vsel %vm1744, %v6069, -inf
      %6408 = vmax.xlane.f32.xlu0 %v6407
      %v6409 = vpop.xlane.xlu0 %6408
      %v6410 = vsel %vm1744, %v6072, -inf
      %6411 = vmax.xlane.f32.xlu0 %v6410
      %v6412 = vpop.xlane.xlu0 %6411
      %v6413 = vsel %vm1744, %v6075, -inf
      %6414 = vmax.xlane.f32.xlu0 %v6413
      %v6415 = vpop.xlane.xlu0 %6414
      %v6416 = vsel %vm1744, %v6078, -inf
      %6417 = vmax.xlane.f32.xlu0 %v6416
      %v6418 = vpop.xlane.xlu0 %6417
      %v6419 = vsel %vm1744, %v6081, -inf
      %6420 = vmax.xlane.f32.xlu0 %v6419
      %v6421 = vpop.xlane.xlu0 %6420
      %v6422 = vsel %vm1744, %v6084, -inf
      %6423 = vmax.xlane.f32.xlu0 %v6422
      %v6424 = vpop.xlane.xlu0 %6423
      %v6425 = vsel %vm1744, %v6087, -inf
      %6426 = vmax.xlane.f32.xlu0 %v6425
      %v6427 = vpop.xlane.xlu0 %6426
      %v6428 = vsel %vm1744, %v6171, -inf
      %6429 = vmax.xlane.f32.xlu0 %v6428
      %v6430 = vpop.xlane.xlu0 %6429
      %v6431 = vsel %vm1744, %v6174, -inf
      %6432 = vmax.xlane.f32.xlu0 %v6431
      %v6433 = vpop.xlane.xlu0 %6432
      %v6434 = vsel %vm1744, %v6177, -inf
      %6435 = vmax.xlane.f32.xlu0 %v6434
      %v6436 = vpop.xlane.xlu0 %6435
      %v6437 = vsel %vm1744, %v6180, -inf
      %6438 = vmax.xlane.f32.xlu0 %v6437
      %v6439 = vpop.xlane.xlu0 %6438
      %v6440 = vsel %vm1744, %v6183, -inf
      %6441 = vmax.xlane.f32.xlu0 %v6440
      %v6442 = vpop.xlane.xlu0 %6441
      %v6443 = vsel %vm1744, %v6186, -inf
      %6444 = vmax.xlane.f32.xlu0 %v6443
      %v6445 = vpop.xlane.xlu0 %6444
      %v6446 = vsel %vm1744, %v6189, -inf
      %6447 = vmax.xlane.f32.xlu0 %v6446
      %v6448 = vpop.xlane.xlu0 %6447
      %v6449 = vsel %vm1744, %v6192, -inf
      %6450 = vmax.xlane.f32.xlu0 %v6449
      %v6451 = vpop.xlane.xlu0 %6450
      %v6452 = vsel %vm1744, %v6276, -inf
      %6453 = vmax.xlane.f32.xlu0 %v6452
      %v6454 = vpop.xlane.xlu0 %6453
      %v6455 = vsel %vm1744, %v6279, -inf
      %6456 = vmax.xlane.f32.xlu0 %v6455
      %v6457 = vpop.xlane.xlu0 %6456
      %v6458 = vsel %vm1744, %v6282, -inf
      %6459 = vmax.xlane.f32.xlu0 %v6458
      %v6460 = vpop.xlane.xlu0 %6459
      %v6461 = vsel %vm1744, %v6285, -inf
      %6462 = vmax.xlane.f32.xlu0 %v6461
      %v6463 = vpop.xlane.xlu0 %6462
      %v6464 = vsel %vm1744, %v6288, -inf
      %6465 = vmax.xlane.f32.xlu0 %v6464
      %v6466 = vpop.xlane.xlu0 %6465
      %v6467 = vsel %vm1744, %v6291, -inf
      %6468 = vmax.xlane.f32.xlu0 %v6467
      %v6469 = vpop.xlane.xlu0 %6468
      %v6470 = vsel %vm1744, %v6294, -inf
      %6471 = vmax.xlane.f32.xlu0 %v6470
      %v6472 = vpop.xlane.xlu0 %6471
      %v6473 = vsel %vm1744, %v6297, -inf
      %6474 = vmax.xlane.f32.xlu0 %v6473
      %v6475 = vpop.xlane.xlu0 %6474
      %v6476 = vsel %vm1744, %v6381, -inf
      %6477 = vmax.xlane.f32.xlu0 %v6476
      %v6478 = vpop.xlane.xlu0 %6477
      %v6479 = vsel %vm1744, %v6384, -inf
      %6480 = vmax.xlane.f32.xlu0 %v6479
      %v6481 = vpop.xlane.xlu0 %6480
      %v6482 = vsel %vm1744, %v6387, -inf
      %6483 = vmax.xlane.f32.xlu0 %v6482
      %v6484 = vpop.xlane.xlu0 %6483
      %v6485 = vsel %vm1744, %v6390, -inf
      %6486 = vmax.xlane.f32.xlu0 %v6485
      %v6487 = vpop.xlane.xlu0 %6486
      %v6488 = vsel %vm1744, %v6393, -inf
      %6489 = vmax.xlane.f32.xlu0 %v6488
      %v6490 = vpop.xlane.xlu0 %6489
      %v6491 = vsel %vm1744, %v6396, -inf
      %6492 = vmax.xlane.f32.xlu0 %v6491
      %v6493 = vpop.xlane.xlu0 %6492
      %v6494 = vsel %vm1744, %v6399, -inf
      %6495 = vmax.xlane.f32.xlu0 %v6494
      %v6496 = vpop.xlane.xlu0 %6495
      %v6497 = vsel %vm1744, %v6402, -inf
      %6498 = vmax.xlane.f32.xlu0 %v6497
      %v6499 = vpop.xlane.xlu0 %6498
      %v6500 = vsub.f32 %v6066, %v6406
      %v6501 = vsub.f32 %v6069, %v6409
      %v6502 = vsub.f32 %v6072, %v6412
      %v6503 = vsub.f32 %v6075, %v6415
      %v6504 = vsub.f32 %v6078, %v6418
      %v6505 = vsub.f32 %v6081, %v6421
      %v6506 = vsub.f32 %v6084, %v6424
      %v6507 = vsub.f32 %v6087, %v6427
      %v6508 = vsub.f32 %v6171, %v6430
      %v6509 = vsub.f32 %v6174, %v6433
      %v6510 = vsub.f32 %v6177, %v6436
      %v6511 = vsub.f32 %v6180, %v6439
      %v6512 = vsub.f32 %v6183, %v6442
      %v6513 = vsub.f32 %v6186, %v6445
      %v6514 = vsub.f32 %v6189, %v6448
      %v6515 = vsub.f32 %v6192, %v6451
      %v6516 = vsub.f32 %v6276, %v6454
      %v6517 = vsub.f32 %v6279, %v6457
      %v6518 = vsub.f32 %v6282, %v6460
      %v6519 = vsub.f32 %v6285, %v6463
      %v6520 = vsub.f32 %v6288, %v6466
      %v6521 = vsub.f32 %v6291, %v6469
      %v6522 = vsub.f32 %v6294, %v6472
      %v6523 = vsub.f32 %v6297, %v6475
      %v6524 = vsub.f32 %v6381, %v6478
      %v6525 = vsub.f32 %v6384, %v6481
      %v6526 = vsub.f32 %v6387, %v6484
      %v6527 = vsub.f32 %v6390, %v6487
      %v6528 = vsub.f32 %v6393, %v6490
      %v6529 = vsub.f32 %v6396, %v6493
      %v6530 = vsub.f32 %v6399, %v6496
      %v6531 = vsub.f32 %v6402, %v6499
      %v6532 = vmul.f32 %v6500, 1.442695
      %v6533 = vpow.pop %v6532
      %v6534 = vmul.f32 %v6501, 1.442695
      %v6535 = vpow.pop %v6534
      %v6536 = vmul.f32 %v6502, 1.442695
      %v6537 = vpow.pop %v6536
      %v6538 = vmul.f32 %v6503, 1.442695
      %v6539 = vpow.pop %v6538
      %v6540 = vmul.f32 %v6504, 1.442695
      %v6541 = vpow.pop %v6540
      %v6542 = vmul.f32 %v6505, 1.442695
      %v6543 = vpow.pop %v6542
      %v6544 = vmul.f32 %v6506, 1.442695
      %v6545 = vpow.pop %v6544
      %v6546 = vmul.f32 %v6507, 1.442695
      %v6547 = vpow.pop %v6546
      %v6548 = vmul.f32 %v6508, 1.442695
      %v6549 = vpow.pop %v6548
      %v6550 = vmul.f32 %v6509, 1.442695
      %v6551 = vpow.pop %v6550
      %v6552 = vmul.f32 %v6510, 1.442695
      %v6553 = vpow.pop %v6552
      %v6554 = vmul.f32 %v6511, 1.442695
      %v6555 = vpow.pop %v6554
      %v6556 = vmul.f32 %v6512, 1.442695
      %v6557 = vpow.pop %v6556
      %v6558 = vmul.f32 %v6513, 1.442695
      %v6559 = vpow.pop %v6558
      %v6560 = vmul.f32 %v6514, 1.442695
      %v6561 = vpow.pop %v6560
      %v6562 = vmul.f32 %v6515, 1.442695
      %v6563 = vpow.pop %v6562
      %v6564 = vmul.f32 %v6516, 1.442695
      %v6565 = vpow.pop %v6564
      %v6566 = vmul.f32 %v6517, 1.442695
      %v6567 = vpow.pop %v6566
      %v6568 = vmul.f32 %v6518, 1.442695
      %v6569 = vpow.pop %v6568
      %v6570 = vmul.f32 %v6519, 1.442695
      %v6571 = vpow.pop %v6570
      %v6572 = vmul.f32 %v6520, 1.442695
      %v6573 = vpow.pop %v6572
      %v6574 = vmul.f32 %v6521, 1.442695
      %v6575 = vpow.pop %v6574
      %v6576 = vmul.f32 %v6522, 1.442695
      %v6577 = vpow.pop %v6576
      %v6578 = vmul.f32 %v6523, 1.442695
      %v6579 = vpow.pop %v6578
      %v6580 = vmul.f32 %v6524, 1.442695
      %v6581 = vpow.pop %v6580
      %v6582 = vmul.f32 %v6525, 1.442695
      %v6583 = vpow.pop %v6582
      %v6584 = vmul.f32 %v6526, 1.442695
      %v6585 = vpow.pop %v6584
      %v6586 = vmul.f32 %v6527, 1.442695
      %v6587 = vpow.pop %v6586
      %v6588 = vmul.f32 %v6528, 1.442695
      %v6589 = vpow.pop %v6588
      %v6590 = vmul.f32 %v6529, 1.442695
      %v6591 = vpow.pop %v6590
      %v6592 = vmul.f32 %v6530, 1.442695
      %v6593 = vpow.pop %v6592
      %v6594 = vmul.f32 %v6531, 1.442695
      %v6595 = vpow.pop %v6594
      %v6596 = vsel %vm1744, %v6533, 0.0
      %6597 = vadd.xlane.f32.xlu0 %v6596
      %v6598 = vpop.xlane.xlu0 %6597
      %v6599 = vsel %vm1744, %v6535, 0.0
      %6600 = vadd.xlane.f32.xlu0 %v6599
      %v6601 = vpop.xlane.xlu0 %6600
      %v6602 = vsel %vm1744, %v6537, 0.0
      %6603 = vadd.xlane.f32.xlu0 %v6602
      %v6604 = vpop.xlane.xlu0 %6603
      %v6605 = vsel %vm1744, %v6539, 0.0
      %6606 = vadd.xlane.f32.xlu0 %v6605
      %v6607 = vpop.xlane.xlu0 %6606
      %v6608 = vsel %vm1744, %v6541, 0.0
      %6609 = vadd.xlane.f32.xlu0 %v6608
      %v6610 = vpop.xlane.xlu0 %6609
      %v6611 = vsel %vm1744, %v6543, 0.0
      %6612 = vadd.xlane.f32.xlu0 %v6611
      %v6613 = vpop.xlane.xlu0 %6612
      %v6614 = vsel %vm1744, %v6545, 0.0
      %6615 = vadd.xlane.f32.xlu0 %v6614
      %v6616 = vpop.xlane.xlu0 %6615
      %v6617 = vsel %vm1744, %v6547, 0.0
      %6618 = vadd.xlane.f32.xlu0 %v6617
      %v6619 = vpop.xlane.xlu0 %6618
      %v6620 = vsel %vm1744, %v6549, 0.0
      %6621 = vadd.xlane.f32.xlu0 %v6620
      %v6622 = vpop.xlane.xlu0 %6621
      %v6623 = vsel %vm1744, %v6551, 0.0
      %6624 = vadd.xlane.f32.xlu0 %v6623
      %v6625 = vpop.xlane.xlu0 %6624
      %v6626 = vsel %vm1744, %v6553, 0.0
      %6627 = vadd.xlane.f32.xlu0 %v6626
      %v6628 = vpop.xlane.xlu0 %6627
      %v6629 = vsel %vm1744, %v6555, 0.0
      %6630 = vadd.xlane.f32.xlu0 %v6629
      %v6631 = vpop.xlane.xlu0 %6630
      %v6632 = vsel %vm1744, %v6557, 0.0
      %6633 = vadd.xlane.f32.xlu0 %v6632
      %v6634 = vpop.xlane.xlu0 %6633
      %v6635 = vsel %vm1744, %v6559, 0.0
      %6636 = vadd.xlane.f32.xlu0 %v6635
      %v6637 = vpop.xlane.xlu0 %6636
      %v6638 = vsel %vm1744, %v6561, 0.0
      %6639 = vadd.xlane.f32.xlu0 %v6638
      %v6640 = vpop.xlane.xlu0 %6639
      %v6641 = vsel %vm1744, %v6563, 0.0
      %6642 = vadd.xlane.f32.xlu0 %v6641
      %v6643 = vpop.xlane.xlu0 %6642
      %v6644 = vsel %vm1744, %v6565, 0.0
      %6645 = vadd.xlane.f32.xlu0 %v6644
      %v6646 = vpop.xlane.xlu0 %6645
      %v6647 = vsel %vm1744, %v6567, 0.0
      %6648 = vadd.xlane.f32.xlu0 %v6647
      %v6649 = vpop.xlane.xlu0 %6648
      %v6650 = vsel %vm1744, %v6569, 0.0
      %6651 = vadd.xlane.f32.xlu0 %v6650
      %v6652 = vpop.xlane.xlu0 %6651
      %v6653 = vsel %vm1744, %v6571, 0.0
      %6654 = vadd.xlane.f32.xlu0 %v6653
      %v6655 = vpop.xlane.xlu0 %6654
      %v6656 = vsel %vm1744, %v6573, 0.0
      %6657 = vadd.xlane.f32.xlu0 %v6656
      %v6658 = vpop.xlane.xlu0 %6657
      %v6659 = vsel %vm1744, %v6575, 0.0
      %6660 = vadd.xlane.f32.xlu0 %v6659
      %v6661 = vpop.xlane.xlu0 %6660
      %v6662 = vsel %vm1744, %v6577, 0.0
      %6663 = vadd.xlane.f32.xlu0 %v6662
      %v6664 = vpop.xlane.xlu0 %6663
      %v6665 = vsel %vm1744, %v6579, 0.0
      %6666 = vadd.xlane.f32.xlu0 %v6665
      %v6667 = vpop.xlane.xlu0 %6666
      %v6668 = vsel %vm1744, %v6581, 0.0
      %6669 = vadd.xlane.f32.xlu0 %v6668
      %v6670 = vpop.xlane.xlu0 %6669
      %v6671 = vsel %vm1744, %v6583, 0.0
      %6672 = vadd.xlane.f32.xlu0 %v6671
      %v6673 = vpop.xlane.xlu0 %6672
      %v6674 = vsel %vm1744, %v6585, 0.0
      %6675 = vadd.xlane.f32.xlu0 %v6674
      %v6676 = vpop.xlane.xlu0 %6675
      %v6677 = vsel %vm1744, %v6587, 0.0
      %6678 = vadd.xlane.f32.xlu0 %v6677
      %v6679 = vpop.xlane.xlu0 %6678
      %v6680 = vsel %vm1744, %v6589, 0.0
      %6681 = vadd.xlane.f32.xlu0 %v6680
      %v6682 = vpop.xlane.xlu0 %6681
      %v6683 = vsel %vm1744, %v6591, 0.0
      %6684 = vadd.xlane.f32.xlu0 %v6683
      %v6685 = vpop.xlane.xlu0 %6684
      %v6686 = vsel %vm1744, %v6593, 0.0
      %6687 = vadd.xlane.f32.xlu0 %v6686
      %v6688 = vpop.xlane.xlu0 %6687
      %v6689 = vsel %vm1744, %v6595, 0.0
      %6690 = vadd.xlane.f32.xlu0 %v6689
      %v6691 = vpop.xlane.xlu0 %6690
      %v6692 = vrcp.pop %v6598
      %v6693 = vmul.f32 %v6598, %v6692
      %v6694 = vsub.f32 1.0, %v6693
      %v6695 = vmul.f32 %v6692, %v6694
      %v6696 = vadd.f32 %v6692, %v6695
      %vm6697 = vweird.f32 %v6598
      %vm6698 = vweird.f32 %v6692
      %vm6699 = vmor %vm6697, %vm6698
      %v6700 = vsel %vm6699, %v6692, %v6696
      %v6701 = vand.u32 2147483647, %v6598
      %vm6702 = vcmp.eq.f32.partialorder %v6701, 8.507059e+37
      %v6703 = vand.u32 %v6598, 2147483648
      %v6704 = vor.u32 1.1754944e-38, %v6703
      %v6705 = vsel %vm6702, %v6704, %v6700
      %v6706 = vrcp.pop %v6601
      %v6707 = vmul.f32 %v6601, %v6706
      %v6708 = vsub.f32 1.0, %v6707
      %v6709 = vmul.f32 %v6706, %v6708
      %v6710 = vadd.f32 %v6706, %v6709
      %vm6711 = vweird.f32 %v6601
      %vm6712 = vweird.f32 %v6706
      %vm6713 = vmor %vm6711, %vm6712
      %v6714 = vsel %vm6713, %v6706, %v6710
      %v6715 = vand.u32 2147483647, %v6601
      %vm6716 = vcmp.eq.f32.partialorder %v6715, 8.507059e+37
      %v6717 = vand.u32 %v6601, 2147483648
      %v6718 = vor.u32 1.1754944e-38, %v6717
      %v6719 = vsel %vm6716, %v6718, %v6714
      %v6720 = vrcp.pop %v6604
      %v6721 = vmul.f32 %v6604, %v6720
      %v6722 = vsub.f32 1.0, %v6721
      %v6723 = vmul.f32 %v6720, %v6722
      %v6724 = vadd.f32 %v6720, %v6723
      %vm6725 = vweird.f32 %v6604
      %vm6726 = vweird.f32 %v6720
      %vm6727 = vmor %vm6725, %vm6726
      %v6728 = vsel %vm6727, %v6720, %v6724
      %v6729 = vand.u32 2147483647, %v6604
      %vm6730 = vcmp.eq.f32.partialorder %v6729, 8.507059e+37
      %v6731 = vand.u32 %v6604, 2147483648
      %v6732 = vor.u32 1.1754944e-38, %v6731
      %v6733 = vsel %vm6730, %v6732, %v6728
      %v6734 = vrcp.pop %v6607
      %v6735 = vmul.f32 %v6607, %v6734
      %v6736 = vsub.f32 1.0, %v6735
      %v6737 = vmul.f32 %v6734, %v6736
      %v6738 = vadd.f32 %v6734, %v6737
      %vm6739 = vweird.f32 %v6607
      %vm6740 = vweird.f32 %v6734
      %vm6741 = vmor %vm6739, %vm6740
      %v6742 = vsel %vm6741, %v6734, %v6738
      %v6743 = vand.u32 2147483647, %v6607
      %vm6744 = vcmp.eq.f32.partialorder %v6743, 8.507059e+37
      %v6745 = vand.u32 %v6607, 2147483648
      %v6746 = vor.u32 1.1754944e-38, %v6745
      %v6747 = vsel %vm6744, %v6746, %v6742
      %v6748 = vrcp.pop %v6610
      %v6749 = vmul.f32 %v6610, %v6748
      %v6750 = vsub.f32 1.0, %v6749
      %v6751 = vmul.f32 %v6748, %v6750
      %v6752 = vadd.f32 %v6748, %v6751
      %vm6753 = vweird.f32 %v6610
      %vm6754 = vweird.f32 %v6748
      %vm6755 = vmor %vm6753, %vm6754
      %v6756 = vsel %vm6755, %v6748, %v6752
      %v6757 = vand.u32 2147483647, %v6610
      %vm6758 = vcmp.eq.f32.partialorder %v6757, 8.507059e+37
      %v6759 = vand.u32 %v6610, 2147483648
      %v6760 = vor.u32 1.1754944e-38, %v6759
      %v6761 = vsel %vm6758, %v6760, %v6756
      %v6762 = vrcp.pop %v6613
      %v6763 = vmul.f32 %v6613, %v6762
      %v6764 = vsub.f32 1.0, %v6763
      %v6765 = vmul.f32 %v6762, %v6764
      %v6766 = vadd.f32 %v6762, %v6765
      %vm6767 = vweird.f32 %v6613
      %vm6768 = vweird.f32 %v6762
      %vm6769 = vmor %vm6767, %vm6768
      %v6770 = vsel %vm6769, %v6762, %v6766
      %v6771 = vand.u32 2147483647, %v6613
      %vm6772 = vcmp.eq.f32.partialorder %v6771, 8.507059e+37
      %v6773 = vand.u32 %v6613, 2147483648
      %v6774 = vor.u32 1.1754944e-38, %v6773
      %v6775 = vsel %vm6772, %v6774, %v6770
      %v6776 = vrcp.pop %v6616
      %v6777 = vmul.f32 %v6616, %v6776
      %v6778 = vsub.f32 1.0, %v6777
      %v6779 = vmul.f32 %v6776, %v6778
      %v6780 = vadd.f32 %v6776, %v6779
      %vm6781 = vweird.f32 %v6616
      %vm6782 = vweird.f32 %v6776
      %vm6783 = vmor %vm6781, %vm6782
      %v6784 = vsel %vm6783, %v6776, %v6780
      %v6785 = vand.u32 2147483647, %v6616
      %vm6786 = vcmp.eq.f32.partialorder %v6785, 8.507059e+37
      %v6787 = vand.u32 %v6616, 2147483648
      %v6788 = vor.u32 1.1754944e-38, %v6787
      %v6789 = vsel %vm6786, %v6788, %v6784
      %v6790 = vrcp.pop %v6619
      %v6791 = vmul.f32 %v6619, %v6790
      %v6792 = vsub.f32 1.0, %v6791
      %v6793 = vmul.f32 %v6790, %v6792
      %v6794 = vadd.f32 %v6790, %v6793
      %vm6795 = vweird.f32 %v6619
      %vm6796 = vweird.f32 %v6790
      %vm6797 = vmor %vm6795, %vm6796
      %v6798 = vsel %vm6797, %v6790, %v6794
      %v6799 = vand.u32 2147483647, %v6619
      %vm6800 = vcmp.eq.f32.partialorder %v6799, 8.507059e+37
      %v6801 = vand.u32 %v6619, 2147483648
      %v6802 = vor.u32 1.1754944e-38, %v6801
      %v6803 = vsel %vm6800, %v6802, %v6798
      %v6804 = vrcp.pop %v6622
      %v6805 = vmul.f32 %v6622, %v6804
      %v6806 = vsub.f32 1.0, %v6805
      %v6807 = vmul.f32 %v6804, %v6806
      %v6808 = vadd.f32 %v6804, %v6807
      %vm6809 = vweird.f32 %v6622
      %vm6810 = vweird.f32 %v6804
      %vm6811 = vmor %vm6809, %vm6810
      %v6812 = vsel %vm6811, %v6804, %v6808
      %v6813 = vand.u32 2147483647, %v6622
      %vm6814 = vcmp.eq.f32.partialorder %v6813, 8.507059e+37
      %v6815 = vand.u32 %v6622, 2147483648
      %v6816 = vor.u32 1.1754944e-38, %v6815
      %v6817 = vsel %vm6814, %v6816, %v6812
      %v6818 = vrcp.pop %v6625
      %v6819 = vmul.f32 %v6625, %v6818
      %v6820 = vsub.f32 1.0, %v6819
      %v6821 = vmul.f32 %v6818, %v6820
      %v6822 = vadd.f32 %v6818, %v6821
      %vm6823 = vweird.f32 %v6625
      %vm6824 = vweird.f32 %v6818
      %vm6825 = vmor %vm6823, %vm6824
      %v6826 = vsel %vm6825, %v6818, %v6822
      %v6827 = vand.u32 2147483647, %v6625
      %vm6828 = vcmp.eq.f32.partialorder %v6827, 8.507059e+37
      %v6829 = vand.u32 %v6625, 2147483648
      %v6830 = vor.u32 1.1754944e-38, %v6829
      %v6831 = vsel %vm6828, %v6830, %v6826
      %v6832 = vrcp.pop %v6628
      %v6833 = vmul.f32 %v6628, %v6832
      %v6834 = vsub.f32 1.0, %v6833
      %v6835 = vmul.f32 %v6832, %v6834
      %v6836 = vadd.f32 %v6832, %v6835
      %vm6837 = vweird.f32 %v6628
      %vm6838 = vweird.f32 %v6832
      %vm6839 = vmor %vm6837, %vm6838
      %v6840 = vsel %vm6839, %v6832, %v6836
      %v6841 = vand.u32 2147483647, %v6628
      %vm6842 = vcmp.eq.f32.partialorder %v6841, 8.507059e+37
      %v6843 = vand.u32 %v6628, 2147483648
      %v6844 = vor.u32 1.1754944e-38, %v6843
      %v6845 = vsel %vm6842, %v6844, %v6840
      %v6846 = vrcp.pop %v6631
      %v6847 = vmul.f32 %v6631, %v6846
      %v6848 = vsub.f32 1.0, %v6847
      %v6849 = vmul.f32 %v6846, %v6848
      %v6850 = vadd.f32 %v6846, %v6849
      %vm6851 = vweird.f32 %v6631
      %vm6852 = vweird.f32 %v6846
      %vm6853 = vmor %vm6851, %vm6852
      %v6854 = vsel %vm6853, %v6846, %v6850
      %v6855 = vand.u32 2147483647, %v6631
      %vm6856 = vcmp.eq.f32.partialorder %v6855, 8.507059e+37
      %v6857 = vand.u32 %v6631, 2147483648
      %v6858 = vor.u32 1.1754944e-38, %v6857
      %v6859 = vsel %vm6856, %v6858, %v6854
      %v6860 = vrcp.pop %v6634
      %v6861 = vmul.f32 %v6634, %v6860
      %v6862 = vsub.f32 1.0, %v6861
      %v6863 = vmul.f32 %v6860, %v6862
      %v6864 = vadd.f32 %v6860, %v6863
      %vm6865 = vweird.f32 %v6634
      %vm6866 = vweird.f32 %v6860
      %vm6867 = vmor %vm6865, %vm6866
      %v6868 = vsel %vm6867, %v6860, %v6864
      %v6869 = vand.u32 2147483647, %v6634
      %vm6870 = vcmp.eq.f32.partialorder %v6869, 8.507059e+37
      %v6871 = vand.u32 %v6634, 2147483648
      %v6872 = vor.u32 1.1754944e-38, %v6871
      %v6873 = vsel %vm6870, %v6872, %v6868
      %v6874 = vrcp.pop %v6637
      %v6875 = vmul.f32 %v6637, %v6874
      %v6876 = vsub.f32 1.0, %v6875
      %v6877 = vmul.f32 %v6874, %v6876
      %v6878 = vadd.f32 %v6874, %v6877
      %vm6879 = vweird.f32 %v6637
      %vm6880 = vweird.f32 %v6874
      %vm6881 = vmor %vm6879, %vm6880
      %v6882 = vsel %vm6881, %v6874, %v6878
      %v6883 = vand.u32 2147483647, %v6637
      %vm6884 = vcmp.eq.f32.partialorder %v6883, 8.507059e+37
      %v6885 = vand.u32 %v6637, 2147483648
      %v6886 = vor.u32 1.1754944e-38, %v6885
      %v6887 = vsel %vm6884, %v6886, %v6882
      %v6888 = vrcp.pop %v6640
      %v6889 = vmul.f32 %v6640, %v6888
      %v6890 = vsub.f32 1.0, %v6889
      %v6891 = vmul.f32 %v6888, %v6890
      %v6892 = vadd.f32 %v6888, %v6891
      %vm6893 = vweird.f32 %v6640
      %vm6894 = vweird.f32 %v6888
      %vm6895 = vmor %vm6893, %vm6894
      %v6896 = vsel %vm6895, %v6888, %v6892
      %v6897 = vand.u32 2147483647, %v6640
      %vm6898 = vcmp.eq.f32.partialorder %v6897, 8.507059e+37
      %v6899 = vand.u32 %v6640, 2147483648
      %v6900 = vor.u32 1.1754944e-38, %v6899
      %v6901 = vsel %vm6898, %v6900, %v6896
      %v6902 = vrcp.pop %v6643
      %v6903 = vmul.f32 %v6643, %v6902
      %v6904 = vsub.f32 1.0, %v6903
      %v6905 = vmul.f32 %v6902, %v6904
      %v6906 = vadd.f32 %v6902, %v6905
      %vm6907 = vweird.f32 %v6643
      %vm6908 = vweird.f32 %v6902
      %vm6909 = vmor %vm6907, %vm6908
      %v6910 = vsel %vm6909, %v6902, %v6906
      %v6911 = vand.u32 2147483647, %v6643
      %vm6912 = vcmp.eq.f32.partialorder %v6911, 8.507059e+37
      %v6913 = vand.u32 %v6643, 2147483648
      %v6914 = vor.u32 1.1754944e-38, %v6913
      %v6915 = vsel %vm6912, %v6914, %v6910
      %v6916 = vrcp.pop %v6646
      %v6917 = vmul.f32 %v6646, %v6916
      %v6918 = vsub.f32 1.0, %v6917
      %v6919 = vmul.f32 %v6916, %v6918
      %v6920 = vadd.f32 %v6916, %v6919
      %vm6921 = vweird.f32 %v6646
      %vm6922 = vweird.f32 %v6916
      %vm6923 = vmor %vm6921, %vm6922
      %v6924 = vsel %vm6923, %v6916, %v6920
      %v6925 = vand.u32 2147483647, %v6646
      %vm6926 = vcmp.eq.f32.partialorder %v6925, 8.507059e+37
      %v6927 = vand.u32 %v6646, 2147483648
      %v6928 = vor.u32 1.1754944e-38, %v6927
      %v6929 = vsel %vm6926, %v6928, %v6924
      %v6930 = vrcp.pop %v6649
      %v6931 = vmul.f32 %v6649, %v6930
      %v6932 = vsub.f32 1.0, %v6931
      %v6933 = vmul.f32 %v6930, %v6932
      %v6934 = vadd.f32 %v6930, %v6933
      %vm6935 = vweird.f32 %v6649
      %vm6936 = vweird.f32 %v6930
      %vm6937 = vmor %vm6935, %vm6936
      %v6938 = vsel %vm6937, %v6930, %v6934
      %v6939 = vand.u32 2147483647, %v6649
      %vm6940 = vcmp.eq.f32.partialorder %v6939, 8.507059e+37
      %v6941 = vand.u32 %v6649, 2147483648
      %v6942 = vor.u32 1.1754944e-38, %v6941
      %v6943 = vsel %vm6940, %v6942, %v6938
      %v6944 = vrcp.pop %v6652
      %v6945 = vmul.f32 %v6652, %v6944
      %v6946 = vsub.f32 1.0, %v6945
      %v6947 = vmul.f32 %v6944, %v6946
      %v6948 = vadd.f32 %v6944, %v6947
      %vm6949 = vweird.f32 %v6652
      %vm6950 = vweird.f32 %v6944
      %vm6951 = vmor %vm6949, %vm6950
      %v6952 = vsel %vm6951, %v6944, %v6948
      %v6953 = vand.u32 2147483647, %v6652
      %vm6954 = vcmp.eq.f32.partialorder %v6953, 8.507059e+37
      %v6955 = vand.u32 %v6652, 2147483648
      %v6956 = vor.u32 1.1754944e-38, %v6955
      %v6957 = vsel %vm6954, %v6956, %v6952
      %v6958 = vrcp.pop %v6655
      %v6959 = vmul.f32 %v6655, %v6958
      %v6960 = vsub.f32 1.0, %v6959
      %v6961 = vmul.f32 %v6958, %v6960
      %v6962 = vadd.f32 %v6958, %v6961
      %vm6963 = vweird.f32 %v6655
      %vm6964 = vweird.f32 %v6958
      %vm6965 = vmor %vm6963, %vm6964
      %v6966 = vsel %vm6965, %v6958, %v6962
      %v6967 = vand.u32 2147483647, %v6655
      %vm6968 = vcmp.eq.f32.partialorder %v6967, 8.507059e+37
      %v6969 = vand.u32 %v6655, 2147483648
      %v6970 = vor.u32 1.1754944e-38, %v6969
      %v6971 = vsel %vm6968, %v6970, %v6966
      %v6972 = vrcp.pop %v6658
      %v6973 = vmul.f32 %v6658, %v6972
      %v6974 = vsub.f32 1.0, %v6973
      %v6975 = vmul.f32 %v6972, %v6974
      %v6976 = vadd.f32 %v6972, %v6975
      %vm6977 = vweird.f32 %v6658
      %vm6978 = vweird.f32 %v6972
      %vm6979 = vmor %vm6977, %vm6978
      %v6980 = vsel %vm6979, %v6972, %v6976
      %v6981 = vand.u32 2147483647, %v6658
      %vm6982 = vcmp.eq.f32.partialorder %v6981, 8.507059e+37
      %v6983 = vand.u32 %v6658, 2147483648
      %v6984 = vor.u32 1.1754944e-38, %v6983
      %v6985 = vsel %vm6982, %v6984, %v6980
      %v6986 = vrcp.pop %v6661
      %v6987 = vmul.f32 %v6661, %v6986
      %v6988 = vsub.f32 1.0, %v6987
      %v6989 = vmul.f32 %v6986, %v6988
      %v6990 = vadd.f32 %v6986, %v6989
      %vm6991 = vweird.f32 %v6661
      %vm6992 = vweird.f32 %v6986
      %vm6993 = vmor %vm6991, %vm6992
      %v6994 = vsel %vm6993, %v6986, %v6990
      %v6995 = vand.u32 2147483647, %v6661
      %vm6996 = vcmp.eq.f32.partialorder %v6995, 8.507059e+37
      %v6997 = vand.u32 %v6661, 2147483648
      %v6998 = vor.u32 1.1754944e-38, %v6997
      %v6999 = vsel %vm6996, %v6998, %v6994
      %v7000 = vrcp.pop %v6664
      %v7001 = vmul.f32 %v6664, %v7000
      %v7002 = vsub.f32 1.0, %v7001
      %v7003 = vmul.f32 %v7000, %v7002
      %v7004 = vadd.f32 %v7000, %v7003
      %vm7005 = vweird.f32 %v6664
      %vm7006 = vweird.f32 %v7000
      %vm7007 = vmor %vm7005, %vm7006
      %v7008 = vsel %vm7007, %v7000, %v7004
      %v7009 = vand.u32 2147483647, %v6664
      %vm7010 = vcmp.eq.f32.partialorder %v7009, 8.507059e+37
      %v7011 = vand.u32 %v6664, 2147483648
      %v7012 = vor.u32 1.1754944e-38, %v7011
      %v7013 = vsel %vm7010, %v7012, %v7008
      %v7014 = vrcp.pop %v6667
      %v7015 = vmul.f32 %v6667, %v7014
      %v7016 = vsub.f32 1.0, %v7015
      %v7017 = vmul.f32 %v7014, %v7016
      %v7018 = vadd.f32 %v7014, %v7017
      %vm7019 = vweird.f32 %v6667
      %vm7020 = vweird.f32 %v7014
      %vm7021 = vmor %vm7019, %vm7020
      %v7022 = vsel %vm7021, %v7014, %v7018
      %v7023 = vand.u32 2147483647, %v6667
      %vm7024 = vcmp.eq.f32.partialorder %v7023, 8.507059e+37
      %v7025 = vand.u32 %v6667, 2147483648
      %v7026 = vor.u32 1.1754944e-38, %v7025
      %v7027 = vsel %vm7024, %v7026, %v7022
      %v7028 = vrcp.pop %v6670
      %v7029 = vmul.f32 %v6670, %v7028
      %v7030 = vsub.f32 1.0, %v7029
      %v7031 = vmul.f32 %v7028, %v7030
      %v7032 = vadd.f32 %v7028, %v7031
      %vm7033 = vweird.f32 %v6670
      %vm7034 = vweird.f32 %v7028
      %vm7035 = vmor %vm7033, %vm7034
      %v7036 = vsel %vm7035, %v7028, %v7032
      %v7037 = vand.u32 2147483647, %v6670
      %vm7038 = vcmp.eq.f32.partialorder %v7037, 8.507059e+37
      %v7039 = vand.u32 %v6670, 2147483648
      %v7040 = vor.u32 1.1754944e-38, %v7039
      %v7041 = vsel %vm7038, %v7040, %v7036
      %v7042 = vrcp.pop %v6673
      %v7043 = vmul.f32 %v6673, %v7042
      %v7044 = vsub.f32 1.0, %v7043
      %v7045 = vmul.f32 %v7042, %v7044
      %v7046 = vadd.f32 %v7042, %v7045
      %vm7047 = vweird.f32 %v6673
      %vm7048 = vweird.f32 %v7042
      %vm7049 = vmor %vm7047, %vm7048
      %v7050 = vsel %vm7049, %v7042, %v7046
      %v7051 = vand.u32 2147483647, %v6673
      %vm7052 = vcmp.eq.f32.partialorder %v7051, 8.507059e+37
      %v7053 = vand.u32 %v6673, 2147483648
      %v7054 = vor.u32 1.1754944e-38, %v7053
      %v7055 = vsel %vm7052, %v7054, %v7050
      %v7056 = vrcp.pop %v6676
      %v7057 = vmul.f32 %v6676, %v7056
      %v7058 = vsub.f32 1.0, %v7057
      %v7059 = vmul.f32 %v7056, %v7058
      %v7060 = vadd.f32 %v7056, %v7059
      %vm7061 = vweird.f32 %v6676
      %vm7062 = vweird.f32 %v7056
      %vm7063 = vmor %vm7061, %vm7062
      %v7064 = vsel %vm7063, %v7056, %v7060
      %v7065 = vand.u32 2147483647, %v6676
      %vm7066 = vcmp.eq.f32.partialorder %v7065, 8.507059e+37
      %v7067 = vand.u32 %v6676, 2147483648
      %v7068 = vor.u32 1.1754944e-38, %v7067
      %v7069 = vsel %vm7066, %v7068, %v7064
      %v7070 = vrcp.pop %v6679
      %v7071 = vmul.f32 %v6679, %v7070
      %v7072 = vsub.f32 1.0, %v7071
      %v7073 = vmul.f32 %v7070, %v7072
      %v7074 = vadd.f32 %v7070, %v7073
      %vm7075 = vweird.f32 %v6679
      %vm7076 = vweird.f32 %v7070
      %vm7077 = vmor %vm7075, %vm7076
      %v7078 = vsel %vm7077, %v7070, %v7074
      %v7079 = vand.u32 2147483647, %v6679
      %vm7080 = vcmp.eq.f32.partialorder %v7079, 8.507059e+37
      %v7081 = vand.u32 %v6679, 2147483648
      %v7082 = vor.u32 1.1754944e-38, %v7081
      %v7083 = vsel %vm7080, %v7082, %v7078
      %v7084 = vrcp.pop %v6682
      %v7085 = vmul.f32 %v6682, %v7084
      %v7086 = vsub.f32 1.0, %v7085
      %v7087 = vmul.f32 %v7084, %v7086
      %v7088 = vadd.f32 %v7084, %v7087
      %vm7089 = vweird.f32 %v6682
      %vm7090 = vweird.f32 %v7084
      %vm7091 = vmor %vm7089, %vm7090
      %v7092 = vsel %vm7091, %v7084, %v7088
      %v7093 = vand.u32 2147483647, %v6682
      %vm7094 = vcmp.eq.f32.partialorder %v7093, 8.507059e+37
      %v7095 = vand.u32 %v6682, 2147483648
      %v7096 = vor.u32 1.1754944e-38, %v7095
      %v7097 = vsel %vm7094, %v7096, %v7092
      %v7098 = vrcp.pop %v6685
      %v7099 = vmul.f32 %v6685, %v7098
      %v7100 = vsub.f32 1.0, %v7099
      %v7101 = vmul.f32 %v7098, %v7100
      %v7102 = vadd.f32 %v7098, %v7101
      %vm7103 = vweird.f32 %v6685
      %vm7104 = vweird.f32 %v7098
      %vm7105 = vmor %vm7103, %vm7104
      %v7106 = vsel %vm7105, %v7098, %v7102
      %v7107 = vand.u32 2147483647, %v6685
      %vm7108 = vcmp.eq.f32.partialorder %v7107, 8.507059e+37
      %v7109 = vand.u32 %v6685, 2147483648
      %v7110 = vor.u32 1.1754944e-38, %v7109
      %v7111 = vsel %vm7108, %v7110, %v7106
      %v7112 = vrcp.pop %v6688
      %v7113 = vmul.f32 %v6688, %v7112
      %v7114 = vsub.f32 1.0, %v7113
      %v7115 = vmul.f32 %v7112, %v7114
      %v7116 = vadd.f32 %v7112, %v7115
      %vm7117 = vweird.f32 %v6688
      %vm7118 = vweird.f32 %v7112
      %vm7119 = vmor %vm7117, %vm7118
      %v7120 = vsel %vm7119, %v7112, %v7116
      %v7121 = vand.u32 2147483647, %v6688
      %vm7122 = vcmp.eq.f32.partialorder %v7121, 8.507059e+37
      %v7123 = vand.u32 %v6688, 2147483648
      %v7124 = vor.u32 1.1754944e-38, %v7123
      %v7125 = vsel %vm7122, %v7124, %v7120
      %v7126 = vrcp.pop %v6691
      %v7127 = vmul.f32 %v6691, %v7126
      %v7128 = vsub.f32 1.0, %v7127
      %v7129 = vmul.f32 %v7126, %v7128
      %v7130 = vadd.f32 %v7126, %v7129
      %vm7131 = vweird.f32 %v6691
      %vm7132 = vweird.f32 %v7126
      %vm7133 = vmor %vm7131, %vm7132
      %v7134 = vsel %vm7133, %v7126, %v7130
      %v7135 = vand.u32 2147483647, %v6691
      %vm7136 = vcmp.eq.f32.partialorder %v7135, 8.507059e+37
      %v7137 = vand.u32 %v6691, 2147483648
      %v7138 = vor.u32 1.1754944e-38, %v7137
      %v7139 = vsel %vm7136, %v7138, %v7134
      %v7140 = vmul.f32 %v6533, %v6705
      %v7141 = vmul.f32 %v6535, %v6719
      %v7142 = vmul.f32 %v6537, %v6733
      %v7143 = vmul.f32 %v6539, %v6747
      %v7144 = vmul.f32 %v6541, %v6761
      %v7145 = vmul.f32 %v6543, %v6775
      %v7146 = vmul.f32 %v6545, %v6789
      %v7147 = vmul.f32 %v6547, %v6803
      %v7148 = vmul.f32 %v6549, %v6817
      %v7149 = vmul.f32 %v6551, %v6831
      %v7150 = vmul.f32 %v6553, %v6845
      %v7151 = vmul.f32 %v6555, %v6859
      %v7152 = vmul.f32 %v6557, %v6873
      %v7153 = vmul.f32 %v6559, %v6887
      %v7154 = vmul.f32 %v6561, %v6901
      %v7155 = vmul.f32 %v6563, %v6915
      %v7156 = vmul.f32 %v6565, %v6929
      %v7157 = vmul.f32 %v6567, %v6943
      %v7158 = vmul.f32 %v6569, %v6957
      %v7159 = vmul.f32 %v6571, %v6971
      %v7160 = vmul.f32 %v6573, %v6985
      %v7161 = vmul.f32 %v6575, %v6999
      %v7162 = vmul.f32 %v6577, %v7013
      %v7163 = vmul.f32 %v6579, %v7027
      %v7164 = vmul.f32 %v6581, %v7041
      %v7165 = vmul.f32 %v6583, %v7055
      %v7166 = vmul.f32 %v6585, %v7069
      %v7167 = vmul.f32 %v6587, %v7083
      %v7168 = vmul.f32 %v6589, %v7097
      %v7169 = vmul.f32 %v6591, %v7111
      %v7170 = vmul.f32 %v6593, %v7125
      %v7171 = vmul.f32 %v6595, %v7139
      %7172 = vrot.lane.b32.xlu0 %v1252, 40
      %v7173 = vpop.permute.xlu0 %7172
      %7174 = vrot.lane.b32.xlu0 %v1255, 40
      %v7175 = vpop.permute.xlu0 %7174
      %7176 = vrot.lane.b32.xlu0 %v1258, 40
      %v7177 = vpop.permute.xlu0 %7176
      %7178 = vrot.lane.b32.xlu0 %v1261, 40
      %v7179 = vpop.permute.xlu0 %7178
      %7180 = vrot.lane.b32.xlu0 %v1264, 40
      %v7181 = vpop.permute.xlu0 %7180
      %7182 = vrot.lane.b32.xlu0 %v1267, 40
      %v7183 = vpop.permute.xlu0 %7182
      %7184 = vrot.lane.b32.xlu0 %v1270, 40
      %v7185 = vpop.permute.xlu0 %7184
      %7186 = vrot.lane.b32.xlu0 %v1273, 40
      %v7187 = vpop.permute.xlu0 %7186
      %v7197 = vsel %vm1744, %v7140, 0
      %v7200 = vsel %vm1744, %v7141, 0
      %v7203 = vsel %vm1744, %v7142, 0
      %v7206 = vsel %vm1744, %v7143, 0
      %v7209 = vsel %vm1744, %v7144, 0
      %v7212 = vsel %vm1744, %v7145, 0
      %v7215 = vsel %vm1744, %v7146, 0
      %v7218 = vsel %vm1744, %v7147, 0
      %7220 = vmatpush.msra.mxu0 0.0
      %7221 = vmatpush.msra.mxu0 0.0
      %7222 = vmatpush.msra.mxu0 0.0
      %7223 = vmatpush.msra.mxu0 0.0
      %7224 = vmatpush.msra.mxu0 0.0
      %7225 = vmatpush.msra.mxu0 0.0
      %7226 = vmatpush.msra.mxu0 0.0
      %7227 = vmatpush.msra.mxu0 0.0
      %7228 = vmatpush.msra.mxu0 %v7187
      %7229 = vmatpush.msra.mxu0 %v7185
      %7230 = vmatpush.msra.mxu0 %v7183
      %7231 = vmatpush.msra.mxu0 %v7181
      %7232 = vmatpush.msra.mxu0 %v7179
      %7233 = vmatpush.msra.mxu0 %v7177
      %7234 = vmatpush.msra.mxu0 %v7175
      %7235 = vmatpush.msra.mxu0 %v7173
      %7236 = vmatmul.f32.gmra.mxu0 %v7197
      %v7237 = vpop.f32.mrf.mxu0
      %v7238 = vadd.f32 0.0, %v7237
      %7239 = vmatmul.f32.gmra.mxu0 %v7200
      %v7240 = vpop.f32.mrf.mxu0
      %v7241 = vadd.f32 0.0, %v7240
      %7242 = vmatmul.f32.gmra.mxu0 %v7203
      %v7243 = vpop.f32.mrf.mxu0
      %v7244 = vadd.f32 0.0, %v7243
      %7245 = vmatmul.f32.gmra.mxu0 %v7206
      %v7246 = vpop.f32.mrf.mxu0
      %v7247 = vadd.f32 0.0, %v7246
      %7248 = vmatmul.f32.gmra.mxu0 %v7209
      %v7249 = vpop.f32.mrf.mxu0
      %v7250 = vadd.f32 0.0, %v7249
      %7251 = vmatmul.f32.gmra.mxu0 %v7212
      %v7252 = vpop.f32.mrf.mxu0
      %v7253 = vadd.f32 0.0, %v7252
      %7254 = vmatmul.f32.gmra.mxu0 %v7215
      %v7255 = vpop.f32.mrf.mxu0
      %v7256 = vadd.f32 0.0, %v7255
      %7257 = vmatmul.f32.gmra.mxu0 %v7218
      %v7258 = vpop.f32.mrf.mxu0
      %v7259 = vadd.f32 0.0, %v7258
      %7260 = vdwg.mxu0
      %7261 = vrot.lane.b32.xlu0 %v1276, 40
      %v7262 = vpop.permute.xlu0 %7261
      %7263 = vrot.lane.b32.xlu0 %v1279, 40
      %v7264 = vpop.permute.xlu0 %7263
      %7265 = vrot.lane.b32.xlu0 %v1282, 40
      %v7266 = vpop.permute.xlu0 %7265
      %7267 = vrot.lane.b32.xlu0 %v1285, 40
      %v7268 = vpop.permute.xlu0 %7267
      %7269 = vrot.lane.b32.xlu0 %v1288, 40
      %v7270 = vpop.permute.xlu0 %7269
      %7271 = vrot.lane.b32.xlu0 %v1291, 40
      %v7272 = vpop.permute.xlu0 %7271
      %7273 = vrot.lane.b32.xlu0 %v1294, 40
      %v7274 = vpop.permute.xlu0 %7273
      %7275 = vrot.lane.b32.xlu0 %v1297, 40
      %v7276 = vpop.permute.xlu0 %7275
      %v7286 = vsel %vm1744, %v7148, 0
      %v7289 = vsel %vm1744, %v7149, 0
      %v7292 = vsel %vm1744, %v7150, 0
      %v7295 = vsel %vm1744, %v7151, 0
      %v7298 = vsel %vm1744, %v7152, 0
      %v7301 = vsel %vm1744, %v7153, 0
      %v7304 = vsel %vm1744, %v7154, 0
      %v7307 = vsel %vm1744, %v7155, 0
      %7309 = vmatpush.msra.mxu0 0.0
      %7310 = vmatpush.msra.mxu0 0.0
      %7311 = vmatpush.msra.mxu0 0.0
      %7312 = vmatpush.msra.mxu0 0.0
      %7313 = vmatpush.msra.mxu0 0.0
      %7314 = vmatpush.msra.mxu0 0.0
      %7315 = vmatpush.msra.mxu0 0.0
      %7316 = vmatpush.msra.mxu0 0.0
      %7317 = vmatpush.msra.mxu0 %v7276
      %7318 = vmatpush.msra.mxu0 %v7274
      %7319 = vmatpush.msra.mxu0 %v7272
      %7320 = vmatpush.msra.mxu0 %v7270
      %7321 = vmatpush.msra.mxu0 %v7268
      %7322 = vmatpush.msra.mxu0 %v7266
      %7323 = vmatpush.msra.mxu0 %v7264
      %7324 = vmatpush.msra.mxu0 %v7262
      %7325 = vmatmul.f32.gmra.mxu0 %v7286
      %v7326 = vpop.f32.mrf.mxu0
      %v7327 = vadd.f32 0.0, %v7326
      %7328 = vmatmul.f32.gmra.mxu0 %v7289
      %v7329 = vpop.f32.mrf.mxu0
      %v7330 = vadd.f32 0.0, %v7329
      %7331 = vmatmul.f32.gmra.mxu0 %v7292
      %v7332 = vpop.f32.mrf.mxu0
      %v7333 = vadd.f32 0.0, %v7332
      %7334 = vmatmul.f32.gmra.mxu0 %v7295
      %v7335 = vpop.f32.mrf.mxu0
      %v7336 = vadd.f32 0.0, %v7335
      %7337 = vmatmul.f32.gmra.mxu0 %v7298
      %v7338 = vpop.f32.mrf.mxu0
      %v7339 = vadd.f32 0.0, %v7338
      %7340 = vmatmul.f32.gmra.mxu0 %v7301
      %v7341 = vpop.f32.mrf.mxu0
      %v7342 = vadd.f32 0.0, %v7341
      %7343 = vmatmul.f32.gmra.mxu0 %v7304
      %v7344 = vpop.f32.mrf.mxu0
      %v7345 = vadd.f32 0.0, %v7344
      %7346 = vmatmul.f32.gmra.mxu0 %v7307
      %v7347 = vpop.f32.mrf.mxu0
      %v7348 = vadd.f32 0.0, %v7347
      %7349 = vdwg.mxu0
      %7350 = vrot.lane.b32.xlu0 %v1300, 40
      %v7351 = vpop.permute.xlu0 %7350
      %7352 = vrot.lane.b32.xlu0 %v1303, 40
      %v7353 = vpop.permute.xlu0 %7352
      %7354 = vrot.lane.b32.xlu0 %v1306, 40
      %v7355 = vpop.permute.xlu0 %7354
      %7356 = vrot.lane.b32.xlu0 %v1309, 40
      %v7357 = vpop.permute.xlu0 %7356
      %7358 = vrot.lane.b32.xlu0 %v1312, 40
      %v7359 = vpop.permute.xlu0 %7358
      %7360 = vrot.lane.b32.xlu0 %v1315, 40
      %v7361 = vpop.permute.xlu0 %7360
      %7362 = vrot.lane.b32.xlu0 %v1318, 40
      %v7363 = vpop.permute.xlu0 %7362
      %7364 = vrot.lane.b32.xlu0 %v1321, 40
      %v7365 = vpop.permute.xlu0 %7364
      %v7375 = vsel %vm1744, %v7156, 0
      %v7378 = vsel %vm1744, %v7157, 0
      %v7381 = vsel %vm1744, %v7158, 0
      %v7384 = vsel %vm1744, %v7159, 0
      %v7387 = vsel %vm1744, %v7160, 0
      %v7390 = vsel %vm1744, %v7161, 0
      %v7393 = vsel %vm1744, %v7162, 0
      %v7396 = vsel %vm1744, %v7163, 0
      %7398 = vmatpush.msra.mxu0 0.0
      %7399 = vmatpush.msra.mxu0 0.0
      %7400 = vmatpush.msra.mxu0 0.0
      %7401 = vmatpush.msra.mxu0 0.0
      %7402 = vmatpush.msra.mxu0 0.0
      %7403 = vmatpush.msra.mxu0 0.0
      %7404 = vmatpush.msra.mxu0 0.0
      %7405 = vmatpush.msra.mxu0 0.0
      %7406 = vmatpush.msra.mxu0 %v7365
      %7407 = vmatpush.msra.mxu0 %v7363
      %7408 = vmatpush.msra.mxu0 %v7361
      %7409 = vmatpush.msra.mxu0 %v7359
      %7410 = vmatpush.msra.mxu0 %v7357
      %7411 = vmatpush.msra.mxu0 %v7355
      %7412 = vmatpush.msra.mxu0 %v7353
      %7413 = vmatpush.msra.mxu0 %v7351
      %7414 = vmatmul.f32.gmra.mxu0 %v7375
      %v7415 = vpop.f32.mrf.mxu0
      %v7416 = vadd.f32 0.0, %v7415
      %7417 = vmatmul.f32.gmra.mxu0 %v7378
      %v7418 = vpop.f32.mrf.mxu0
      %v7419 = vadd.f32 0.0, %v7418
      %7420 = vmatmul.f32.gmra.mxu0 %v7381
      %v7421 = vpop.f32.mrf.mxu0
      %v7422 = vadd.f32 0.0, %v7421
      %7423 = vmatmul.f32.gmra.mxu0 %v7384
      %v7424 = vpop.f32.mrf.mxu0
      %v7425 = vadd.f32 0.0, %v7424
      %7426 = vmatmul.f32.gmra.mxu0 %v7387
      %v7427 = vpop.f32.mrf.mxu0
      %v7428 = vadd.f32 0.0, %v7427
      %7429 = vmatmul.f32.gmra.mxu0 %v7390
      %v7430 = vpop.f32.mrf.mxu0
      %v7431 = vadd.f32 0.0, %v7430
      %7432 = vmatmul.f32.gmra.mxu0 %v7393
      %v7433 = vpop.f32.mrf.mxu0
      %v7434 = vadd.f32 0.0, %v7433
      %7435 = vmatmul.f32.gmra.mxu0 %v7396
      %v7436 = vpop.f32.mrf.mxu0
      %v7437 = vadd.f32 0.0, %v7436
      %7438 = vdwg.mxu0
      %7439 = vrot.lane.b32.xlu0 %v1324, 40
      %v7440 = vpop.permute.xlu0 %7439
      %7441 = vrot.lane.b32.xlu0 %v1327, 40
      %v7442 = vpop.permute.xlu0 %7441
      %7443 = vrot.lane.b32.xlu0 %v1330, 40
      %v7444 = vpop.permute.xlu0 %7443
      %7445 = vrot.lane.b32.xlu0 %v1333, 40
      %v7446 = vpop.permute.xlu0 %7445
      %7447 = vrot.lane.b32.xlu0 %v1336, 40
      %v7448 = vpop.permute.xlu0 %7447
      %7449 = vrot.lane.b32.xlu0 %v1339, 40
      %v7450 = vpop.permute.xlu0 %7449
      %7451 = vrot.lane.b32.xlu0 %v1342, 40
      %v7452 = vpop.permute.xlu0 %7451
      %7453 = vrot.lane.b32.xlu0 %v1345, 40
      %v7454 = vpop.permute.xlu0 %7453
      %v7464 = vsel %vm1744, %v7164, 0
      %v7467 = vsel %vm1744, %v7165, 0
      %v7470 = vsel %vm1744, %v7166, 0
      %v7473 = vsel %vm1744, %v7167, 0
      %v7476 = vsel %vm1744, %v7168, 0
      %v7479 = vsel %vm1744, %v7169, 0
      %v7482 = vsel %vm1744, %v7170, 0
      %v7485 = vsel %vm1744, %v7171, 0
      %7487 = vmatpush.msra.mxu0 0.0
      %7488 = vmatpush.msra.mxu0 0.0
      %7489 = vmatpush.msra.mxu0 0.0
      %7490 = vmatpush.msra.mxu0 0.0
      %7491 = vmatpush.msra.mxu0 0.0
      %7492 = vmatpush.msra.mxu0 0.0
      %7493 = vmatpush.msra.mxu0 0.0
      %7494 = vmatpush.msra.mxu0 0.0
      %7495 = vmatpush.msra.mxu0 %v7454
      %7496 = vmatpush.msra.mxu0 %v7452
      %7497 = vmatpush.msra.mxu0 %v7450
      %7498 = vmatpush.msra.mxu0 %v7448
      %7499 = vmatpush.msra.mxu0 %v7446
      %7500 = vmatpush.msra.mxu0 %v7444
      %7501 = vmatpush.msra.mxu0 %v7442
      %7502 = vmatpush.msra.mxu0 %v7440
      %7503 = vmatmul.f32.gmra.mxu0 %v7464
      %v7504 = vpop.f32.mrf.mxu0
      %v7505 = vadd.f32 0.0, %v7504
      %7506 = vmatmul.f32.gmra.mxu0 %v7467
      %v7507 = vpop.f32.mrf.mxu0
      %v7508 = vadd.f32 0.0, %v7507
      %7509 = vmatmul.f32.gmra.mxu0 %v7470
      %v7510 = vpop.f32.mrf.mxu0
      %v7511 = vadd.f32 0.0, %v7510
      %7512 = vmatmul.f32.gmra.mxu0 %v7473
      %v7513 = vpop.f32.mrf.mxu0
      %v7514 = vadd.f32 0.0, %v7513
      %7515 = vmatmul.f32.gmra.mxu0 %v7476
      %v7516 = vpop.f32.mrf.mxu0
      %v7517 = vadd.f32 0.0, %v7516
      %7518 = vmatmul.f32.gmra.mxu0 %v7479
      %v7519 = vpop.f32.mrf.mxu0
      %v7520 = vadd.f32 0.0, %v7519
      %7521 = vmatmul.f32.gmra.mxu0 %v7482
      %v7522 = vpop.f32.mrf.mxu0
      %v7523 = vadd.f32 0.0, %v7522
      %7524 = vmatmul.f32.gmra.mxu0 %v7485
      %v7525 = vpop.f32.mrf.mxu0
      %v7526 = vadd.f32 0.0, %v7525
      %7527 = vdwg.mxu0
      %7560 = vrot.lane.b32.xlu0 %v4132, 8
      %v7561 = vpop.permute.xlu0 %7560
      %7562 = vrot.lane.b32.xlu0 %v4135, 8
      %v7563 = vpop.permute.xlu0 %7562
      %7564 = vrot.lane.b32.xlu0 %v4138, 8
      %v7565 = vpop.permute.xlu0 %7564
      %7566 = vrot.lane.b32.xlu0 %v4141, 8
      %v7567 = vpop.permute.xlu0 %7566
      %7568 = vrot.lane.b32.xlu0 %v4144, 8
      %v7569 = vpop.permute.xlu0 %7568
      %7570 = vrot.lane.b32.xlu0 %v4147, 8
      %v7571 = vpop.permute.xlu0 %7570
      %7572 = vrot.lane.b32.xlu0 %v4150, 8
      %v7573 = vpop.permute.xlu0 %7572
      %7574 = vrot.lane.b32.xlu0 %v4153, 8
      %v7575 = vpop.permute.xlu0 %7574
      %7576 = vrot.lane.b32.xlu0 %v4221, 8
      %v7577 = vpop.permute.xlu0 %7576
      %7578 = vrot.lane.b32.xlu0 %v4224, 8
      %v7579 = vpop.permute.xlu0 %7578
      %7580 = vrot.lane.b32.xlu0 %v4227, 8
      %v7581 = vpop.permute.xlu0 %7580
      %7582 = vrot.lane.b32.xlu0 %v4230, 8
      %v7583 = vpop.permute.xlu0 %7582
      %7584 = vrot.lane.b32.xlu0 %v4233, 8
      %v7585 = vpop.permute.xlu0 %7584
      %7586 = vrot.lane.b32.xlu0 %v4236, 8
      %v7587 = vpop.permute.xlu0 %7586
      %7588 = vrot.lane.b32.xlu0 %v4239, 8
      %v7589 = vpop.permute.xlu0 %7588
      %7590 = vrot.lane.b32.xlu0 %v4242, 8
      %v7591 = vpop.permute.xlu0 %7590
      %7592 = vrot.lane.b32.xlu0 %v4310, 8
      %v7593 = vpop.permute.xlu0 %7592
      %7594 = vrot.lane.b32.xlu0 %v4313, 8
      %v7595 = vpop.permute.xlu0 %7594
      %7596 = vrot.lane.b32.xlu0 %v4316, 8
      %v7597 = vpop.permute.xlu0 %7596
      %7598 = vrot.lane.b32.xlu0 %v4319, 8
      %v7599 = vpop.permute.xlu0 %7598
      %7600 = vrot.lane.b32.xlu0 %v4322, 8
      %v7601 = vpop.permute.xlu0 %7600
      %7602 = vrot.lane.b32.xlu0 %v4325, 8
      %v7603 = vpop.permute.xlu0 %7602
      %7604 = vrot.lane.b32.xlu0 %v4328, 8
      %v7605 = vpop.permute.xlu0 %7604
      %7606 = vrot.lane.b32.xlu0 %v4331, 8
      %v7607 = vpop.permute.xlu0 %7606
      %7608 = vrot.lane.b32.xlu0 %v4399, 8
      %v7609 = vpop.permute.xlu0 %7608
      %7610 = vrot.lane.b32.xlu0 %v4402, 8
      %v7611 = vpop.permute.xlu0 %7610
      %7612 = vrot.lane.b32.xlu0 %v4405, 8
      %v7613 = vpop.permute.xlu0 %7612
      %7614 = vrot.lane.b32.xlu0 %v4408, 8
      %v7615 = vpop.permute.xlu0 %7614
      %7616 = vrot.lane.b32.xlu0 %v4411, 8
      %v7617 = vpop.permute.xlu0 %7616
      %7618 = vrot.lane.b32.xlu0 %v4414, 8
      %v7619 = vpop.permute.xlu0 %7618
      %7620 = vrot.lane.b32.xlu0 %v4417, 8
      %v7621 = vpop.permute.xlu0 %7620
      %7622 = vrot.lane.b32.xlu0 %v4420, 8
      %v7623 = vpop.permute.xlu0 %7622
      %7688 = vrot.lane.b32.xlu0 %v5685, 16
      %v7689 = vpop.permute.xlu0 %7688
      %7690 = vrot.lane.b32.xlu0 %v5688, 16
      %v7691 = vpop.permute.xlu0 %7690
      %7692 = vrot.lane.b32.xlu0 %v5691, 16
      %v7693 = vpop.permute.xlu0 %7692
      %7694 = vrot.lane.b32.xlu0 %v5694, 16
      %v7695 = vpop.permute.xlu0 %7694
      %7696 = vrot.lane.b32.xlu0 %v5697, 16
      %v7697 = vpop.permute.xlu0 %7696
      %7698 = vrot.lane.b32.xlu0 %v5700, 16
      %v7699 = vpop.permute.xlu0 %7698
      %7700 = vrot.lane.b32.xlu0 %v5703, 16
      %v7701 = vpop.permute.xlu0 %7700
      %7702 = vrot.lane.b32.xlu0 %v5706, 16
      %v7703 = vpop.permute.xlu0 %7702
      %7704 = vrot.lane.b32.xlu0 %v5774, 16
      %v7705 = vpop.permute.xlu0 %7704
      %7706 = vrot.lane.b32.xlu0 %v5777, 16
      %v7707 = vpop.permute.xlu0 %7706
      %7708 = vrot.lane.b32.xlu0 %v5780, 16
      %v7709 = vpop.permute.xlu0 %7708
      %7710 = vrot.lane.b32.xlu0 %v5783, 16
      %v7711 = vpop.permute.xlu0 %7710
      %7712 = vrot.lane.b32.xlu0 %v5786, 16
      %v7713 = vpop.permute.xlu0 %7712
      %7714 = vrot.lane.b32.xlu0 %v5789, 16
      %v7715 = vpop.permute.xlu0 %7714
      %7716 = vrot.lane.b32.xlu0 %v5792, 16
      %v7717 = vpop.permute.xlu0 %7716
      %7718 = vrot.lane.b32.xlu0 %v5795, 16
      %v7719 = vpop.permute.xlu0 %7718
      %7720 = vrot.lane.b32.xlu0 %v5863, 16
      %v7721 = vpop.permute.xlu0 %7720
      %7722 = vrot.lane.b32.xlu0 %v5866, 16
      %v7723 = vpop.permute.xlu0 %7722
      %7724 = vrot.lane.b32.xlu0 %v5869, 16
      %v7725 = vpop.permute.xlu0 %7724
      %7726 = vrot.lane.b32.xlu0 %v5872, 16
      %v7727 = vpop.permute.xlu0 %7726
      %7728 = vrot.lane.b32.xlu0 %v5875, 16
      %v7729 = vpop.permute.xlu0 %7728
      %7730 = vrot.lane.b32.xlu0 %v5878, 16
      %v7731 = vpop.permute.xlu0 %7730
      %7732 = vrot.lane.b32.xlu0 %v5881, 16
      %v7733 = vpop.permute.xlu0 %7732
      %7734 = vrot.lane.b32.xlu0 %v5884, 16
      %v7735 = vpop.permute.xlu0 %7734
      %7736 = vrot.lane.b32.xlu0 %v5952, 16
      %v7737 = vpop.permute.xlu0 %7736
      %7738 = vrot.lane.b32.xlu0 %v5955, 16
      %v7739 = vpop.permute.xlu0 %7738
      %7740 = vrot.lane.b32.xlu0 %v5958, 16
      %v7741 = vpop.permute.xlu0 %7740
      %7742 = vrot.lane.b32.xlu0 %v5961, 16
      %v7743 = vpop.permute.xlu0 %7742
      %7744 = vrot.lane.b32.xlu0 %v5964, 16
      %v7745 = vpop.permute.xlu0 %7744
      %7746 = vrot.lane.b32.xlu0 %v5967, 16
      %v7747 = vpop.permute.xlu0 %7746
      %7748 = vrot.lane.b32.xlu0 %v5970, 16
      %v7749 = vpop.permute.xlu0 %7748
      %7750 = vrot.lane.b32.xlu0 %v5973, 16
      %v7751 = vpop.permute.xlu0 %7750
      %7816 = vrot.lane.b32.xlu0 %v7238, 24
      %v7817 = vpop.permute.xlu0 %7816
      %7818 = vrot.lane.b32.xlu0 %v7241, 24
      %v7819 = vpop.permute.xlu0 %7818
      %7820 = vrot.lane.b32.xlu0 %v7244, 24
      %v7821 = vpop.permute.xlu0 %7820
      %7822 = vrot.lane.b32.xlu0 %v7247, 24
      %v7823 = vpop.permute.xlu0 %7822
      %7824 = vrot.lane.b32.xlu0 %v7250, 24
      %v7825 = vpop.permute.xlu0 %7824
      %7826 = vrot.lane.b32.xlu0 %v7253, 24
      %v7827 = vpop.permute.xlu0 %7826
      %7828 = vrot.lane.b32.xlu0 %v7256, 24
      %v7829 = vpop.permute.xlu0 %7828
      %7830 = vrot.lane.b32.xlu0 %v7259, 24
      %v7831 = vpop.permute.xlu0 %7830
      %7832 = vrot.lane.b32.xlu0 %v7327, 24
      %v7833 = vpop.permute.xlu0 %7832
      %7834 = vrot.lane.b32.xlu0 %v7330, 24
      %v7835 = vpop.permute.xlu0 %7834
      %7836 = vrot.lane.b32.xlu0 %v7333, 24
      %v7837 = vpop.permute.xlu0 %7836
      %7838 = vrot.lane.b32.xlu0 %v7336, 24
      %v7839 = vpop.permute.xlu0 %7838
      %7840 = vrot.lane.b32.xlu0 %v7339, 24
      %v7841 = vpop.permute.xlu0 %7840
      %7842 = vrot.lane.b32.xlu0 %v7342, 24
      %v7843 = vpop.permute.xlu0 %7842
      %7844 = vrot.lane.b32.xlu0 %v7345, 24
      %v7845 = vpop.permute.xlu0 %7844
      %7846 = vrot.lane.b32.xlu0 %v7348, 24
      %v7847 = vpop.permute.xlu0 %7846
      %7848 = vrot.lane.b32.xlu0 %v7416, 24
      %v7849 = vpop.permute.xlu0 %7848
      %7850 = vrot.lane.b32.xlu0 %v7419, 24
      %v7851 = vpop.permute.xlu0 %7850
      %7852 = vrot.lane.b32.xlu0 %v7422, 24
      %v7853 = vpop.permute.xlu0 %7852
      %7854 = vrot.lane.b32.xlu0 %v7425, 24
      %v7855 = vpop.permute.xlu0 %7854
      %7856 = vrot.lane.b32.xlu0 %v7428, 24
      %v7857 = vpop.permute.xlu0 %7856
      %7858 = vrot.lane.b32.xlu0 %v7431, 24
      %v7859 = vpop.permute.xlu0 %7858
      %7860 = vrot.lane.b32.xlu0 %v7434, 24
      %v7861 = vpop.permute.xlu0 %7860
      %7862 = vrot.lane.b32.xlu0 %v7437, 24
      %v7863 = vpop.permute.xlu0 %7862
      %7864 = vrot.lane.b32.xlu0 %v7505, 24
      %v7865 = vpop.permute.xlu0 %7864
      %7866 = vrot.lane.b32.xlu0 %v7508, 24
      %v7867 = vpop.permute.xlu0 %7866
      %7868 = vrot.lane.b32.xlu0 %v7511, 24
      %v7869 = vpop.permute.xlu0 %7868
      %7870 = vrot.lane.b32.xlu0 %v7514, 24
      %v7871 = vpop.permute.xlu0 %7870
      %7872 = vrot.lane.b32.xlu0 %v7517, 24
      %v7873 = vpop.permute.xlu0 %7872
      %7874 = vrot.lane.b32.xlu0 %v7520, 24
      %v7875 = vpop.permute.xlu0 %7874
      %7876 = vrot.lane.b32.xlu0 %v7523, 24
      %v7877 = vpop.permute.xlu0 %7876
      %7878 = vrot.lane.b32.xlu0 %v7526, 24
      %v7879 = vpop.permute.xlu0 %7878
      %v7912 = vsel %vm1379, %v2579, %v7561
      %v7913 = vsel %vm1379, %v2582, %v7563
      %v7914 = vsel %vm1379, %v2585, %v7565
      %v7915 = vsel %vm1379, %v2588, %v7567
      %v7916 = vsel %vm1379, %v2591, %v7569
      %v7917 = vsel %vm1379, %v2594, %v7571
      %v7918 = vsel %vm1379, %v2597, %v7573
      %v7919 = vsel %vm1379, %v2600, %v7575
      %v7920 = vsel %vm1379, %v2668, %v7577
      %v7921 = vsel %vm1379, %v2671, %v7579
      %v7922 = vsel %vm1379, %v2674, %v7581
      %v7923 = vsel %vm1379, %v2677, %v7583
      %v7924 = vsel %vm1379, %v2680, %v7585
      %v7925 = vsel %vm1379, %v2683, %v7587
      %v7926 = vsel %vm1379, %v2686, %v7589
      %v7927 = vsel %vm1379, %v2689, %v7591
      %v7928 = vsel %vm1379, %v2757, %v7593
      %v7929 = vsel %vm1379, %v2760, %v7595
      %v7930 = vsel %vm1379, %v2763, %v7597
      %v7931 = vsel %vm1379, %v2766, %v7599
      %v7932 = vsel %vm1379, %v2769, %v7601
      %v7933 = vsel %vm1379, %v2772, %v7603
      %v7934 = vsel %vm1379, %v2775, %v7605
      %v7935 = vsel %vm1379, %v2778, %v7607
      %v7936 = vsel %vm1379, %v2846, %v7609
      %v7937 = vsel %vm1379, %v2849, %v7611
      %v7938 = vsel %vm1379, %v2852, %v7613
      %v7939 = vsel %vm1379, %v2855, %v7615
      %v7940 = vsel %vm1379, %v2858, %v7617
      %v7941 = vsel %vm1379, %v2861, %v7619
      %v7942 = vsel %vm1379, %v2864, %v7621
      %v7943 = vsel %vm1379, %v2867, %v7623
      %vm7944 = vcmask 130048
      %v7945 = vsel %vm7944, %v7912, %v7689
      %v7946 = vsel %vm7944, %v7913, %v7691
      %v7947 = vsel %vm7944, %v7914, %v7693
      %v7948 = vsel %vm7944, %v7915, %v7695
      %v7949 = vsel %vm7944, %v7916, %v7697
      %v7950 = vsel %vm7944, %v7917, %v7699
      %v7951 = vsel %vm7944, %v7918, %v7701
      %v7952 = vsel %vm7944, %v7919, %v7703
      %v7953 = vsel %vm7944, %v7920, %v7705
      %v7954 = vsel %vm7944, %v7921, %v7707
      %v7955 = vsel %vm7944, %v7922, %v7709
      %v7956 = vsel %vm7944, %v7923, %v7711
      %v7957 = vsel %vm7944, %v7924, %v7713
      %v7958 = vsel %vm7944, %v7925, %v7715
      %v7959 = vsel %vm7944, %v7926, %v7717
      %v7960 = vsel %vm7944, %v7927, %v7719
      %v7961 = vsel %vm7944, %v7928, %v7721
      %v7962 = vsel %vm7944, %v7929, %v7723
      %v7963 = vsel %vm7944, %v7930, %v7725
      %v7964 = vsel %vm7944, %v7931, %v7727
      %v7965 = vsel %vm7944, %v7932, %v7729
      %v7966 = vsel %vm7944, %v7933, %v7731
      %v7967 = vsel %vm7944, %v7934, %v7733
      %v7968 = vsel %vm7944, %v7935, %v7735
      %v7969 = vsel %vm7944, %v7936, %v7737
      %v7970 = vsel %vm7944, %v7937, %v7739
      %v7971 = vsel %vm7944, %v7938, %v7741
      %v7972 = vsel %vm7944, %v7939, %v7743
      %v7973 = vsel %vm7944, %v7940, %v7745
      %v7974 = vsel %vm7944, %v7941, %v7747
      %v7975 = vsel %vm7944, %v7942, %v7749
      %v7976 = vsel %vm7944, %v7943, %v7751
      %vm7977 = vcmask 195584
      %v7978 = vsel %vm7977, %v7945, %v7817
      %v7979 = vsel %vm7977, %v7946, %v7819
      %v7980 = vsel %vm7977, %v7947, %v7821
      %v7981 = vsel %vm7977, %v7948, %v7823
      %v7982 = vsel %vm7977, %v7949, %v7825
      %v7983 = vsel %vm7977, %v7950, %v7827
      %v7984 = vsel %vm7977, %v7951, %v7829
      %v7985 = vsel %vm7977, %v7952, %v7831
      %v7986 = vsel %vm7977, %v7953, %v7833
      %v7987 = vsel %vm7977, %v7954, %v7835
      %v7988 = vsel %vm7977, %v7955, %v7837
      %v7989 = vsel %vm7977, %v7956, %v7839
      %v7990 = vsel %vm7977, %v7957, %v7841
      %v7991 = vsel %vm7977, %v7958, %v7843
      %v7992 = vsel %vm7977, %v7959, %v7845
      %v7993 = vsel %vm7977, %v7960, %v7847
      %v7994 = vsel %vm7977, %v7961, %v7849
      %v7995 = vsel %vm7977, %v7962, %v7851
      %v7996 = vsel %vm7977, %v7963, %v7853
      %v7997 = vsel %vm7977, %v7964, %v7855
      %v7998 = vsel %vm7977, %v7965, %v7857
      %v7999 = vsel %vm7977, %v7966, %v7859
      %v8000 = vsel %vm7977, %v7967, %v7861
      %v8001 = vsel %vm7977, %v7968, %v7863
      %v8002 = vsel %vm7977, %v7969, %v7865
      %v8003 = vsel %vm7977, %v7970, %v7867
      %v8004 = vsel %vm7977, %v7971, %v7869
      %v8005 = vsel %vm7977, %v7972, %v7871
      %v8006 = vsel %vm7977, %v7973, %v7873
      %v8007 = vsel %vm7977, %v7974, %v7875
      %v8008 = vsel %vm7977, %v7975, %v7877
      %v8009 = vsel %vm7977, %v7976, %v7879
      %v8010 = vld [vmem:[%s6] sm:$0xff]
      %v8011 = vld [vmem:[%s6 + $0x8] sm:$0xff]
      %v8012 = vld [vmem:[%s6 + $0x10] sm:$0xff]
      %v8013 = vld [vmem:[%s6 + $0x18] sm:$0xff]
      %v8014 = vld [vmem:[%s7] sm:$0x1]
      %v8016 = vperm.slane %v8014, 0
      %v8019 = vsel %vm346, %v7978, 0
      %v8022 = vsel %vm346, %v7979, 0
      %v8025 = vsel %vm346, %v7980, 0
      %v8028 = vsel %vm346, %v7981, 0
      %v8031 = vsel %vm346, %v7982, 0
      %v8034 = vsel %vm346, %v7983, 0
      %v8037 = vsel %vm346, %v7984, 0
      %v8040 = vsel %vm346, %v7985, 0
      %v8043 = vsel %vm346, %v7986, 0
      %v8046 = vsel %vm346, %v7987, 0
      %v8049 = vsel %vm346, %v7988, 0
      %v8052 = vsel %vm346, %v7989, 0
      %v8055 = vsel %vm346, %v7990, 0
      %v8058 = vsel %vm346, %v7991, 0
      %v8061 = vsel %vm346, %v7992, 0
      %v8064 = vsel %vm346, %v7993, 0
      %v8067 = vsel %vm346, %v7994, 0
      %v8070 = vsel %vm346, %v7995, 0
      %v8073 = vsel %vm346, %v7996, 0
      %v8076 = vsel %vm346, %v7997, 0
      %v8079 = vsel %vm346, %v7998, 0
      %v8082 = vsel %vm346, %v7999, 0
      %v8085 = vsel %vm346, %v8000, 0
      %v8088 = vsel %vm346, %v8001, 0
      %v8091 = vsel %vm346, %v8002, 0
      %v8094 = vsel %vm346, %v8003, 0
      %v8097 = vsel %vm346, %v8004, 0
      %v8100 = vsel %vm346, %v8005, 0
      %v8103 = vsel %vm346, %v8006, 0
      %v8106 = vsel %vm346, %v8007, 0
      %v8109 = vsel %vm346, %v8008, 0
      %v8112 = vsel %vm346, %v8009, 0
      %8114 = vmatpush.msra.mxu0 0.0
      %8115 = vmatpush.msra.mxu0 0.0
      %8116 = vmatpush.msra.mxu0 0.0
      %8117 = vmatpush.msra.mxu0 0.0
      %8118 = vmatpush.msra.mxu0 0.0
      %8119 = vmatpush.msra.mxu0 0.0
      %8120 = vmatpush.msra.mxu0 0.0
      %8121 = vmatpush.msra.mxu0 0.0
      %8122 = vmatpush.msra.mxu0 0.0
      %8123 = vmatpush.msra.mxu0 0.0
      %8124 = vmatpush.msra.mxu0 0.0
      %8125 = vmatpush.msra.mxu0 0.0
      %8126 = vmatpush.msra.mxu0 %v8013
      %8127 = vmatpush.msra.mxu0 %v8012
      %8128 = vmatpush.msra.mxu0 %v8011
      %8129 = vmatpush.msra.mxu0 %v8010
      %8130 = vmatmul.f32.gmra.mxu0 %v8019
      %v8131 = vpop.f32.mrf.mxu0
      %v8132 = vadd.f32 %v8016, %v8131
      %8133 = vmatmul.f32.gmra.mxu0 %v8022
      %v8134 = vpop.f32.mrf.mxu0
      %v8135 = vadd.f32 %v8016, %v8134
      %8136 = vmatmul.f32.gmra.mxu0 %v8025
      %v8137 = vpop.f32.mrf.mxu0
      %v8138 = vadd.f32 %v8016, %v8137
      %8139 = vmatmul.f32.gmra.mxu0 %v8028
      %v8140 = vpop.f32.mrf.mxu0
      %v8141 = vadd.f32 %v8016, %v8140
      %8142 = vmatmul.f32.gmra.mxu0 %v8031
      %v8143 = vpop.f32.mrf.mxu0
      %v8144 = vadd.f32 %v8016, %v8143
      %8145 = vmatmul.f32.gmra.mxu0 %v8034
      %v8146 = vpop.f32.mrf.mxu0
      %v8147 = vadd.f32 %v8016, %v8146
      %8148 = vmatmul.f32.gmra.mxu0 %v8037
      %v8149 = vpop.f32.mrf.mxu0
      %v8150 = vadd.f32 %v8016, %v8149
      %8151 = vmatmul.f32.gmra.mxu0 %v8040
      %v8152 = vpop.f32.mrf.mxu0
      %v8153 = vadd.f32 %v8016, %v8152
      %8154 = vmatmul.f32.gmra.mxu0 %v8043
      %v8155 = vpop.f32.mrf.mxu0
      %v8156 = vadd.f32 %v8016, %v8155
      %8157 = vmatmul.f32.gmra.mxu0 %v8046
      %v8158 = vpop.f32.mrf.mxu0
      %v8159 = vadd.f32 %v8016, %v8158
      %8160 = vmatmul.f32.gmra.mxu0 %v8049
      %v8161 = vpop.f32.mrf.mxu0
      %v8162 = vadd.f32 %v8016, %v8161
      %8163 = vmatmul.f32.gmra.mxu0 %v8052
      %v8164 = vpop.f32.mrf.mxu0
      %v8165 = vadd.f32 %v8016, %v8164
      %8166 = vmatmul.f32.gmra.mxu0 %v8055
      %v8167 = vpop.f32.mrf.mxu0
      %v8168 = vadd.f32 %v8016, %v8167
      %8169 = vmatmul.f32.gmra.mxu0 %v8058
      %v8170 = vpop.f32.mrf.mxu0
      %v8171 = vadd.f32 %v8016, %v8170
      %8172 = vmatmul.f32.gmra.mxu0 %v8061
      %v8173 = vpop.f32.mrf.mxu0
      %v8174 = vadd.f32 %v8016, %v8173
      %8175 = vmatmul.f32.gmra.mxu0 %v8064
      %v8176 = vpop.f32.mrf.mxu0
      %v8177 = vadd.f32 %v8016, %v8176
      %8178 = vmatmul.f32.gmra.mxu0 %v8067
      %v8179 = vpop.f32.mrf.mxu0
      %v8180 = vadd.f32 %v8016, %v8179
      %8181 = vmatmul.f32.gmra.mxu0 %v8070
      %v8182 = vpop.f32.mrf.mxu0
      %v8183 = vadd.f32 %v8016, %v8182
      %8184 = vmatmul.f32.gmra.mxu0 %v8073
      %v8185 = vpop.f32.mrf.mxu0
      %v8186 = vadd.f32 %v8016, %v8185
      %8187 = vmatmul.f32.gmra.mxu0 %v8076
      %v8188 = vpop.f32.mrf.mxu0
      %v8189 = vadd.f32 %v8016, %v8188
      %8190 = vmatmul.f32.gmra.mxu0 %v8079
      %v8191 = vpop.f32.mrf.mxu0
      %v8192 = vadd.f32 %v8016, %v8191
      %8193 = vmatmul.f32.gmra.mxu0 %v8082
      %v8194 = vpop.f32.mrf.mxu0
      %v8195 = vadd.f32 %v8016, %v8194
      %8196 = vmatmul.f32.gmra.mxu0 %v8085
      %v8197 = vpop.f32.mrf.mxu0
      %v8198 = vadd.f32 %v8016, %v8197
      %8199 = vmatmul.f32.gmra.mxu0 %v8088
      %v8200 = vpop.f32.mrf.mxu0
      %v8201 = vadd.f32 %v8016, %v8200
      %8202 = vmatmul.f32.gmra.mxu0 %v8091
      %v8203 = vpop.f32.mrf.mxu0
      %v8204 = vadd.f32 %v8016, %v8203
      %8205 = vmatmul.f32.gmra.mxu0 %v8094
      %v8206 = vpop.f32.mrf.mxu0
      %v8207 = vadd.f32 %v8016, %v8206
      %8208 = vmatmul.f32.gmra.mxu0 %v8097
      %v8209 = vpop.f32.mrf.mxu0
      %v8210 = vadd.f32 %v8016, %v8209
      %8211 = vmatmul.f32.gmra.mxu0 %v8100
      %v8212 = vpop.f32.mrf.mxu0
      %v8213 = vadd.f32 %v8016, %v8212
      %8214 = vmatmul.f32.gmra.mxu0 %v8103
      %v8215 = vpop.f32.mrf.mxu0
      %v8216 = vadd.f32 %v8016, %v8215
      %8217 = vmatmul.f32.gmra.mxu0 %v8106
      %v8218 = vpop.f32.mrf.mxu0
      %v8219 = vadd.f32 %v8016, %v8218
      %8220 = vmatmul.f32.gmra.mxu0 %v8109
      %v8221 = vpop.f32.mrf.mxu0
      %v8222 = vadd.f32 %v8016, %v8221
      %8223 = vmatmul.f32.gmra.mxu0 %v8112
      %v8224 = vpop.f32.mrf.mxu0
      %v8225 = vadd.f32 %v8016, %v8224
      %8226 = vdwg.mxu0
      %v8227 = vadd.f32 %v8132, %v314
      %v8228 = vadd.f32 %v8135, %v315
      %v8229 = vadd.f32 %v8138, %v316
      %v8230 = vadd.f32 %v8141, %v317
      %v8231 = vadd.f32 %v8144, %v318
      %v8232 = vadd.f32 %v8147, %v319
      %v8233 = vadd.f32 %v8150, %v320
      %v8234 = vadd.f32 %v8153, %v321
      %v8235 = vadd.f32 %v8156, %v322
      %v8236 = vadd.f32 %v8159, %v323
      %v8237 = vadd.f32 %v8162, %v324
      %v8238 = vadd.f32 %v8165, %v325
      %v8239 = vadd.f32 %v8168, %v326
      %v8240 = vadd.f32 %v8171, %v327
      %v8241 = vadd.f32 %v8174, %v328
      %v8242 = vadd.f32 %v8177, %v329
      %v8243 = vadd.f32 %v8180, %v330
      %v8244 = vadd.f32 %v8183, %v331
      %v8245 = vadd.f32 %v8186, %v332
      %v8246 = vadd.f32 %v8189, %v333
      %v8247 = vadd.f32 %v8192, %v334
      %v8248 = vadd.f32 %v8195, %v335
      %v8249 = vadd.f32 %v8198, %v336
      %v8250 = vadd.f32 %v8201, %v337
      %v8251 = vadd.f32 %v8204, %v338
      %v8252 = vadd.f32 %v8207, %v339
      %v8253 = vadd.f32 %v8210, %v340
      %v8254 = vadd.f32 %v8213, %v341
      %v8255 = vadd.f32 %v8216, %v342
      %v8256 = vadd.f32 %v8219, %v343
      %v8257 = vadd.f32 %v8222, %v344
      %v8258 = vadd.f32 %v8225, %v345
      %8259 = vst.msk [vmem:[%s312] sm:$0xff] %vm346, %v8227
      %8260 = vst.msk [vmem:[%s312 + $0x8] sm:$0xff] %vm346, %v8228
      %8261 = vst.msk [vmem:[%s312 + $0x10] sm:$0xff] %vm346, %v8229
      %8262 = vst.msk [vmem:[%s312 + $0x18] sm:$0xff] %vm346, %v8230
      %8263 = vst.msk [vmem:[%s312 + $0x20] sm:$0xff] %vm346, %v8231
      %8264 = vst.msk [vmem:[%s312 + $0x28] sm:$0xff] %vm346, %v8232
      %8265 = vst.msk [vmem:[%s312 + $0x30] sm:$0xff] %vm346, %v8233
      %8266 = vst.msk [vmem:[%s312 + $0x38] sm:$0xff] %vm346, %v8234
      %8267 = vst.msk [vmem:[%s312 + $0x40] sm:$0xff] %vm346, %v8235
      %8268 = vst.msk [vmem:[%s312 + $0x48] sm:$0xff] %vm346, %v8236
      %8269 = vst.msk [vmem:[%s312 + $0x50] sm:$0xff] %vm346, %v8237
      %8270 = vst.msk [vmem:[%s312 + $0x58] sm:$0xff] %vm346, %v8238
      %8271 = vst.msk [vmem:[%s312 + $0x60] sm:$0xff] %vm346, %v8239
      %8272 = vst.msk [vmem:[%s312 + $0x68] sm:$0xff] %vm346, %v8240
      %8273 = vst.msk [vmem:[%s312 + $0x70] sm:$0xff] %vm346, %v8241
      %8274 = vst.msk [vmem:[%s312 + $0x78] sm:$0xff] %vm346, %v8242
      %8275 = vst.msk [vmem:[%s312 + $0x80] sm:$0xff] %vm346, %v8243
      %8276 = vst.msk [vmem:[%s312 + $0x88] sm:$0xff] %vm346, %v8244
      %8277 = vst.msk [vmem:[%s312 + $0x90] sm:$0xff] %vm346, %v8245
      %8278 = vst.msk [vmem:[%s312 + $0x98] sm:$0xff] %vm346, %v8246
      %8279 = vst.msk [vmem:[%s312 + $0xa0] sm:$0xff] %vm346, %v8247
      %8280 = vst.msk [vmem:[%s312 + $0xa8] sm:$0xff] %vm346, %v8248
      %8281 = vst.msk [vmem:[%s312 + $0xb0] sm:$0xff] %vm346, %v8249
      %8282 = vst.msk [vmem:[%s312 + $0xb8] sm:$0xff] %vm346, %v8250
      %8283 = vst.msk [vmem:[%s312 + $0xc0] sm:$0xff] %vm346, %v8251
      %8284 = vst.msk [vmem:[%s312 + $0xc8] sm:$0xff] %vm346, %v8252
      %8285 = vst.msk [vmem:[%s312 + $0xd0] sm:$0xff] %vm346, %v8253
      %8286 = vst.msk [vmem:[%s312 + $0xd8] sm:$0xff] %vm346, %v8254
      %8287 = vst.msk [vmem:[%s312 + $0xe0] sm:$0xff] %vm346, %v8255
      %8288 = vst.msk [vmem:[%s312 + $0xe8] sm:$0xff] %vm346, %v8256
      %8289 = vst.msk [vmem:[%s312 + $0xf0] sm:$0xff] %vm346, %v8257
      %8290 = vst.msk [vmem:[%s312 + $0xf8] sm:$0xff] %vm346, %v8258
      %s8291 = smul.u32 4, %s19
      %p8292 = scmp.lt.s32.totalorder %s8291, 7
      %s8293 = scalar_select %p8292, %s8291, 7
      %s8294 = smul.addr %s8293, 8
      %s8295 = smul.addr %s8294, 8
      %s8296 = scalar_lea.vmem %s8, %s8295
      // Predicated region
      $region53: #{swin_block_forward.2} parent=51 // pred_check
        %p8297 = pneg %p210
      $region54: #{swin_block_forward.2} parent=51 // pred_check_branch
        %8299 = sbr.rel (%p8297) target = $region56
      $region55: #{swin_block_forward.2} parent=51 // pred_region
        %s8300 = smul.u32 4, %s19
      $region56: #{swin_block_forward.2} parent=51 // pred_fallthru
        _
    $region52: #{swin_block_forward.2} parent=5 // pred_fallthru
      _
    %p8301 = scmp.le.s32.totalorder 2, %s14
    // Predicated region
    $region57: #{swin_block_forward.2} parent=5 // pred_check
      %p8302 = pneg %p8301
    $region58: #{swin_block_forward.2} parent=5 // pred_check_branch
      %8304 = sbr.rel (%p8302) target = $region60
    $region59: #{swin_block_forward.2} parent=5 // pred_region
      %s8305 = ssub.s32 %s14, 2
      // Predicated region
      $region61: #{swin_block_forward.2} parent=59 // pred_check
        %p8306 = pneg %p216
      $region62: #{swin_block_forward.2} parent=59 // pred_check_branch
        %8308 = sbr.rel (%p8306) target = $region64
      $region63: #{swin_block_forward.2} parent=59 // pred_region
        %s8309 = smul.u32 4, %s20
        %p8310 = scmp.lt.s32.totalorder %s8309, 7
        %s8311 = scalar_select %p8310, %s8309, 7
        %s8312 = smul.addr %s8311, 8
        %s8313 = smul.addr %s8312, 8
        %s8314 = scalar_lea.vmem %s8, %s8313
      $region64: #{swin_block_forward.2} parent=59 // pred_fallthru
        _
    $region60: #{swin_block_forward.2} parent=5 // pred_fallthru
      _
  $region6: #{swin_block_forward.2} parent=0 // loop_footer
    %s18 = sadd.s32 1, %s14
  $region7: #{swin_block_forward.2} parent=0 // loop_footer_branch
    %13 = sbr.rel target = $region3
  $region8: #{swin_block_forward.2} parent=0 // loop_exit
    _

</llo_original>
